<compile_context>
chip_gen: v7x
topology: tpu7x:2x2x1
jax: 0.10.0
libtpu: 0.0.40
codegen_flags: <defaults>
</compile_context>

<pallas_src>
import functools

import jax
import jax.numpy as jnp
from jax.experimental import pallas as pl
from jax.experimental.pallas import tpu as pltpu

PARAM_ORDER = (
    "g1", "b1", "g2", "b2",
    "wq", "bq", "wk", "bk", "wv", "bv",
    "w1", "bm1", "w2", "bm2",
)
N_PARAMS = len(PARAM_ORDER)
LN_EPS = 1e-5  # nn.LayerNorm default


def _fused_kernel(*refs, num_heads, head_dim, mix, fused_heads, compute_dtype):
    """Both CrossAttentionBlocks for one (block_batch, Lq, D) tile of the batch."""
    x_ref, c1_ref, c2_ref = refs[:3]
    p1 = dict(zip(PARAM_ORDER, refs[3:3 + N_PARAMS]))
    p2 = dict(zip(PARAM_ORDER, refs[3 + N_PARAMS:3 + 2 * N_PARAMS]))
    o_ref = refs[3 + 2 * N_PARAMS]

    Bb, Lq, D = x_ref.shape
    Lk = c1_ref.shape[1]
    H, hd = num_heads, head_dim

    def ln_normalize(z):                       # (rows, D) f32 -> pre-affine LN(z)
        mu = jnp.mean(z, axis=-1, keepdims=True)
        c = z - mu
        var = jnp.mean(c * c, axis=-1, keepdims=True)
        return c * jax.lax.rsqrt(var + LN_EPS)

    def attention(q, k, v):
        # q: (Bb*Lq, H*hd) f32 (softmax scale already folded into wq/bq at prep time)
        # k, v: (Bb*Lk, H*hd) f32.  Returns a lane-dense (Bb, Lq, D) f32 value.
        qc, kc, vc = (t.astype(compute_dtype) for t in (q, k, v))
        if fused_heads:
            q4 = qc.reshape(Bb, Lq, H, hd)
            k4 = kc.reshape(Bb, Lk, H, hd)
            v4 = vc.reshape(Bb, Lk, H, hd)
            s = jnp.einsum("bqhd,bkhd->bhqk", q4, k4,
                           preferred_element_type=jnp.float32)
            s = s - jnp.max(s, axis=-1, keepdims=True)
            e = jnp.exp(s)
            pr = (e * pl.reciprocal(jnp.sum(e, axis=-1, keepdims=True),
                                    approx=True)).astype(compute_dtype)
            attn = jnp.einsum("bhqk,bkhd->bqhd", pr, v4,
                              preferred_element_type=jnp.float32)
            return attn.reshape(Bb, Lq, D)
        # Fallback: static per-head loop (single-batch-dim 3-D einsums), head outputs
        # concatenated once along the lane axis (no scratch, no masked partial stores).
        q3 = qc.reshape(Bb, Lq, H * hd)
        k3 = kc.reshape(Bb, Lk, H * hd)
        v3 = vc.reshape(Bb, Lk, H * hd)
        heads = []
        for h in range(H):
            sl = slice(h * hd, (h + 1) * hd)
            s = jnp.einsum("bqd,bkd->bqk", q3[:, :, sl], k3[:, :, sl],
                           preferred_element_type=jnp.float32)
            s = s - jnp.max(s, axis=-1, keepdims=True)
            e = jnp.exp(s)
            pr = (e * pl.reciprocal(jnp.sum(e, axis=-1, keepdims=True),
                                    approx=True)).astype(compute_dtype)
            heads.append(jnp.einsum("bqk,bkd->bqd", pr, v3[:, :, sl],
                                    preferred_element_type=jnp.float32))
        return jnp.concatenate(heads, axis=-1)

    def block(x, x_hat, y_hat, p):
        # x: (Bb, Lq, D) f32 residual stream; x_hat/y_hat: pre-affine LN of q / kv input.
        rows_q = Bb * Lq
        g1, b1 = p["g1"][...], p["b1"][...]
        xn = (x_hat * g1 + b1).astype(compute_dtype)
        yn = (y_hat * g1 + b1).astype(compute_dtype)

        # Big row-slab projections: bf16 operands, f32 MXU accumulation.
        q = jnp.dot(xn, p["wq"][...], preferred_element_type=jnp.float32) + p["bq"][...]
        k = jnp.dot(yn, p["wk"][...], preferred_element_type=jnp.float32) + p["bk"][...]
        v = jnp.dot(yn, p["wv"][...], preferred_element_type=jnp.float32) + p["bv"][...]

        out = x + attention(q, k, v)               # residual 1 (f32)

        g2, b2 = p["g2"][...], p["b2"][...]
        on = (ln_normalize(out.reshape(rows_q, D)) * g2 + b2).astype(compute_dtype)
        hid = jnp.dot(on, p["w1"][...], preferred_element_type=jnp.float32) + p["bm1"][...]
        hid = jnp.maximum(hid, 0.0).astype(compute_dtype)          # ReLU
        mlp = jnp.dot(hid, p["w2"][...], preferred_element_type=jnp.float32) + p["bm2"][...]
        return out + mlp.reshape(Bb, Lq, D)        # residual 2 (f32)

    x = x_ref[...].astype(jnp.float32)
    c1 = c1_ref[...].astype(jnp.float32)
    c2 = c2_ref[...].astype(jnp.float32)

    rows_q, rows_k = Bb * Lq, Bb * Lk
    x_hat = ln_normalize(x.reshape(rows_q, D))
    c1_hat = ln_normalize(c1.reshape(rows_k, D))
    c2_hat = ln_normalize(c2.reshape(rows_k, D))

    if mix:
        # LN statistics of x computed once and reused by both blocks (only affine differs).
        o = block(x, x_hat, c1_hat, p1) + block(x, x_hat, c2_hat, p2)
    else:
        y = block(x, x_hat, c1_hat, p1)
        y_hat = ln_normalize(y.reshape(rows_q, D))
        o = block(y, y_hat, c2_hat, p2)

    o_ref[...] = o.astype(o_ref.dtype)


def _tpu_vmem_capacity_bytes():
    try:
        return int(pltpu.get_tpu_info().vmem_capacity_bytes)
    except Exception:
        return 0


def clip2vid_miniformer(base, initial, final, params_initial, params_final, *,
                        num_heads, head_dim, mix=False,
                        compute_dtype=jnp.bfloat16, block_batch=None):
    """base: (B, Lq, D) queries; initial/final: (B, Lk, D) keys/values."""
    B, Lq, D = base.shape
    _, Lk, _ = initial.shape
    assert final.shape == initial.shape
    assert D == num_heads * head_dim
    proj = num_heads * head_dim
    mlp_hidden = params_initial["w1"].shape[1]

    # Weights in bf16 for the MXU; the reference's (inverted) softmax scale is folded
    # into wq/bq once at prep time instead of scaling activations per call.
    softmax_scale = float(head_dim) ** 0.5
    def prep(p):
        q = dict(p)
        q["wq"] = (p["wq"].astype(jnp.float32) * softmax_scale).astype(compute_dtype)
        q["bq"] = p["bq"].astype(jnp.float32) * softmax_scale
        for wname in ("wk", "wv", "w1", "w2"):
            q[wname] = p[wname].astype(compute_dtype)
        return q

    p1, p2 = prep(params_initial), prep(params_final)
    param_list = [p1[k] for k in PARAM_ORDER] + [p2[k] for k in PARAM_ORDER]
    param_bytes = sum(int(v.size) * v.dtype.itemsize for v in param_list)

    # ---- generation-aware VMEM budget / batch-tile sizing ----
    vmem_bytes = _tpu_vmem_capacity_bytes()
    if vmem_bytes <= 0:
        vmem_bytes = 64 * 1024 * 1024          # conservative: assume smallest (v7x) VMEM
    small_vmem = vmem_bytes <= 64 * 1024 * 1024  # v7x-like: 64 MiB/TC, 2 TCs/chip
    vmem_limit = int(min(vmem_bytes * 5 // 8, 96 * 1024 * 1024))  # ~40 MiB v7x, 80 MiB v5e/v6e

    if block_batch is None:
        per_b = (                                   # rough per-batch-element working set
            2 * 2 * (Lq + 2 * Lk) * D * 4           # double-buffered activation tiles (in+out)
            + (Lq + 2 * Lk) * proj * 6              # q, k, v (f32 + bf16)
            + num_heads * Lq * Lk * 6               # scores (f32) + probs (bf16)
            + 3 * Lq * D * 4                        # attn out / residuals
            + Lq * mlp_hidden * 6)                  # MLP hidden (f32 + bf16)
        budget = max(vmem_limit - 2 * param_bytes, per_b)
        bb = max(1, min(B, budget // per_b, max(1, 512 // max(Lq, 1))))
        if small_vmem and B >= 2:                   # >=2 grid steps so both v7x TCs get work
            bb = min(bb, max(1, B // 2))
        while B % bb:
            bb -= 1
        if small_vmem:                              # prefer an even grid length on v7x
            while bb > 1 and (B // bb) % 2:
                bb -= 1
                while B % bb:
                    bb -= 1
        block_batch = int(bb)
    assert B % block_batch == 0
    grid = (B // block_batch,)

    act_q_spec = pl.BlockSpec((block_batch, Lq, D), lambda b: (b, 0, 0))
    act_k_spec = pl.BlockSpec((block_batch, Lk, D), lambda b: (b, 0, 0))
    out_spec = pl.BlockSpec((block_batch, Lq, D), lambda b: (b, 0, 0))

    # Advisory cost estimate so XLA can schedule around the custom call.
    per_block_flops = (
        2 * B * Lq * D * proj                          # q projection
        + 2 * 2 * B * Lk * D * proj                    # k, v projections
        + 2 * 2 * B * num_heads * Lq * Lk * head_dim   # scores + p@v
        + 2 * 2 * B * Lq * D * mlp_hidden)             # MLP
    cost = pl.CostEstimate(
        flops=int(2 * per_block_flops),
        transcendentals=int(2 * B * num_heads * Lq * Lk),
        bytes_accessed=int(param_bytes + (base.size + initial.size + final.size
                                          + base.size) * base.dtype.itemsize))

    def build(fused_heads, single_buffer_weights):
        wkw = {"pipeline_mode": pl.Buffered(1)} if single_buffer_weights else {}
        in_specs = [act_q_spec, act_k_spec, act_k_spec]
        for p in param_list:   # whole, VMEM-resident, constant index -> fetched once
            in_specs.append(pl.BlockSpec(p.shape, lambda b, n=p.ndim: (0,) * n, **wkw))
        kernel = functools.partial(_fused_kernel, num_heads=num_heads, head_dim=head_dim,
                                   mix=mix, fused_heads=fused_heads,
                                   compute_dtype=compute_dtype)
        return pl.pallas_call(
            kernel,
            out_shape=jax.ShapeDtypeStruct((B, Lq, D), base.dtype),
            grid=grid,
            in_specs=in_specs,
            out_specs=out_spec,
            compiler_params=pltpu.CompilerParams(
                dimension_semantics=("parallel",),
                vmem_limit_bytes=vmem_limit),
            cost_estimate=cost,
        )

    # Try the preferred configuration first; fall back if the installed jax/Mosaic
    # can't lower the all-heads (multi-batch-dim) contraction or pipeline_mode.
    last_err = None
    for fused_heads, single_buffer in ((True, True), (True, False),
                                       (False, True), (False, False)):
        try:
            return build(fused_heads, single_buffer)(base, initial, final, *param_list)
        except Exception as err:   # keep the kernel runnable on older toolchains
            last_err = err
    raise last_err


# -------------------- parameter construction (deterministic) --------------------

def make_block_params(key, dim, num_heads, head_dim, mlp_hidden):
    proj = num_heads * head_dim
    ks = jax.random.split(key, 5)
    w = lambda k, i, o: (0.02 * jax.random.normal(k, (i, o), jnp.float32))
    return {
        "g1": jnp.ones((1, dim), jnp.float32),
        "b1": jnp.zeros((1, dim), jnp.float32),
        "g2": jnp.ones((1, dim), jnp.float32),
        "b2": jnp.zeros((1, dim), jnp.float32),
        "wq": w(ks[0], dim, proj), "bq": jnp.zeros((1, proj), jnp.float32),
        "wk": w(ks[1], dim, proj), "bk": jnp.zeros((1, proj), jnp.float32),
        "wv": w(ks[2], dim, proj), "bv": jnp.zeros((1, proj), jnp.float32),
        "w1": w(ks[3], dim, mlp_hidden), "bm1": jnp.zeros((1, mlp_hidden), jnp.float32),
        "w2": w(ks[4], mlp_hidden, dim), "bm2": jnp.zeros((1, dim), jnp.float32),
    }


# -------- pure-JAX reference (module math order; bf16 matmul casts, f32 accumulation) ----

def _ref_block(x, y, p, num_heads, head_dim, compute_dtype):
    cd = compute_dtype

    def ln(z, g, b):
        mu = jnp.mean(z, -1, keepdims=True)
        var = jnp.mean((z - mu) ** 2, -1, keepdims=True)
        return (z - mu) * jax.lax.rsqrt(var + LN_EPS) * g + b

    B, Lq, D = x.shape
    Lk = y.shape[1]
    H, hd = num_heads, head_dim
    dot = lambda a, w: jnp.dot(a, w.astype(cd), preferred_element_type=jnp.float32)

    xn = ln(x, p["g1"], p["b1"]).astype(cd)
    yn = ln(y, p["g1"], p["b1"]).astype(cd)
    q = dot(xn, p["wq"]) + p["bq"]
    k = dot(yn, p["wk"]) + p["bk"]
    v = dot(yn, p["wv"]) + p["bv"]
    q = (q * (float(hd) ** 0.5)).astype(cd).reshape(B, Lq, H, hd)   # inverted scale
    k = k.astype(cd).reshape(B, Lk, H, hd)
    v = v.astype(cd).reshape(B, Lk, H, hd)
    s = jnp.einsum("bqhd,bkhd->bhqk", q, k, preferred_element_type=jnp.float32)
    pr = jax.nn.softmax(s, axis=-1).astype(cd)
    attn = jnp.einsum("bhqk,bkhd->bqhd", pr, v,
                      preferred_element_type=jnp.float32).reshape(B, Lq, D)
    out = x + attn
    on = ln(out, p["g2"], p["b2"]).astype(cd)
    hid = jnp.maximum(dot(on, p["w1"]) + p["bm1"], 0.0).astype(cd)
    return out + dot(hid, p["w2"]) + p["bm2"]


def _ref_miniformer(base, c1, c2, p1, p2, num_heads, head_dim, mix, compute_dtype):
    blk = functools.partial(_ref_block, num_heads=num_heads, head_dim=head_dim,
                            compute_dtype=compute_dtype)
    if mix:
        return blk(base, c1, p1) + blk(base, c2, p2)
    y = blk(base, c1, p1)
    return blk(y, c2, p2)


# -------------------- main --------------------

if __name__ == "__main__":
    # Small-shape analogue of dim=512, heads=8, mlp=1024.
    # D is a multiple of 128 so output stores are lane-dense (no masked vst).
    B, Lq, Lk = 2, 8, 8
    NUM_HEADS, HEAD_DIM = 4, 32
    DIM = NUM_HEADS * HEAD_DIM          # 128
    MLP_HIDDEN = 2 * DIM                # 256

    root = jax.random.PRNGKey(0)
    k_in, k_p1, k_p2 = jax.random.split(root, 3)
    kx, k1, k2 = jax.random.split(k_in, 3)

    base_clip_embed = jax.random.normal(kx, (B, Lq, DIM), jnp.float32)
    initial_clip_embed = jax.random.normal(k1, (B, Lk, DIM), jnp.float32)
    final_clip_embed = jax.random.normal(k2, (B, Lk, DIM), jnp.float32)

    params_initial = make_block_params(k_p1, DIM, NUM_HEADS, HEAD_DIM, MLP_HIDDEN)
    params_final = make_block_params(k_p2, DIM, NUM_HEADS, HEAD_DIM, MLP_HIDDEN)

    for mix in (False, True):
        out = clip2vid_miniformer(base_clip_embed, initial_clip_embed, final_clip_embed,
                                  params_initial, params_final,
                                  num_heads=NUM_HEADS, head_dim=HEAD_DIM, mix=mix)
        out = jax.block_until_ready(out)
        ref = _ref_miniformer(base_clip_embed, initial_clip_embed, final_clip_embed,
                              params_initial, params_final,
                              NUM_HEADS, HEAD_DIM, mix, jnp.bfloat16)
        assert out.shape == (B, Lq, DIM)
        # Slightly looser than before: scale-folding into wq and the approx reciprocal
        # introduce ~1e-3-level deviations on top of the bf16 cast noise.
        assert jnp.allclose(out, ref, atol=2e-2, rtol=2e-2), f"mismatch (mix={mix})"

    print("KERNEL_OK")
</pallas_src>

<mosaic_0001>
module attributes {stable_mosaic.version = 11 : i64} {
  func.func @_fused_kernel(%arg0: i32, %arg1: memref<1x8x128xf32, #tpu.memory_space<vmem>>, %arg2: memref<1x8x128xf32, #tpu.memory_space<vmem>>, %arg3: memref<1x8x128xf32, #tpu.memory_space<vmem>>, %arg4: memref<1x128xf32, #tpu.memory_space<vmem>>, %arg5: memref<1x128xf32, #tpu.memory_space<vmem>>, %arg6: memref<1x128xf32, #tpu.memory_space<vmem>>, %arg7: memref<1x128xf32, #tpu.memory_space<vmem>>, %arg8: memref<128x128xbf16, #tpu.memory_space<vmem>>, %arg9: memref<1x128xf32, #tpu.memory_space<vmem>>, %arg10: memref<128x128xbf16, #tpu.memory_space<vmem>>, %arg11: memref<1x128xf32, #tpu.memory_space<vmem>>, %arg12: memref<128x128xbf16, #tpu.memory_space<vmem>>, %arg13: memref<1x128xf32, #tpu.memory_space<vmem>>, %arg14: memref<128x256xbf16, #tpu.memory_space<vmem>>, %arg15: memref<1x256xf32, #tpu.memory_space<vmem>>, %arg16: memref<256x128xbf16, #tpu.memory_space<vmem>>, %arg17: memref<1x128xf32, #tpu.memory_space<vmem>>, %arg18: memref<1x128xf32, #tpu.memory_space<vmem>>, %arg19: memref<1x128xf32, #tpu.memory_space<vmem>>, %arg20: memref<1x128xf32, #tpu.memory_space<vmem>>, %arg21: memref<1x128xf32, #tpu.memory_space<vmem>>, %arg22: memref<128x128xbf16, #tpu.memory_space<vmem>>, %arg23: memref<1x128xf32, #tpu.memory_space<vmem>>, %arg24: memref<128x128xbf16, #tpu.memory_space<vmem>>, %arg25: memref<1x128xf32, #tpu.memory_space<vmem>>, %arg26: memref<128x128xbf16, #tpu.memory_space<vmem>>, %arg27: memref<1x128xf32, #tpu.memory_space<vmem>>, %arg28: memref<128x256xbf16, #tpu.memory_space<vmem>>, %arg29: memref<1x256xf32, #tpu.memory_space<vmem>>, %arg30: memref<256x128xbf16, #tpu.memory_space<vmem>>, %arg31: memref<1x128xf32, #tpu.memory_space<vmem>>, %arg32: memref<1x8x128xf32, #tpu.memory_space<vmem>>) attributes {dimension_semantics = [#tpu.dimension_semantics<parallel>], iteration_bounds = array<i64: 2>, scalar_prefetch = 0 : i64, scratch_operands = 0 : i64, tpu.core_type = #tpu.core_type<tc>, window_params = [{transform_indices = @transform_0, window_bounds = array<i64: 1, 8, 128>}, {transform_indices = @transform_1, window_bounds = array<i64: 1, 8, 128>}, {transform_indices = @transform_2, window_bounds = array<i64: 1, 8, 128>}, {pipeline_mode = #tpu.pipeline_mode<synchronous>, transform_indices = @transform_3, window_bounds = array<i64: 1, 128>}, {pipeline_mode = #tpu.pipeline_mode<synchronous>, transform_indices = @transform_4, window_bounds = array<i64: 1, 128>}, {pipeline_mode = #tpu.pipeline_mode<synchronous>, transform_indices = @transform_5, window_bounds = array<i64: 1, 128>}, {pipeline_mode = #tpu.pipeline_mode<synchronous>, transform_indices = @transform_6, window_bounds = array<i64: 1, 128>}, {pipeline_mode = #tpu.pipeline_mode<synchronous>, transform_indices = @transform_7, window_bounds = array<i64: 128, 128>}, {pipeline_mode = #tpu.pipeline_mode<synchronous>, transform_indices = @transform_8, window_bounds = array<i64: 1, 128>}, {pipeline_mode = #tpu.pipeline_mode<synchronous>, transform_indices = @transform_9, window_bounds = array<i64: 128, 128>}, {pipeline_mode = #tpu.pipeline_mode<synchronous>, transform_indices = @transform_10, window_bounds = array<i64: 1, 128>}, {pipeline_mode = #tpu.pipeline_mode<synchronous>, transform_indices = @transform_11, window_bounds = array<i64: 128, 128>}, {pipeline_mode = #tpu.pipeline_mode<synchronous>, transform_indices = @transform_12, window_bounds = array<i64: 1, 128>}, {pipeline_mode = #tpu.pipeline_mode<synchronous>, transform_indices = @transform_13, window_bounds = array<i64: 128, 256>}, {pipeline_mode = #tpu.pipeline_mode<synchronous>, transform_indices = @transform_14, window_bounds = array<i64: 1, 256>}, {pipeline_mode = #tpu.pipeline_mode<synchronous>, transform_indices = @transform_15, window_bounds = array<i64: 256, 128>}, {pipeline_mode = #tpu.pipeline_mode<synchronous>, transform_indices = @transform_16, window_bounds = array<i64: 1, 128>}, {pipeline_mode = #tpu.pipeline_mode<synchronous>, transform_indices = @transform_17, window_bounds = array<i64: 1, 128>}, {pipeline_mode = #tpu.pipeline_mode<synchronous>, transform_indices = @transform_18, window_bounds = array<i64: 1, 128>}, {pipeline_mode = #tpu.pipeline_mode<synchronous>, transform_indices = @transform_19, window_bounds = array<i64: 1, 128>}, {pipeline_mode = #tpu.pipeline_mode<synchronous>, transform_indices = @transform_20, window_bounds = array<i64: 1, 128>}, {pipeline_mode = #tpu.pipeline_mode<synchronous>, transform_indices = @transform_21, window_bounds = array<i64: 128, 128>}, {pipeline_mode = #tpu.pipeline_mode<synchronous>, transform_indices = @transform_22, window_bounds = array<i64: 1, 128>}, {pipeline_mode = #tpu.pipeline_mode<synchronous>, transform_indices = @transform_23, window_bounds = array<i64: 128, 128>}, {pipeline_mode = #tpu.pipeline_mode<synchronous>, transform_indices = @transform_24, window_bounds = array<i64: 1, 128>}, {pipeline_mode = #tpu.pipeline_mode<synchronous>, transform_indices = @transform_25, window_bounds = array<i64: 128, 128>}, {pipeline_mode = #tpu.pipeline_mode<synchronous>, transform_indices = @transform_26, window_bounds = array<i64: 1, 128>}, {pipeline_mode = #tpu.pipeline_mode<synchronous>, transform_indices = @transform_27, window_bounds = array<i64: 128, 256>}, {pipeline_mode = #tpu.pipeline_mode<synchronous>, transform_indices = @transform_28, window_bounds = array<i64: 1, 256>}, {pipeline_mode = #tpu.pipeline_mode<synchronous>, transform_indices = @transform_29, window_bounds = array<i64: 256, 128>}, {pipeline_mode = #tpu.pipeline_mode<synchronous>, transform_indices = @transform_30, window_bounds = array<i64: 1, 128>}, {transform_indices = @transform_31, window_bounds = array<i64: 1, 8, 128>}]} {
    %c0 = arith.constant 0 : index
    %c0_0 = arith.constant 0 : index
    %c0_1 = arith.constant 0 : index
    %0 = vector.load %arg1[%c0, %c0_0, %c0_1] : memref<1x8x128xf32, #tpu.memory_space<vmem>>, vector<1x8x128xf32>
    %c0_2 = arith.constant 0 : index
    %c0_3 = arith.constant 0 : index
    %c0_4 = arith.constant 0 : index
    %1 = vector.load %arg2[%c0_2, %c0_3, %c0_4] : memref<1x8x128xf32, #tpu.memory_space<vmem>>, vector<1x8x128xf32>
    %c0_5 = arith.constant 0 : index
    %c0_6 = arith.constant 0 : index
    %c0_7 = arith.constant 0 : index
    %2 = vector.load %arg3[%c0_5, %c0_6, %c0_7] : memref<1x8x128xf32, #tpu.memory_space<vmem>>, vector<1x8x128xf32>
    %3 = vector.shape_cast %0 : vector<1x8x128xf32> to vector<8x128xf32>
    %cst = arith.constant dense<0.000000e+00> : vector<8xf32>
    %4 = vector.multi_reduction <add>, %3, %cst [1] : vector<8x128xf32> to vector<8xf32>
    %5 = vector.shape_cast %4 : vector<8xf32> to vector<8x1xf32>
    %cst_8 = arith.constant 1.280000e+02 : f32
    %6 = vector.broadcast %cst_8 : f32 to vector<8x1xf32>
    %7 = arith.divf %5, %6 : vector<8x1xf32>
    %8 = vector.broadcast %7 : vector<8x1xf32> to vector<8x128xf32>
    %9 = arith.subf %3, %8 : vector<8x128xf32>
    %10 = arith.mulf %9, %9 : vector<8x128xf32>
    %cst_9 = arith.constant dense<0.000000e+00> : vector<8xf32>
    %11 = vector.multi_reduction <add>, %10, %cst_9 [1] : vector<8x128xf32> to vector<8xf32>
    %12 = vector.shape_cast %11 : vector<8xf32> to vector<8x1xf32>
    %cst_10 = arith.constant 1.280000e+02 : f32
    %13 = vector.broadcast %cst_10 : f32 to vector<8x1xf32>
    %14 = arith.divf %12, %13 : vector<8x1xf32>
    %cst_11 = arith.constant 9.99999974E-6 : f32
    %15 = vector.broadcast %cst_11 : f32 to vector<8x1xf32>
    %16 = arith.addf %14, %15 : vector<8x1xf32>
    %17 = math.rsqrt %16 : vector<8x1xf32>
    %18 = vector.broadcast %17 : vector<8x1xf32> to vector<8x128xf32>
    %19 = arith.mulf %9, %18 : vector<8x128xf32>
    %20 = vector.shape_cast %1 : vector<1x8x128xf32> to vector<8x128xf32>
    %cst_12 = arith.constant dense<0.000000e+00> : vector<8xf32>
    %21 = vector.multi_reduction <add>, %20, %cst_12 [1] : vector<8x128xf32> to vector<8xf32>
    %22 = vector.shape_cast %21 : vector<8xf32> to vector<8x1xf32>
    %cst_13 = arith.constant 1.280000e+02 : f32
    %23 = vector.broadcast %cst_13 : f32 to vector<8x1xf32>
    %24 = arith.divf %22, %23 : vector<8x1xf32>
    %25 = vector.broadcast %24 : vector<8x1xf32> to vector<8x128xf32>
    %26 = arith.subf %20, %25 : vector<8x128xf32>
    %27 = arith.mulf %26, %26 : vector<8x128xf32>
    %cst_14 = arith.constant dense<0.000000e+00> : vector<8xf32>
    %28 = vector.multi_reduction <add>, %27, %cst_14 [1] : vector<8x128xf32> to vector<8xf32>
    %29 = vector.shape_cast %28 : vector<8xf32> to vector<8x1xf32>
    %cst_15 = arith.constant 1.280000e+02 : f32
    %30 = vector.broadcast %cst_15 : f32 to vector<8x1xf32>
    %31 = arith.divf %29, %30 : vector<8x1xf32>
    %cst_16 = arith.constant 9.99999974E-6 : f32
    %32 = vector.broadcast %cst_16 : f32 to vector<8x1xf32>
    %33 = arith.addf %31, %32 : vector<8x1xf32>
    %34 = math.rsqrt %33 : vector<8x1xf32>
    %35 = vector.broadcast %34 : vector<8x1xf32> to vector<8x128xf32>
    %36 = arith.mulf %26, %35 : vector<8x128xf32>
    %37 = vector.shape_cast %2 : vector<1x8x128xf32> to vector<8x128xf32>
    %cst_17 = arith.constant dense<0.000000e+00> : vector<8xf32>
    %38 = vector.multi_reduction <add>, %37, %cst_17 [1] : vector<8x128xf32> to vector<8xf32>
    %39 = vector.shape_cast %38 : vector<8xf32> to vector<8x1xf32>
    %cst_18 = arith.constant 1.280000e+02 : f32
    %40 = vector.broadcast %cst_18 : f32 to vector<8x1xf32>
    %41 = arith.divf %39, %40 : vector<8x1xf32>
    %42 = vector.broadcast %41 : vector<8x1xf32> to vector<8x128xf32>
    %43 = arith.subf %37, %42 : vector<8x128xf32>
    %44 = arith.mulf %43, %43 : vector<8x128xf32>
    %cst_19 = arith.constant dense<0.000000e+00> : vector<8xf32>
    %45 = vector.multi_reduction <add>, %44, %cst_19 [1] : vector<8x128xf32> to vector<8xf32>
    %46 = vector.shape_cast %45 : vector<8xf32> to vector<8x1xf32>
    %cst_20 = arith.constant 1.280000e+02 : f32
    %47 = vector.broadcast %cst_20 : f32 to vector<8x1xf32>
    %48 = arith.divf %46, %47 : vector<8x1xf32>
    %cst_21 = arith.constant 9.99999974E-6 : f32
    %49 = vector.broadcast %cst_21 : f32 to vector<8x1xf32>
    %50 = arith.addf %48, %49 : vector<8x1xf32>
    %51 = math.rsqrt %50 : vector<8x1xf32>
    %52 = vector.broadcast %51 : vector<8x1xf32> to vector<8x128xf32>
    %53 = arith.mulf %43, %52 : vector<8x128xf32>
    %c0_22 = arith.constant 0 : index
    %c0_23 = arith.constant 0 : index
    %54 = vector.load %arg4[%c0_22, %c0_23] : memref<1x128xf32, #tpu.memory_space<vmem>>, vector<1x128xf32>
    %c0_24 = arith.constant 0 : index
    %c0_25 = arith.constant 0 : index
    %55 = vector.load %arg5[%c0_24, %c0_25] : memref<1x128xf32, #tpu.memory_space<vmem>>, vector<1x128xf32>
    %56 = vector.broadcast %54 : vector<1x128xf32> to vector<8x128xf32>
    %57 = arith.mulf %19, %56 : vector<8x128xf32>
    %58 = vector.broadcast %55 : vector<1x128xf32> to vector<8x128xf32>
    %59 = arith.addf %57, %58 : vector<8x128xf32>
    %60 = arith.truncf %59 : vector<8x128xf32> to vector<8x128xbf16>
    %61 = vector.broadcast %54 : vector<1x128xf32> to vector<8x128xf32>
    %62 = arith.mulf %36, %61 : vector<8x128xf32>
    %63 = vector.broadcast %55 : vector<1x128xf32> to vector<8x128xf32>
    %64 = arith.addf %62, %63 : vector<8x128xf32>
    %65 = arith.truncf %64 : vector<8x128xf32> to vector<8x128xbf16>
    %c0_26 = arith.constant 0 : index
    %c0_27 = arith.constant 0 : index
    %66 = vector.load %arg8[%c0_26, %c0_27] : memref<128x128xbf16, #tpu.memory_space<vmem>>, vector<128x128xbf16>
    %cst_28 = arith.constant dense<0.000000e+00> : vector<8x128xf32>
    %67 = tpu.matmul %60, %66, %cst_28 {dimension_numbers = #tpu.dot_dimension_numbers<[1], [0], [0], [1], [0, 0, 1, 1], [], []>} : vector<8x128xbf16>, vector<128x128xbf16>, vector<8x128xf32> -> vector<8x128xf32>
    %c0_29 = arith.constant 0 : index
    %c0_30 = arith.constant 0 : index
    %68 = vector.load %arg9[%c0_29, %c0_30] : memref<1x128xf32, #tpu.memory_space<vmem>>, vector<1x128xf32>
    %69 = vector.broadcast %68 : vector<1x128xf32> to vector<8x128xf32>
    %70 = arith.addf %67, %69 : vector<8x128xf32>
    %c0_31 = arith.constant 0 : index
    %c0_32 = arith.constant 0 : index
    %71 = vector.load %arg10[%c0_31, %c0_32] : memref<128x128xbf16, #tpu.memory_space<vmem>>, vector<128x128xbf16>
    %cst_33 = arith.constant dense<0.000000e+00> : vector<8x128xf32>
    %72 = tpu.matmul %65, %71, %cst_33 {dimension_numbers = #tpu.dot_dimension_numbers<[1], [0], [0], [1], [0, 0, 1, 1], [], []>} : vector<8x128xbf16>, vector<128x128xbf16>, vector<8x128xf32> -> vector<8x128xf32>
    %c0_34 = arith.constant 0 : index
    %c0_35 = arith.constant 0 : index
    %73 = vector.load %arg11[%c0_34, %c0_35] : memref<1x128xf32, #tpu.memory_space<vmem>>, vector<1x128xf32>
    %74 = vector.broadcast %73 : vector<1x128xf32> to vector<8x128xf32>
    %75 = arith.addf %72, %74 : vector<8x128xf32>
    %c0_36 = arith.constant 0 : index
    %c0_37 = arith.constant 0 : index
    %76 = vector.load %arg12[%c0_36, %c0_37] : memref<128x128xbf16, #tpu.memory_space<vmem>>, vector<128x128xbf16>
    %cst_38 = arith.constant dense<0.000000e+00> : vector<8x128xf32>
    %77 = tpu.matmul %65, %76, %cst_38 {dimension_numbers = #tpu.dot_dimension_numbers<[1], [0], [0], [1], [0, 0, 1, 1], [], []>} : vector<8x128xbf16>, vector<128x128xbf16>, vector<8x128xf32> -> vector<8x128xf32>
    %c0_39 = arith.constant 0 : index
    %c0_40 = arith.constant 0 : index
    %78 = vector.load %arg13[%c0_39, %c0_40] : memref<1x128xf32, #tpu.memory_space<vmem>>, vector<1x128xf32>
    %79 = vector.broadcast %78 : vector<1x128xf32> to vector<8x128xf32>
    %80 = arith.addf %77, %79 : vector<8x128xf32>
    %81 = arith.truncf %70 : vector<8x128xf32> to vector<8x128xbf16>
    %82 = arith.truncf %75 : vector<8x128xf32> to vector<8x128xbf16>
    %83 = arith.truncf %80 : vector<8x128xf32> to vector<8x128xbf16>
    %84 = vector.shape_cast %81 : vector<8x128xbf16> to vector<1x8x128xbf16>
    %85 = vector.shape_cast %82 : vector<8x128xbf16> to vector<1x8x128xbf16>
    %86 = vector.shape_cast %83 : vector<8x128xbf16> to vector<1x8x128xbf16>
    %87 = vector.extract_strided_slice %84 {offsets = [0, 0, 0], sizes = [1, 8, 32], strides = [1, 1, 1]} : vector<1x8x128xbf16> to vector<1x8x32xbf16>
    %88 = vector.extract_strided_slice %85 {offsets = [0, 0, 0], sizes = [1, 8, 32], strides = [1, 1, 1]} : vector<1x8x128xbf16> to vector<1x8x32xbf16>
    "tpu.trace_start"() <{level = 10 : i32, message = "bqd,bkd->bqk"}> : () -> ()
    %cst_41 = arith.constant dense<0.000000e+00> : vector<1x8x8xf32>
    %89 = tpu.matmul %87, %88, %cst_41 {dimension_numbers = #tpu.dot_dimension_numbers<[2], [2], [1], [1], [0, 0, 0, 1, 1, 1], [0], [0]>} : vector<1x8x32xbf16>, vector<1x8x32xbf16>, vector<1x8x8xf32> -> vector<1x8x8xf32>
    "tpu.trace_stop"() : () -> ()
    %cst_42 = arith.constant dense<0xFF800000> : vector<1x8xf32>
    %90 = vector.multi_reduction <maximumf>, %89, %cst_42 [2] : vector<1x8x8xf32> to vector<1x8xf32>
    %91 = vector.shape_cast %90 : vector<1x8xf32> to vector<1x8x1xf32>
    %92 = vector.broadcast %91 : vector<1x8x1xf32> to vector<1x8x8xf32>
    %93 = arith.subf %89, %92 : vector<1x8x8xf32>
    %94 = math.exp %93 : vector<1x8x8xf32>
    %cst_43 = arith.constant dense<0.000000e+00> : vector<1x8xf32>
    %95 = vector.multi_reduction <add>, %94, %cst_43 [2] : vector<1x8x8xf32> to vector<1x8xf32>
    %96 = vector.shape_cast %95 : vector<1x8xf32> to vector<1x8x1xf32>
    %97 = tpu.reciprocal %96 {approx = true} : vector<1x8x1xf32> -> vector<1x8x1xf32>
    %98 = vector.broadcast %97 : vector<1x8x1xf32> to vector<1x8x8xf32>
    %99 = arith.mulf %94, %98 : vector<1x8x8xf32>
    %100 = arith.truncf %99 : vector<1x8x8xf32> to vector<1x8x8xbf16>
    %101 = vector.extract_strided_slice %86 {offsets = [0, 0, 0], sizes = [1, 8, 32], strides = [1, 1, 1]} : vector<1x8x128xbf16> to vector<1x8x32xbf16>
    "tpu.trace_start"() <{level = 10 : i32, message = "bqk,bkd->bqd"}> : () -> ()
    %cst_44 = arith.constant dense<0.000000e+00> : vector<1x8x32xf32>
    %102 = tpu.matmul %100, %101, %cst_44 {dimension_numbers = #tpu.dot_dimension_numbers<[2], [1], [1], [2], [0, 0, 0, 1, 1, 2], [0], [0]>} : vector<1x8x8xbf16>, vector<1x8x32xbf16>, vector<1x8x32xf32> -> vector<1x8x32xf32>
    "tpu.trace_stop"() : () -> ()
    %103 = vector.extract_strided_slice %84 {offsets = [0, 0, 32], sizes = [1, 8, 32], strides = [1, 1, 1]} : vector<1x8x128xbf16> to vector<1x8x32xbf16>
    %104 = vector.extract_strided_slice %85 {offsets = [0, 0, 32], sizes = [1, 8, 32], strides = [1, 1, 1]} : vector<1x8x128xbf16> to vector<1x8x32xbf16>
    "tpu.trace_start"() <{level = 10 : i32, message = "bqd,bkd->bqk"}> : () -> ()
    %cst_45 = arith.constant dense<0.000000e+00> : vector<1x8x8xf32>
    %105 = tpu.matmul %103, %104, %cst_45 {dimension_numbers = #tpu.dot_dimension_numbers<[2], [2], [1], [1], [0, 0, 0, 1, 1, 1], [0], [0]>} : vector<1x8x32xbf16>, vector<1x8x32xbf16>, vector<1x8x8xf32> -> vector<1x8x8xf32>
    "tpu.trace_stop"() : () -> ()
    %cst_46 = arith.constant dense<0xFF800000> : vector<1x8xf32>
    %106 = vector.multi_reduction <maximumf>, %105, %cst_46 [2] : vector<1x8x8xf32> to vector<1x8xf32>
    %107 = vector.shape_cast %106 : vector<1x8xf32> to vector<1x8x1xf32>
    %108 = vector.broadcast %107 : vector<1x8x1xf32> to vector<1x8x8xf32>
    %109 = arith.subf %105, %108 : vector<1x8x8xf32>
    %110 = math.exp %109 : vector<1x8x8xf32>
    %cst_47 = arith.constant dense<0.000000e+00> : vector<1x8xf32>
    %111 = vector.multi_reduction <add>, %110, %cst_47 [2] : vector<1x8x8xf32> to vector<1x8xf32>
    %112 = vector.shape_cast %111 : vector<1x8xf32> to vector<1x8x1xf32>
    %113 = tpu.reciprocal %112 {approx = true} : vector<1x8x1xf32> -> vector<1x8x1xf32>
    %114 = vector.broadcast %113 : vector<1x8x1xf32> to vector<1x8x8xf32>
    %115 = arith.mulf %110, %114 : vector<1x8x8xf32>
    %116 = arith.truncf %115 : vector<1x8x8xf32> to vector<1x8x8xbf16>
    %117 = vector.extract_strided_slice %86 {offsets = [0, 0, 32], sizes = [1, 8, 32], strides = [1, 1, 1]} : vector<1x8x128xbf16> to vector<1x8x32xbf16>
    "tpu.trace_start"() <{level = 10 : i32, message = "bqk,bkd->bqd"}> : () -> ()
    %cst_48 = arith.constant dense<0.000000e+00> : vector<1x8x32xf32>
    %118 = tpu.matmul %116, %117, %cst_48 {dimension_numbers = #tpu.dot_dimension_numbers<[2], [1], [1], [2], [0, 0, 0, 1, 1, 2], [0], [0]>} : vector<1x8x8xbf16>, vector<1x8x32xbf16>, vector<1x8x32xf32> -> vector<1x8x32xf32>
    "tpu.trace_stop"() : () -> ()
    %119 = vector.extract_strided_slice %84 {offsets = [0, 0, 64], sizes = [1, 8, 32], strides = [1, 1, 1]} : vector<1x8x128xbf16> to vector<1x8x32xbf16>
    %120 = vector.extract_strided_slice %85 {offsets = [0, 0, 64], sizes = [1, 8, 32], strides = [1, 1, 1]} : vector<1x8x128xbf16> to vector<1x8x32xbf16>
    "tpu.trace_start"() <{level = 10 : i32, message = "bqd,bkd->bqk"}> : () -> ()
    %cst_49 = arith.constant dense<0.000000e+00> : vector<1x8x8xf32>
    %121 = tpu.matmul %119, %120, %cst_49 {dimension_numbers = #tpu.dot_dimension_numbers<[2], [2], [1], [1], [0, 0, 0, 1, 1, 1], [0], [0]>} : vector<1x8x32xbf16>, vector<1x8x32xbf16>, vector<1x8x8xf32> -> vector<1x8x8xf32>
    "tpu.trace_stop"() : () -> ()
    %cst_50 = arith.constant dense<0xFF800000> : vector<1x8xf32>
    %122 = vector.multi_reduction <maximumf>, %121, %cst_50 [2] : vector<1x8x8xf32> to vector<1x8xf32>
    %123 = vector.shape_cast %122 : vector<1x8xf32> to vector<1x8x1xf32>
    %124 = vector.broadcast %123 : vector<1x8x1xf32> to vector<1x8x8xf32>
    %125 = arith.subf %121, %124 : vector<1x8x8xf32>
    %126 = math.exp %125 : vector<1x8x8xf32>
    %cst_51 = arith.constant dense<0.000000e+00> : vector<1x8xf32>
    %127 = vector.multi_reduction <add>, %126, %cst_51 [2] : vector<1x8x8xf32> to vector<1x8xf32>
    %128 = vector.shape_cast %127 : vector<1x8xf32> to vector<1x8x1xf32>
    %129 = tpu.reciprocal %128 {approx = true} : vector<1x8x1xf32> -> vector<1x8x1xf32>
    %130 = vector.broadcast %129 : vector<1x8x1xf32> to vector<1x8x8xf32>
    %131 = arith.mulf %126, %130 : vector<1x8x8xf32>
    %132 = arith.truncf %131 : vector<1x8x8xf32> to vector<1x8x8xbf16>
    %133 = vector.extract_strided_slice %86 {offsets = [0, 0, 64], sizes = [1, 8, 32], strides = [1, 1, 1]} : vector<1x8x128xbf16> to vector<1x8x32xbf16>
    "tpu.trace_start"() <{level = 10 : i32, message = "bqk,bkd->bqd"}> : () -> ()
    %cst_52 = arith.constant dense<0.000000e+00> : vector<1x8x32xf32>
    %134 = tpu.matmul %132, %133, %cst_52 {dimension_numbers = #tpu.dot_dimension_numbers<[2], [1], [1], [2], [0, 0, 0, 1, 1, 2], [0], [0]>} : vector<1x8x8xbf16>, vector<1x8x32xbf16>, vector<1x8x32xf32> -> vector<1x8x32xf32>
    "tpu.trace_stop"() : () -> ()
    %135 = vector.extract_strided_slice %84 {offsets = [0, 0, 96], sizes = [1, 8, 32], strides = [1, 1, 1]} : vector<1x8x128xbf16> to vector<1x8x32xbf16>
    %136 = vector.extract_strided_slice %85 {offsets = [0, 0, 96], sizes = [1, 8, 32], strides = [1, 1, 1]} : vector<1x8x128xbf16> to vector<1x8x32xbf16>
    "tpu.trace_start"() <{level = 10 : i32, message = "bqd,bkd->bqk"}> : () -> ()
    %cst_53 = arith.constant dense<0.000000e+00> : vector<1x8x8xf32>
    %137 = tpu.matmul %135, %136, %cst_53 {dimension_numbers = #tpu.dot_dimension_numbers<[2], [2], [1], [1], [0, 0, 0, 1, 1, 1], [0], [0]>} : vector<1x8x32xbf16>, vector<1x8x32xbf16>, vector<1x8x8xf32> -> vector<1x8x8xf32>
    "tpu.trace_stop"() : () -> ()
    %cst_54 = arith.constant dense<0xFF800000> : vector<1x8xf32>
    %138 = vector.multi_reduction <maximumf>, %137, %cst_54 [2] : vector<1x8x8xf32> to vector<1x8xf32>
    %139 = vector.shape_cast %138 : vector<1x8xf32> to vector<1x8x1xf32>
    %140 = vector.broadcast %139 : vector<1x8x1xf32> to vector<1x8x8xf32>
    %141 = arith.subf %137, %140 : vector<1x8x8xf32>
    %142 = math.exp %141 : vector<1x8x8xf32>
    %cst_55 = arith.constant dense<0.000000e+00> : vector<1x8xf32>
    %143 = vector.multi_reduction <add>, %142, %cst_55 [2] : vector<1x8x8xf32> to vector<1x8xf32>
    %144 = vector.shape_cast %143 : vector<1x8xf32> to vector<1x8x1xf32>
    %145 = tpu.reciprocal %144 {approx = true} : vector<1x8x1xf32> -> vector<1x8x1xf32>
    %146 = vector.broadcast %145 : vector<1x8x1xf32> to vector<1x8x8xf32>
    %147 = arith.mulf %142, %146 : vector<1x8x8xf32>
    %148 = arith.truncf %147 : vector<1x8x8xf32> to vector<1x8x8xbf16>
    %149 = vector.extract_strided_slice %86 {offsets = [0, 0, 96], sizes = [1, 8, 32], strides = [1, 1, 1]} : vector<1x8x128xbf16> to vector<1x8x32xbf16>
    "tpu.trace_start"() <{level = 10 : i32, message = "bqk,bkd->bqd"}> : () -> ()
    %cst_56 = arith.constant dense<0.000000e+00> : vector<1x8x32xf32>
    %150 = tpu.matmul %148, %149, %cst_56 {dimension_numbers = #tpu.dot_dimension_numbers<[2], [1], [1], [2], [0, 0, 0, 1, 1, 2], [0], [0]>} : vector<1x8x8xbf16>, vector<1x8x32xbf16>, vector<1x8x32xf32> -> vector<1x8x32xf32>
    "tpu.trace_stop"() : () -> ()
    %151 = tpu.concatenate %102, %118, %134, %150 in 2 : vector<1x8x32xf32>, vector<1x8x32xf32>, vector<1x8x32xf32>, vector<1x8x32xf32> -> vector<1x8x128xf32>
    %152 = arith.addf %0, %151 : vector<1x8x128xf32>
    %c0_57 = arith.constant 0 : index
    %c0_58 = arith.constant 0 : index
    %153 = vector.load %arg6[%c0_57, %c0_58] : memref<1x128xf32, #tpu.memory_space<vmem>>, vector<1x128xf32>
    %c0_59 = arith.constant 0 : index
    %c0_60 = arith.constant 0 : index
    %154 = vector.load %arg7[%c0_59, %c0_60] : memref<1x128xf32, #tpu.memory_space<vmem>>, vector<1x128xf32>
    %155 = vector.shape_cast %152 : vector<1x8x128xf32> to vector<8x128xf32>
    %cst_61 = arith.constant dense<0.000000e+00> : vector<8xf32>
    %156 = vector.multi_reduction <add>, %155, %cst_61 [1] : vector<8x128xf32> to vector<8xf32>
    %157 = vector.shape_cast %156 : vector<8xf32> to vector<8x1xf32>
    %cst_62 = arith.constant 1.280000e+02 : f32
    %158 = vector.broadcast %cst_62 : f32 to vector<8x1xf32>
    %159 = arith.divf %157, %158 : vector<8x1xf32>
    %160 = vector.broadcast %159 : vector<8x1xf32> to vector<8x128xf32>
    %161 = arith.subf %155, %160 : vector<8x128xf32>
    %162 = arith.mulf %161, %161 : vector<8x128xf32>
    %cst_63 = arith.constant dense<0.000000e+00> : vector<8xf32>
    %163 = vector.multi_reduction <add>, %162, %cst_63 [1] : vector<8x128xf32> to vector<8xf32>
    %164 = vector.shape_cast %163 : vector<8xf32> to vector<8x1xf32>
    %cst_64 = arith.constant 1.280000e+02 : f32
    %165 = vector.broadcast %cst_64 : f32 to vector<8x1xf32>
    %166 = arith.divf %164, %165 : vector<8x1xf32>
    %cst_65 = arith.constant 9.99999974E-6 : f32
    %167 = vector.broadcast %cst_65 : f32 to vector<8x1xf32>
    %168 = arith.addf %166, %167 : vector<8x1xf32>
    %169 = math.rsqrt %168 : vector<8x1xf32>
    %170 = vector.broadcast %169 : vector<8x1xf32> to vector<8x128xf32>
    %171 = arith.mulf %161, %170 : vector<8x128xf32>
    %172 = vector.broadcast %153 : vector<1x128xf32> to vector<8x128xf32>
    %173 = arith.mulf %171, %172 : vector<8x128xf32>
    %174 = vector.broadcast %154 : vector<1x128xf32> to vector<8x128xf32>
    %175 = arith.addf %173, %174 : vector<8x128xf32>
    %176 = arith.truncf %175 : vector<8x128xf32> to vector<8x128xbf16>
    %c0_66 = arith.constant 0 : index
    %c0_67 = arith.constant 0 : index
    %177 = vector.load %arg14[%c0_66, %c0_67] : memref<128x256xbf16, #tpu.memory_space<vmem>>, vector<128x256xbf16>
    %cst_68 = arith.constant dense<0.000000e+00> : vector<8x256xf32>
    %178 = tpu.matmul %176, %177, %cst_68 {dimension_numbers = #tpu.dot_dimension_numbers<[1], [0], [0], [1], [0, 0, 1, 1], [], []>} : vector<8x128xbf16>, vector<128x256xbf16>, vector<8x256xf32> -> vector<8x256xf32>
    %c0_69 = arith.constant 0 : index
    %c0_70 = arith.constant 0 : index
    %179 = vector.load %arg15[%c0_69, %c0_70] : memref<1x256xf32, #tpu.memory_space<vmem>>, vector<1x256xf32>
    %180 = vector.broadcast %179 : vector<1x256xf32> to vector<8x256xf32>
    %181 = arith.addf %178, %180 : vector<8x256xf32>
    %cst_71 = arith.constant 0.000000e+00 : f32
    %182 = vector.broadcast %cst_71 : f32 to vector<8x256xf32>
    %183 = arith.maximumf %181, %182 : vector<8x256xf32>
    %184 = arith.truncf %183 : vector<8x256xf32> to vector<8x256xbf16>
    %c0_72 = arith.constant 0 : index
    %c0_73 = arith.constant 0 : index
    %185 = vector.load %arg16[%c0_72, %c0_73] : memref<256x128xbf16, #tpu.memory_space<vmem>>, vector<256x128xbf16>
    %cst_74 = arith.constant dense<0.000000e+00> : vector<8x128xf32>
    %186 = tpu.matmul %184, %185, %cst_74 {dimension_numbers = #tpu.dot_dimension_numbers<[1], [0], [0], [1], [0, 0, 1, 1], [], []>} : vector<8x256xbf16>, vector<256x128xbf16>, vector<8x128xf32> -> vector<8x128xf32>
    %c0_75 = arith.constant 0 : index
    %c0_76 = arith.constant 0 : index
    %187 = vector.load %arg17[%c0_75, %c0_76] : memref<1x128xf32, #tpu.memory_space<vmem>>, vector<1x128xf32>
    %188 = vector.broadcast %187 : vector<1x128xf32> to vector<8x128xf32>
    %189 = arith.addf %186, %188 : vector<8x128xf32>
    %190 = vector.shape_cast %189 : vector<8x128xf32> to vector<1x8x128xf32>
    %191 = arith.addf %152, %190 : vector<1x8x128xf32>
    %192 = vector.shape_cast %191 : vector<1x8x128xf32> to vector<8x128xf32>
    %cst_77 = arith.constant dense<0.000000e+00> : vector<8xf32>
    %193 = vector.multi_reduction <add>, %192, %cst_77 [1] : vector<8x128xf32> to vector<8xf32>
    %194 = vector.shape_cast %193 : vector<8xf32> to vector<8x1xf32>
    %cst_78 = arith.constant 1.280000e+02 : f32
    %195 = vector.broadcast %cst_78 : f32 to vector<8x1xf32>
    %196 = arith.divf %194, %195 : vector<8x1xf32>
    %197 = vector.broadcast %196 : vector<8x1xf32> to vector<8x128xf32>
    %198 = arith.subf %192, %197 : vector<8x128xf32>
    %199 = arith.mulf %198, %198 : vector<8x128xf32>
    %cst_79 = arith.constant dense<0.000000e+00> : vector<8xf32>
    %200 = vector.multi_reduction <add>, %199, %cst_79 [1] : vector<8x128xf32> to vector<8xf32>
    %201 = vector.shape_cast %200 : vector<8xf32> to vector<8x1xf32>
    %cst_80 = arith.constant 1.280000e+02 : f32
    %202 = vector.broadcast %cst_80 : f32 to vector<8x1xf32>
    %203 = arith.divf %201, %202 : vector<8x1xf32>
    %cst_81 = arith.constant 9.99999974E-6 : f32
    %204 = vector.broadcast %cst_81 : f32 to vector<8x1xf32>
    %205 = arith.addf %203, %204 : vector<8x1xf32>
    %206 = math.rsqrt %205 : vector<8x1xf32>
    %207 = vector.broadcast %206 : vector<8x1xf32> to vector<8x128xf32>
    %208 = arith.mulf %198, %207 : vector<8x128xf32>
    %c0_82 = arith.constant 0 : index
    %c0_83 = arith.constant 0 : index
    %209 = vector.load %arg18[%c0_82, %c0_83] : memref<1x128xf32, #tpu.memory_space<vmem>>, vector<1x128xf32>
    %c0_84 = arith.constant 0 : index
    %c0_85 = arith.constant 0 : index
    %210 = vector.load %arg19[%c0_84, %c0_85] : memref<1x128xf32, #tpu.memory_space<vmem>>, vector<1x128xf32>
    %211 = vector.broadcast %209 : vector<1x128xf32> to vector<8x128xf32>
    %212 = arith.mulf %208, %211 : vector<8x128xf32>
    %213 = vector.broadcast %210 : vector<1x128xf32> to vector<8x128xf32>
    %214 = arith.addf %212, %213 : vector<8x128xf32>
    %215 = arith.truncf %214 : vector<8x128xf32> to vector<8x128xbf16>
    %216 = vector.broadcast %209 : vector<1x128xf32> to vector<8x128xf32>
    %217 = arith.mulf %53, %216 : vector<8x128xf32>
    %218 = vector.broadcast %210 : vector<1x128xf32> to vector<8x128xf32>
    %219 = arith.addf %217, %218 : vector<8x128xf32>
    %220 = arith.truncf %219 : vector<8x128xf32> to vector<8x128xbf16>
    %c0_86 = arith.constant 0 : index
    %c0_87 = arith.constant 0 : index
    %221 = vector.load %arg22[%c0_86, %c0_87] : memref<128x128xbf16, #tpu.memory_space<vmem>>, vector<128x128xbf16>
    %cst_88 = arith.constant dense<0.000000e+00> : vector<8x128xf32>
    %222 = tpu.matmul %215, %221, %cst_88 {dimension_numbers = #tpu.dot_dimension_numbers<[1], [0], [0], [1], [0, 0, 1, 1], [], []>} : vector<8x128xbf16>, vector<128x128xbf16>, vector<8x128xf32> -> vector<8x128xf32>
    %c0_89 = arith.constant 0 : index
    %c0_90 = arith.constant 0 : index
    %223 = vector.load %arg23[%c0_89, %c0_90] : memref<1x128xf32, #tpu.memory_space<vmem>>, vector<1x128xf32>
    %224 = vector.broadcast %223 : vector<1x128xf32> to vector<8x128xf32>
    %225 = arith.addf %222, %224 : vector<8x128xf32>
    %c0_91 = arith.constant 0 : index
    %c0_92 = arith.constant 0 : index
    %226 = vector.load %arg24[%c0_91, %c0_92] : memref<128x128xbf16, #tpu.memory_space<vmem>>, vector<128x128xbf16>
    %cst_93 = arith.constant dense<0.000000e+00> : vector<8x128xf32>
    %227 = tpu.matmul %220, %226, %cst_93 {dimension_numbers = #tpu.dot_dimension_numbers<[1], [0], [0], [1], [0, 0, 1, 1], [], []>} : vector<8x128xbf16>, vector<128x128xbf16>, vector<8x128xf32> -> vector<8x128xf32>
    %c0_94 = arith.constant 0 : index
    %c0_95 = arith.constant 0 : index
    %228 = vector.load %arg25[%c0_94, %c0_95] : memref<1x128xf32, #tpu.memory_space<vmem>>, vector<1x128xf32>
    %229 = vector.broadcast %228 : vector<1x128xf32> to vector<8x128xf32>
    %230 = arith.addf %227, %229 : vector<8x128xf32>
    %c0_96 = arith.constant 0 : index
    %c0_97 = arith.constant 0 : index
    %231 = vector.load %arg26[%c0_96, %c0_97] : memref<128x128xbf16, #tpu.memory_space<vmem>>, vector<128x128xbf16>
    %cst_98 = arith.constant dense<0.000000e+00> : vector<8x128xf32>
    %232 = tpu.matmul %220, %231, %cst_98 {dimension_numbers = #tpu.dot_dimension_numbers<[1], [0], [0], [1], [0, 0, 1, 1], [], []>} : vector<8x128xbf16>, vector<128x128xbf16>, vector<8x128xf32> -> vector<8x128xf32>
    %c0_99 = arith.constant 0 : index
    %c0_100 = arith.constant 0 : index
    %233 = vector.load %arg27[%c0_99, %c0_100] : memref<1x128xf32, #tpu.memory_space<vmem>>, vector<1x128xf32>
    %234 = vector.broadcast %233 : vector<1x128xf32> to vector<8x128xf32>
    %235 = arith.addf %232, %234 : vector<8x128xf32>
    %236 = arith.truncf %225 : vector<8x128xf32> to vector<8x128xbf16>
    %237 = arith.truncf %230 : vector<8x128xf32> to vector<8x128xbf16>
    %238 = arith.truncf %235 : vector<8x128xf32> to vector<8x128xbf16>
    %239 = vector.shape_cast %236 : vector<8x128xbf16> to vector<1x8x128xbf16>
    %240 = vector.shape_cast %237 : vector<8x128xbf16> to vector<1x8x128xbf16>
    %241 = vector.shape_cast %238 : vector<8x128xbf16> to vector<1x8x128xbf16>
    %242 = vector.extract_strided_slice %239 {offsets = [0, 0, 0], sizes = [1, 8, 32], strides = [1, 1, 1]} : vector<1x8x128xbf16> to vector<1x8x32xbf16>
    %243 = vector.extract_strided_slice %240 {offsets = [0, 0, 0], sizes = [1, 8, 32], strides = [1, 1, 1]} : vector<1x8x128xbf16> to vector<1x8x32xbf16>
    "tpu.trace_start"() <{level = 10 : i32, message = "bqd,bkd->bqk"}> : () -> ()
    %cst_101 = arith.constant dense<0.000000e+00> : vector<1x8x8xf32>
    %244 = tpu.matmul %242, %243, %cst_101 {dimension_numbers = #tpu.dot_dimension_numbers<[2], [2], [1], [1], [0, 0, 0, 1, 1, 1], [0], [0]>} : vector<1x8x32xbf16>, vector<1x8x32xbf16>, vector<1x8x8xf32> -> vector<1x8x8xf32>
    "tpu.trace_stop"() : () -> ()
    %cst_102 = arith.constant dense<0xFF800000> : vector<1x8xf32>
    %245 = vector.multi_reduction <maximumf>, %244, %cst_102 [2] : vector<1x8x8xf32> to vector<1x8xf32>
    %246 = vector.shape_cast %245 : vector<1x8xf32> to vector<1x8x1xf32>
    %247 = vector.broadcast %246 : vector<1x8x1xf32> to vector<1x8x8xf32>
    %248 = arith.subf %244, %247 : vector<1x8x8xf32>
    %249 = math.exp %248 : vector<1x8x8xf32>
    %cst_103 = arith.constant dense<0.000000e+00> : vector<1x8xf32>
    %250 = vector.multi_reduction <add>, %249, %cst_103 [2] : vector<1x8x8xf32> to vector<1x8xf32>
    %251 = vector.shape_cast %250 : vector<1x8xf32> to vector<1x8x1xf32>
    %252 = tpu.reciprocal %251 {approx = true} : vector<1x8x1xf32> -> vector<1x8x1xf32>
    %253 = vector.broadcast %252 : vector<1x8x1xf32> to vector<1x8x8xf32>
    %254 = arith.mulf %249, %253 : vector<1x8x8xf32>
    %255 = arith.truncf %254 : vector<1x8x8xf32> to vector<1x8x8xbf16>
    %256 = vector.extract_strided_slice %241 {offsets = [0, 0, 0], sizes = [1, 8, 32], strides = [1, 1, 1]} : vector<1x8x128xbf16> to vector<1x8x32xbf16>
    "tpu.trace_start"() <{level = 10 : i32, message = "bqk,bkd->bqd"}> : () -> ()
    %cst_104 = arith.constant dense<0.000000e+00> : vector<1x8x32xf32>
    %257 = tpu.matmul %255, %256, %cst_104 {dimension_numbers = #tpu.dot_dimension_numbers<[2], [1], [1], [2], [0, 0, 0, 1, 1, 2], [0], [0]>} : vector<1x8x8xbf16>, vector<1x8x32xbf16>, vector<1x8x32xf32> -> vector<1x8x32xf32>
    "tpu.trace_stop"() : () -> ()
    %258 = vector.extract_strided_slice %239 {offsets = [0, 0, 32], sizes = [1, 8, 32], strides = [1, 1, 1]} : vector<1x8x128xbf16> to vector<1x8x32xbf16>
    %259 = vector.extract_strided_slice %240 {offsets = [0, 0, 32], sizes = [1, 8, 32], strides = [1, 1, 1]} : vector<1x8x128xbf16> to vector<1x8x32xbf16>
    "tpu.trace_start"() <{level = 10 : i32, message = "bqd,bkd->bqk"}> : () -> ()
    %cst_105 = arith.constant dense<0.000000e+00> : vector<1x8x8xf32>
    %260 = tpu.matmul %258, %259, %cst_105 {dimension_numbers = #tpu.dot_dimension_numbers<[2], [2], [1], [1], [0, 0, 0, 1, 1, 1], [0], [0]>} : vector<1x8x32xbf16>, vector<1x8x32xbf16>, vector<1x8x8xf32> -> vector<1x8x8xf32>
    "tpu.trace_stop"() : () -> ()
    %cst_106 = arith.constant dense<0xFF800000> : vector<1x8xf32>
    %261 = vector.multi_reduction <maximumf>, %260, %cst_106 [2] : vector<1x8x8xf32> to vector<1x8xf32>
    %262 = vector.shape_cast %261 : vector<1x8xf32> to vector<1x8x1xf32>
    %263 = vector.broadcast %262 : vector<1x8x1xf32> to vector<1x8x8xf32>
    %264 = arith.subf %260, %263 : vector<1x8x8xf32>
    %265 = math.exp %264 : vector<1x8x8xf32>
    %cst_107 = arith.constant dense<0.000000e+00> : vector<1x8xf32>
    %266 = vector.multi_reduction <add>, %265, %cst_107 [2] : vector<1x8x8xf32> to vector<1x8xf32>
    %267 = vector.shape_cast %266 : vector<1x8xf32> to vector<1x8x1xf32>
    %268 = tpu.reciprocal %267 {approx = true} : vector<1x8x1xf32> -> vector<1x8x1xf32>
    %269 = vector.broadcast %268 : vector<1x8x1xf32> to vector<1x8x8xf32>
    %270 = arith.mulf %265, %269 : vector<1x8x8xf32>
    %271 = arith.truncf %270 : vector<1x8x8xf32> to vector<1x8x8xbf16>
    %272 = vector.extract_strided_slice %241 {offsets = [0, 0, 32], sizes = [1, 8, 32], strides = [1, 1, 1]} : vector<1x8x128xbf16> to vector<1x8x32xbf16>
    "tpu.trace_start"() <{level = 10 : i32, message = "bqk,bkd->bqd"}> : () -> ()
    %cst_108 = arith.constant dense<0.000000e+00> : vector<1x8x32xf32>
    %273 = tpu.matmul %271, %272, %cst_108 {dimension_numbers = #tpu.dot_dimension_numbers<[2], [1], [1], [2], [0, 0, 0, 1, 1, 2], [0], [0]>} : vector<1x8x8xbf16>, vector<1x8x32xbf16>, vector<1x8x32xf32> -> vector<1x8x32xf32>
    "tpu.trace_stop"() : () -> ()
    %274 = vector.extract_strided_slice %239 {offsets = [0, 0, 64], sizes = [1, 8, 32], strides = [1, 1, 1]} : vector<1x8x128xbf16> to vector<1x8x32xbf16>
    %275 = vector.extract_strided_slice %240 {offsets = [0, 0, 64], sizes = [1, 8, 32], strides = [1, 1, 1]} : vector<1x8x128xbf16> to vector<1x8x32xbf16>
    "tpu.trace_start"() <{level = 10 : i32, message = "bqd,bkd->bqk"}> : () -> ()
    %cst_109 = arith.constant dense<0.000000e+00> : vector<1x8x8xf32>
    %276 = tpu.matmul %274, %275, %cst_109 {dimension_numbers = #tpu.dot_dimension_numbers<[2], [2], [1], [1], [0, 0, 0, 1, 1, 1], [0], [0]>} : vector<1x8x32xbf16>, vector<1x8x32xbf16>, vector<1x8x8xf32> -> vector<1x8x8xf32>
    "tpu.trace_stop"() : () -> ()
    %cst_110 = arith.constant dense<0xFF800000> : vector<1x8xf32>
    %277 = vector.multi_reduction <maximumf>, %276, %cst_110 [2] : vector<1x8x8xf32> to vector<1x8xf32>
    %278 = vector.shape_cast %277 : vector<1x8xf32> to vector<1x8x1xf32>
    %279 = vector.broadcast %278 : vector<1x8x1xf32> to vector<1x8x8xf32>
    %280 = arith.subf %276, %279 : vector<1x8x8xf32>
    %281 = math.exp %280 : vector<1x8x8xf32>
    %cst_111 = arith.constant dense<0.000000e+00> : vector<1x8xf32>
    %282 = vector.multi_reduction <add>, %281, %cst_111 [2] : vector<1x8x8xf32> to vector<1x8xf32>
    %283 = vector.shape_cast %282 : vector<1x8xf32> to vector<1x8x1xf32>
    %284 = tpu.reciprocal %283 {approx = true} : vector<1x8x1xf32> -> vector<1x8x1xf32>
    %285 = vector.broadcast %284 : vector<1x8x1xf32> to vector<1x8x8xf32>
    %286 = arith.mulf %281, %285 : vector<1x8x8xf32>
    %287 = arith.truncf %286 : vector<1x8x8xf32> to vector<1x8x8xbf16>
    %288 = vector.extract_strided_slice %241 {offsets = [0, 0, 64], sizes = [1, 8, 32], strides = [1, 1, 1]} : vector<1x8x128xbf16> to vector<1x8x32xbf16>
    "tpu.trace_start"() <{level = 10 : i32, message = "bqk,bkd->bqd"}> : () -> ()
    %cst_112 = arith.constant dense<0.000000e+00> : vector<1x8x32xf32>
    %289 = tpu.matmul %287, %288, %cst_112 {dimension_numbers = #tpu.dot_dimension_numbers<[2], [1], [1], [2], [0, 0, 0, 1, 1, 2], [0], [0]>} : vector<1x8x8xbf16>, vector<1x8x32xbf16>, vector<1x8x32xf32> -> vector<1x8x32xf32>
    "tpu.trace_stop"() : () -> ()
    %290 = vector.extract_strided_slice %239 {offsets = [0, 0, 96], sizes = [1, 8, 32], strides = [1, 1, 1]} : vector<1x8x128xbf16> to vector<1x8x32xbf16>
    %291 = vector.extract_strided_slice %240 {offsets = [0, 0, 96], sizes = [1, 8, 32], strides = [1, 1, 1]} : vector<1x8x128xbf16> to vector<1x8x32xbf16>
    "tpu.trace_start"() <{level = 10 : i32, message = "bqd,bkd->bqk"}> : () -> ()
    %cst_113 = arith.constant dense<0.000000e+00> : vector<1x8x8xf32>
    %292 = tpu.matmul %290, %291, %cst_113 {dimension_numbers = #tpu.dot_dimension_numbers<[2], [2], [1], [1], [0, 0, 0, 1, 1, 1], [0], [0]>} : vector<1x8x32xbf16>, vector<1x8x32xbf16>, vector<1x8x8xf32> -> vector<1x8x8xf32>
    "tpu.trace_stop"() : () -> ()
    %cst_114 = arith.constant dense<0xFF800000> : vector<1x8xf32>
    %293 = vector.multi_reduction <maximumf>, %292, %cst_114 [2] : vector<1x8x8xf32> to vector<1x8xf32>
    %294 = vector.shape_cast %293 : vector<1x8xf32> to vector<1x8x1xf32>
    %295 = vector.broadcast %294 : vector<1x8x1xf32> to vector<1x8x8xf32>
    %296 = arith.subf %292, %295 : vector<1x8x8xf32>
    %297 = math.exp %296 : vector<1x8x8xf32>
    %cst_115 = arith.constant dense<0.000000e+00> : vector<1x8xf32>
    %298 = vector.multi_reduction <add>, %297, %cst_115 [2] : vector<1x8x8xf32> to vector<1x8xf32>
    %299 = vector.shape_cast %298 : vector<1x8xf32> to vector<1x8x1xf32>
    %300 = tpu.reciprocal %299 {approx = true} : vector<1x8x1xf32> -> vector<1x8x1xf32>
    %301 = vector.broadcast %300 : vector<1x8x1xf32> to vector<1x8x8xf32>
    %302 = arith.mulf %297, %301 : vector<1x8x8xf32>
    %303 = arith.truncf %302 : vector<1x8x8xf32> to vector<1x8x8xbf16>
    %304 = vector.extract_strided_slice %241 {offsets = [0, 0, 96], sizes = [1, 8, 32], strides = [1, 1, 1]} : vector<1x8x128xbf16> to vector<1x8x32xbf16>
    "tpu.trace_start"() <{level = 10 : i32, message = "bqk,bkd->bqd"}> : () -> ()
    %cst_116 = arith.constant dense<0.000000e+00> : vector<1x8x32xf32>
    %305 = tpu.matmul %303, %304, %cst_116 {dimension_numbers = #tpu.dot_dimension_numbers<[2], [1], [1], [2], [0, 0, 0, 1, 1, 2], [0], [0]>} : vector<1x8x8xbf16>, vector<1x8x32xbf16>, vector<1x8x32xf32> -> vector<1x8x32xf32>
    "tpu.trace_stop"() : () -> ()
    %306 = tpu.concatenate %257, %273, %289, %305 in 2 : vector<1x8x32xf32>, vector<1x8x32xf32>, vector<1x8x32xf32>, vector<1x8x32xf32> -> vector<1x8x128xf32>
    %307 = arith.addf %191, %306 : vector<1x8x128xf32>
    %c0_117 = arith.constant 0 : index
    %c0_118 = arith.constant 0 : index
    %308 = vector.load %arg20[%c0_117, %c0_118] : memref<1x128xf32, #tpu.memory_space<vmem>>, vector<1x128xf32>
    %c0_119 = arith.constant 0 : index
    %c0_120 = arith.constant 0 : index
    %309 = vector.load %arg21[%c0_119, %c0_120] : memref<1x128xf32, #tpu.memory_space<vmem>>, vector<1x128xf32>
    %310 = vector.shape_cast %307 : vector<1x8x128xf32> to vector<8x128xf32>
    %cst_121 = arith.constant dense<0.000000e+00> : vector<8xf32>
    %311 = vector.multi_reduction <add>, %310, %cst_121 [1] : vector<8x128xf32> to vector<8xf32>
    %312 = vector.shape_cast %311 : vector<8xf32> to vector<8x1xf32>
    %cst_122 = arith.constant 1.280000e+02 : f32
    %313 = vector.broadcast %cst_122 : f32 to vector<8x1xf32>
    %314 = arith.divf %312, %313 : vector<8x1xf32>
    %315 = vector.broadcast %314 : vector<8x1xf32> to vector<8x128xf32>
    %316 = arith.subf %310, %315 : vector<8x128xf32>
    %317 = arith.mulf %316, %316 : vector<8x128xf32>
    %cst_123 = arith.constant dense<0.000000e+00> : vector<8xf32>
    %318 = vector.multi_reduction <add>, %317, %cst_123 [1] : vector<8x128xf32> to vector<8xf32>
    %319 = vector.shape_cast %318 : vector<8xf32> to vector<8x1xf32>
    %cst_124 = arith.constant 1.280000e+02 : f32
    %320 = vector.broadcast %cst_124 : f32 to vector<8x1xf32>
    %321 = arith.divf %319, %320 : vector<8x1xf32>
    %cst_125 = arith.constant 9.99999974E-6 : f32
    %322 = vector.broadcast %cst_125 : f32 to vector<8x1xf32>
    %323 = arith.addf %321, %322 : vector<8x1xf32>
    %324 = math.rsqrt %323 : vector<8x1xf32>
    %325 = vector.broadcast %324 : vector<8x1xf32> to vector<8x128xf32>
    %326 = arith.mulf %316, %325 : vector<8x128xf32>
    %327 = vector.broadcast %308 : vector<1x128xf32> to vector<8x128xf32>
    %328 = arith.mulf %326, %327 : vector<8x128xf32>
    %329 = vector.broadcast %309 : vector<1x128xf32> to vector<8x128xf32>
    %330 = arith.addf %328, %329 : vector<8x128xf32>
    %331 = arith.truncf %330 : vector<8x128xf32> to vector<8x128xbf16>
    %c0_126 = arith.constant 0 : index
    %c0_127 = arith.constant 0 : index
    %332 = vector.load %arg28[%c0_126, %c0_127] : memref<128x256xbf16, #tpu.memory_space<vmem>>, vector<128x256xbf16>
    %cst_128 = arith.constant dense<0.000000e+00> : vector<8x256xf32>
    %333 = tpu.matmul %331, %332, %cst_128 {dimension_numbers = #tpu.dot_dimension_numbers<[1], [0], [0], [1], [0, 0, 1, 1], [], []>} : vector<8x128xbf16>, vector<128x256xbf16>, vector<8x256xf32> -> vector<8x256xf32>
    %c0_129 = arith.constant 0 : index
    %c0_130 = arith.constant 0 : index
    %334 = vector.load %arg29[%c0_129, %c0_130] : memref<1x256xf32, #tpu.memory_space<vmem>>, vector<1x256xf32>
    %335 = vector.broadcast %334 : vector<1x256xf32> to vector<8x256xf32>
    %336 = arith.addf %333, %335 : vector<8x256xf32>
    %cst_131 = arith.constant 0.000000e+00 : f32
    %337 = vector.broadcast %cst_131 : f32 to vector<8x256xf32>
    %338 = arith.maximumf %336, %337 : vector<8x256xf32>
    %339 = arith.truncf %338 : vector<8x256xf32> to vector<8x256xbf16>
    %c0_132 = arith.constant 0 : index
    %c0_133 = arith.constant 0 : index
    %340 = vector.load %arg30[%c0_132, %c0_133] : memref<256x128xbf16, #tpu.memory_space<vmem>>, vector<256x128xbf16>
    %cst_134 = arith.constant dense<0.000000e+00> : vector<8x128xf32>
    %341 = tpu.matmul %339, %340, %cst_134 {dimension_numbers = #tpu.dot_dimension_numbers<[1], [0], [0], [1], [0, 0, 1, 1], [], []>} : vector<8x256xbf16>, vector<256x128xbf16>, vector<8x128xf32> -> vector<8x128xf32>
    %c0_135 = arith.constant 0 : index
    %c0_136 = arith.constant 0 : index
    %342 = vector.load %arg31[%c0_135, %c0_136] : memref<1x128xf32, #tpu.memory_space<vmem>>, vector<1x128xf32>
    %343 = vector.broadcast %342 : vector<1x128xf32> to vector<8x128xf32>
    %344 = arith.addf %341, %343 : vector<8x128xf32>
    %345 = vector.shape_cast %344 : vector<8x128xf32> to vector<1x8x128xf32>
    %346 = arith.addf %307, %345 : vector<1x8x128xf32>
    %c0_137 = arith.constant 0 : index
    %c0_138 = arith.constant 0 : index
    %c0_139 = arith.constant 0 : index
    %347 = vector.load %arg32[%c0_137, %c0_138, %c0_139] : memref<1x8x128xf32, #tpu.memory_space<vmem>>, vector<1x8x128xf32>
    tpu.vector_store %arg32[%c0_137, %c0_138, %c0_139], %346 {strides = array<i32>} : memref<1x8x128xf32, #tpu.memory_space<vmem>>, vector<1x8x128xf32>,
    return
  }
  func.func @transform_0(%arg0: i32) -> (i32, i32, i32) {
    %c0_i32 = arith.constant 0 : i32
    %c0_i32_0 = arith.constant 0 : i32
    %c0_i32_1 = arith.constant 0 : i32
    return %arg0, %c0_i32, %c0_i32_0 : i32, i32, i32
  }
  func.func @transform_1(%arg0: i32) -> (i32, i32, i32) {
    %c0_i32 = arith.constant 0 : i32
    %c0_i32_0 = arith.constant 0 : i32
    %c0_i32_1 = arith.constant 0 : i32
    return %arg0, %c0_i32, %c0_i32_0 : i32, i32, i32
  }
  func.func @transform_2(%arg0: i32) -> (i32, i32, i32) {
    %c0_i32 = arith.constant 0 : i32
    %c0_i32_0 = arith.constant 0 : i32
    %c0_i32_1 = arith.constant 0 : i32
    return %arg0, %c0_i32, %c0_i32_0 : i32, i32, i32
  }
  func.func @transform_3(%arg0: i32) -> (i32, i32) {
    %c0_i32 = arith.constant 0 : i32
    %c0_i32_0 = arith.constant 0 : i32
    %c0_i32_1 = arith.constant 0 : i32
    return %c0_i32, %c0_i32_0 : i32, i32
  }
  func.func @transform_4(%arg0: i32) -> (i32, i32) {
    %c0_i32 = arith.constant 0 : i32
    %c0_i32_0 = arith.constant 0 : i32
    %c0_i32_1 = arith.constant 0 : i32
    return %c0_i32, %c0_i32_0 : i32, i32
  }
  func.func @transform_5(%arg0: i32) -> (i32, i32) {
    %c0_i32 = arith.constant 0 : i32
    %c0_i32_0 = arith.constant 0 : i32
    %c0_i32_1 = arith.constant 0 : i32
    return %c0_i32, %c0_i32_0 : i32, i32
  }
  func.func @transform_6(%arg0: i32) -> (i32, i32) {
    %c0_i32 = arith.constant 0 : i32
    %c0_i32_0 = arith.constant 0 : i32
    %c0_i32_1 = arith.constant 0 : i32
    return %c0_i32, %c0_i32_0 : i32, i32
  }
  func.func @transform_7(%arg0: i32) -> (i32, i32) {
    %c0_i32 = arith.constant 0 : i32
    %c0_i32_0 = arith.constant 0 : i32
    %c0_i32_1 = arith.constant 0 : i32
    return %c0_i32, %c0_i32_0 : i32, i32
  }
  func.func @transform_8(%arg0: i32) -> (i32, i32) {
    %c0_i32 = arith.constant 0 : i32
    %c0_i32_0 = arith.constant 0 : i32
    %c0_i32_1 = arith.constant 0 : i32
    return %c0_i32, %c0_i32_0 : i32, i32
  }
  func.func @transform_9(%arg0: i32) -> (i32, i32) {
    %c0_i32 = arith.constant 0 : i32
    %c0_i32_0 = arith.constant 0 : i32
    %c0_i32_1 = arith.constant 0 : i32
    return %c0_i32, %c0_i32_0 : i32, i32
  }
  func.func @transform_10(%arg0: i32) -> (i32, i32) {
    %c0_i32 = arith.constant 0 : i32
    %c0_i32_0 = arith.constant 0 : i32
    %c0_i32_1 = arith.constant 0 : i32
    return %c0_i32, %c0_i32_0 : i32, i32
  }
  func.func @transform_11(%arg0: i32) -> (i32, i32) {
    %c0_i32 = arith.constant 0 : i32
    %c0_i32_0 = arith.constant 0 : i32
    %c0_i32_1 = arith.constant 0 : i32
    return %c0_i32, %c0_i32_0 : i32, i32
  }
  func.func @transform_12(%arg0: i32) -> (i32, i32) {
    %c0_i32 = arith.constant 0 : i32
    %c0_i32_0 = arith.constant 0 : i32
    %c0_i32_1 = arith.constant 0 : i32
    return %c0_i32, %c0_i32_0 : i32, i32
  }
  func.func @transform_13(%arg0: i32) -> (i32, i32) {
    %c0_i32 = arith.constant 0 : i32
    %c0_i32_0 = arith.constant 0 : i32
    %c0_i32_1 = arith.constant 0 : i32
    return %c0_i32, %c0_i32_0 : i32, i32
  }
  func.func @transform_14(%arg0: i32) -> (i32, i32) {
    %c0_i32 = arith.constant 0 : i32
    %c0_i32_0 = arith.constant 0 : i32
    %c0_i32_1 = arith.constant 0 : i32
    return %c0_i32, %c0_i32_0 : i32, i32
  }
  func.func @transform_15(%arg0: i32) -> (i32, i32) {
    %c0_i32 = arith.constant 0 : i32
    %c0_i32_0 = arith.constant 0 : i32
    %c0_i32_1 = arith.constant 0 : i32
    return %c0_i32, %c0_i32_0 : i32, i32
  }
  func.func @transform_16(%arg0: i32) -> (i32, i32) {
    %c0_i32 = arith.constant 0 : i32
    %c0_i32_0 = arith.constant 0 : i32
    %c0_i32_1 = arith.constant 0 : i32
    return %c0_i32, %c0_i32_0 : i32, i32
  }
  func.func @transform_17(%arg0: i32) -> (i32, i32) {
    %c0_i32 = arith.constant 0 : i32
    %c0_i32_0 = arith.constant 0 : i32
    %c0_i32_1 = arith.constant 0 : i32
    return %c0_i32, %c0_i32_0 : i32, i32
  }
  func.func @transform_18(%arg0: i32) -> (i32, i32) {
    %c0_i32 = arith.constant 0 : i32
    %c0_i32_0 = arith.constant 0 : i32
    %c0_i32_1 = arith.constant 0 : i32
    return %c0_i32, %c0_i32_0 : i32, i32
  }
  func.func @transform_19(%arg0: i32) -> (i32, i32) {
    %c0_i32 = arith.constant 0 : i32
    %c0_i32_0 = arith.constant 0 : i32
    %c0_i32_1 = arith.constant 0 : i32
    return %c0_i32, %c0_i32_0 : i32, i32
  }
  func.func @transform_20(%arg0: i32) -> (i32, i32) {
    %c0_i32 = arith.constant 0 : i32
    %c0_i32_0 = arith.constant 0 : i32
    %c0_i32_1 = arith.constant 0 : i32
    return %c0_i32, %c0_i32_0 : i32, i32
  }
  func.func @transform_21(%arg0: i32) -> (i32, i32) {
    %c0_i32 = arith.constant 0 : i32
    %c0_i32_0 = arith.constant 0 : i32
    %c0_i32_1 = arith.constant 0 : i32
    return %c0_i32, %c0_i32_0 : i32, i32
  }
  func.func @transform_22(%arg0: i32) -> (i32, i32) {
    %c0_i32 = arith.constant 0 : i32
    %c0_i32_0 = arith.constant 0 : i32
    %c0_i32_1 = arith.constant 0 : i32
    return %c0_i32, %c0_i32_0 : i32, i32
  }
  func.func @transform_23(%arg0: i32) -> (i32, i32) {
    %c0_i32 = arith.constant 0 : i32
    %c0_i32_0 = arith.constant 0 : i32
    %c0_i32_1 = arith.constant 0 : i32
    return %c0_i32, %c0_i32_0 : i32, i32
  }
  func.func @transform_24(%arg0: i32) -> (i32, i32) {
    %c0_i32 = arith.constant 0 : i32
    %c0_i32_0 = arith.constant 0 : i32
    %c0_i32_1 = arith.constant 0 : i32
    return %c0_i32, %c0_i32_0 : i32, i32
  }
  func.func @transform_25(%arg0: i32) -> (i32, i32) {
    %c0_i32 = arith.constant 0 : i32
    %c0_i32_0 = arith.constant 0 : i32
    %c0_i32_1 = arith.constant 0 : i32
    return %c0_i32, %c0_i32_0 : i32, i32
  }
  func.func @transform_26(%arg0: i32) -> (i32, i32) {
    %c0_i32 = arith.constant 0 : i32
    %c0_i32_0 = arith.constant 0 : i32
    %c0_i32_1 = arith.constant 0 : i32
    return %c0_i32, %c0_i32_0 : i32, i32
  }
  func.func @transform_27(%arg0: i32) -> (i32, i32) {
    %c0_i32 = arith.constant 0 : i32
    %c0_i32_0 = arith.constant 0 : i32
    %c0_i32_1 = arith.constant 0 : i32
    return %c0_i32, %c0_i32_0 : i32, i32
  }
  func.func @transform_28(%arg0: i32) -> (i32, i32) {
    %c0_i32 = arith.constant 0 : i32
    %c0_i32_0 = arith.constant 0 : i32
    %c0_i32_1 = arith.constant 0 : i32
    return %c0_i32, %c0_i32_0 : i32, i32
  }
  func.func @transform_29(%arg0: i32) -> (i32, i32) {
    %c0_i32 = arith.constant 0 : i32
    %c0_i32_0 = arith.constant 0 : i32
    %c0_i32_1 = arith.constant 0 : i32
    return %c0_i32, %c0_i32_0 : i32, i32
  }
  func.func @transform_30(%arg0: i32) -> (i32, i32) {
    %c0_i32 = arith.constant 0 : i32
    %c0_i32_0 = arith.constant 0 : i32
    %c0_i32_1 = arith.constant 0 : i32
    return %c0_i32, %c0_i32_0 : i32, i32
  }
  func.func @transform_31(%arg0: i32) -> (i32, i32, i32) {
    %c0_i32 = arith.constant 0 : i32
    %c0_i32_0 = arith.constant 0 : i32
    %c0_i32_1 = arith.constant 0 : i32
    return %arg0, %c0_i32, %c0_i32_0 : i32, i32, i32
  }
}

module attributes {stable_mosaic.version = 11 : i64} {
  func.func @_fused_kernel(%arg0: i32, %arg1: memref<1x8x128xf32, #tpu.memory_space<vmem>>, %arg2: memref<1x8x128xf32, #tpu.memory_space<vmem>>, %arg3: memref<1x8x128xf32, #tpu.memory_space<vmem>>, %arg4: memref<1x128xf32, #tpu.memory_space<vmem>>, %arg5: memref<1x128xf32, #tpu.memory_space<vmem>>, %arg6: memref<1x128xf32, #tpu.memory_space<vmem>>, %arg7: memref<1x128xf32, #tpu.memory_space<vmem>>, %arg8: memref<128x128xbf16, #tpu.memory_space<vmem>>, %arg9: memref<1x128xf32, #tpu.memory_space<vmem>>, %arg10: memref<128x128xbf16, #tpu.memory_space<vmem>>, %arg11: memref<1x128xf32, #tpu.memory_space<vmem>>, %arg12: memref<128x128xbf16, #tpu.memory_space<vmem>>, %arg13: memref<1x128xf32, #tpu.memory_space<vmem>>, %arg14: memref<128x256xbf16, #tpu.memory_space<vmem>>, %arg15: memref<1x256xf32, #tpu.memory_space<vmem>>, %arg16: memref<256x128xbf16, #tpu.memory_space<vmem>>, %arg17: memref<1x128xf32, #tpu.memory_space<vmem>>, %arg18: memref<1x128xf32, #tpu.memory_space<vmem>>, %arg19: memref<1x128xf32, #tpu.memory_space<vmem>>, %arg20: memref<1x128xf32, #tpu.memory_space<vmem>>, %arg21: memref<1x128xf32, #tpu.memory_space<vmem>>, %arg22: memref<128x128xbf16, #tpu.memory_space<vmem>>, %arg23: memref<1x128xf32, #tpu.memory_space<vmem>>, %arg24: memref<128x128xbf16, #tpu.memory_space<vmem>>, %arg25: memref<1x128xf32, #tpu.memory_space<vmem>>, %arg26: memref<128x128xbf16, #tpu.memory_space<vmem>>, %arg27: memref<1x128xf32, #tpu.memory_space<vmem>>, %arg28: memref<128x256xbf16, #tpu.memory_space<vmem>>, %arg29: memref<1x256xf32, #tpu.memory_space<vmem>>, %arg30: memref<256x128xbf16, #tpu.memory_space<vmem>>, %arg31: memref<1x128xf32, #tpu.memory_space<vmem>>, %arg32: memref<1x8x128xf32, #tpu.memory_space<vmem>>) attributes {dimension_semantics = [#tpu.dimension_semantics<parallel>], iteration_bounds = array<i64: 2>, scalar_prefetch = 0 : i64, scratch_operands = 0 : i64, tpu.core_type = #tpu.core_type<tc>, window_params = [{transform_indices = @transform_0, window_bounds = array<i64: 1, 8, 128>}, {transform_indices = @transform_1, window_bounds = array<i64: 1, 8, 128>}, {transform_indices = @transform_2, window_bounds = array<i64: 1, 8, 128>}, {pipeline_mode = #tpu.pipeline_mode<synchronous>, transform_indices = @transform_3, window_bounds = array<i64: 1, 128>}, {pipeline_mode = #tpu.pipeline_mode<synchronous>, transform_indices = @transform_4, window_bounds = array<i64: 1, 128>}, {pipeline_mode = #tpu.pipeline_mode<synchronous>, transform_indices = @transform_5, window_bounds = array<i64: 1, 128>}, {pipeline_mode = #tpu.pipeline_mode<synchronous>, transform_indices = @transform_6, window_bounds = array<i64: 1, 128>}, {pipeline_mode = #tpu.pipeline_mode<synchronous>, transform_indices = @transform_7, window_bounds = array<i64: 128, 128>}, {pipeline_mode = #tpu.pipeline_mode<synchronous>, transform_indices = @transform_8, window_bounds = array<i64: 1, 128>}, {pipeline_mode = #tpu.pipeline_mode<synchronous>, transform_indices = @transform_9, window_bounds = array<i64: 128, 128>}, {pipeline_mode = #tpu.pipeline_mode<synchronous>, transform_indices = @transform_10, window_bounds = array<i64: 1, 128>}, {pipeline_mode = #tpu.pipeline_mode<synchronous>, transform_indices = @transform_11, window_bounds = array<i64: 128, 128>}, {pipeline_mode = #tpu.pipeline_mode<synchronous>, transform_indices = @transform_12, window_bounds = array<i64: 1, 128>}, {pipeline_mode = #tpu.pipeline_mode<synchronous>, transform_indices = @transform_13, window_bounds = array<i64: 128, 256>}, {pipeline_mode = #tpu.pipeline_mode<synchronous>, transform_indices = @transform_14, window_bounds = array<i64: 1, 256>}, {pipeline_mode = #tpu.pipeline_mode<synchronous>, transform_indices = @transform_15, window_bounds = array<i64: 256, 128>}, {pipeline_mode = #tpu.pipeline_mode<synchronous>, transform_indices = @transform_16, window_bounds = array<i64: 1, 128>}, {pipeline_mode = #tpu.pipeline_mode<synchronous>, transform_indices = @transform_17, window_bounds = array<i64: 1, 128>}, {pipeline_mode = #tpu.pipeline_mode<synchronous>, transform_indices = @transform_18, window_bounds = array<i64: 1, 128>}, {pipeline_mode = #tpu.pipeline_mode<synchronous>, transform_indices = @transform_19, window_bounds = array<i64: 1, 128>}, {pipeline_mode = #tpu.pipeline_mode<synchronous>, transform_indices = @transform_20, window_bounds = array<i64: 1, 128>}, {pipeline_mode = #tpu.pipeline_mode<synchronous>, transform_indices = @transform_21, window_bounds = array<i64: 128, 128>}, {pipeline_mode = #tpu.pipeline_mode<synchronous>, transform_indices = @transform_22, window_bounds = array<i64: 1, 128>}, {pipeline_mode = #tpu.pipeline_mode<synchronous>, transform_indices = @transform_23, window_bounds = array<i64: 128, 128>}, {pipeline_mode = #tpu.pipeline_mode<synchronous>, transform_indices = @transform_24, window_bounds = array<i64: 1, 128>}, {pipeline_mode = #tpu.pipeline_mode<synchronous>, transform_indices = @transform_25, window_bounds = array<i64: 128, 128>}, {pipeline_mode = #tpu.pipeline_mode<synchronous>, transform_indices = @transform_26, window_bounds = array<i64: 1, 128>}, {pipeline_mode = #tpu.pipeline_mode<synchronous>, transform_indices = @transform_27, window_bounds = array<i64: 128, 256>}, {pipeline_mode = #tpu.pipeline_mode<synchronous>, transform_indices = @transform_28, window_bounds = array<i64: 1, 256>}, {pipeline_mode = #tpu.pipeline_mode<synchronous>, transform_indices = @transform_29, window_bounds = array<i64: 256, 128>}, {pipeline_mode = #tpu.pipeline_mode<synchronous>, transform_indices = @transform_30, window_bounds = array<i64: 1, 128>}, {transform_indices = @transform_31, window_bounds = array<i64: 1, 8, 128>}]} {
    %c0 = arith.constant 0 : index
    %c0_0 = arith.constant 0 : index
    %c0_1 = arith.constant 0 : index
    %0 = vector.load %arg1[%c0, %c0_0, %c0_1] : memref<1x8x128xf32, #tpu.memory_space<vmem>>, vector<1x8x128xf32>
    %c0_2 = arith.constant 0 : index
    %c0_3 = arith.constant 0 : index
    %c0_4 = arith.constant 0 : index
    %1 = vector.load %arg2[%c0_2, %c0_3, %c0_4] : memref<1x8x128xf32, #tpu.memory_space<vmem>>, vector<1x8x128xf32>
    %c0_5 = arith.constant 0 : index
    %c0_6 = arith.constant 0 : index
    %c0_7 = arith.constant 0 : index
    %2 = vector.load %arg3[%c0_5, %c0_6, %c0_7] : memref<1x8x128xf32, #tpu.memory_space<vmem>>, vector<1x8x128xf32>
    %3 = vector.shape_cast %0 : vector<1x8x128xf32> to vector<8x128xf32>
    %cst = arith.constant dense<0.000000e+00> : vector<8xf32>
    %4 = vector.multi_reduction <add>, %3, %cst [1] : vector<8x128xf32> to vector<8xf32>
    %5 = vector.shape_cast %4 : vector<8xf32> to vector<8x1xf32>
    %cst_8 = arith.constant 1.280000e+02 : f32
    %6 = vector.broadcast %cst_8 : f32 to vector<8x1xf32>
    %7 = arith.divf %5, %6 : vector<8x1xf32>
    %8 = vector.broadcast %7 : vector<8x1xf32> to vector<8x128xf32>
    %9 = arith.subf %3, %8 : vector<8x128xf32>
    %10 = arith.mulf %9, %9 : vector<8x128xf32>
    %cst_9 = arith.constant dense<0.000000e+00> : vector<8xf32>
    %11 = vector.multi_reduction <add>, %10, %cst_9 [1] : vector<8x128xf32> to vector<8xf32>
    %12 = vector.shape_cast %11 : vector<8xf32> to vector<8x1xf32>
    %cst_10 = arith.constant 1.280000e+02 : f32
    %13 = vector.broadcast %cst_10 : f32 to vector<8x1xf32>
    %14 = arith.divf %12, %13 : vector<8x1xf32>
    %cst_11 = arith.constant 9.99999974E-6 : f32
    %15 = vector.broadcast %cst_11 : f32 to vector<8x1xf32>
    %16 = arith.addf %14, %15 : vector<8x1xf32>
    %17 = math.rsqrt %16 : vector<8x1xf32>
    %18 = vector.broadcast %17 : vector<8x1xf32> to vector<8x128xf32>
    %19 = arith.mulf %9, %18 : vector<8x128xf32>
    %20 = vector.shape_cast %1 : vector<1x8x128xf32> to vector<8x128xf32>
    %cst_12 = arith.constant dense<0.000000e+00> : vector<8xf32>
    %21 = vector.multi_reduction <add>, %20, %cst_12 [1] : vector<8x128xf32> to vector<8xf32>
    %22 = vector.shape_cast %21 : vector<8xf32> to vector<8x1xf32>
    %cst_13 = arith.constant 1.280000e+02 : f32
    %23 = vector.broadcast %cst_13 : f32 to vector<8x1xf32>
    %24 = arith.divf %22, %23 : vector<8x1xf32>
    %25 = vector.broadcast %24 : vector<8x1xf32> to vector<8x128xf32>
    %26 = arith.subf %20, %25 : vector<8x128xf32>
    %27 = arith.mulf %26, %26 : vector<8x128xf32>
    %cst_14 = arith.constant dense<0.000000e+00> : vector<8xf32>
    %28 = vector.multi_reduction <add>, %27, %cst_14 [1] : vector<8x128xf32> to vector<8xf32>
    %29 = vector.shape_cast %28 : vector<8xf32> to vector<8x1xf32>
    %cst_15 = arith.constant 1.280000e+02 : f32
    %30 = vector.broadcast %cst_15 : f32 to vector<8x1xf32>
    %31 = arith.divf %29, %30 : vector<8x1xf32>
    %cst_16 = arith.constant 9.99999974E-6 : f32
    %32 = vector.broadcast %cst_16 : f32 to vector<8x1xf32>
    %33 = arith.addf %31, %32 : vector<8x1xf32>
    %34 = math.rsqrt %33 : vector<8x1xf32>
    %35 = vector.broadcast %34 : vector<8x1xf32> to vector<8x128xf32>
    %36 = arith.mulf %26, %35 : vector<8x128xf32>
    %37 = vector.shape_cast %2 : vector<1x8x128xf32> to vector<8x128xf32>
    %cst_17 = arith.constant dense<0.000000e+00> : vector<8xf32>
    %38 = vector.multi_reduction <add>, %37, %cst_17 [1] : vector<8x128xf32> to vector<8xf32>
    %39 = vector.shape_cast %38 : vector<8xf32> to vector<8x1xf32>
    %cst_18 = arith.constant 1.280000e+02 : f32
    %40 = vector.broadcast %cst_18 : f32 to vector<8x1xf32>
    %41 = arith.divf %39, %40 : vector<8x1xf32>
    %42 = vector.broadcast %41 : vector<8x1xf32> to vector<8x128xf32>
    %43 = arith.subf %37, %42 : vector<8x128xf32>
    %44 = arith.mulf %43, %43 : vector<8x128xf32>
    %cst_19 = arith.constant dense<0.000000e+00> : vector<8xf32>
    %45 = vector.multi_reduction <add>, %44, %cst_19 [1] : vector<8x128xf32> to vector<8xf32>
    %46 = vector.shape_cast %45 : vector<8xf32> to vector<8x1xf32>
    %cst_20 = arith.constant 1.280000e+02 : f32
    %47 = vector.broadcast %cst_20 : f32 to vector<8x1xf32>
    %48 = arith.divf %46, %47 : vector<8x1xf32>
    %cst_21 = arith.constant 9.99999974E-6 : f32
    %49 = vector.broadcast %cst_21 : f32 to vector<8x1xf32>
    %50 = arith.addf %48, %49 : vector<8x1xf32>
    %51 = math.rsqrt %50 : vector<8x1xf32>
    %52 = vector.broadcast %51 : vector<8x1xf32> to vector<8x128xf32>
    %53 = arith.mulf %43, %52 : vector<8x128xf32>
    %c0_22 = arith.constant 0 : index
    %c0_23 = arith.constant 0 : index
    %54 = vector.load %arg4[%c0_22, %c0_23] : memref<1x128xf32, #tpu.memory_space<vmem>>, vector<1x128xf32>
    %c0_24 = arith.constant 0 : index
    %c0_25 = arith.constant 0 : index
    %55 = vector.load %arg5[%c0_24, %c0_25] : memref<1x128xf32, #tpu.memory_space<vmem>>, vector<1x128xf32>
    %56 = vector.broadcast %54 : vector<1x128xf32> to vector<8x128xf32>
    %57 = arith.mulf %19, %56 : vector<8x128xf32>
    %58 = vector.broadcast %55 : vector<1x128xf32> to vector<8x128xf32>
    %59 = arith.addf %57, %58 : vector<8x128xf32>
    %60 = arith.truncf %59 : vector<8x128xf32> to vector<8x128xbf16>
    %61 = vector.broadcast %54 : vector<1x128xf32> to vector<8x128xf32>
    %62 = arith.mulf %36, %61 : vector<8x128xf32>
    %63 = vector.broadcast %55 : vector<1x128xf32> to vector<8x128xf32>
    %64 = arith.addf %62, %63 : vector<8x128xf32>
    %65 = arith.truncf %64 : vector<8x128xf32> to vector<8x128xbf16>
    %c0_26 = arith.constant 0 : index
    %c0_27 = arith.constant 0 : index
    %66 = vector.load %arg8[%c0_26, %c0_27] : memref<128x128xbf16, #tpu.memory_space<vmem>>, vector<128x128xbf16>
    %cst_28 = arith.constant dense<0.000000e+00> : vector<8x128xf32>
    %67 = tpu.matmul %60, %66, %cst_28 {dimension_numbers = #tpu.dot_dimension_numbers<[1], [0], [0], [1], [0, 0, 1, 1], [], []>} : vector<8x128xbf16>, vector<128x128xbf16>, vector<8x128xf32> -> vector<8x128xf32>
    %c0_29 = arith.constant 0 : index
    %c0_30 = arith.constant 0 : index
    %68 = vector.load %arg9[%c0_29, %c0_30] : memref<1x128xf32, #tpu.memory_space<vmem>>, vector<1x128xf32>
    %69 = vector.broadcast %68 : vector<1x128xf32> to vector<8x128xf32>
    %70 = arith.addf %67, %69 : vector<8x128xf32>
    %c0_31 = arith.constant 0 : index
    %c0_32 = arith.constant 0 : index
    %71 = vector.load %arg10[%c0_31, %c0_32] : memref<128x128xbf16, #tpu.memory_space<vmem>>, vector<128x128xbf16>
    %cst_33 = arith.constant dense<0.000000e+00> : vector<8x128xf32>
    %72 = tpu.matmul %65, %71, %cst_33 {dimension_numbers = #tpu.dot_dimension_numbers<[1], [0], [0], [1], [0, 0, 1, 1], [], []>} : vector<8x128xbf16>, vector<128x128xbf16>, vector<8x128xf32> -> vector<8x128xf32>
    %c0_34 = arith.constant 0 : index
    %c0_35 = arith.constant 0 : index
    %73 = vector.load %arg11[%c0_34, %c0_35] : memref<1x128xf32, #tpu.memory_space<vmem>>, vector<1x128xf32>
    %74 = vector.broadcast %73 : vector<1x128xf32> to vector<8x128xf32>
    %75 = arith.addf %72, %74 : vector<8x128xf32>
    %c0_36 = arith.constant 0 : index
    %c0_37 = arith.constant 0 : index
    %76 = vector.load %arg12[%c0_36, %c0_37] : memref<128x128xbf16, #tpu.memory_space<vmem>>, vector<128x128xbf16>
    %cst_38 = arith.constant dense<0.000000e+00> : vector<8x128xf32>
    %77 = tpu.matmul %65, %76, %cst_38 {dimension_numbers = #tpu.dot_dimension_numbers<[1], [0], [0], [1], [0, 0, 1, 1], [], []>} : vector<8x128xbf16>, vector<128x128xbf16>, vector<8x128xf32> -> vector<8x128xf32>
    %c0_39 = arith.constant 0 : index
    %c0_40 = arith.constant 0 : index
    %78 = vector.load %arg13[%c0_39, %c0_40] : memref<1x128xf32, #tpu.memory_space<vmem>>, vector<1x128xf32>
    %79 = vector.broadcast %78 : vector<1x128xf32> to vector<8x128xf32>
    %80 = arith.addf %77, %79 : vector<8x128xf32>
    %81 = arith.truncf %70 : vector<8x128xf32> to vector<8x128xbf16>
    %82 = arith.truncf %75 : vector<8x128xf32> to vector<8x128xbf16>
    %83 = arith.truncf %80 : vector<8x128xf32> to vector<8x128xbf16>
    %84 = vector.shape_cast %81 : vector<8x128xbf16> to vector<1x8x128xbf16>
    %85 = vector.shape_cast %82 : vector<8x128xbf16> to vector<1x8x128xbf16>
    %86 = vector.shape_cast %83 : vector<8x128xbf16> to vector<1x8x128xbf16>
    %87 = vector.extract_strided_slice %84 {offsets = [0, 0, 0], sizes = [1, 8, 32], strides = [1, 1, 1]} : vector<1x8x128xbf16> to vector<1x8x32xbf16>
    %88 = vector.extract_strided_slice %85 {offsets = [0, 0, 0], sizes = [1, 8, 32], strides = [1, 1, 1]} : vector<1x8x128xbf16> to vector<1x8x32xbf16>
    "tpu.trace_start"() <{level = 10 : i32, message = "bqd,bkd->bqk"}> : () -> ()
    %cst_41 = arith.constant dense<0.000000e+00> : vector<1x8x8xf32>
    %89 = tpu.matmul %87, %88, %cst_41 {dimension_numbers = #tpu.dot_dimension_numbers<[2], [2], [1], [1], [0, 0, 0, 1, 1, 1], [0], [0]>} : vector<1x8x32xbf16>, vector<1x8x32xbf16>, vector<1x8x8xf32> -> vector<1x8x8xf32>
    "tpu.trace_stop"() : () -> ()
    %cst_42 = arith.constant dense<0xFF800000> : vector<1x8xf32>
    %90 = vector.multi_reduction <maximumf>, %89, %cst_42 [2] : vector<1x8x8xf32> to vector<1x8xf32>
    %91 = vector.shape_cast %90 : vector<1x8xf32> to vector<1x8x1xf32>
    %92 = vector.broadcast %91 : vector<1x8x1xf32> to vector<1x8x8xf32>
    %93 = arith.subf %89, %92 : vector<1x8x8xf32>
    %94 = math.exp %93 : vector<1x8x8xf32>
    %cst_43 = arith.constant dense<0.000000e+00> : vector<1x8xf32>
    %95 = vector.multi_reduction <add>, %94, %cst_43 [2] : vector<1x8x8xf32> to vector<1x8xf32>
    %96 = vector.shape_cast %95 : vector<1x8xf32> to vector<1x8x1xf32>
    %97 = tpu.reciprocal %96 {approx = true} : vector<1x8x1xf32> -> vector<1x8x1xf32>
    %98 = vector.broadcast %97 : vector<1x8x1xf32> to vector<1x8x8xf32>
    %99 = arith.mulf %94, %98 : vector<1x8x8xf32>
    %100 = arith.truncf %99 : vector<1x8x8xf32> to vector<1x8x8xbf16>
    %101 = vector.extract_strided_slice %86 {offsets = [0, 0, 0], sizes = [1, 8, 32], strides = [1, 1, 1]} : vector<1x8x128xbf16> to vector<1x8x32xbf16>
    "tpu.trace_start"() <{level = 10 : i32, message = "bqk,bkd->bqd"}> : () -> ()
    %cst_44 = arith.constant dense<0.000000e+00> : vector<1x8x32xf32>
    %102 = tpu.matmul %100, %101, %cst_44 {dimension_numbers = #tpu.dot_dimension_numbers<[2], [1], [1], [2], [0, 0, 0, 1, 1, 2], [0], [0]>} : vector<1x8x8xbf16>, vector<1x8x32xbf16>, vector<1x8x32xf32> -> vector<1x8x32xf32>
    "tpu.trace_stop"() : () -> ()
    %103 = vector.extract_strided_slice %84 {offsets = [0, 0, 32], sizes = [1, 8, 32], strides = [1, 1, 1]} : vector<1x8x128xbf16> to vector<1x8x32xbf16>
    %104 = vector.extract_strided_slice %85 {offsets = [0, 0, 32], sizes = [1, 8, 32], strides = [1, 1, 1]} : vector<1x8x128xbf16> to vector<1x8x32xbf16>
    "tpu.trace_start"() <{level = 10 : i32, message = "bqd,bkd->bqk"}> : () -> ()
    %cst_45 = arith.constant dense<0.000000e+00> : vector<1x8x8xf32>
    %105 = tpu.matmul %103, %104, %cst_45 {dimension_numbers = #tpu.dot_dimension_numbers<[2], [2], [1], [1], [0, 0, 0, 1, 1, 1], [0], [0]>} : vector<1x8x32xbf16>, vector<1x8x32xbf16>, vector<1x8x8xf32> -> vector<1x8x8xf32>
    "tpu.trace_stop"() : () -> ()
    %cst_46 = arith.constant dense<0xFF800000> : vector<1x8xf32>
    %106 = vector.multi_reduction <maximumf>, %105, %cst_46 [2] : vector<1x8x8xf32> to vector<1x8xf32>
    %107 = vector.shape_cast %106 : vector<1x8xf32> to vector<1x8x1xf32>
    %108 = vector.broadcast %107 : vector<1x8x1xf32> to vector<1x8x8xf32>
    %109 = arith.subf %105, %108 : vector<1x8x8xf32>
    %110 = math.exp %109 : vector<1x8x8xf32>
    %cst_47 = arith.constant dense<0.000000e+00> : vector<1x8xf32>
    %111 = vector.multi_reduction <add>, %110, %cst_47 [2] : vector<1x8x8xf32> to vector<1x8xf32>
    %112 = vector.shape_cast %111 : vector<1x8xf32> to vector<1x8x1xf32>
    %113 = tpu.reciprocal %112 {approx = true} : vector<1x8x1xf32> -> vector<1x8x1xf32>
    %114 = vector.broadcast %113 : vector<1x8x1xf32> to vector<1x8x8xf32>
    %115 = arith.mulf %110, %114 : vector<1x8x8xf32>
    %116 = arith.truncf %115 : vector<1x8x8xf32> to vector<1x8x8xbf16>
    %117 = vector.extract_strided_slice %86 {offsets = [0, 0, 32], sizes = [1, 8, 32], strides = [1, 1, 1]} : vector<1x8x128xbf16> to vector<1x8x32xbf16>
    "tpu.trace_start"() <{level = 10 : i32, message = "bqk,bkd->bqd"}> : () -> ()
    %cst_48 = arith.constant dense<0.000000e+00> : vector<1x8x32xf32>
    %118 = tpu.matmul %116, %117, %cst_48 {dimension_numbers = #tpu.dot_dimension_numbers<[2], [1], [1], [2], [0, 0, 0, 1, 1, 2], [0], [0]>} : vector<1x8x8xbf16>, vector<1x8x32xbf16>, vector<1x8x32xf32> -> vector<1x8x32xf32>
    "tpu.trace_stop"() : () -> ()
    %119 = vector.extract_strided_slice %84 {offsets = [0, 0, 64], sizes = [1, 8, 32], strides = [1, 1, 1]} : vector<1x8x128xbf16> to vector<1x8x32xbf16>
    %120 = vector.extract_strided_slice %85 {offsets = [0, 0, 64], sizes = [1, 8, 32], strides = [1, 1, 1]} : vector<1x8x128xbf16> to vector<1x8x32xbf16>
    "tpu.trace_start"() <{level = 10 : i32, message = "bqd,bkd->bqk"}> : () -> ()
    %cst_49 = arith.constant dense<0.000000e+00> : vector<1x8x8xf32>
    %121 = tpu.matmul %119, %120, %cst_49 {dimension_numbers = #tpu.dot_dimension_numbers<[2], [2], [1], [1], [0, 0, 0, 1, 1, 1], [0], [0]>} : vector<1x8x32xbf16>, vector<1x8x32xbf16>, vector<1x8x8xf32> -> vector<1x8x8xf32>
    "tpu.trace_stop"() : () -> ()
    %cst_50 = arith.constant dense<0xFF800000> : vector<1x8xf32>
    %122 = vector.multi_reduction <maximumf>, %121, %cst_50 [2] : vector<1x8x8xf32> to vector<1x8xf32>
    %123 = vector.shape_cast %122 : vector<1x8xf32> to vector<1x8x1xf32>
    %124 = vector.broadcast %123 : vector<1x8x1xf32> to vector<1x8x8xf32>
    %125 = arith.subf %121, %124 : vector<1x8x8xf32>
    %126 = math.exp %125 : vector<1x8x8xf32>
    %cst_51 = arith.constant dense<0.000000e+00> : vector<1x8xf32>
    %127 = vector.multi_reduction <add>, %126, %cst_51 [2] : vector<1x8x8xf32> to vector<1x8xf32>
    %128 = vector.shape_cast %127 : vector<1x8xf32> to vector<1x8x1xf32>
    %129 = tpu.reciprocal %128 {approx = true} : vector<1x8x1xf32> -> vector<1x8x1xf32>
    %130 = vector.broadcast %129 : vector<1x8x1xf32> to vector<1x8x8xf32>
    %131 = arith.mulf %126, %130 : vector<1x8x8xf32>
    %132 = arith.truncf %131 : vector<1x8x8xf32> to vector<1x8x8xbf16>
    %133 = vector.extract_strided_slice %86 {offsets = [0, 0, 64], sizes = [1, 8, 32], strides = [1, 1, 1]} : vector<1x8x128xbf16> to vector<1x8x32xbf16>
    "tpu.trace_start"() <{level = 10 : i32, message = "bqk,bkd->bqd"}> : () -> ()
    %cst_52 = arith.constant dense<0.000000e+00> : vector<1x8x32xf32>
    %134 = tpu.matmul %132, %133, %cst_52 {dimension_numbers = #tpu.dot_dimension_numbers<[2], [1], [1], [2], [0, 0, 0, 1, 1, 2], [0], [0]>} : vector<1x8x8xbf16>, vector<1x8x32xbf16>, vector<1x8x32xf32> -> vector<1x8x32xf32>
    "tpu.trace_stop"() : () -> ()
    %135 = vector.extract_strided_slice %84 {offsets = [0, 0, 96], sizes = [1, 8, 32], strides = [1, 1, 1]} : vector<1x8x128xbf16> to vector<1x8x32xbf16>
    %136 = vector.extract_strided_slice %85 {offsets = [0, 0, 96], sizes = [1, 8, 32], strides = [1, 1, 1]} : vector<1x8x128xbf16> to vector<1x8x32xbf16>
    "tpu.trace_start"() <{level = 10 : i32, message = "bqd,bkd->bqk"}> : () -> ()
    %cst_53 = arith.constant dense<0.000000e+00> : vector<1x8x8xf32>
    %137 = tpu.matmul %135, %136, %cst_53 {dimension_numbers = #tpu.dot_dimension_numbers<[2], [2], [1], [1], [0, 0, 0, 1, 1, 1], [0], [0]>} : vector<1x8x32xbf16>, vector<1x8x32xbf16>, vector<1x8x8xf32> -> vector<1x8x8xf32>
    "tpu.trace_stop"() : () -> ()
    %cst_54 = arith.constant dense<0xFF800000> : vector<1x8xf32>
    %138 = vector.multi_reduction <maximumf>, %137, %cst_54 [2] : vector<1x8x8xf32> to vector<1x8xf32>
    %139 = vector.shape_cast %138 : vector<1x8xf32> to vector<1x8x1xf32>
    %140 = vector.broadcast %139 : vector<1x8x1xf32> to vector<1x8x8xf32>
    %141 = arith.subf %137, %140 : vector<1x8x8xf32>
    %142 = math.exp %141 : vector<1x8x8xf32>
    %cst_55 = arith.constant dense<0.000000e+00> : vector<1x8xf32>
    %143 = vector.multi_reduction <add>, %142, %cst_55 [2] : vector<1x8x8xf32> to vector<1x8xf32>
    %144 = vector.shape_cast %143 : vector<1x8xf32> to vector<1x8x1xf32>
    %145 = tpu.reciprocal %144 {approx = true} : vector<1x8x1xf32> -> vector<1x8x1xf32>
    %146 = vector.broadcast %145 : vector<1x8x1xf32> to vector<1x8x8xf32>
    %147 = arith.mulf %142, %146 : vector<1x8x8xf32>
    %148 = arith.truncf %147 : vector<1x8x8xf32> to vector<1x8x8xbf16>
    %149 = vector.extract_strided_slice %86 {offsets = [0, 0, 96], sizes = [1, 8, 32], strides = [1, 1, 1]} : vector<1x8x128xbf16> to vector<1x8x32xbf16>
    "tpu.trace_start"() <{level = 10 : i32, message = "bqk,bkd->bqd"}> : () -> ()
    %cst_56 = arith.constant dense<0.000000e+00> : vector<1x8x32xf32>
    %150 = tpu.matmul %148, %149, %cst_56 {dimension_numbers = #tpu.dot_dimension_numbers<[2], [1], [1], [2], [0, 0, 0, 1, 1, 2], [0], [0]>} : vector<1x8x8xbf16>, vector<1x8x32xbf16>, vector<1x8x32xf32> -> vector<1x8x32xf32>
    "tpu.trace_stop"() : () -> ()
    %151 = tpu.concatenate %102, %118, %134, %150 in 2 : vector<1x8x32xf32>, vector<1x8x32xf32>, vector<1x8x32xf32>, vector<1x8x32xf32> -> vector<1x8x128xf32>
    %152 = arith.addf %0, %151 : vector<1x8x128xf32>
    %c0_57 = arith.constant 0 : index
    %c0_58 = arith.constant 0 : index
    %153 = vector.load %arg6[%c0_57, %c0_58] : memref<1x128xf32, #tpu.memory_space<vmem>>, vector<1x128xf32>
    %c0_59 = arith.constant 0 : index
    %c0_60 = arith.constant 0 : index
    %154 = vector.load %arg7[%c0_59, %c0_60] : memref<1x128xf32, #tpu.memory_space<vmem>>, vector<1x128xf32>
    %155 = vector.shape_cast %152 : vector<1x8x128xf32> to vector<8x128xf32>
    %cst_61 = arith.constant dense<0.000000e+00> : vector<8xf32>
    %156 = vector.multi_reduction <add>, %155, %cst_61 [1] : vector<8x128xf32> to vector<8xf32>
    %157 = vector.shape_cast %156 : vector<8xf32> to vector<8x1xf32>
    %cst_62 = arith.constant 1.280000e+02 : f32
    %158 = vector.broadcast %cst_62 : f32 to vector<8x1xf32>
    %159 = arith.divf %157, %158 : vector<8x1xf32>
    %160 = vector.broadcast %159 : vector<8x1xf32> to vector<8x128xf32>
    %161 = arith.subf %155, %160 : vector<8x128xf32>
    %162 = arith.mulf %161, %161 : vector<8x128xf32>
    %cst_63 = arith.constant dense<0.000000e+00> : vector<8xf32>
    %163 = vector.multi_reduction <add>, %162, %cst_63 [1] : vector<8x128xf32> to vector<8xf32>
    %164 = vector.shape_cast %163 : vector<8xf32> to vector<8x1xf32>
    %cst_64 = arith.constant 1.280000e+02 : f32
    %165 = vector.broadcast %cst_64 : f32 to vector<8x1xf32>
    %166 = arith.divf %164, %165 : vector<8x1xf32>
    %cst_65 = arith.constant 9.99999974E-6 : f32
    %167 = vector.broadcast %cst_65 : f32 to vector<8x1xf32>
    %168 = arith.addf %166, %167 : vector<8x1xf32>
    %169 = math.rsqrt %168 : vector<8x1xf32>
    %170 = vector.broadcast %169 : vector<8x1xf32> to vector<8x128xf32>
    %171 = arith.mulf %161, %170 : vector<8x128xf32>
    %172 = vector.broadcast %153 : vector<1x128xf32> to vector<8x128xf32>
    %173 = arith.mulf %171, %172 : vector<8x128xf32>
    %174 = vector.broadcast %154 : vector<1x128xf32> to vector<8x128xf32>
    %175 = arith.addf %173, %174 : vector<8x128xf32>
    %176 = arith.truncf %175 : vector<8x128xf32> to vector<8x128xbf16>
    %c0_66 = arith.constant 0 : index
    %c0_67 = arith.constant 0 : index
    %177 = vector.load %arg14[%c0_66, %c0_67] : memref<128x256xbf16, #tpu.memory_space<vmem>>, vector<128x256xbf16>
    %cst_68 = arith.constant dense<0.000000e+00> : vector<8x256xf32>
    %178 = tpu.matmul %176, %177, %cst_68 {dimension_numbers = #tpu.dot_dimension_numbers<[1], [0], [0], [1], [0, 0, 1, 1], [], []>} : vector<8x128xbf16>, vector<128x256xbf16>, vector<8x256xf32> -> vector<8x256xf32>
    %c0_69 = arith.constant 0 : index
    %c0_70 = arith.constant 0 : index
    %179 = vector.load %arg15[%c0_69, %c0_70] : memref<1x256xf32, #tpu.memory_space<vmem>>, vector<1x256xf32>
    %180 = vector.broadcast %179 : vector<1x256xf32> to vector<8x256xf32>
    %181 = arith.addf %178, %180 : vector<8x256xf32>
    %cst_71 = arith.constant 0.000000e+00 : f32
    %182 = vector.broadcast %cst_71 : f32 to vector<8x256xf32>
    %183 = arith.maximumf %181, %182 : vector<8x256xf32>
    %184 = arith.truncf %183 : vector<8x256xf32> to vector<8x256xbf16>
    %c0_72 = arith.constant 0 : index
    %c0_73 = arith.constant 0 : index
    %185 = vector.load %arg16[%c0_72, %c0_73] : memref<256x128xbf16, #tpu.memory_space<vmem>>, vector<256x128xbf16>
    %cst_74 = arith.constant dense<0.000000e+00> : vector<8x128xf32>
    %186 = tpu.matmul %184, %185, %cst_74 {dimension_numbers = #tpu.dot_dimension_numbers<[1], [0], [0], [1], [0, 0, 1, 1], [], []>} : vector<8x256xbf16>, vector<256x128xbf16>, vector<8x128xf32> -> vector<8x128xf32>
    %c0_75 = arith.constant 0 : index
    %c0_76 = arith.constant 0 : index
    %187 = vector.load %arg17[%c0_75, %c0_76] : memref<1x128xf32, #tpu.memory_space<vmem>>, vector<1x128xf32>
    %188 = vector.broadcast %187 : vector<1x128xf32> to vector<8x128xf32>
    %189 = arith.addf %186, %188 : vector<8x128xf32>
    %190 = vector.shape_cast %189 : vector<8x128xf32> to vector<1x8x128xf32>
    %191 = arith.addf %152, %190 : vector<1x8x128xf32>
    %192 = vector.shape_cast %191 : vector<1x8x128xf32> to vector<8x128xf32>
    %cst_77 = arith.constant dense<0.000000e+00> : vector<8xf32>
    %193 = vector.multi_reduction <add>, %192, %cst_77 [1] : vector<8x128xf32> to vector<8xf32>
    %194 = vector.shape_cast %193 : vector<8xf32> to vector<8x1xf32>
    %cst_78 = arith.constant 1.280000e+02 : f32
    %195 = vector.broadcast %cst_78 : f32 to vector<8x1xf32>
    %196 = arith.divf %194, %195 : vector<8x1xf32>
    %197 = vector.broadcast %196 : vector<8x1xf32> to vector<8x128xf32>
    %198 = arith.subf %192, %197 : vector<8x128xf32>
    %199 = arith.mulf %198, %198 : vector<8x128xf32>
    %cst_79 = arith.constant dense<0.000000e+00> : vector<8xf32>
    %200 = vector.multi_reduction <add>, %199, %cst_79 [1] : vector<8x128xf32> to vector<8xf32>
    %201 = vector.shape_cast %200 : vector<8xf32> to vector<8x1xf32>
    %cst_80 = arith.constant 1.280000e+02 : f32
    %202 = vector.broadcast %cst_80 : f32 to vector<8x1xf32>
    %203 = arith.divf %201, %202 : vector<8x1xf32>
    %cst_81 = arith.constant 9.99999974E-6 : f32
    %204 = vector.broadcast %cst_81 : f32 to vector<8x1xf32>
    %205 = arith.addf %203, %204 : vector<8x1xf32>
    %206 = math.rsqrt %205 : vector<8x1xf32>
    %207 = vector.broadcast %206 : vector<8x1xf32> to vector<8x128xf32>
    %208 = arith.mulf %198, %207 : vector<8x128xf32>
    %c0_82 = arith.constant 0 : index
    %c0_83 = arith.constant 0 : index
    %209 = vector.load %arg18[%c0_82, %c0_83] : memref<1x128xf32, #tpu.memory_space<vmem>>, vector<1x128xf32>
    %c0_84 = arith.constant 0 : index
    %c0_85 = arith.constant 0 : index
    %210 = vector.load %arg19[%c0_84, %c0_85] : memref<1x128xf32, #tpu.memory_space<vmem>>, vector<1x128xf32>
    %211 = vector.broadcast %209 : vector<1x128xf32> to vector<8x128xf32>
    %212 = arith.mulf %208, %211 : vector<8x128xf32>
    %213 = vector.broadcast %210 : vector<1x128xf32> to vector<8x128xf32>
    %214 = arith.addf %212, %213 : vector<8x128xf32>
    %215 = arith.truncf %214 : vector<8x128xf32> to vector<8x128xbf16>
    %216 = vector.broadcast %209 : vector<1x128xf32> to vector<8x128xf32>
    %217 = arith.mulf %53, %216 : vector<8x128xf32>
    %218 = vector.broadcast %210 : vector<1x128xf32> to vector<8x128xf32>
    %219 = arith.addf %217, %218 : vector<8x128xf32>
    %220 = arith.truncf %219 : vector<8x128xf32> to vector<8x128xbf16>
    %c0_86 = arith.constant 0 : index
    %c0_87 = arith.constant 0 : index
    %221 = vector.load %arg22[%c0_86, %c0_87] : memref<128x128xbf16, #tpu.memory_space<vmem>>, vector<128x128xbf16>
    %cst_88 = arith.constant dense<0.000000e+00> : vector<8x128xf32>
    %222 = tpu.matmul %215, %221, %cst_88 {dimension_numbers = #tpu.dot_dimension_numbers<[1], [0], [0], [1], [0, 0, 1, 1], [], []>} : vector<8x128xbf16>, vector<128x128xbf16>, vector<8x128xf32> -> vector<8x128xf32>
    %c0_89 = arith.constant 0 : index
    %c0_90 = arith.constant 0 : index
    %223 = vector.load %arg23[%c0_89, %c0_90] : memref<1x128xf32, #tpu.memory_space<vmem>>, vector<1x128xf32>
    %224 = vector.broadcast %223 : vector<1x128xf32> to vector<8x128xf32>
    %225 = arith.addf %222, %224 : vector<8x128xf32>
    %c0_91 = arith.constant 0 : index
    %c0_92 = arith.constant 0 : index
    %226 = vector.load %arg24[%c0_91, %c0_92] : memref<128x128xbf16, #tpu.memory_space<vmem>>, vector<128x128xbf16>
    %cst_93 = arith.constant dense<0.000000e+00> : vector<8x128xf32>
    %227 = tpu.matmul %220, %226, %cst_93 {dimension_numbers = #tpu.dot_dimension_numbers<[1], [0], [0], [1], [0, 0, 1, 1], [], []>} : vector<8x128xbf16>, vector<128x128xbf16>, vector<8x128xf32> -> vector<8x128xf32>
    %c0_94 = arith.constant 0 : index
    %c0_95 = arith.constant 0 : index
    %228 = vector.load %arg25[%c0_94, %c0_95] : memref<1x128xf32, #tpu.memory_space<vmem>>, vector<1x128xf32>
    %229 = vector.broadcast %228 : vector<1x128xf32> to vector<8x128xf32>
    %230 = arith.addf %227, %229 : vector<8x128xf32>
    %c0_96 = arith.constant 0 : index
    %c0_97 = arith.constant 0 : index
    %231 = vector.load %arg26[%c0_96, %c0_97] : memref<128x128xbf16, #tpu.memory_space<vmem>>, vector<128x128xbf16>
    %cst_98 = arith.constant dense<0.000000e+00> : vector<8x128xf32>
    %232 = tpu.matmul %220, %231, %cst_98 {dimension_numbers = #tpu.dot_dimension_numbers<[1], [0], [0], [1], [0, 0, 1, 1], [], []>} : vector<8x128xbf16>, vector<128x128xbf16>, vector<8x128xf32> -> vector<8x128xf32>
    %c0_99 = arith.constant 0 : index
    %c0_100 = arith.constant 0 : index
    %233 = vector.load %arg27[%c0_99, %c0_100] : memref<1x128xf32, #tpu.memory_space<vmem>>, vector<1x128xf32>
    %234 = vector.broadcast %233 : vector<1x128xf32> to vector<8x128xf32>
    %235 = arith.addf %232, %234 : vector<8x128xf32>
    %236 = arith.truncf %225 : vector<8x128xf32> to vector<8x128xbf16>
    %237 = arith.truncf %230 : vector<8x128xf32> to vector<8x128xbf16>
    %238 = arith.truncf %235 : vector<8x128xf32> to vector<8x128xbf16>
    %239 = vector.shape_cast %236 : vector<8x128xbf16> to vector<1x8x128xbf16>
    %240 = vector.shape_cast %237 : vector<8x128xbf16> to vector<1x8x128xbf16>
    %241 = vector.shape_cast %238 : vector<8x128xbf16> to vector<1x8x128xbf16>
    %242 = vector.extract_strided_slice %239 {offsets = [0, 0, 0], sizes = [1, 8, 32], strides = [1, 1, 1]} : vector<1x8x128xbf16> to vector<1x8x32xbf16>
    %243 = vector.extract_strided_slice %240 {offsets = [0, 0, 0], sizes = [1, 8, 32], strides = [1, 1, 1]} : vector<1x8x128xbf16> to vector<1x8x32xbf16>
    "tpu.trace_start"() <{level = 10 : i32, message = "bqd,bkd->bqk"}> : () -> ()
    %cst_101 = arith.constant dense<0.000000e+00> : vector<1x8x8xf32>
    %244 = tpu.matmul %242, %243, %cst_101 {dimension_numbers = #tpu.dot_dimension_numbers<[2], [2], [1], [1], [0, 0, 0, 1, 1, 1], [0], [0]>} : vector<1x8x32xbf16>, vector<1x8x32xbf16>, vector<1x8x8xf32> -> vector<1x8x8xf32>
    "tpu.trace_stop"() : () -> ()
    %cst_102 = arith.constant dense<0xFF800000> : vector<1x8xf32>
    %245 = vector.multi_reduction <maximumf>, %244, %cst_102 [2] : vector<1x8x8xf32> to vector<1x8xf32>
    %246 = vector.shape_cast %245 : vector<1x8xf32> to vector<1x8x1xf32>
    %247 = vector.broadcast %246 : vector<1x8x1xf32> to vector<1x8x8xf32>
    %248 = arith.subf %244, %247 : vector<1x8x8xf32>
    %249 = math.exp %248 : vector<1x8x8xf32>
    %cst_103 = arith.constant dense<0.000000e+00> : vector<1x8xf32>
    %250 = vector.multi_reduction <add>, %249, %cst_103 [2] : vector<1x8x8xf32> to vector<1x8xf32>
    %251 = vector.shape_cast %250 : vector<1x8xf32> to vector<1x8x1xf32>
    %252 = tpu.reciprocal %251 {approx = true} : vector<1x8x1xf32> -> vector<1x8x1xf32>
    %253 = vector.broadcast %252 : vector<1x8x1xf32> to vector<1x8x8xf32>
    %254 = arith.mulf %249, %253 : vector<1x8x8xf32>
    %255 = arith.truncf %254 : vector<1x8x8xf32> to vector<1x8x8xbf16>
    %256 = vector.extract_strided_slice %241 {offsets = [0, 0, 0], sizes = [1, 8, 32], strides = [1, 1, 1]} : vector<1x8x128xbf16> to vector<1x8x32xbf16>
    "tpu.trace_start"() <{level = 10 : i32, message = "bqk,bkd->bqd"}> : () -> ()
    %cst_104 = arith.constant dense<0.000000e+00> : vector<1x8x32xf32>
    %257 = tpu.matmul %255, %256, %cst_104 {dimension_numbers = #tpu.dot_dimension_numbers<[2], [1], [1], [2], [0, 0, 0, 1, 1, 2], [0], [0]>} : vector<1x8x8xbf16>, vector<1x8x32xbf16>, vector<1x8x32xf32> -> vector<1x8x32xf32>
    "tpu.trace_stop"() : () -> ()
    %258 = vector.extract_strided_slice %239 {offsets = [0, 0, 32], sizes = [1, 8, 32], strides = [1, 1, 1]} : vector<1x8x128xbf16> to vector<1x8x32xbf16>
    %259 = vector.extract_strided_slice %240 {offsets = [0, 0, 32], sizes = [1, 8, 32], strides = [1, 1, 1]} : vector<1x8x128xbf16> to vector<1x8x32xbf16>
    "tpu.trace_start"() <{level = 10 : i32, message = "bqd,bkd->bqk"}> : () -> ()
    %cst_105 = arith.constant dense<0.000000e+00> : vector<1x8x8xf32>
    %260 = tpu.matmul %258, %259, %cst_105 {dimension_numbers = #tpu.dot_dimension_numbers<[2], [2], [1], [1], [0, 0, 0, 1, 1, 1], [0], [0]>} : vector<1x8x32xbf16>, vector<1x8x32xbf16>, vector<1x8x8xf32> -> vector<1x8x8xf32>
    "tpu.trace_stop"() : () -> ()
    %cst_106 = arith.constant dense<0xFF800000> : vector<1x8xf32>
    %261 = vector.multi_reduction <maximumf>, %260, %cst_106 [2] : vector<1x8x8xf32> to vector<1x8xf32>
    %262 = vector.shape_cast %261 : vector<1x8xf32> to vector<1x8x1xf32>
    %263 = vector.broadcast %262 : vector<1x8x1xf32> to vector<1x8x8xf32>
    %264 = arith.subf %260, %263 : vector<1x8x8xf32>
    %265 = math.exp %264 : vector<1x8x8xf32>
    %cst_107 = arith.constant dense<0.000000e+00> : vector<1x8xf32>
    %266 = vector.multi_reduction <add>, %265, %cst_107 [2] : vector<1x8x8xf32> to vector<1x8xf32>
    %267 = vector.shape_cast %266 : vector<1x8xf32> to vector<1x8x1xf32>
    %268 = tpu.reciprocal %267 {approx = true} : vector<1x8x1xf32> -> vector<1x8x1xf32>
    %269 = vector.broadcast %268 : vector<1x8x1xf32> to vector<1x8x8xf32>
    %270 = arith.mulf %265, %269 : vector<1x8x8xf32>
    %271 = arith.truncf %270 : vector<1x8x8xf32> to vector<1x8x8xbf16>
    %272 = vector.extract_strided_slice %241 {offsets = [0, 0, 32], sizes = [1, 8, 32], strides = [1, 1, 1]} : vector<1x8x128xbf16> to vector<1x8x32xbf16>
    "tpu.trace_start"() <{level = 10 : i32, message = "bqk,bkd->bqd"}> : () -> ()
    %cst_108 = arith.constant dense<0.000000e+00> : vector<1x8x32xf32>
    %273 = tpu.matmul %271, %272, %cst_108 {dimension_numbers = #tpu.dot_dimension_numbers<[2], [1], [1], [2], [0, 0, 0, 1, 1, 2], [0], [0]>} : vector<1x8x8xbf16>, vector<1x8x32xbf16>, vector<1x8x32xf32> -> vector<1x8x32xf32>
    "tpu.trace_stop"() : () -> ()
    %274 = vector.extract_strided_slice %239 {offsets = [0, 0, 64], sizes = [1, 8, 32], strides = [1, 1, 1]} : vector<1x8x128xbf16> to vector<1x8x32xbf16>
    %275 = vector.extract_strided_slice %240 {offsets = [0, 0, 64], sizes = [1, 8, 32], strides = [1, 1, 1]} : vector<1x8x128xbf16> to vector<1x8x32xbf16>
    "tpu.trace_start"() <{level = 10 : i32, message = "bqd,bkd->bqk"}> : () -> ()
    %cst_109 = arith.constant dense<0.000000e+00> : vector<1x8x8xf32>
    %276 = tpu.matmul %274, %275, %cst_109 {dimension_numbers = #tpu.dot_dimension_numbers<[2], [2], [1], [1], [0, 0, 0, 1, 1, 1], [0], [0]>} : vector<1x8x32xbf16>, vector<1x8x32xbf16>, vector<1x8x8xf32> -> vector<1x8x8xf32>
    "tpu.trace_stop"() : () -> ()
    %cst_110 = arith.constant dense<0xFF800000> : vector<1x8xf32>
    %277 = vector.multi_reduction <maximumf>, %276, %cst_110 [2] : vector<1x8x8xf32> to vector<1x8xf32>
    %278 = vector.shape_cast %277 : vector<1x8xf32> to vector<1x8x1xf32>
    %279 = vector.broadcast %278 : vector<1x8x1xf32> to vector<1x8x8xf32>
    %280 = arith.subf %276, %279 : vector<1x8x8xf32>
    %281 = math.exp %280 : vector<1x8x8xf32>
    %cst_111 = arith.constant dense<0.000000e+00> : vector<1x8xf32>
    %282 = vector.multi_reduction <add>, %281, %cst_111 [2] : vector<1x8x8xf32> to vector<1x8xf32>
    %283 = vector.shape_cast %282 : vector<1x8xf32> to vector<1x8x1xf32>
    %284 = tpu.reciprocal %283 {approx = true} : vector<1x8x1xf32> -> vector<1x8x1xf32>
    %285 = vector.broadcast %284 : vector<1x8x1xf32> to vector<1x8x8xf32>
    %286 = arith.mulf %281, %285 : vector<1x8x8xf32>
    %287 = arith.truncf %286 : vector<1x8x8xf32> to vector<1x8x8xbf16>
    %288 = vector.extract_strided_slice %241 {offsets = [0, 0, 64], sizes = [1, 8, 32], strides = [1, 1, 1]} : vector<1x8x128xbf16> to vector<1x8x32xbf16>
    "tpu.trace_start"() <{level = 10 : i32, message = "bqk,bkd->bqd"}> : () -> ()
    %cst_112 = arith.constant dense<0.000000e+00> : vector<1x8x32xf32>
    %289 = tpu.matmul %287, %288, %cst_112 {dimension_numbers = #tpu.dot_dimension_numbers<[2], [1], [1], [2], [0, 0, 0, 1, 1, 2], [0], [0]>} : vector<1x8x8xbf16>, vector<1x8x32xbf16>, vector<1x8x32xf32> -> vector<1x8x32xf32>
    "tpu.trace_stop"() : () -> ()
    %290 = vector.extract_strided_slice %239 {offsets = [0, 0, 96], sizes = [1, 8, 32], strides = [1, 1, 1]} : vector<1x8x128xbf16> to vector<1x8x32xbf16>
    %291 = vector.extract_strided_slice %240 {offsets = [0, 0, 96], sizes = [1, 8, 32], strides = [1, 1, 1]} : vector<1x8x128xbf16> to vector<1x8x32xbf16>
    "tpu.trace_start"() <{level = 10 : i32, message = "bqd,bkd->bqk"}> : () -> ()
    %cst_113 = arith.constant dense<0.000000e+00> : vector<1x8x8xf32>
    %292 = tpu.matmul %290, %291, %cst_113 {dimension_numbers = #tpu.dot_dimension_numbers<[2], [2], [1], [1], [0, 0, 0, 1, 1, 1], [0], [0]>} : vector<1x8x32xbf16>, vector<1x8x32xbf16>, vector<1x8x8xf32> -> vector<1x8x8xf32>
    "tpu.trace_stop"() : () -> ()
    %cst_114 = arith.constant dense<0xFF800000> : vector<1x8xf32>
    %293 = vector.multi_reduction <maximumf>, %292, %cst_114 [2] : vector<1x8x8xf32> to vector<1x8xf32>
    %294 = vector.shape_cast %293 : vector<1x8xf32> to vector<1x8x1xf32>
    %295 = vector.broadcast %294 : vector<1x8x1xf32> to vector<1x8x8xf32>
    %296 = arith.subf %292, %295 : vector<1x8x8xf32>
    %297 = math.exp %296 : vector<1x8x8xf32>
    %cst_115 = arith.constant dense<0.000000e+00> : vector<1x8xf32>
    %298 = vector.multi_reduction <add>, %297, %cst_115 [2] : vector<1x8x8xf32> to vector<1x8xf32>
    %299 = vector.shape_cast %298 : vector<1x8xf32> to vector<1x8x1xf32>
    %300 = tpu.reciprocal %299 {approx = true} : vector<1x8x1xf32> -> vector<1x8x1xf32>
    %301 = vector.broadcast %300 : vector<1x8x1xf32> to vector<1x8x8xf32>
    %302 = arith.mulf %297, %301 : vector<1x8x8xf32>
    %303 = arith.truncf %302 : vector<1x8x8xf32> to vector<1x8x8xbf16>
    %304 = vector.extract_strided_slice %241 {offsets = [0, 0, 96], sizes = [1, 8, 32], strides = [1, 1, 1]} : vector<1x8x128xbf16> to vector<1x8x32xbf16>
    "tpu.trace_start"() <{level = 10 : i32, message = "bqk,bkd->bqd"}> : () -> ()
    %cst_116 = arith.constant dense<0.000000e+00> : vector<1x8x32xf32>
    %305 = tpu.matmul %303, %304, %cst_116 {dimension_numbers = #tpu.dot_dimension_numbers<[2], [1], [1], [2], [0, 0, 0, 1, 1, 2], [0], [0]>} : vector<1x8x8xbf16>, vector<1x8x32xbf16>, vector<1x8x32xf32> -> vector<1x8x32xf32>
    "tpu.trace_stop"() : () -> ()
    %306 = tpu.concatenate %257, %273, %289, %305 in 2 : vector<1x8x32xf32>, vector<1x8x32xf32>, vector<1x8x32xf32>, vector<1x8x32xf32> -> vector<1x8x128xf32>
    %307 = arith.addf %191, %306 : vector<1x8x128xf32>
    %c0_117 = arith.constant 0 : index
    %c0_118 = arith.constant 0 : index
    %308 = vector.load %arg20[%c0_117, %c0_118] : memref<1x128xf32, #tpu.memory_space<vmem>>, vector<1x128xf32>
    %c0_119 = arith.constant 0 : index
    %c0_120 = arith.constant 0 : index
    %309 = vector.load %arg21[%c0_119, %c0_120] : memref<1x128xf32, #tpu.memory_space<vmem>>, vector<1x128xf32>
    %310 = vector.shape_cast %307 : vector<1x8x128xf32> to vector<8x128xf32>
    %cst_121 = arith.constant dense<0.000000e+00> : vector<8xf32>
    %311 = vector.multi_reduction <add>, %310, %cst_121 [1] : vector<8x128xf32> to vector<8xf32>
    %312 = vector.shape_cast %311 : vector<8xf32> to vector<8x1xf32>
    %cst_122 = arith.constant 1.280000e+02 : f32
    %313 = vector.broadcast %cst_122 : f32 to vector<8x1xf32>
    %314 = arith.divf %312, %313 : vector<8x1xf32>
    %315 = vector.broadcast %314 : vector<8x1xf32> to vector<8x128xf32>
    %316 = arith.subf %310, %315 : vector<8x128xf32>
    %317 = arith.mulf %316, %316 : vector<8x128xf32>
    %cst_123 = arith.constant dense<0.000000e+00> : vector<8xf32>
    %318 = vector.multi_reduction <add>, %317, %cst_123 [1] : vector<8x128xf32> to vector<8xf32>
    %319 = vector.shape_cast %318 : vector<8xf32> to vector<8x1xf32>
    %cst_124 = arith.constant 1.280000e+02 : f32
    %320 = vector.broadcast %cst_124 : f32 to vector<8x1xf32>
    %321 = arith.divf %319, %320 : vector<8x1xf32>
    %cst_125 = arith.constant 9.99999974E-6 : f32
    %322 = vector.broadcast %cst_125 : f32 to vector<8x1xf32>
    %323 = arith.addf %321, %322 : vector<8x1xf32>
    %324 = math.rsqrt %323 : vector<8x1xf32>
    %325 = vector.broadcast %324 : vector<8x1xf32> to vector<8x128xf32>
    %326 = arith.mulf %316, %325 : vector<8x128xf32>
    %327 = vector.broadcast %308 : vector<1x128xf32> to vector<8x128xf32>
    %328 = arith.mulf %326, %327 : vector<8x128xf32>
    %329 = vector.broadcast %309 : vector<1x128xf32> to vector<8x128xf32>
    %330 = arith.addf %328, %329 : vector<8x128xf32>
    %331 = arith.truncf %330 : vector<8x128xf32> to vector<8x128xbf16>
    %c0_126 = arith.constant 0 : index
    %c0_127 = arith.constant 0 : index
    %332 = vector.load %arg28[%c0_126, %c0_127] : memref<128x256xbf16, #tpu.memory_space<vmem>>, vector<128x256xbf16>
    %cst_128 = arith.constant dense<0.000000e+00> : vector<8x256xf32>
    %333 = tpu.matmul %331, %332, %cst_128 {dimension_numbers = #tpu.dot_dimension_numbers<[1], [0], [0], [1], [0, 0, 1, 1], [], []>} : vector<8x128xbf16>, vector<128x256xbf16>, vector<8x256xf32> -> vector<8x256xf32>
    %c0_129 = arith.constant 0 : index
    %c0_130 = arith.constant 0 : index
    %334 = vector.load %arg29[%c0_129, %c0_130] : memref<1x256xf32, #tpu.memory_space<vmem>>, vector<1x256xf32>
    %335 = vector.broadcast %334 : vector<1x256xf32> to vector<8x256xf32>
    %336 = arith.addf %333, %335 : vector<8x256xf32>
    %cst_131 = arith.constant 0.000000e+00 : f32
    %337 = vector.broadcast %cst_131 : f32 to vector<8x256xf32>
    %338 = arith.maximumf %336, %337 : vector<8x256xf32>
    %339 = arith.truncf %338 : vector<8x256xf32> to vector<8x256xbf16>
    %c0_132 = arith.constant 0 : index
    %c0_133 = arith.constant 0 : index
    %340 = vector.load %arg30[%c0_132, %c0_133] : memref<256x128xbf16, #tpu.memory_space<vmem>>, vector<256x128xbf16>
    %cst_134 = arith.constant dense<0.000000e+00> : vector<8x128xf32>
    %341 = tpu.matmul %339, %340, %cst_134 {dimension_numbers = #tpu.dot_dimension_numbers<[1], [0], [0], [1], [0, 0, 1, 1], [], []>} : vector<8x256xbf16>, vector<256x128xbf16>, vector<8x128xf32> -> vector<8x128xf32>
    %c0_135 = arith.constant 0 : index
    %c0_136 = arith.constant 0 : index
    %342 = vector.load %arg31[%c0_135, %c0_136] : memref<1x128xf32, #tpu.memory_space<vmem>>, vector<1x128xf32>
    %343 = vector.broadcast %342 : vector<1x128xf32> to vector<8x128xf32>
    %344 = arith.addf %341, %343 : vector<8x128xf32>
    %345 = vector.shape_cast %344 : vector<8x128xf32> to vector<1x8x128xf32>
    %346 = arith.addf %307, %345 : vector<1x8x128xf32>
    %c0_137 = arith.constant 0 : index
    %c0_138 = arith.constant 0 : index
    %c0_139 = arith.constant 0 : index
    %347 = vector.load %arg32[%c0_137, %c0_138, %c0_139] : memref<1x8x128xf32, #tpu.memory_space<vmem>>, vector<1x8x128xf32>
    tpu.vector_store %arg32[%c0_137, %c0_138, %c0_139], %346 {strides = array<i32>} : memref<1x8x128xf32, #tpu.memory_space<vmem>>, vector<1x8x128xf32>,
    return
  }
  func.func @transform_0(%arg0: i32) -> (i32, i32, i32) {
    %c0_i32 = arith.constant 0 : i32
    %c0_i32_0 = arith.constant 0 : i32
    %c0_i32_1 = arith.constant 0 : i32
    return %arg0, %c0_i32, %c0_i32_0 : i32, i32, i32
  }
  func.func @transform_1(%arg0: i32) -> (i32, i32, i32) {
    %c0_i32 = arith.constant 0 : i32
    %c0_i32_0 = arith.constant 0 : i32
    %c0_i32_1 = arith.constant 0 : i32
    return %arg0, %c0_i32, %c0_i32_0 : i32, i32, i32
  }
  func.func @transform_2(%arg0: i32) -> (i32, i32, i32) {
    %c0_i32 = arith.constant 0 : i32
    %c0_i32_0 = arith.constant 0 : i32
    %c0_i32_1 = arith.constant 0 : i32
    return %arg0, %c0_i32, %c0_i32_0 : i32, i32, i32
  }
  func.func @transform_3(%arg0: i32) -> (i32, i32) {
    %c0_i32 = arith.constant 0 : i32
    %c0_i32_0 = arith.constant 0 : i32
    %c0_i32_1 = arith.constant 0 : i32
    return %c0_i32, %c0_i32_0 : i32, i32
  }
  func.func @transform_4(%arg0: i32) -> (i32, i32) {
    %c0_i32 = arith.constant 0 : i32
    %c0_i32_0 = arith.constant 0 : i32
    %c0_i32_1 = arith.constant 0 : i32
    return %c0_i32, %c0_i32_0 : i32, i32
  }
  func.func @transform_5(%arg0: i32) -> (i32, i32) {
    %c0_i32 = arith.constant 0 : i32
    %c0_i32_0 = arith.constant 0 : i32
    %c0_i32_1 = arith.constant 0 : i32
    return %c0_i32, %c0_i32_0 : i32, i32
  }
  func.func @transform_6(%arg0: i32) -> (i32, i32) {
    %c0_i32 = arith.constant 0 : i32
    %c0_i32_0 = arith.constant 0 : i32
    %c0_i32_1 = arith.constant 0 : i32
    return %c0_i32, %c0_i32_0 : i32, i32
  }
  func.func @transform_7(%arg0: i32) -> (i32, i32) {
    %c0_i32 = arith.constant 0 : i32
    %c0_i32_0 = arith.constant 0 : i32
    %c0_i32_1 = arith.constant 0 : i32
    return %c0_i32, %c0_i32_0 : i32, i32
  }
  func.func @transform_8(%arg0: i32) -> (i32, i32) {
    %c0_i32 = arith.constant 0 : i32
    %c0_i32_0 = arith.constant 0 : i32
    %c0_i32_1 = arith.constant 0 : i32
    return %c0_i32, %c0_i32_0 : i32, i32
  }
  func.func @transform_9(%arg0: i32) -> (i32, i32) {
    %c0_i32 = arith.constant 0 : i32
    %c0_i32_0 = arith.constant 0 : i32
    %c0_i32_1 = arith.constant 0 : i32
    return %c0_i32, %c0_i32_0 : i32, i32
  }
  func.func @transform_10(%arg0: i32) -> (i32, i32) {
    %c0_i32 = arith.constant 0 : i32
    %c0_i32_0 = arith.constant 0 : i32
    %c0_i32_1 = arith.constant 0 : i32
    return %c0_i32, %c0_i32_0 : i32, i32
  }
  func.func @transform_11(%arg0: i32) -> (i32, i32) {
    %c0_i32 = arith.constant 0 : i32
    %c0_i32_0 = arith.constant 0 : i32
    %c0_i32_1 = arith.constant 0 : i32
    return %c0_i32, %c0_i32_0 : i32, i32
  }
  func.func @transform_12(%arg0: i32) -> (i32, i32) {
    %c0_i32 = arith.constant 0 : i32
    %c0_i32_0 = arith.constant 0 : i32
    %c0_i32_1 = arith.constant 0 : i32
    return %c0_i32, %c0_i32_0 : i32, i32
  }
  func.func @transform_13(%arg0: i32) -> (i32, i32) {
    %c0_i32 = arith.constant 0 : i32
    %c0_i32_0 = arith.constant 0 : i32
    %c0_i32_1 = arith.constant 0 : i32
    return %c0_i32, %c0_i32_0 : i32, i32
  }
  func.func @transform_14(%arg0: i32) -> (i32, i32) {
    %c0_i32 = arith.constant 0 : i32
    %c0_i32_0 = arith.constant 0 : i32
    %c0_i32_1 = arith.constant 0 : i32
    return %c0_i32, %c0_i32_0 : i32, i32
  }
  func.func @transform_15(%arg0: i32) -> (i32, i32) {
    %c0_i32 = arith.constant 0 : i32
    %c0_i32_0 = arith.constant 0 : i32
    %c0_i32_1 = arith.constant 0 : i32
    return %c0_i32, %c0_i32_0 : i32, i32
  }
  func.func @transform_16(%arg0: i32) -> (i32, i32) {
    %c0_i32 = arith.constant 0 : i32
    %c0_i32_0 = arith.constant 0 : i32
    %c0_i32_1 = arith.constant 0 : i32
    return %c0_i32, %c0_i32_0 : i32, i32
  }
  func.func @transform_17(%arg0: i32) -> (i32, i32) {
    %c0_i32 = arith.constant 0 : i32
    %c0_i32_0 = arith.constant 0 : i32
    %c0_i32_1 = arith.constant 0 : i32
    return %c0_i32, %c0_i32_0 : i32, i32
  }
  func.func @transform_18(%arg0: i32) -> (i32, i32) {
    %c0_i32 = arith.constant 0 : i32
    %c0_i32_0 = arith.constant 0 : i32
    %c0_i32_1 = arith.constant 0 : i32
    return %c0_i32, %c0_i32_0 : i32, i32
  }
  func.func @transform_19(%arg0: i32) -> (i32, i32) {
    %c0_i32 = arith.constant 0 : i32
    %c0_i32_0 = arith.constant 0 : i32
    %c0_i32_1 = arith.constant 0 : i32
    return %c0_i32, %c0_i32_0 : i32, i32
  }
  func.func @transform_20(%arg0: i32) -> (i32, i32) {
    %c0_i32 = arith.constant 0 : i32
    %c0_i32_0 = arith.constant 0 : i32
    %c0_i32_1 = arith.constant 0 : i32
    return %c0_i32, %c0_i32_0 : i32, i32
  }
  func.func @transform_21(%arg0: i32) -> (i32, i32) {
    %c0_i32 = arith.constant 0 : i32
    %c0_i32_0 = arith.constant 0 : i32
    %c0_i32_1 = arith.constant 0 : i32
    return %c0_i32, %c0_i32_0 : i32, i32
  }
  func.func @transform_22(%arg0: i32) -> (i32, i32) {
    %c0_i32 = arith.constant 0 : i32
    %c0_i32_0 = arith.constant 0 : i32
    %c0_i32_1 = arith.constant 0 : i32
    return %c0_i32, %c0_i32_0 : i32, i32
  }
  func.func @transform_23(%arg0: i32) -> (i32, i32) {
    %c0_i32 = arith.constant 0 : i32
    %c0_i32_0 = arith.constant 0 : i32
    %c0_i32_1 = arith.constant 0 : i32
    return %c0_i32, %c0_i32_0 : i32, i32
  }
  func.func @transform_24(%arg0: i32) -> (i32, i32) {
    %c0_i32 = arith.constant 0 : i32
    %c0_i32_0 = arith.constant 0 : i32
    %c0_i32_1 = arith.constant 0 : i32
    return %c0_i32, %c0_i32_0 : i32, i32
  }
  func.func @transform_25(%arg0: i32) -> (i32, i32) {
    %c0_i32 = arith.constant 0 : i32
    %c0_i32_0 = arith.constant 0 : i32
    %c0_i32_1 = arith.constant 0 : i32
    return %c0_i32, %c0_i32_0 : i32, i32
  }
  func.func @transform_26(%arg0: i32) -> (i32, i32) {
    %c0_i32 = arith.constant 0 : i32
    %c0_i32_0 = arith.constant 0 : i32
    %c0_i32_1 = arith.constant 0 : i32
    return %c0_i32, %c0_i32_0 : i32, i32
  }
  func.func @transform_27(%arg0: i32) -> (i32, i32) {
    %c0_i32 = arith.constant 0 : i32
    %c0_i32_0 = arith.constant 0 : i32
    %c0_i32_1 = arith.constant 0 : i32
    return %c0_i32, %c0_i32_0 : i32, i32
  }
  func.func @transform_28(%arg0: i32) -> (i32, i32) {
    %c0_i32 = arith.constant 0 : i32
    %c0_i32_0 = arith.constant 0 : i32
    %c0_i32_1 = arith.constant 0 : i32
    return %c0_i32, %c0_i32_0 : i32, i32
  }
  func.func @transform_29(%arg0: i32) -> (i32, i32) {
    %c0_i32 = arith.constant 0 : i32
    %c0_i32_0 = arith.constant 0 : i32
    %c0_i32_1 = arith.constant 0 : i32
    return %c0_i32, %c0_i32_0 : i32, i32
  }
  func.func @transform_30(%arg0: i32) -> (i32, i32) {
    %c0_i32 = arith.constant 0 : i32
    %c0_i32_0 = arith.constant 0 : i32
    %c0_i32_1 = arith.constant 0 : i32
    return %c0_i32, %c0_i32_0 : i32, i32
  }
  func.func @transform_31(%arg0: i32) -> (i32, i32, i32) {
    %c0_i32 = arith.constant 0 : i32
    %c0_i32_0 = arith.constant 0 : i32
    %c0_i32_1 = arith.constant 0 : i32
    return %arg0, %c0_i32, %c0_i32_0 : i32, i32, i32
  }
}

</mosaic_0001>

<llo_original>
// kernel: tpu_custom_call.1
$region0: #{tpu_custom_call.1}
  #allocation0 [shape = 'u32[]', space=smem, size = 0x4, offset = 0x4, fixed_abs, tag = 'smem constant byte address 0x4 - core index']
  #allocation1 [shape = 'u32[144,128]{1,0:T(1,128)}', space=vmem, size = 0x12000, scoped, tag = 'internal scratch']
  %s0 = inlined_call_operand.smem [shape: u32[32], index: -1, kind: input, shape index: {}]
  %s1 = sld [smem:[%s0]]
  %s2 = scalar_lea.smem %s0, 1
  %s3 = sld [smem:[%s2]]
  %s4 = scalar_lea.smem %s0, 2
  %s5 = sld [smem:[%s4]]
  %s6 = scalar_lea.smem %s0, 3
  %s7 = sld [smem:[%s6]]
  %s8 = scalar_lea.smem %s0, 4
  %s9 = sld [smem:[%s8]]
  %s10 = scalar_lea.smem %s0, 5
  %s11 = sld [smem:[%s10]]
  %s12 = scalar_lea.smem %s0, 6
  %s13 = sld [smem:[%s12]]
  %s14 = scalar_lea.smem %s0, 7
  %s15 = sld [smem:[%s14]]
  %s16 = scalar_lea.smem %s0, 8
  %s17 = sld [smem:[%s16]]
  %s18 = scalar_lea.smem %s0, 9
  %s19 = sld [smem:[%s18]]
  %s20 = scalar_lea.smem %s0, 10
  %s21 = sld [smem:[%s20]]
  %s22 = scalar_lea.smem %s0, 11
  %s23 = sld [smem:[%s22]]
  %s24 = scalar_lea.smem %s0, 12
  %s25 = sld [smem:[%s24]]
  %s26 = scalar_lea.smem %s0, 13
  %s27 = sld [smem:[%s26]]
  %s28 = scalar_lea.smem %s0, 14
  %s29 = sld [smem:[%s28]]
  %s30 = scalar_lea.smem %s0, 15
  %s31 = sld [smem:[%s30]]
  %s32 = scalar_lea.smem %s0, 16
  %s33 = sld [smem:[%s32]]
  %s34 = scalar_lea.smem %s0, 17
  %s35 = sld [smem:[%s34]]
  %s36 = scalar_lea.smem %s0, 18
  %s37 = sld [smem:[%s36]]
  %s38 = scalar_lea.smem %s0, 19
  %s39 = sld [smem:[%s38]]
  %s40 = scalar_lea.smem %s0, 20
  %s41 = sld [smem:[%s40]]
  %s42 = scalar_lea.smem %s0, 21
  %s43 = sld [smem:[%s42]]
  %s44 = scalar_lea.smem %s0, 22
  %s45 = sld [smem:[%s44]]
  %s46 = scalar_lea.smem %s0, 23
  %s47 = sld [smem:[%s46]]
  %s48 = scalar_lea.smem %s0, 24
  %s49 = sld [smem:[%s48]]
  %s50 = scalar_lea.smem %s0, 25
  %s51 = sld [smem:[%s50]]
  %s52 = scalar_lea.smem %s0, 26
  %s53 = sld [smem:[%s52]]
  %s54 = scalar_lea.smem %s0, 27
  %s55 = sld [smem:[%s54]]
  %s56 = scalar_lea.smem %s0, 28
  %s57 = sld [smem:[%s56]]
  %s58 = scalar_lea.smem %s0, 29
  %s59 = sld [smem:[%s58]]
  %s60 = scalar_lea.smem %s0, 30
  %s61 = sld [smem:[%s60]]
  %s62 = scalar_lea.smem %s0, 31
  %s63 = sld [smem:[%s62]]
  %s64 = sld [smem:[#allocation0]]
  $region209: #{tpu_custom_call.1} parent=0
    _
  %s66 = ssub.s32 1, %s64
  %s67 = scalar_select 0, %s66, %s64
  $region1: #{tpu_custom_call.1} parent=0
    #allocation2 [shape = 'u8[8192]{0}', space=vmem, size = 0x2000, scoped, tag = 'input window, operand 0']
    #allocation3 [shape = 's32[2]{0}', space=sflag, size = 0x8, scoped, tag = 'scoped memory for tpu_custom_call.1']
    #allocation4 [shape = 's32[2]{0}', space=sflag, size = 0x8, scoped, tag = 'scoped memory for tpu_custom_call.1']
    #allocation5 [shape = 'u8[8192]{0}', space=vmem, size = 0x2000, scoped, tag = 'input window, operand 1']
    #allocation6 [shape = 's32[2]{0}', space=sflag, size = 0x8, scoped, tag = 'scoped memory for tpu_custom_call.1']
    #allocation7 [shape = 'u8[8192]{0}', space=vmem, size = 0x2000, scoped, tag = 'input window, operand 2']
    #allocation8 [shape = 'u8[32768]{0}', space=vmem, size = 0x8000, scoped, tag = 'input window, operand 7, single buffered']
    #allocation9 [shape = 's32[1]{0}', space=sflag, size = 0x4, scoped, tag = 'scoped memory for tpu_custom_call.1']
    #allocation10 [shape = 'u8[32768]{0}', space=vmem, size = 0x8000, scoped, tag = 'input window, operand 9, single buffered']
    #allocation11 [shape = 'u8[32768]{0}', space=vmem, size = 0x8000, scoped, tag = 'input window, operand 11, single buffered']
    #allocation12 [shape = 's32[1]{0}', space=sflag, size = 0x4, scoped, tag = 'scoped memory for tpu_custom_call.1']
    #allocation13 [shape = 'u8[65536]{0}', space=vmem, size = 0x10000, scoped, tag = 'input window, operand 13, single buffered']
    #allocation14 [shape = 'u8[65536]{0}', space=vmem, size = 0x10000, scoped, tag = 'input window, operand 15, single buffered']
    #allocation15 [shape = 's32[1]{0}', space=sflag, size = 0x4, scoped, tag = 'scoped memory for tpu_custom_call.1']
    #allocation16 [shape = 'u8[512]{0}', space=vmem, size = 0x400, scoped, tag = 'input window, operand 20, single buffered']
    #allocation17 [shape = 'u8[32768]{0}', space=vmem, size = 0x8000, scoped, tag = 'input window, operand 23, single buffered']
    #allocation18 [shape = 's32[1]{0}', space=sflag, size = 0x4, scoped, tag = 'scoped memory for tpu_custom_call.1']
    #allocation19 [shape = 'u8[32768]{0}', space=vmem, size = 0x8000, scoped, tag = 'input window, operand 25, single buffered']
    #allocation20 [shape = 'u8[65536]{0}', space=vmem, size = 0x10000, scoped, tag = 'input window, operand 27, single buffered']
    #allocation21 [shape = 's32[1]{0}', space=sflag, size = 0x4, scoped, tag = 'scoped memory for tpu_custom_call.1']
    #allocation22 [shape = 'u8[65536]{0}', space=vmem, size = 0x10000, scoped, tag = 'input window, operand 29, single buffered']
    #allocation23 [shape = 'u8[8192]{0}', space=vmem, size = 0x2000, scoped, tag = 'output window, operand 0']
    %68 = vsyncpa [#allocation3], 0
    %s69 = scalar_lea.sflag [#allocation3], 1
    %70 = vsyncpa %s69, 0
    %71 = vsyncpa [#allocation6], 0
    %s72 = scalar_lea.sflag [#allocation6], 1
    %73 = vsyncpa %s72, 0
    %74 = vsyncpa [#allocation9], 0
    %75 = vsyncpa [#allocation12], 0
    %76 = vsyncpa [#allocation15], 0
    %77 = vsyncpa [#allocation18], 0
    %78 = vsyncpa [#allocation21], 0
    %79 = vsyncpa [#allocation4], 0
    %s80 = scalar_lea.sflag [#allocation4], 1
    %81 = vsyncpa %s80, 0
    loop: start=0, step=1, limit=4
    $region2: #{tpu_custom_call.1} parent=1 // loop_pre_header
      _
    $region3: #{tpu_custom_call.1} parent=1 // loop_header
      %s83 = sphi 0, %s87
      %p84 = scmp.ge.s32.totalorder %s83, 4
      %s93 = sphi 0, %s95
      %s96 = sphi 0, %s93
      %s97 = sphi 0, %s96
      %s113 = sphi 0, %s97
      %s119 = sphi 0, %s121
      %s122 = sphi 0, %s119
      %s123 = sphi 0, %s122
      %s139 = sphi 0, %s123
      %s145 = sphi 0, %s147
      %s148 = sphi 0, %s145
      %s149 = sphi 0, %s148
      %s165 = sphi 0, %s149
      %s169 = sphi 0, %s169
      %s171 = sphi 0, %s169
      %s172 = sphi 0, %s171
      %s186 = sphi 0, %s172
      %s190 = sphi 0, %s190
      %s192 = sphi 0, %s190
      %s193 = sphi 0, %s192
      %s207 = sphi 0, %s193
      %s211 = sphi 0, %s211
      %s213 = sphi 0, %s211
      %s214 = sphi 0, %s213
      %s228 = sphi 0, %s214
      %s232 = sphi 0, %s232
      %s234 = sphi 0, %s232
      %s235 = sphi 0, %s234
      %s249 = sphi 0, %s235
      %s253 = sphi 0, %s253
      %s255 = sphi 0, %s253
      %s256 = sphi 0, %s255
      %s270 = sphi 0, %s256
      %s274 = sphi 0, %s274
      %s276 = sphi 0, %s274
      %s277 = sphi 0, %s276
      %s291 = sphi 0, %s277
      %s295 = sphi 0, %s295
      %s297 = sphi 0, %s295
      %s298 = sphi 0, %s297
      %s312 = sphi 0, %s298
      %s316 = sphi 0, %s316
      %s318 = sphi 0, %s316
      %s319 = sphi 0, %s318
      %s333 = sphi 0, %s319
      %s337 = sphi 0, %s337
      %s339 = sphi 0, %s337
      %s340 = sphi 0, %s339
      %s354 = sphi 0, %s340
      %s358 = sphi 0, %s358
      %s360 = sphi 0, %s358
      %s361 = sphi 0, %s360
      %s375 = sphi 0, %s361
      %s379 = sphi 0, %s379
      %s381 = sphi 0, %s379
      %s382 = sphi 0, %s381
      %s396 = sphi 0, %s382
      %s400 = sphi 0, %s400
      %s402 = sphi 0, %s400
      %s403 = sphi 0, %s402
      %s417 = sphi 0, %s403
      %s421 = sphi 0, %s421
      %s423 = sphi 0, %s421
      %s424 = sphi 0, %s423
      %s438 = sphi 0, %s424
      %s442 = sphi 0, %s442
      %s444 = sphi 0, %s442
      %s445 = sphi 0, %s444
      %s459 = sphi 0, %s445
      %s463 = sphi 0, %s463
      %s465 = sphi 0, %s463
      %s466 = sphi 0, %s465
      %s480 = sphi 0, %s466
      %s484 = sphi 0, %s484
      %s486 = sphi 0, %s484
      %s487 = sphi 0, %s486
      %s501 = sphi 0, %s487
      %s505 = sphi 0, %s505
      %s507 = sphi 0, %s505
      %s508 = sphi 0, %s507
      %s522 = sphi 0, %s508
      %s526 = sphi 0, %s526
      %s528 = sphi 0, %s526
      %s529 = sphi 0, %s528
      %s543 = sphi 0, %s529
      %s547 = sphi 0, %s547
      %s549 = sphi 0, %s547
      %s550 = sphi 0, %s549
      %s564 = sphi 0, %s550
      %s568 = sphi 0, %s568
      %s570 = sphi 0, %s568
      %s571 = sphi 0, %s570
      %s585 = sphi 0, %s571
      %s589 = sphi 0, %s589
      %s591 = sphi 0, %s589
      %s592 = sphi 0, %s591
      %s606 = sphi 0, %s592
      %s610 = sphi 0, %s610
      %s612 = sphi 0, %s610
      %s613 = sphi 0, %s612
      %s627 = sphi 0, %s613
      %s631 = sphi 0, %s631
      %s633 = sphi 0, %s631
      %s634 = sphi 0, %s633
      %s648 = sphi 0, %s634
      %s652 = sphi 0, %s652
      %s654 = sphi 0, %s652
      %s655 = sphi 0, %s654
      %s669 = sphi 0, %s655
      %s673 = sphi 0, %s673
      %s675 = sphi 0, %s673
      %s676 = sphi 0, %s675
      %s690 = sphi 0, %s676
      %s694 = sphi 0, %s694
      %s696 = sphi 0, %s694
      %s697 = sphi 0, %s696
      %s711 = sphi 0, %s697
      %s715 = sphi 0, %s715
      %s717 = sphi 0, %s715
      %s718 = sphi 0, %s717
      %s732 = sphi 0, %s718
      %s736 = sphi 0, %s736
      %s738 = sphi 0, %s736
      %s739 = sphi 0, %s738
      %s753 = sphi 0, %s739
      %s759 = sphi 0, %s761
      %s762 = sphi 0, %s759
      %s763 = sphi 0, %s762
      %s779 = sphi 0, %s763
    $region4: #{tpu_custom_call.1} parent=1 // loop_header_branch
      %86 = sbr.rel (%p84) target = $region8
    $region5: #{tpu_custom_call.1} parent=1 // loop_body
      %s88 = ssub.s32 %s83, 1
      %s89 = ssub.s32 %s83, 2
      %s90 = sadd.s32 %s83, 1
      %s91 = ssub.s32 %s83, %s90
      %p92 = scmp.eq.s32.totalorder %s91, 0
      %s94 = sadd.s32 %s93, 1
      %s95 = scalar_select %p92, %s93, %s94
      %p98 = pneg %p92
      %p99 = scmp.eq.s32.totalorder %s83, 1
      %p100 = por %p98, %p99
      %p101 = scmp.ne.s32.totalorder %s93, %s96
      %p102 = scmp.eq.s32.totalorder %s83, 0
      %p103 = por %p101, %p102
      %p104 = scmp.ne.s32.totalorder %s93, %s96
      %p105 = scmp.eq.s32.totalorder %s88, 1
      %p106 = por %p104, %p105
      %p107 = scmp.ne.s32.totalorder %s96, %s97
      %p108 = scmp.eq.s32.totalorder %s88, 0
      %p109 = por %p107, %p108
      %p110 = scmp.ne.s32.totalorder %s96, %s97
      %p111 = scmp.eq.s32.totalorder %s89, 1
      %p112 = por %p110, %p111
      %p114 = scmp.ne.s32.totalorder %s97, %s113
      %p115 = scmp.eq.s32.totalorder %s89, 0
      %p116 = por %p114, %p115
      %s117 = ssub.s32 %s83, %s90
      %p118 = scmp.eq.s32.totalorder %s117, 0
      %s120 = sadd.s32 %s119, 1
      %s121 = scalar_select %p118, %s119, %s120
      %p124 = pneg %p118
      %p125 = scmp.eq.s32.totalorder %s83, 1
      %p126 = por %p124, %p125
      %p127 = scmp.ne.s32.totalorder %s119, %s122
      %p128 = scmp.eq.s32.totalorder %s83, 0
      %p129 = por %p127, %p128
      %p130 = scmp.ne.s32.totalorder %s119, %s122
      %p131 = scmp.eq.s32.totalorder %s88, 1
      %p132 = por %p130, %p131
      %p133 = scmp.ne.s32.totalorder %s122, %s123
      %p134 = scmp.eq.s32.totalorder %s88, 0
      %p135 = por %p133, %p134
      %p136 = scmp.ne.s32.totalorder %s122, %s123
      %p137 = scmp.eq.s32.totalorder %s89, 1
      %p138 = por %p136, %p137
      %p140 = scmp.ne.s32.totalorder %s123, %s139
      %p141 = scmp.eq.s32.totalorder %s89, 0
      %p142 = por %p140, %p141
      %s143 = ssub.s32 %s83, %s90
      %p144 = scmp.eq.s32.totalorder %s143, 0
      %s146 = sadd.s32 %s145, 1
      %s147 = scalar_select %p144, %s145, %s146
      %p150 = pneg %p144
      %p151 = scmp.eq.s32.totalorder %s83, 1
      %p152 = por %p150, %p151
      %p153 = scmp.ne.s32.totalorder %s145, %s148
      %p154 = scmp.eq.s32.totalorder %s83, 0
      %p155 = por %p153, %p154
      %p156 = scmp.ne.s32.totalorder %s145, %s148
      %p157 = scmp.eq.s32.totalorder %s88, 1
      %p158 = por %p156, %p157
      %p159 = scmp.ne.s32.totalorder %s148, %s149
      %p160 = scmp.eq.s32.totalorder %s88, 0
      %p161 = por %p159, %p160
      %p162 = scmp.ne.s32.totalorder %s148, %s149
      %p163 = scmp.eq.s32.totalorder %s89, 1
      %p164 = por %p162, %p163
      %p166 = scmp.ne.s32.totalorder %s149, %s165
      %p167 = scmp.eq.s32.totalorder %s89, 0
      %p168 = por %p166, %p167
      %s170 = sadd.s32 %s169, 1
      %p173 = scmp.eq.s32.totalorder %s83, 1
      %p174 = scmp.ne.s32.totalorder %s169, %s171
      %p175 = scmp.eq.s32.totalorder %s83, 0
      %p176 = por %p174, %p175
      %p177 = scmp.ne.s32.totalorder %s169, %s171
      %p178 = scmp.eq.s32.totalorder %s88, 1
      %p179 = por %p177, %p178
      %p180 = scmp.ne.s32.totalorder %s171, %s172
      %p181 = scmp.eq.s32.totalorder %s88, 0
      %p182 = por %p180, %p181
      %p183 = scmp.ne.s32.totalorder %s171, %s172
      %p184 = scmp.eq.s32.totalorder %s89, 1
      %p185 = por %p183, %p184
      %p187 = scmp.ne.s32.totalorder %s172, %s186
      %p188 = scmp.eq.s32.totalorder %s89, 0
      %p189 = por %p187, %p188
      %s191 = sadd.s32 %s190, 1
      %p194 = scmp.eq.s32.totalorder %s83, 1
      %p195 = scmp.ne.s32.totalorder %s190, %s192
      %p196 = scmp.eq.s32.totalorder %s83, 0
      %p197 = por %p195, %p196
      %p198 = scmp.ne.s32.totalorder %s190, %s192
      %p199 = scmp.eq.s32.totalorder %s88, 1
      %p200 = por %p198, %p199
      %p201 = scmp.ne.s32.totalorder %s192, %s193
      %p202 = scmp.eq.s32.totalorder %s88, 0
      %p203 = por %p201, %p202
      %p204 = scmp.ne.s32.totalorder %s192, %s193
      %p205 = scmp.eq.s32.totalorder %s89, 1
      %p206 = por %p204, %p205
      %p208 = scmp.ne.s32.totalorder %s193, %s207
      %p209 = scmp.eq.s32.totalorder %s89, 0
      %p210 = por %p208, %p209
      %s212 = sadd.s32 %s211, 1
      %p215 = scmp.eq.s32.totalorder %s83, 1
      %p216 = scmp.ne.s32.totalorder %s211, %s213
      %p217 = scmp.eq.s32.totalorder %s83, 0
      %p218 = por %p216, %p217
      %p219 = scmp.ne.s32.totalorder %s211, %s213
      %p220 = scmp.eq.s32.totalorder %s88, 1
      %p221 = por %p219, %p220
      %p222 = scmp.ne.s32.totalorder %s213, %s214
      %p223 = scmp.eq.s32.totalorder %s88, 0
      %p224 = por %p222, %p223
      %p225 = scmp.ne.s32.totalorder %s213, %s214
      %p226 = scmp.eq.s32.totalorder %s89, 1
      %p227 = por %p225, %p226
      %p229 = scmp.ne.s32.totalorder %s214, %s228
      %p230 = scmp.eq.s32.totalorder %s89, 0
      %p231 = por %p229, %p230
      %s233 = sadd.s32 %s232, 1
      %p236 = scmp.eq.s32.totalorder %s83, 1
      %p237 = scmp.ne.s32.totalorder %s232, %s234
      %p238 = scmp.eq.s32.totalorder %s83, 0
      %p239 = por %p237, %p238
      %p240 = scmp.ne.s32.totalorder %s232, %s234
      %p241 = scmp.eq.s32.totalorder %s88, 1
      %p242 = por %p240, %p241
      %p243 = scmp.ne.s32.totalorder %s234, %s235
      %p244 = scmp.eq.s32.totalorder %s88, 0
      %p245 = por %p243, %p244
      %p246 = scmp.ne.s32.totalorder %s234, %s235
      %p247 = scmp.eq.s32.totalorder %s89, 1
      %p248 = por %p246, %p247
      %p250 = scmp.ne.s32.totalorder %s235, %s249
      %p251 = scmp.eq.s32.totalorder %s89, 0
      %p252 = por %p250, %p251
      %s254 = sadd.s32 %s253, 1
      %p257 = scmp.eq.s32.totalorder %s83, 1
      %p258 = scmp.ne.s32.totalorder %s253, %s255
      %p259 = scmp.eq.s32.totalorder %s83, 0
      %p260 = por %p258, %p259
      %p261 = scmp.ne.s32.totalorder %s253, %s255
      %p262 = scmp.eq.s32.totalorder %s88, 1
      %p263 = por %p261, %p262
      %p264 = scmp.ne.s32.totalorder %s255, %s256
      %p265 = scmp.eq.s32.totalorder %s88, 0
      %p266 = por %p264, %p265
      %p267 = scmp.ne.s32.totalorder %s255, %s256
      %p268 = scmp.eq.s32.totalorder %s89, 1
      %p269 = por %p267, %p268
      %p271 = scmp.ne.s32.totalorder %s256, %s270
      %p272 = scmp.eq.s32.totalorder %s89, 0
      %p273 = por %p271, %p272
      %s275 = sadd.s32 %s274, 1
      %p278 = scmp.eq.s32.totalorder %s83, 1
      %p279 = scmp.ne.s32.totalorder %s274, %s276
      %p280 = scmp.eq.s32.totalorder %s83, 0
      %p281 = por %p279, %p280
      %p282 = scmp.ne.s32.totalorder %s274, %s276
      %p283 = scmp.eq.s32.totalorder %s88, 1
      %p284 = por %p282, %p283
      %p285 = scmp.ne.s32.totalorder %s276, %s277
      %p286 = scmp.eq.s32.totalorder %s88, 0
      %p287 = por %p285, %p286
      %p288 = scmp.ne.s32.totalorder %s276, %s277
      %p289 = scmp.eq.s32.totalorder %s89, 1
      %p290 = por %p288, %p289
      %p292 = scmp.ne.s32.totalorder %s277, %s291
      %p293 = scmp.eq.s32.totalorder %s89, 0
      %p294 = por %p292, %p293
      %s296 = sadd.s32 %s295, 1
      %p299 = scmp.eq.s32.totalorder %s83, 1
      %p300 = scmp.ne.s32.totalorder %s295, %s297
      %p301 = scmp.eq.s32.totalorder %s83, 0
      %p302 = por %p300, %p301
      %p303 = scmp.ne.s32.totalorder %s295, %s297
      %p304 = scmp.eq.s32.totalorder %s88, 1
      %p305 = por %p303, %p304
      %p306 = scmp.ne.s32.totalorder %s297, %s298
      %p307 = scmp.eq.s32.totalorder %s88, 0
      %p308 = por %p306, %p307
      %p309 = scmp.ne.s32.totalorder %s297, %s298
      %p310 = scmp.eq.s32.totalorder %s89, 1
      %p311 = por %p309, %p310
      %p313 = scmp.ne.s32.totalorder %s298, %s312
      %p314 = scmp.eq.s32.totalorder %s89, 0
      %p315 = por %p313, %p314
      %s317 = sadd.s32 %s316, 1
      %p320 = scmp.eq.s32.totalorder %s83, 1
      %p321 = scmp.ne.s32.totalorder %s316, %s318
      %p322 = scmp.eq.s32.totalorder %s83, 0
      %p323 = por %p321, %p322
      %p324 = scmp.ne.s32.totalorder %s316, %s318
      %p325 = scmp.eq.s32.totalorder %s88, 1
      %p326 = por %p324, %p325
      %p327 = scmp.ne.s32.totalorder %s318, %s319
      %p328 = scmp.eq.s32.totalorder %s88, 0
      %p329 = por %p327, %p328
      %p330 = scmp.ne.s32.totalorder %s318, %s319
      %p331 = scmp.eq.s32.totalorder %s89, 1
      %p332 = por %p330, %p331
      %p334 = scmp.ne.s32.totalorder %s319, %s333
      %p335 = scmp.eq.s32.totalorder %s89, 0
      %p336 = por %p334, %p335
      %s338 = sadd.s32 %s337, 1
      %p341 = scmp.eq.s32.totalorder %s83, 1
      %p342 = scmp.ne.s32.totalorder %s337, %s339
      %p343 = scmp.eq.s32.totalorder %s83, 0
      %p344 = por %p342, %p343
      %p345 = scmp.ne.s32.totalorder %s337, %s339
      %p346 = scmp.eq.s32.totalorder %s88, 1
      %p347 = por %p345, %p346
      %p348 = scmp.ne.s32.totalorder %s339, %s340
      %p349 = scmp.eq.s32.totalorder %s88, 0
      %p350 = por %p348, %p349
      %p351 = scmp.ne.s32.totalorder %s339, %s340
      %p352 = scmp.eq.s32.totalorder %s89, 1
      %p353 = por %p351, %p352
      %p355 = scmp.ne.s32.totalorder %s340, %s354
      %p356 = scmp.eq.s32.totalorder %s89, 0
      %p357 = por %p355, %p356
      %s359 = sadd.s32 %s358, 1
      %p362 = scmp.eq.s32.totalorder %s83, 1
      %p363 = scmp.ne.s32.totalorder %s358, %s360
      %p364 = scmp.eq.s32.totalorder %s83, 0
      %p365 = por %p363, %p364
      %p366 = scmp.ne.s32.totalorder %s358, %s360
      %p367 = scmp.eq.s32.totalorder %s88, 1
      %p368 = por %p366, %p367
      %p369 = scmp.ne.s32.totalorder %s360, %s361
      %p370 = scmp.eq.s32.totalorder %s88, 0
      %p371 = por %p369, %p370
      %p372 = scmp.ne.s32.totalorder %s360, %s361
      %p373 = scmp.eq.s32.totalorder %s89, 1
      %p374 = por %p372, %p373
      %p376 = scmp.ne.s32.totalorder %s361, %s375
      %p377 = scmp.eq.s32.totalorder %s89, 0
      %p378 = por %p376, %p377
      %s380 = sadd.s32 %s379, 1
      %p383 = scmp.eq.s32.totalorder %s83, 1
      %p384 = scmp.ne.s32.totalorder %s379, %s381
      %p385 = scmp.eq.s32.totalorder %s83, 0
      %p386 = por %p384, %p385
      %p387 = scmp.ne.s32.totalorder %s379, %s381
      %p388 = scmp.eq.s32.totalorder %s88, 1
      %p389 = por %p387, %p388
      %p390 = scmp.ne.s32.totalorder %s381, %s382
      %p391 = scmp.eq.s32.totalorder %s88, 0
      %p392 = por %p390, %p391
      %p393 = scmp.ne.s32.totalorder %s381, %s382
      %p394 = scmp.eq.s32.totalorder %s89, 1
      %p395 = por %p393, %p394
      %p397 = scmp.ne.s32.totalorder %s382, %s396
      %p398 = scmp.eq.s32.totalorder %s89, 0
      %p399 = por %p397, %p398
      %s401 = sadd.s32 %s400, 1
      %p404 = scmp.eq.s32.totalorder %s83, 1
      %p405 = scmp.ne.s32.totalorder %s400, %s402
      %p406 = scmp.eq.s32.totalorder %s83, 0
      %p407 = por %p405, %p406
      %p408 = scmp.ne.s32.totalorder %s400, %s402
      %p409 = scmp.eq.s32.totalorder %s88, 1
      %p410 = por %p408, %p409
      %p411 = scmp.ne.s32.totalorder %s402, %s403
      %p412 = scmp.eq.s32.totalorder %s88, 0
      %p413 = por %p411, %p412
      %p414 = scmp.ne.s32.totalorder %s402, %s403
      %p415 = scmp.eq.s32.totalorder %s89, 1
      %p416 = por %p414, %p415
      %p418 = scmp.ne.s32.totalorder %s403, %s417
      %p419 = scmp.eq.s32.totalorder %s89, 0
      %p420 = por %p418, %p419
      %s422 = sadd.s32 %s421, 1
      %p425 = scmp.eq.s32.totalorder %s83, 1
      %p426 = scmp.ne.s32.totalorder %s421, %s423
      %p427 = scmp.eq.s32.totalorder %s83, 0
      %p428 = por %p426, %p427
      %p429 = scmp.ne.s32.totalorder %s421, %s423
      %p430 = scmp.eq.s32.totalorder %s88, 1
      %p431 = por %p429, %p430
      %p432 = scmp.ne.s32.totalorder %s423, %s424
      %p433 = scmp.eq.s32.totalorder %s88, 0
      %p434 = por %p432, %p433
      %p435 = scmp.ne.s32.totalorder %s423, %s424
      %p436 = scmp.eq.s32.totalorder %s89, 1
      %p437 = por %p435, %p436
      %p439 = scmp.ne.s32.totalorder %s424, %s438
      %p440 = scmp.eq.s32.totalorder %s89, 0
      %p441 = por %p439, %p440
      %s443 = sadd.s32 %s442, 1
      %p446 = scmp.eq.s32.totalorder %s83, 1
      %p447 = scmp.ne.s32.totalorder %s442, %s444
      %p448 = scmp.eq.s32.totalorder %s83, 0
      %p449 = por %p447, %p448
      %p450 = scmp.ne.s32.totalorder %s442, %s444
      %p451 = scmp.eq.s32.totalorder %s88, 1
      %p452 = por %p450, %p451
      %p453 = scmp.ne.s32.totalorder %s444, %s445
      %p454 = scmp.eq.s32.totalorder %s88, 0
      %p455 = por %p453, %p454
      %p456 = scmp.ne.s32.totalorder %s444, %s445
      %p457 = scmp.eq.s32.totalorder %s89, 1
      %p458 = por %p456, %p457
      %p460 = scmp.ne.s32.totalorder %s445, %s459
      %p461 = scmp.eq.s32.totalorder %s89, 0
      %p462 = por %p460, %p461
      %s464 = sadd.s32 %s463, 1
      %p467 = scmp.eq.s32.totalorder %s83, 1
      %p468 = scmp.ne.s32.totalorder %s463, %s465
      %p469 = scmp.eq.s32.totalorder %s83, 0
      %p470 = por %p468, %p469
      %p471 = scmp.ne.s32.totalorder %s463, %s465
      %p472 = scmp.eq.s32.totalorder %s88, 1
      %p473 = por %p471, %p472
      %p474 = scmp.ne.s32.totalorder %s465, %s466
      %p475 = scmp.eq.s32.totalorder %s88, 0
      %p476 = por %p474, %p475
      %p477 = scmp.ne.s32.totalorder %s465, %s466
      %p478 = scmp.eq.s32.totalorder %s89, 1
      %p479 = por %p477, %p478
      %p481 = scmp.ne.s32.totalorder %s466, %s480
      %p482 = scmp.eq.s32.totalorder %s89, 0
      %p483 = por %p481, %p482
      %s485 = sadd.s32 %s484, 1
      %p488 = scmp.eq.s32.totalorder %s83, 1
      %p489 = scmp.ne.s32.totalorder %s484, %s486
      %p490 = scmp.eq.s32.totalorder %s83, 0
      %p491 = por %p489, %p490
      %p492 = scmp.ne.s32.totalorder %s484, %s486
      %p493 = scmp.eq.s32.totalorder %s88, 1
      %p494 = por %p492, %p493
      %p495 = scmp.ne.s32.totalorder %s486, %s487
      %p496 = scmp.eq.s32.totalorder %s88, 0
      %p497 = por %p495, %p496
      %p498 = scmp.ne.s32.totalorder %s486, %s487
      %p499 = scmp.eq.s32.totalorder %s89, 1
      %p500 = por %p498, %p499
      %p502 = scmp.ne.s32.totalorder %s487, %s501
      %p503 = scmp.eq.s32.totalorder %s89, 0
      %p504 = por %p502, %p503
      %s506 = sadd.s32 %s505, 1
      %p509 = scmp.eq.s32.totalorder %s83, 1
      %p510 = scmp.ne.s32.totalorder %s505, %s507
      %p511 = scmp.eq.s32.totalorder %s83, 0
      %p512 = por %p510, %p511
      %p513 = scmp.ne.s32.totalorder %s505, %s507
      %p514 = scmp.eq.s32.totalorder %s88, 1
      %p515 = por %p513, %p514
      %p516 = scmp.ne.s32.totalorder %s507, %s508
      %p517 = scmp.eq.s32.totalorder %s88, 0
      %p518 = por %p516, %p517
      %p519 = scmp.ne.s32.totalorder %s507, %s508
      %p520 = scmp.eq.s32.totalorder %s89, 1
      %p521 = por %p519, %p520
      %p523 = scmp.ne.s32.totalorder %s508, %s522
      %p524 = scmp.eq.s32.totalorder %s89, 0
      %p525 = por %p523, %p524
      %s527 = sadd.s32 %s526, 1
      %p530 = scmp.eq.s32.totalorder %s83, 1
      %p531 = scmp.ne.s32.totalorder %s526, %s528
      %p532 = scmp.eq.s32.totalorder %s83, 0
      %p533 = por %p531, %p532
      %p534 = scmp.ne.s32.totalorder %s526, %s528
      %p535 = scmp.eq.s32.totalorder %s88, 1
      %p536 = por %p534, %p535
      %p537 = scmp.ne.s32.totalorder %s528, %s529
      %p538 = scmp.eq.s32.totalorder %s88, 0
      %p539 = por %p537, %p538
      %p540 = scmp.ne.s32.totalorder %s528, %s529
      %p541 = scmp.eq.s32.totalorder %s89, 1
      %p542 = por %p540, %p541
      %p544 = scmp.ne.s32.totalorder %s529, %s543
      %p545 = scmp.eq.s32.totalorder %s89, 0
      %p546 = por %p544, %p545
      %s548 = sadd.s32 %s547, 1
      %p551 = scmp.eq.s32.totalorder %s83, 1
      %p552 = scmp.ne.s32.totalorder %s547, %s549
      %p553 = scmp.eq.s32.totalorder %s83, 0
      %p554 = por %p552, %p553
      %p555 = scmp.ne.s32.totalorder %s547, %s549
      %p556 = scmp.eq.s32.totalorder %s88, 1
      %p557 = por %p555, %p556
      %p558 = scmp.ne.s32.totalorder %s549, %s550
      %p559 = scmp.eq.s32.totalorder %s88, 0
      %p560 = por %p558, %p559
      %p561 = scmp.ne.s32.totalorder %s549, %s550
      %p562 = scmp.eq.s32.totalorder %s89, 1
      %p563 = por %p561, %p562
      %p565 = scmp.ne.s32.totalorder %s550, %s564
      %p566 = scmp.eq.s32.totalorder %s89, 0
      %p567 = por %p565, %p566
      %s569 = sadd.s32 %s568, 1
      %p572 = scmp.eq.s32.totalorder %s83, 1
      %p573 = scmp.ne.s32.totalorder %s568, %s570
      %p574 = scmp.eq.s32.totalorder %s83, 0
      %p575 = por %p573, %p574
      %p576 = scmp.ne.s32.totalorder %s568, %s570
      %p577 = scmp.eq.s32.totalorder %s88, 1
      %p578 = por %p576, %p577
      %p579 = scmp.ne.s32.totalorder %s570, %s571
      %p580 = scmp.eq.s32.totalorder %s88, 0
      %p581 = por %p579, %p580
      %p582 = scmp.ne.s32.totalorder %s570, %s571
      %p583 = scmp.eq.s32.totalorder %s89, 1
      %p584 = por %p582, %p583
      %p586 = scmp.ne.s32.totalorder %s571, %s585
      %p587 = scmp.eq.s32.totalorder %s89, 0
      %p588 = por %p586, %p587
      %s590 = sadd.s32 %s589, 1
      %p593 = scmp.eq.s32.totalorder %s83, 1
      %p594 = scmp.ne.s32.totalorder %s589, %s591
      %p595 = scmp.eq.s32.totalorder %s83, 0
      %p596 = por %p594, %p595
      %p597 = scmp.ne.s32.totalorder %s589, %s591
      %p598 = scmp.eq.s32.totalorder %s88, 1
      %p599 = por %p597, %p598
      %p600 = scmp.ne.s32.totalorder %s591, %s592
      %p601 = scmp.eq.s32.totalorder %s88, 0
      %p602 = por %p600, %p601
      %p603 = scmp.ne.s32.totalorder %s591, %s592
      %p604 = scmp.eq.s32.totalorder %s89, 1
      %p605 = por %p603, %p604
      %p607 = scmp.ne.s32.totalorder %s592, %s606
      %p608 = scmp.eq.s32.totalorder %s89, 0
      %p609 = por %p607, %p608
      %s611 = sadd.s32 %s610, 1
      %p614 = scmp.eq.s32.totalorder %s83, 1
      %p615 = scmp.ne.s32.totalorder %s610, %s612
      %p616 = scmp.eq.s32.totalorder %s83, 0
      %p617 = por %p615, %p616
      %p618 = scmp.ne.s32.totalorder %s610, %s612
      %p619 = scmp.eq.s32.totalorder %s88, 1
      %p620 = por %p618, %p619
      %p621 = scmp.ne.s32.totalorder %s612, %s613
      %p622 = scmp.eq.s32.totalorder %s88, 0
      %p623 = por %p621, %p622
      %p624 = scmp.ne.s32.totalorder %s612, %s613
      %p625 = scmp.eq.s32.totalorder %s89, 1
      %p626 = por %p624, %p625
      %p628 = scmp.ne.s32.totalorder %s613, %s627
      %p629 = scmp.eq.s32.totalorder %s89, 0
      %p630 = por %p628, %p629
      %s632 = sadd.s32 %s631, 1
      %p635 = scmp.eq.s32.totalorder %s83, 1
      %p636 = scmp.ne.s32.totalorder %s631, %s633
      %p637 = scmp.eq.s32.totalorder %s83, 0
      %p638 = por %p636, %p637
      %p639 = scmp.ne.s32.totalorder %s631, %s633
      %p640 = scmp.eq.s32.totalorder %s88, 1
      %p641 = por %p639, %p640
      %p642 = scmp.ne.s32.totalorder %s633, %s634
      %p643 = scmp.eq.s32.totalorder %s88, 0
      %p644 = por %p642, %p643
      %p645 = scmp.ne.s32.totalorder %s633, %s634
      %p646 = scmp.eq.s32.totalorder %s89, 1
      %p647 = por %p645, %p646
      %p649 = scmp.ne.s32.totalorder %s634, %s648
      %p650 = scmp.eq.s32.totalorder %s89, 0
      %p651 = por %p649, %p650
      %s653 = sadd.s32 %s652, 1
      %p656 = scmp.eq.s32.totalorder %s83, 1
      %p657 = scmp.ne.s32.totalorder %s652, %s654
      %p658 = scmp.eq.s32.totalorder %s83, 0
      %p659 = por %p657, %p658
      %p660 = scmp.ne.s32.totalorder %s652, %s654
      %p661 = scmp.eq.s32.totalorder %s88, 1
      %p662 = por %p660, %p661
      %p663 = scmp.ne.s32.totalorder %s654, %s655
      %p664 = scmp.eq.s32.totalorder %s88, 0
      %p665 = por %p663, %p664
      %p666 = scmp.ne.s32.totalorder %s654, %s655
      %p667 = scmp.eq.s32.totalorder %s89, 1
      %p668 = por %p666, %p667
      %p670 = scmp.ne.s32.totalorder %s655, %s669
      %p671 = scmp.eq.s32.totalorder %s89, 0
      %p672 = por %p670, %p671
      %s674 = sadd.s32 %s673, 1
      %p677 = scmp.eq.s32.totalorder %s83, 1
      %p678 = scmp.ne.s32.totalorder %s673, %s675
      %p679 = scmp.eq.s32.totalorder %s83, 0
      %p680 = por %p678, %p679
      %p681 = scmp.ne.s32.totalorder %s673, %s675
      %p682 = scmp.eq.s32.totalorder %s88, 1
      %p683 = por %p681, %p682
      %p684 = scmp.ne.s32.totalorder %s675, %s676
      %p685 = scmp.eq.s32.totalorder %s88, 0
      %p686 = por %p684, %p685
      %p687 = scmp.ne.s32.totalorder %s675, %s676
      %p688 = scmp.eq.s32.totalorder %s89, 1
      %p689 = por %p687, %p688
      %p691 = scmp.ne.s32.totalorder %s676, %s690
      %p692 = scmp.eq.s32.totalorder %s89, 0
      %p693 = por %p691, %p692
      %s695 = sadd.s32 %s694, 1
      %p698 = scmp.eq.s32.totalorder %s83, 1
      %p699 = scmp.ne.s32.totalorder %s694, %s696
      %p700 = scmp.eq.s32.totalorder %s83, 0
      %p701 = por %p699, %p700
      %p702 = scmp.ne.s32.totalorder %s694, %s696
      %p703 = scmp.eq.s32.totalorder %s88, 1
      %p704 = por %p702, %p703
      %p705 = scmp.ne.s32.totalorder %s696, %s697
      %p706 = scmp.eq.s32.totalorder %s88, 0
      %p707 = por %p705, %p706
      %p708 = scmp.ne.s32.totalorder %s696, %s697
      %p709 = scmp.eq.s32.totalorder %s89, 1
      %p710 = por %p708, %p709
      %p712 = scmp.ne.s32.totalorder %s697, %s711
      %p713 = scmp.eq.s32.totalorder %s89, 0
      %p714 = por %p712, %p713
      %s716 = sadd.s32 %s715, 1
      %p719 = scmp.eq.s32.totalorder %s83, 1
      %p720 = scmp.ne.s32.totalorder %s715, %s717
      %p721 = scmp.eq.s32.totalorder %s83, 0
      %p722 = por %p720, %p721
      %p723 = scmp.ne.s32.totalorder %s715, %s717
      %p724 = scmp.eq.s32.totalorder %s88, 1
      %p725 = por %p723, %p724
      %p726 = scmp.ne.s32.totalorder %s717, %s718
      %p727 = scmp.eq.s32.totalorder %s88, 0
      %p728 = por %p726, %p727
      %p729 = scmp.ne.s32.totalorder %s717, %s718
      %p730 = scmp.eq.s32.totalorder %s89, 1
      %p731 = por %p729, %p730
      %p733 = scmp.ne.s32.totalorder %s718, %s732
      %p734 = scmp.eq.s32.totalorder %s89, 0
      %p735 = por %p733, %p734
      %s737 = sadd.s32 %s736, 1
      %p740 = scmp.eq.s32.totalorder %s83, 1
      %p741 = scmp.ne.s32.totalorder %s736, %s738
      %p742 = scmp.eq.s32.totalorder %s83, 0
      %p743 = por %p741, %p742
      %p744 = scmp.ne.s32.totalorder %s736, %s738
      %p745 = scmp.eq.s32.totalorder %s88, 1
      %p746 = por %p744, %p745
      %p747 = scmp.ne.s32.totalorder %s738, %s739
      %p748 = scmp.eq.s32.totalorder %s88, 0
      %p749 = por %p747, %p748
      %p750 = scmp.ne.s32.totalorder %s738, %s739
      %p751 = scmp.eq.s32.totalorder %s89, 1
      %p752 = por %p750, %p751
      %p754 = scmp.ne.s32.totalorder %s739, %s753
      %p755 = scmp.eq.s32.totalorder %s89, 0
      %p756 = por %p754, %p755
      %s757 = ssub.s32 %s83, %s90
      %p758 = scmp.eq.s32.totalorder %s757, 0
      %s760 = sadd.s32 %s759, 1
      %s761 = scalar_select %p758, %s759, %s760
      %p764 = pneg %p758
      %p765 = scmp.eq.s32.totalorder %s83, 1
      %p766 = por %p764, %p765
      %p767 = scmp.ne.s32.totalorder %s759, %s762
      %p768 = scmp.eq.s32.totalorder %s83, 0
      %p769 = por %p767, %p768
      %p770 = scmp.ne.s32.totalorder %s759, %s762
      %p771 = scmp.eq.s32.totalorder %s88, 1
      %p772 = por %p770, %p771
      %p773 = scmp.ne.s32.totalorder %s762, %s763
      %p774 = scmp.eq.s32.totalorder %s88, 0
      %p775 = por %p773, %p774
      %p776 = scmp.ne.s32.totalorder %s762, %s763
      %p777 = scmp.eq.s32.totalorder %s89, 1
      %p778 = por %p776, %p777
      %p780 = scmp.ne.s32.totalorder %s763, %s779
      %p781 = scmp.eq.s32.totalorder %s89, 0
      %p782 = por %p780, %p781
      %p783 = scmp.le.s32.totalorder 1, %s83
      %p784 = scmp.lt.s32.totalorder %s83, 3
      %p785 = pnand %p783, %p784
      %p786 = pneg %p785
      // Predicated region
      $region9: #{tpu_custom_call.1} parent=5 // pred_check
        _
      $region10: #{tpu_custom_call.1} parent=5 // pred_check_branch
        %788 = sbr.rel (%p785) target = $region12
      $region11: #{tpu_custom_call.1} parent=5 // pred_region
        %s789 = ssub.s32 %s83, 1
        // Predicated region
        $region13: #{tpu_custom_call.1} parent=11 // pred_check
          %p790 = pneg %p182
        $region14: #{tpu_custom_call.1} parent=11 // pred_check_branch
          %792 = sbr.rel (%p790) target = $region16
        $region15: #{tpu_custom_call.1} parent=11 // pred_region
          _
        $region16: #{tpu_custom_call.1} parent=11 // pred_fallthru
          _
        // Predicated region
        $region17: #{tpu_custom_call.1} parent=11 // pred_check
          %p793 = pneg %p203
        $region18: #{tpu_custom_call.1} parent=11 // pred_check_branch
          %795 = sbr.rel (%p793) target = $region20
        $region19: #{tpu_custom_call.1} parent=11 // pred_region
          _
        $region20: #{tpu_custom_call.1} parent=11 // pred_fallthru
          _
        // Predicated region
        $region21: #{tpu_custom_call.1} parent=11 // pred_check
          %p796 = pneg %p224
        $region22: #{tpu_custom_call.1} parent=11 // pred_check_branch
          %798 = sbr.rel (%p796) target = $region24
        $region23: #{tpu_custom_call.1} parent=11 // pred_region
          _
        $region24: #{tpu_custom_call.1} parent=11 // pred_fallthru
          _
        // Predicated region
        $region25: #{tpu_custom_call.1} parent=11 // pred_check
          %p799 = pneg %p245
        $region26: #{tpu_custom_call.1} parent=11 // pred_check_branch
          %801 = sbr.rel (%p799) target = $region28
        $region27: #{tpu_custom_call.1} parent=11 // pred_region
          _
        $region28: #{tpu_custom_call.1} parent=11 // pred_fallthru
          _
        // Predicated region
        $region29: #{tpu_custom_call.1} parent=11 // pred_check
          %p802 = pneg %p266
        $region30: #{tpu_custom_call.1} parent=11 // pred_check_branch
          %804 = sbr.rel (%p802) target = $region32
        $region31: #{tpu_custom_call.1} parent=11 // pred_region
          %s806 = ssub.s32 1024, 1024
          %807 = vsyncadd [#allocation9], %s806
          %s808 = sshll.u32 [#allocation8], 4
          %s809 = int_to_ptr.vmem [resolvable:$true] %s808
          %814 = dma.hbm_to_vmem [thread:$0]  %s15, 1024, %s809, [#allocation9], 64, 64, 4
        $region32: #{tpu_custom_call.1} parent=11 // pred_fallthru
          _
        // Predicated region
        $region33: #{tpu_custom_call.1} parent=11 // pred_check
          %p815 = pneg %p287
        $region34: #{tpu_custom_call.1} parent=11 // pred_check_branch
          %817 = sbr.rel (%p815) target = $region36
        $region35: #{tpu_custom_call.1} parent=11 // pred_region
          _
        $region36: #{tpu_custom_call.1} parent=11 // pred_fallthru
          _
        // Predicated region
        $region37: #{tpu_custom_call.1} parent=11 // pred_check
          %p818 = pneg %p308
        $region38: #{tpu_custom_call.1} parent=11 // pred_check_branch
          %820 = sbr.rel (%p818) target = $region40
        $region39: #{tpu_custom_call.1} parent=11 // pred_region
          %s822 = ssub.s32 1024, 1024
          %823 = vsyncadd [#allocation9], %s822
          %s824 = sshll.u32 [#allocation10], 4
          %s825 = int_to_ptr.vmem [resolvable:$true] %s824
          %830 = dma.hbm_to_vmem [thread:$0]  %s19, 1024, %s825, [#allocation9], 64, 64, 4
        $region40: #{tpu_custom_call.1} parent=11 // pred_fallthru
          _
        // Predicated region
        $region41: #{tpu_custom_call.1} parent=11 // pred_check
          %p831 = pneg %p329
        $region42: #{tpu_custom_call.1} parent=11 // pred_check_branch
          %833 = sbr.rel (%p831) target = $region44
        $region43: #{tpu_custom_call.1} parent=11 // pred_region
          _
        $region44: #{tpu_custom_call.1} parent=11 // pred_fallthru
          _
        // Predicated region
        $region45: #{tpu_custom_call.1} parent=11 // pred_check
          %p834 = pneg %p350
        $region46: #{tpu_custom_call.1} parent=11 // pred_check_branch
          %836 = sbr.rel (%p834) target = $region48
        $region47: #{tpu_custom_call.1} parent=11 // pred_region
          %s838 = ssub.s32 1024, 1024
          %839 = vsyncadd [#allocation12], %s838
          %s840 = sshll.u32 [#allocation11], 4
          %s841 = int_to_ptr.vmem [resolvable:$true] %s840
          %846 = dma.hbm_to_vmem [thread:$0]  %s23, 1024, %s841, [#allocation12], 64, 64, 4
        $region48: #{tpu_custom_call.1} parent=11 // pred_fallthru
          _
        // Predicated region
        $region49: #{tpu_custom_call.1} parent=11 // pred_check
          %p847 = pneg %p371
        $region50: #{tpu_custom_call.1} parent=11 // pred_check_branch
          %849 = sbr.rel (%p847) target = $region52
        $region51: #{tpu_custom_call.1} parent=11 // pred_region
          _
        $region52: #{tpu_custom_call.1} parent=11 // pred_fallthru
          _
        // Predicated region
        $region53: #{tpu_custom_call.1} parent=11 // pred_check
          %p850 = pneg %p392
        $region54: #{tpu_custom_call.1} parent=11 // pred_check_branch
          %852 = sbr.rel (%p850) target = $region56
        $region55: #{tpu_custom_call.1} parent=11 // pred_region
          %s854 = ssub.s32 2048, 2048
          %855 = vsyncadd [#allocation12], %s854
          %s856 = sshll.u32 [#allocation13], 4
          %s857 = int_to_ptr.vmem [resolvable:$true] %s856
          %862 = dma.hbm_to_vmem [thread:$0]  %s27, 2048, %s857, [#allocation12], 128, 128, 8
        $region56: #{tpu_custom_call.1} parent=11 // pred_fallthru
          _
        // Predicated region
        $region57: #{tpu_custom_call.1} parent=11 // pred_check
          %p863 = pneg %p413
        $region58: #{tpu_custom_call.1} parent=11 // pred_check_branch
          %865 = sbr.rel (%p863) target = $region60
        $region59: #{tpu_custom_call.1} parent=11 // pred_region
          _
        $region60: #{tpu_custom_call.1} parent=11 // pred_fallthru
          _
        // Predicated region
        $region61: #{tpu_custom_call.1} parent=11 // pred_check
          %p866 = pneg %p434
        $region62: #{tpu_custom_call.1} parent=11 // pred_check_branch
          %868 = sbr.rel (%p866) target = $region64
        $region63: #{tpu_custom_call.1} parent=11 // pred_region
          %s870 = ssub.s32 2048, 2048
          %871 = vsyncadd [#allocation15], %s870
          %s872 = sshll.u32 [#allocation14], 4
          %s873 = int_to_ptr.vmem [resolvable:$true] %s872
          %878 = dma.hbm_to_vmem [thread:$0]  %s31, 2048, %s873, [#allocation15], 64, 64, 4
        $region64: #{tpu_custom_call.1} parent=11 // pred_fallthru
          _
        // Predicated region
        $region65: #{tpu_custom_call.1} parent=11 // pred_check
          %p879 = pneg %p455
        $region66: #{tpu_custom_call.1} parent=11 // pred_check_branch
          %881 = sbr.rel (%p879) target = $region68
        $region67: #{tpu_custom_call.1} parent=11 // pred_region
          _
        $region68: #{tpu_custom_call.1} parent=11 // pred_fallthru
          _
        // Predicated region
        $region69: #{tpu_custom_call.1} parent=11 // pred_check
          %p882 = pneg %p476
        $region70: #{tpu_custom_call.1} parent=11 // pred_check_branch
          %884 = sbr.rel (%p882) target = $region72
        $region71: #{tpu_custom_call.1} parent=11 // pred_region
          _
        $region72: #{tpu_custom_call.1} parent=11 // pred_fallthru
          _
        // Predicated region
        $region73: #{tpu_custom_call.1} parent=11 // pred_check
          %p885 = pneg %p497
        $region74: #{tpu_custom_call.1} parent=11 // pred_check_branch
          %887 = sbr.rel (%p885) target = $region76
        $region75: #{tpu_custom_call.1} parent=11 // pred_region
          _
        $region76: #{tpu_custom_call.1} parent=11 // pred_fallthru
          _
        // Predicated region
        $region77: #{tpu_custom_call.1} parent=11 // pred_check
          %p888 = pneg %p518
        $region78: #{tpu_custom_call.1} parent=11 // pred_check_branch
          %890 = sbr.rel (%p888) target = $region80
        $region79: #{tpu_custom_call.1} parent=11 // pred_region
          _
        $region80: #{tpu_custom_call.1} parent=11 // pred_fallthru
          _
        // Predicated region
        $region81: #{tpu_custom_call.1} parent=11 // pred_check
          %p891 = pneg %p539
        $region82: #{tpu_custom_call.1} parent=11 // pred_check_branch
          %893 = sbr.rel (%p891) target = $region84
        $region83: #{tpu_custom_call.1} parent=11 // pred_region
          %s895 = ssub.s32 16, 16
          %896 = vsyncadd [#allocation15], %s895
          %s898 = sshll.u32 [#allocation16], 4
          %s899 = int_to_ptr.vmem [resolvable:$true] %s898
          %901 = dma.hbm_to_vmem [thread:$0]  %s41, 16, %s899, [#allocation15]
        $region84: #{tpu_custom_call.1} parent=11 // pred_fallthru
          _
        // Predicated region
        $region85: #{tpu_custom_call.1} parent=11 // pred_check
          %p902 = pneg %p560
        $region86: #{tpu_custom_call.1} parent=11 // pred_check_branch
          %904 = sbr.rel (%p902) target = $region88
        $region87: #{tpu_custom_call.1} parent=11 // pred_region
          _
        $region88: #{tpu_custom_call.1} parent=11 // pred_fallthru
          _
        // Predicated region
        $region89: #{tpu_custom_call.1} parent=11 // pred_check
          %p905 = pneg %p581
        $region90: #{tpu_custom_call.1} parent=11 // pred_check_branch
          %907 = sbr.rel (%p905) target = $region92
        $region91: #{tpu_custom_call.1} parent=11 // pred_region
          _
        $region92: #{tpu_custom_call.1} parent=11 // pred_fallthru
          _
        // Predicated region
        $region93: #{tpu_custom_call.1} parent=11 // pred_check
          %p908 = pneg %p602
        $region94: #{tpu_custom_call.1} parent=11 // pred_check_branch
          %910 = sbr.rel (%p908) target = $region96
        $region95: #{tpu_custom_call.1} parent=11 // pred_region
          %s912 = ssub.s32 1024, 1024
          %913 = vsyncadd [#allocation18], %s912
          %s914 = sshll.u32 [#allocation17], 4
          %s915 = int_to_ptr.vmem [resolvable:$true] %s914
          %920 = dma.hbm_to_vmem [thread:$0]  %s47, 1024, %s915, [#allocation18], 64, 64, 4
        $region96: #{tpu_custom_call.1} parent=11 // pred_fallthru
          _
        // Predicated region
        $region97: #{tpu_custom_call.1} parent=11 // pred_check
          %p921 = pneg %p623
        $region98: #{tpu_custom_call.1} parent=11 // pred_check_branch
          %923 = sbr.rel (%p921) target = $region100
        $region99: #{tpu_custom_call.1} parent=11 // pred_region
          _
        $region100: #{tpu_custom_call.1} parent=11 // pred_fallthru
          _
        // Predicated region
        $region101: #{tpu_custom_call.1} parent=11 // pred_check
          %p924 = pneg %p644
        $region102: #{tpu_custom_call.1} parent=11 // pred_check_branch
          %926 = sbr.rel (%p924) target = $region104
        $region103: #{tpu_custom_call.1} parent=11 // pred_region
          %s928 = ssub.s32 1024, 1024
          %929 = vsyncadd [#allocation18], %s928
          %s930 = sshll.u32 [#allocation19], 4
          %s931 = int_to_ptr.vmem [resolvable:$true] %s930
          %936 = dma.hbm_to_vmem [thread:$0]  %s51, 1024, %s931, [#allocation18], 64, 64, 4
        $region104: #{tpu_custom_call.1} parent=11 // pred_fallthru
          _
        // Predicated region
        $region105: #{tpu_custom_call.1} parent=11 // pred_check
          %p937 = pneg %p665
        $region106: #{tpu_custom_call.1} parent=11 // pred_check_branch
          %939 = sbr.rel (%p937) target = $region108
        $region107: #{tpu_custom_call.1} parent=11 // pred_region
          _
        $region108: #{tpu_custom_call.1} parent=11 // pred_fallthru
          _
        // Predicated region
        $region109: #{tpu_custom_call.1} parent=11 // pred_check
          %p940 = pneg %p686
        $region110: #{tpu_custom_call.1} parent=11 // pred_check_branch
          %942 = sbr.rel (%p940) target = $region112
        $region111: #{tpu_custom_call.1} parent=11 // pred_region
          %s944 = ssub.s32 2048, 2048
          %945 = vsyncadd [#allocation21], %s944
          %s946 = sshll.u32 [#allocation20], 4
          %s947 = int_to_ptr.vmem [resolvable:$true] %s946
          %952 = dma.hbm_to_vmem [thread:$0]  %s55, 2048, %s947, [#allocation21], 128, 128, 8
        $region112: #{tpu_custom_call.1} parent=11 // pred_fallthru
          _
        // Predicated region
        $region113: #{tpu_custom_call.1} parent=11 // pred_check
          %p953 = pneg %p707
        $region114: #{tpu_custom_call.1} parent=11 // pred_check_branch
          %955 = sbr.rel (%p953) target = $region116
        $region115: #{tpu_custom_call.1} parent=11 // pred_region
          _
        $region116: #{tpu_custom_call.1} parent=11 // pred_fallthru
          _
        // Predicated region
        $region117: #{tpu_custom_call.1} parent=11 // pred_check
          %p956 = pneg %p728
        $region118: #{tpu_custom_call.1} parent=11 // pred_check_branch
          %958 = sbr.rel (%p956) target = $region120
        $region119: #{tpu_custom_call.1} parent=11 // pred_region
          %s960 = ssub.s32 2048, 2048
          %961 = vsyncadd [#allocation21], %s960
          %s962 = sshll.u32 [#allocation22], 4
          %s963 = int_to_ptr.vmem [resolvable:$true] %s962
          %968 = dma.hbm_to_vmem [thread:$0]  %s59, 2048, %s963, [#allocation21], 64, 64, 4
        $region120: #{tpu_custom_call.1} parent=11 // pred_fallthru
          _
        // Predicated region
        $region121: #{tpu_custom_call.1} parent=11 // pred_check
          %p969 = pneg %p749
        $region122: #{tpu_custom_call.1} parent=11 // pred_check_branch
          %971 = sbr.rel (%p969) target = $region124
        $region123: #{tpu_custom_call.1} parent=11 // pred_region
          _
        $region124: #{tpu_custom_call.1} parent=11 // pred_fallthru
          _
      $region12: #{tpu_custom_call.1} parent=5 // pred_fallthru
        _
      %p972 = scmp.lt.s32.totalorder %s83, 2
      // Predicated region
      $region125: #{tpu_custom_call.1} parent=5 // pred_check
        %p973 = pneg %p972
      $region126: #{tpu_custom_call.1} parent=5 // pred_check_branch
        %975 = sbr.rel (%p973) target = $region128
      $region127: #{tpu_custom_call.1} parent=5 // pred_region
        // Predicated region
        $region129: #{tpu_custom_call.1} parent=127 // pred_check
          %p976 = pneg %p103
        $region130: #{tpu_custom_call.1} parent=127 // pred_check_branch
          %978 = sbr.rel (%p976) target = $region132
        $region131: #{tpu_custom_call.1} parent=127 // pred_region
          %s979 = sand.u32 %s93, 1
          %s980 = scalar_lea.sflag [#allocation3], %s979
          %s981 = sand.u32 %s93, 1
          %s982 = smul.addr %s981, 8
          %s983 = scalar_lea.vmem [#allocation2], %s982
          %s985 = ssub.s32 128, 128
          %986 = vsyncadd %s980, %s985
          %s987 = smul.addr %s83, 128
          %s988 = scalar_lea.hbm %s1, %s987
          %s990 = sshll.u32 %s983, 4
          %s991 = int_to_ptr.vmem [resolvable:$true] %s990
          %993 = dma.hbm_to_vmem [thread:$0]  %s988, 128, %s991, %s980
        $region132: #{tpu_custom_call.1} parent=127 // pred_fallthru
          _
        // Predicated region
        $region133: #{tpu_custom_call.1} parent=127 // pred_check
          %p994 = pneg %p129
        $region134: #{tpu_custom_call.1} parent=127 // pred_check_branch
          %996 = sbr.rel (%p994) target = $region136
        $region135: #{tpu_custom_call.1} parent=127 // pred_region
          %s997 = sand.u32 %s83, 1
          %s998 = scalar_lea.sflag [#allocation6], %s997
          %s999 = sand.u32 %s119, 1
          %s1000 = smul.addr %s999, 8
          %s1001 = scalar_lea.vmem [#allocation5], %s1000
          %s1003 = ssub.s32 128, 128
          %1004 = vsyncadd %s998, %s1003
          %s1005 = smul.addr %s83, 128
          %s1006 = scalar_lea.hbm %s3, %s1005
          %s1008 = sshll.u32 %s1001, 4
          %s1009 = int_to_ptr.vmem [resolvable:$true] %s1008
          %1011 = dma.hbm_to_vmem [thread:$0]  %s1006, 128, %s1009, %s998
        $region136: #{tpu_custom_call.1} parent=127 // pred_fallthru
          _
        // Predicated region
        $region137: #{tpu_custom_call.1} parent=127 // pred_check
          %p1012 = pneg %p155
        $region138: #{tpu_custom_call.1} parent=127 // pred_check_branch
          %1014 = sbr.rel (%p1012) target = $region140
        $region139: #{tpu_custom_call.1} parent=127 // pred_region
          %s1015 = sand.u32 %s83, 1
          %s1016 = scalar_lea.sflag [#allocation6], %s1015
          %s1017 = sand.u32 %s145, 1
          %s1018 = smul.addr %s1017, 8
          %s1019 = scalar_lea.vmem [#allocation7], %s1018
          %s1021 = ssub.s32 128, 128
          %1022 = vsyncadd %s1016, %s1021
          %s1023 = smul.addr %s83, 128
          %s1024 = scalar_lea.hbm %s5, %s1023
          %s1026 = sshll.u32 %s1019, 4
          %s1027 = int_to_ptr.vmem [resolvable:$true] %s1026
          %1029 = dma.hbm_to_vmem [thread:$0]  %s1024, 128, %s1027, %s1016
        $region140: #{tpu_custom_call.1} parent=127 // pred_fallthru
          _
      $region128: #{tpu_custom_call.1} parent=5 // pred_fallthru
        _
      %p1030 = scmp.le.s32.totalorder 1, %s83
      %p1031 = scmp.lt.s32.totalorder %s83, 3
      %p1032 = pnand %p1030, %p1031
      %p1033 = pneg %p1032
      // Predicated region
      $region141: #{tpu_custom_call.1} parent=5 // pred_check
        _
      $region142: #{tpu_custom_call.1} parent=5 // pred_check_branch
        %1035 = sbr.rel (%p1032) target = $region144
      $region143: #{tpu_custom_call.1} parent=5 // pred_region
        %s1036 = ssub.s32 %s83, 1
        %s1037 = sand.u32 %s96, 1
        %s1038 = scalar_lea.sflag [#allocation3], %s1037
        %s1039 = sand.u32 %s96, 1
        %s1040 = smul.addr %s1039, 8
        %s1041 = scalar_lea.vmem [#allocation2], %s1040
        // Predicated region
        $region145: #{tpu_custom_call.1} parent=143 // pred_check
          %p1042 = pneg %p109
        $region146: #{tpu_custom_call.1} parent=143 // pred_check_branch
          %1044 = sbr.rel (%p1042) target = $region148
        $region147: #{tpu_custom_call.1} parent=143 // pred_region
          %1045 = dma.done %s1038, 128
        $region148: #{tpu_custom_call.1} parent=143 // pred_fallthru
          _
        %s1046 = sand.u32 %s88, 1
        %s1047 = scalar_lea.sflag [#allocation6], %s1046
        %s1048 = sand.u32 %s122, 1
        %s1049 = smul.addr %s1048, 8
        %s1050 = scalar_lea.vmem [#allocation5], %s1049
        // Predicated region
        $region149: #{tpu_custom_call.1} parent=143 // pred_check
          %p1051 = pneg %p135
        $region150: #{tpu_custom_call.1} parent=143 // pred_check_branch
          %1053 = sbr.rel (%p1051) target = $region152
        $region151: #{tpu_custom_call.1} parent=143 // pred_region
          %1054 = dma.done %s1047, 128
        $region152: #{tpu_custom_call.1} parent=143 // pred_fallthru
          _
        %s1055 = sand.u32 %s88, 1
        %s1056 = scalar_lea.sflag [#allocation6], %s1055
        %s1057 = sand.u32 %s148, 1
        %s1058 = smul.addr %s1057, 8
        %s1059 = scalar_lea.vmem [#allocation7], %s1058
        // Predicated region
        $region153: #{tpu_custom_call.1} parent=143 // pred_check
          %p1060 = pneg %p161
        $region154: #{tpu_custom_call.1} parent=143 // pred_check_branch
          %1062 = sbr.rel (%p1060) target = $region156
        $region155: #{tpu_custom_call.1} parent=143 // pred_region
          %1063 = dma.done %s1056, 128
        $region156: #{tpu_custom_call.1} parent=143 // pred_fallthru
          _
        // Predicated region
        $region157: #{tpu_custom_call.1} parent=143 // pred_check
          %p1064 = pneg %p266
        $region158: #{tpu_custom_call.1} parent=143 // pred_check_branch
          %1066 = sbr.rel (%p1064) target = $region160
        $region159: #{tpu_custom_call.1} parent=143 // pred_region
          %1067 = dma.done [#allocation9], 1024
        $region160: #{tpu_custom_call.1} parent=143 // pred_fallthru
          _
        // Predicated region
        $region161: #{tpu_custom_call.1} parent=143 // pred_check
          %p1068 = pneg %p308
        $region162: #{tpu_custom_call.1} parent=143 // pred_check_branch
          %1070 = sbr.rel (%p1068) target = $region164
        $region163: #{tpu_custom_call.1} parent=143 // pred_region
          %1071 = dma.done [#allocation9], 1024
        $region164: #{tpu_custom_call.1} parent=143 // pred_fallthru
          _
        // Predicated region
        $region165: #{tpu_custom_call.1} parent=143 // pred_check
          %p1072 = pneg %p350
        $region166: #{tpu_custom_call.1} parent=143 // pred_check_branch
          %1074 = sbr.rel (%p1072) target = $region168
        $region167: #{tpu_custom_call.1} parent=143 // pred_region
          %1075 = dma.done [#allocation12], 1024
        $region168: #{tpu_custom_call.1} parent=143 // pred_fallthru
          _
        // Predicated region
        $region169: #{tpu_custom_call.1} parent=143 // pred_check
          %p1076 = pneg %p392
        $region170: #{tpu_custom_call.1} parent=143 // pred_check_branch
          %1078 = sbr.rel (%p1076) target = $region172
        $region171: #{tpu_custom_call.1} parent=143 // pred_region
          %1079 = dma.done [#allocation12], 2048
        $region172: #{tpu_custom_call.1} parent=143 // pred_fallthru
          _
        // Predicated region
        $region173: #{tpu_custom_call.1} parent=143 // pred_check
          %p1080 = pneg %p434
        $region174: #{tpu_custom_call.1} parent=143 // pred_check_branch
          %1082 = sbr.rel (%p1080) target = $region176
        $region175: #{tpu_custom_call.1} parent=143 // pred_region
          %1083 = dma.done [#allocation15], 2048
        $region176: #{tpu_custom_call.1} parent=143 // pred_fallthru
          _
        // Predicated region
        $region177: #{tpu_custom_call.1} parent=143 // pred_check
          %p1084 = pneg %p539
        $region178: #{tpu_custom_call.1} parent=143 // pred_check_branch
          %1086 = sbr.rel (%p1084) target = $region180
        $region179: #{tpu_custom_call.1} parent=143 // pred_region
          %1087 = dma.done [#allocation15], 16
        $region180: #{tpu_custom_call.1} parent=143 // pred_fallthru
          _
        // Predicated region
        $region181: #{tpu_custom_call.1} parent=143 // pred_check
          %p1088 = pneg %p602
        $region182: #{tpu_custom_call.1} parent=143 // pred_check_branch
          %1090 = sbr.rel (%p1088) target = $region184
        $region183: #{tpu_custom_call.1} parent=143 // pred_region
          %1091 = dma.done [#allocation18], 1024
        $region184: #{tpu_custom_call.1} parent=143 // pred_fallthru
          _
        // Predicated region
        $region185: #{tpu_custom_call.1} parent=143 // pred_check
          %p1092 = pneg %p644
        $region186: #{tpu_custom_call.1} parent=143 // pred_check_branch
          %1094 = sbr.rel (%p1092) target = $region188
        $region187: #{tpu_custom_call.1} parent=143 // pred_region
          %1095 = dma.done [#allocation18], 1024
        $region188: #{tpu_custom_call.1} parent=143 // pred_fallthru
          _
        // Predicated region
        $region189: #{tpu_custom_call.1} parent=143 // pred_check
          %p1096 = pneg %p686
        $region190: #{tpu_custom_call.1} parent=143 // pred_check_branch
          %1098 = sbr.rel (%p1096) target = $region192
        $region191: #{tpu_custom_call.1} parent=143 // pred_region
          %1099 = dma.done [#allocation21], 2048
        $region192: #{tpu_custom_call.1} parent=143 // pred_fallthru
          _
        // Predicated region
        $region193: #{tpu_custom_call.1} parent=143 // pred_check
          %p1100 = pneg %p728
        $region194: #{tpu_custom_call.1} parent=143 // pred_check_branch
          %1102 = sbr.rel (%p1100) target = $region196
        $region195: #{tpu_custom_call.1} parent=143 // pred_region
          %1103 = dma.done [#allocation21], 2048
        $region196: #{tpu_custom_call.1} parent=143 // pred_fallthru
          _
        %s1104 = sand.u32 %s96, 1
        %s1105 = scalar_lea.sflag [#allocation3], %s1104
        %s1106 = sand.u32 %s96, 1
        %s1107 = smul.addr %s1106, 8
        %s1108 = scalar_lea.vmem [#allocation2], %s1107
        %p1109 = pneg %p109
        %p1110 = pneg %p106
        %s1111 = sand.u32 %s88, 1
        %s1112 = scalar_lea.sflag [#allocation6], %s1111
        %s1113 = sand.u32 %s122, 1
        %s1114 = smul.addr %s1113, 8
        %s1115 = scalar_lea.vmem [#allocation5], %s1114
        %p1116 = pneg %p135
        %p1117 = pneg %p132
        %s1118 = sand.u32 %s88, 1
        %s1119 = scalar_lea.sflag [#allocation6], %s1118
        %s1120 = sand.u32 %s148, 1
        %s1121 = smul.addr %s1120, 8
        %s1122 = scalar_lea.vmem [#allocation7], %s1121
        %p1123 = pneg %p161
        %p1124 = pneg %p158
        %p1125 = pneg %p182
        %p1126 = pneg %p179
        %p1127 = pneg %p203
        %p1128 = pneg %p200
        %p1129 = pneg %p224
        %p1130 = pneg %p221
        %p1131 = pneg %p245
        %p1132 = pneg %p242
        %p1133 = pneg %p266
        %p1134 = pneg %p263
        %p1135 = pneg %p287
        %p1136 = pneg %p284
        %p1137 = pneg %p308
        %p1138 = pneg %p305
        %p1139 = pneg %p329
        %p1140 = pneg %p326
        %p1141 = pneg %p350
        %p1142 = pneg %p347
        %p1143 = pneg %p371
        %p1144 = pneg %p368
        %p1145 = pneg %p392
        %p1146 = pneg %p389
        %p1147 = pneg %p413
        %p1148 = pneg %p410
        %p1149 = pneg %p434
        %p1150 = pneg %p431
        %p1151 = pneg %p455
        %p1152 = pneg %p452
        %p1153 = pneg %p476
        %p1154 = pneg %p473
        %p1155 = pneg %p497
        %p1156 = pneg %p494
        %p1157 = pneg %p518
        %p1158 = pneg %p515
        %p1159 = pneg %p539
        %p1160 = pneg %p536
        %p1161 = pneg %p560
        %p1162 = pneg %p557
        %p1163 = pneg %p581
        %p1164 = pneg %p578
        %p1165 = pneg %p602
        %p1166 = pneg %p599
        %p1167 = pneg %p623
        %p1168 = pneg %p620
        %p1169 = pneg %p644
        %p1170 = pneg %p641
        %p1171 = pneg %p665
        %p1172 = pneg %p662
        %p1173 = pneg %p686
        %p1174 = pneg %p683
        %p1175 = pneg %p707
        %p1176 = pneg %p704
        %p1177 = pneg %p728
        %p1178 = pneg %p725
        %p1179 = pneg %p749
        %p1180 = pneg %p746
        %p1181 = pneg %p775
        %p1182 = pneg %p772
        %s1183 = sand.u32 %s762, 1
        %s1184 = scalar_lea.sflag [#allocation4], %s1183
        %s1185 = sand.u32 %s762, 1
        %s1186 = smul.addr %s1185, 8
        %s1187 = scalar_lea.vmem [#allocation23], %s1186
        %v1189 = vld [vmem:[%s1041] sm:$0xff]
        %v1190 = vld [vmem:[%s1050] sm:$0xff]
        %v1191 = vld [vmem:[%s1059] sm:$0xff]
        %1192 = vadd.xlane.f32.xlu0 %v1189
        %v1193 = vpop.xlane.xlu0 %1192
        %v1194 = vrcp.pop 128.0
        %v1195 = vmul.f32 %v1193, %v1194
        %v1196 = vsub.f32 %v1189, %v1195
        %v1197 = vmul.f32 %v1196, %v1196
        %1198 = vadd.xlane.f32.xlu0 %v1197
        %v1199 = vpop.xlane.xlu0 %1198
        %v1200 = vmul.f32 %v1199, %v1194
        %v1201 = vadd.f32 %v1200, 1e-05
        %v1202 = vrsqrt.pop %v1201
        %v1203 = vmul.f32 %v1196, %v1202
        %1204 = vadd.xlane.f32.xlu0 %v1190
        %v1205 = vpop.xlane.xlu0 %1204
        %v1206 = vmul.f32 %v1205, %v1194
        %v1207 = vsub.f32 %v1190, %v1206
        %v1208 = vmul.f32 %v1207, %v1207
        %1209 = vadd.xlane.f32.xlu0 %v1208
        %v1210 = vpop.xlane.xlu0 %1209
        %v1211 = vmul.f32 %v1210, %v1194
        %v1212 = vadd.f32 %v1211, 1e-05
        %v1213 = vrsqrt.pop %v1212
        %v1214 = vmul.f32 %v1207, %v1213
        %1215 = vadd.xlane.f32.xlu0 %v1191
        %v1216 = vpop.xlane.xlu0 %1215
        %v1217 = vmul.f32 %v1216, %v1194
        %v1218 = vsub.f32 %v1191, %v1217
        %v1219 = vmul.f32 %v1218, %v1218
        %1220 = vadd.xlane.f32.xlu0 %v1219
        %v1221 = vpop.xlane.xlu0 %1220
        %v1222 = vmul.f32 %v1221, %v1194
        %v1223 = vadd.f32 %v1222, 1e-05
        %v1224 = vrsqrt.pop %v1223
        %v1225 = vmul.f32 %v1218, %v1224
        %v1226 = vld [vmem:[%s7] sm:$0x1]
        %v1227 = vld [vmem:[%s9] sm:$0x1]
        %v1229 = vlaneseq
        %v1230 = vshrl.u32 %v1229, 7
        %v1231 = vsub.s32 0, %v1230
        %v1232 = vrot.slane %v1226, %v1231
        %v1234 = vmul.f32 %v1203, %v1232
        %v1236 = vlaneseq
        %v1237 = vshrl.u32 %v1236, 7
        %v1238 = vsub.s32 0, %v1237
        %v1239 = vrot.slane %v1227, %v1238
        %v1241 = vadd.f32 %v1234, %v1239
        %v1242 = vpack.c.bf16 %v1241, %v1241
        %v1243 = vmul.f32 %v1214, %v1232
        %v1244 = vadd.f32 %v1243, %v1239
        %v1245 = vpack.c.bf16 %v1244, %v1244
        %v1246 = vld [vmem:[#allocation8] sm:$0xf]
        %v1247 = vld [vmem:[#allocation8 + $0x4] sm:$0xf]
        %v1248 = vld [vmem:[#allocation8 + $0x8] sm:$0xf]
        %v1249 = vld [vmem:[#allocation8 + $0xc] sm:$0xf]
        %v1250 = vld [vmem:[#allocation8 + $0x10] sm:$0xf]
        %v1251 = vld [vmem:[#allocation8 + $0x14] sm:$0xf]
        %v1252 = vld [vmem:[#allocation8 + $0x18] sm:$0xf]
        %v1253 = vld [vmem:[#allocation8 + $0x1c] sm:$0xf]
        %v1254 = vld [vmem:[#allocation8 + $0x20] sm:$0xf]
        %v1255 = vld [vmem:[#allocation8 + $0x24] sm:$0xf]
        %v1256 = vld [vmem:[#allocation8 + $0x28] sm:$0xf]
        %v1257 = vld [vmem:[#allocation8 + $0x2c] sm:$0xf]
        %v1258 = vld [vmem:[#allocation8 + $0x30] sm:$0xf]
        %v1259 = vld [vmem:[#allocation8 + $0x34] sm:$0xf]
        %v1260 = vld [vmem:[#allocation8 + $0x38] sm:$0xf]
        %v1261 = vld [vmem:[#allocation8 + $0x3c] sm:$0xf]
        %v1262 = vld [vmem:[%s17] sm:$0x1]
        %v1264 = vlaneseq
        %v1265 = vshrl.u32 %v1264, 7
        %v1266 = vsub.s32 0, %v1265
        %v1267 = vrot.slane %v1262, %v1266
        %v1285 = vunpack.c.l.b16 %v1246
        %v1286 = vunpack.c.l.b16 %v1247
        %v1287 = vunpack.c.l.b16 %v1248
        %v1288 = vunpack.c.l.b16 %v1249
        %v1289 = vunpack.c.l.b16 %v1250
        %v1290 = vunpack.c.l.b16 %v1251
        %v1291 = vunpack.c.l.b16 %v1252
        %v1292 = vunpack.c.l.b16 %v1253
        %v1293 = vunpack.c.l.b16 %v1254
        %v1294 = vunpack.c.l.b16 %v1255
        %v1295 = vunpack.c.l.b16 %v1256
        %v1296 = vunpack.c.l.b16 %v1257
        %v1297 = vunpack.c.l.b16 %v1258
        %v1298 = vunpack.c.l.b16 %v1259
        %v1299 = vunpack.c.l.b16 %v1260
        %v1300 = vunpack.c.l.b16 %v1261
        %v1301 = vpack.c.b16 %v1286, %v1285
        %v1302 = vpack.c.b16 %v1288, %v1287
        %v1303 = vpack.c.b16 %v1290, %v1289
        %v1304 = vpack.c.b16 %v1292, %v1291
        %v1305 = vpack.c.b16 %v1294, %v1293
        %v1306 = vpack.c.b16 %v1296, %v1295
        %v1307 = vpack.c.b16 %v1298, %v1297
        %v1308 = vpack.c.b16 %v1300, %v1299
        %1317 = vmatprep.subr.bf16.mxu0 0
        %1318 = vmatpush1.bf16.msra.mxu0 %v1301
        %1319 = vmatprep.subr.bf16.mxu0 0
        %1320 = vmatpush1.bf16.msra.mxu0 %v1302
        %1321 = vmatprep.subr.bf16.mxu0 0
        %1322 = vmatpush1.bf16.msra.mxu0 %v1303
        %1323 = vmatprep.subr.bf16.mxu0 0
        %1324 = vmatpush1.bf16.msra.mxu0 %v1304
        %1325 = vmatprep.subr.bf16.mxu0 0
        %1326 = vmatpush1.bf16.msra.mxu0 %v1305
        %1327 = vmatprep.subr.bf16.mxu0 0
        %1328 = vmatpush1.bf16.msra.mxu0 %v1306
        %1329 = vmatprep.subr.bf16.mxu0 0
        %1330 = vmatpush1.bf16.msra.mxu0 %v1307
        %1331 = vmatprep.subr.bf16.mxu0 0
        %1332 = vmatpush1.bf16.msra.mxu0 %v1308
        %1333 = vmatprep.subr.bf16.mxu0 0
        %1334 = vmatpush1.bf16.msra.mxu0 0
        %1335 = vmatprep.subr.bf16.mxu0 0
        %1336 = vmatpush1.bf16.msra.mxu0 0
        %1337 = vmatprep.subr.bf16.mxu0 0
        %1338 = vmatpush1.bf16.msra.mxu0 0
        %1339 = vmatprep.subr.bf16.mxu0 0
        %1340 = vmatpush1.bf16.msra.mxu0 0
        %1341 = vmatprep.subr.bf16.mxu0 0
        %1342 = vmatpush1.bf16.msra.mxu0 0
        %1343 = vmatprep.subr.bf16.mxu0 0
        %1344 = vmatpush1.bf16.msra.mxu0 0
        %1345 = vmatprep.subr.bf16.mxu0 0
        %1346 = vmatpush1.bf16.msra.mxu0 0
        %1347 = vmatprep.subr.bf16.mxu0 0
        %1348 = vmatpush1.bf16.msra.mxu0 0
        %1349 = vmatprep.mubr.bf16.mxu0 0
        %1350 = vmatmul.mubr.bf16.gmra.mrb[0].mxu0 %v1242
        %v1351 = vpop.f32.mrb[0].mxu0
        %v1352 = vadd.f32 %v1267, %v1351
        %v1353 = vpop.f32.mrb[0].mxu0
        %v1354 = vpop.f32.mrb[0].mxu0
        %v1355 = vpop.f32.mrb[0].mxu0
        %1356 = vdwg.mxu0
        %v1357 = vld [vmem:[#allocation10] sm:$0xf]
        %v1358 = vld [vmem:[#allocation10 + $0x4] sm:$0xf]
        %v1359 = vld [vmem:[#allocation10 + $0x8] sm:$0xf]
        %v1360 = vld [vmem:[#allocation10 + $0xc] sm:$0xf]
        %v1361 = vld [vmem:[#allocation10 + $0x10] sm:$0xf]
        %v1362 = vld [vmem:[#allocation10 + $0x14] sm:$0xf]
        %v1363 = vld [vmem:[#allocation10 + $0x18] sm:$0xf]
        %v1364 = vld [vmem:[#allocation10 + $0x1c] sm:$0xf]
        %v1365 = vld [vmem:[#allocation10 + $0x20] sm:$0xf]
        %v1366 = vld [vmem:[#allocation10 + $0x24] sm:$0xf]
        %v1367 = vld [vmem:[#allocation10 + $0x28] sm:$0xf]
        %v1368 = vld [vmem:[#allocation10 + $0x2c] sm:$0xf]
        %v1369 = vld [vmem:[#allocation10 + $0x30] sm:$0xf]
        %v1370 = vld [vmem:[#allocation10 + $0x34] sm:$0xf]
        %v1371 = vld [vmem:[#allocation10 + $0x38] sm:$0xf]
        %v1372 = vld [vmem:[#allocation10 + $0x3c] sm:$0xf]
        %v1373 = vld [vmem:[%s21] sm:$0x1]
        %v1375 = vlaneseq
        %v1376 = vshrl.u32 %v1375, 7
        %v1377 = vsub.s32 0, %v1376
        %v1378 = vrot.slane %v1373, %v1377
        %v1396 = vunpack.c.l.b16 %v1357
        %v1397 = vunpack.c.l.b16 %v1358
        %v1398 = vunpack.c.l.b16 %v1359
        %v1399 = vunpack.c.l.b16 %v1360
        %v1400 = vunpack.c.l.b16 %v1361
        %v1401 = vunpack.c.l.b16 %v1362
        %v1402 = vunpack.c.l.b16 %v1363
        %v1403 = vunpack.c.l.b16 %v1364
        %v1404 = vunpack.c.l.b16 %v1365
        %v1405 = vunpack.c.l.b16 %v1366
        %v1406 = vunpack.c.l.b16 %v1367
        %v1407 = vunpack.c.l.b16 %v1368
        %v1408 = vunpack.c.l.b16 %v1369
        %v1409 = vunpack.c.l.b16 %v1370
        %v1410 = vunpack.c.l.b16 %v1371
        %v1411 = vunpack.c.l.b16 %v1372
        %v1412 = vpack.c.b16 %v1397, %v1396
        %v1413 = vpack.c.b16 %v1399, %v1398
        %v1414 = vpack.c.b16 %v1401, %v1400
        %v1415 = vpack.c.b16 %v1403, %v1402
        %v1416 = vpack.c.b16 %v1405, %v1404
        %v1417 = vpack.c.b16 %v1407, %v1406
        %v1418 = vpack.c.b16 %v1409, %v1408
        %v1419 = vpack.c.b16 %v1411, %v1410
        %1428 = vmatprep.subr.bf16.mxu0 0
        %1429 = vmatpush1.bf16.msra.mxu0 %v1412
        %1430 = vmatprep.subr.bf16.mxu0 0
        %1431 = vmatpush1.bf16.msra.mxu0 %v1413
        %1432 = vmatprep.subr.bf16.mxu0 0
        %1433 = vmatpush1.bf16.msra.mxu0 %v1414
        %1434 = vmatprep.subr.bf16.mxu0 0
        %1435 = vmatpush1.bf16.msra.mxu0 %v1415
        %1436 = vmatprep.subr.bf16.mxu0 0
        %1437 = vmatpush1.bf16.msra.mxu0 %v1416
        %1438 = vmatprep.subr.bf16.mxu0 0
        %1439 = vmatpush1.bf16.msra.mxu0 %v1417
        %1440 = vmatprep.subr.bf16.mxu0 0
        %1441 = vmatpush1.bf16.msra.mxu0 %v1418
        %1442 = vmatprep.subr.bf16.mxu0 0
        %1443 = vmatpush1.bf16.msra.mxu0 %v1419
        %1444 = vmatprep.subr.bf16.mxu0 0
        %1445 = vmatpush1.bf16.msra.mxu0 0
        %1446 = vmatprep.subr.bf16.mxu0 0
        %1447 = vmatpush1.bf16.msra.mxu0 0
        %1448 = vmatprep.subr.bf16.mxu0 0
        %1449 = vmatpush1.bf16.msra.mxu0 0
        %1450 = vmatprep.subr.bf16.mxu0 0
        %1451 = vmatpush1.bf16.msra.mxu0 0
        %1452 = vmatprep.subr.bf16.mxu0 0
        %1453 = vmatpush1.bf16.msra.mxu0 0
        %1454 = vmatprep.subr.bf16.mxu0 0
        %1455 = vmatpush1.bf16.msra.mxu0 0
        %1456 = vmatprep.subr.bf16.mxu0 0
        %1457 = vmatpush1.bf16.msra.mxu0 0
        %1458 = vmatprep.subr.bf16.mxu0 0
        %1459 = vmatpush1.bf16.msra.mxu0 0
        %1460 = vmatprep.mubr.bf16.mxu0 0
        %1461 = vmatmul.mubr.bf16.gmra.mrb[0].mxu0 %v1245
        %v1462 = vpop.f32.mrb[0].mxu0
        %v1463 = vadd.f32 %v1378, %v1462
        %v1464 = vpop.f32.mrb[0].mxu0
        %v1465 = vpop.f32.mrb[0].mxu0
        %v1466 = vpop.f32.mrb[0].mxu0
        %1467 = vdwg.mxu0
        %v1468 = vld [vmem:[#allocation11] sm:$0xf]
        %v1469 = vld [vmem:[#allocation11 + $0x4] sm:$0xf]
        %v1470 = vld [vmem:[#allocation11 + $0x8] sm:$0xf]
        %v1471 = vld [vmem:[#allocation11 + $0xc] sm:$0xf]
        %v1472 = vld [vmem:[#allocation11 + $0x10] sm:$0xf]
        %v1473 = vld [vmem:[#allocation11 + $0x14] sm:$0xf]
        %v1474 = vld [vmem:[#allocation11 + $0x18] sm:$0xf]
        %v1475 = vld [vmem:[#allocation11 + $0x1c] sm:$0xf]
        %v1476 = vld [vmem:[#allocation11 + $0x20] sm:$0xf]
        %v1477 = vld [vmem:[#allocation11 + $0x24] sm:$0xf]
        %v1478 = vld [vmem:[#allocation11 + $0x28] sm:$0xf]
        %v1479 = vld [vmem:[#allocation11 + $0x2c] sm:$0xf]
        %v1480 = vld [vmem:[#allocation11 + $0x30] sm:$0xf]
        %v1481 = vld [vmem:[#allocation11 + $0x34] sm:$0xf]
        %v1482 = vld [vmem:[#allocation11 + $0x38] sm:$0xf]
        %v1483 = vld [vmem:[#allocation11 + $0x3c] sm:$0xf]
        %v1484 = vld [vmem:[%s25] sm:$0x1]
        %v1486 = vlaneseq
        %v1487 = vshrl.u32 %v1486, 7
        %v1488 = vsub.s32 0, %v1487
        %v1489 = vrot.slane %v1484, %v1488
        %v1507 = vunpack.c.l.b16 %v1468
        %v1508 = vunpack.c.l.b16 %v1469
        %v1509 = vunpack.c.l.b16 %v1470
        %v1510 = vunpack.c.l.b16 %v1471
        %v1511 = vunpack.c.l.b16 %v1472
        %v1512 = vunpack.c.l.b16 %v1473
        %v1513 = vunpack.c.l.b16 %v1474
        %v1514 = vunpack.c.l.b16 %v1475
        %v1515 = vunpack.c.l.b16 %v1476
        %v1516 = vunpack.c.l.b16 %v1477
        %v1517 = vunpack.c.l.b16 %v1478
        %v1518 = vunpack.c.l.b16 %v1479
        %v1519 = vunpack.c.l.b16 %v1480
        %v1520 = vunpack.c.l.b16 %v1481
        %v1521 = vunpack.c.l.b16 %v1482
        %v1522 = vunpack.c.l.b16 %v1483
        %v1523 = vpack.c.b16 %v1508, %v1507
        %v1524 = vpack.c.b16 %v1510, %v1509
        %v1525 = vpack.c.b16 %v1512, %v1511
        %v1526 = vpack.c.b16 %v1514, %v1513
        %v1527 = vpack.c.b16 %v1516, %v1515
        %v1528 = vpack.c.b16 %v1518, %v1517
        %v1529 = vpack.c.b16 %v1520, %v1519
        %v1530 = vpack.c.b16 %v1522, %v1521
        %1539 = vmatprep.subr.bf16.mxu0 0
        %1540 = vmatpush1.bf16.msra.mxu0 %v1523
        %1541 = vmatprep.subr.bf16.mxu0 0
        %1542 = vmatpush1.bf16.msra.mxu0 %v1524
        %1543 = vmatprep.subr.bf16.mxu0 0
        %1544 = vmatpush1.bf16.msra.mxu0 %v1525
        %1545 = vmatprep.subr.bf16.mxu0 0
        %1546 = vmatpush1.bf16.msra.mxu0 %v1526
        %1547 = vmatprep.subr.bf16.mxu0 0
        %1548 = vmatpush1.bf16.msra.mxu0 %v1527
        %1549 = vmatprep.subr.bf16.mxu0 0
        %1550 = vmatpush1.bf16.msra.mxu0 %v1528
        %1551 = vmatprep.subr.bf16.mxu0 0
        %1552 = vmatpush1.bf16.msra.mxu0 %v1529
        %1553 = vmatprep.subr.bf16.mxu0 0
        %1554 = vmatpush1.bf16.msra.mxu0 %v1530
        %1555 = vmatprep.subr.bf16.mxu0 0
        %1556 = vmatpush1.bf16.msra.mxu0 0
        %1557 = vmatprep.subr.bf16.mxu0 0
        %1558 = vmatpush1.bf16.msra.mxu0 0
        %1559 = vmatprep.subr.bf16.mxu0 0
        %1560 = vmatpush1.bf16.msra.mxu0 0
        %1561 = vmatprep.subr.bf16.mxu0 0
        %1562 = vmatpush1.bf16.msra.mxu0 0
        %1563 = vmatprep.subr.bf16.mxu0 0
        %1564 = vmatpush1.bf16.msra.mxu0 0
        %1565 = vmatprep.subr.bf16.mxu0 0
        %1566 = vmatpush1.bf16.msra.mxu0 0
        %1567 = vmatprep.subr.bf16.mxu0 0
        %1568 = vmatpush1.bf16.msra.mxu0 0
        %1569 = vmatprep.subr.bf16.mxu0 0
        %1570 = vmatpush1.bf16.msra.mxu0 0
        %1571 = vmatprep.mubr.bf16.mxu0 0
        %1572 = vmatmul.mubr.bf16.gmra.mrb[0].mxu0 %v1245
        %v1573 = vpop.f32.mrb[0].mxu0
        %v1574 = vadd.f32 %v1489, %v1573
        %v1575 = vpop.f32.mrb[0].mxu0
        %v1576 = vpop.f32.mrb[0].mxu0
        %v1577 = vpop.f32.mrb[0].mxu0
        %1578 = vdwg.mxu0
        %v1579 = vpack.c.bf16 %v1352, %v1352
        %v1580 = vpack.c.bf16 %v1463, %v1463
        %v1581 = vpack.c.bf16 %v1574, %v1574
        %vm1582 = vcmask 261120
        %v1584 = vsel %vm1582, %v1579, 0
        %v1587 = vsel %vm1582, %v1580, 0
        %1589 = vmatprep.subr.bf16.mxu0 0
        %1590 = vmatpush1.bf16.xpose.msra.mxu0 %v1587
        %1591 = vmatprep.subr.bf16.mxu0 0
        %1592 = vmatpush1.bf16.xpose.msra.mxu0 0
        %1593 = vmatprep.subr.bf16.mxu0 0
        %1594 = vmatpush1.bf16.xpose.msra.mxu0 0
        %1595 = vmatprep.subr.bf16.mxu0 0
        %1596 = vmatpush1.bf16.xpose.msra.mxu0 0
        %1597 = vmatprep.subr.bf16.mxu0 0
        %1598 = vmatpush1.bf16.xpose.msra.mxu0 0
        %1599 = vmatprep.subr.bf16.mxu0 0
        %1600 = vmatpush1.bf16.xpose.msra.mxu0 0
        %1601 = vmatprep.subr.bf16.mxu0 0
        %1602 = vmatpush1.bf16.xpose.msra.mxu0 0
        %1603 = vmatprep.subr.bf16.mxu0 0
        %1604 = vmatpush1.bf16.xpose.msra.mxu0 0
        %1605 = vmatprep.subr.bf16.mxu0 0
        %1606 = vmatpush1.bf16.xpose.msra.mxu0 0
        %1607 = vmatprep.subr.bf16.mxu0 0
        %1608 = vmatpush1.bf16.xpose.msra.mxu0 0
        %1609 = vmatprep.subr.bf16.mxu0 0
        %1610 = vmatpush1.bf16.xpose.msra.mxu0 0
        %1611 = vmatprep.subr.bf16.mxu0 0
        %1612 = vmatpush1.bf16.xpose.msra.mxu0 0
        %1613 = vmatprep.subr.bf16.mxu0 0
        %1614 = vmatpush1.bf16.xpose.msra.mxu0 0
        %1615 = vmatprep.subr.bf16.mxu0 0
        %1616 = vmatpush1.bf16.xpose.msra.mxu0 0
        %1617 = vmatprep.subr.bf16.mxu0 0
        %1618 = vmatpush1.bf16.xpose.msra.mxu0 0
        %1619 = vmatprep.subr.bf16.mxu0 0
        %1620 = vmatpush1.bf16.xpose.msra.mxu0 0
        %1621 = vmatprep.mubr.bf16.mxu0 0
        %1622 = vmatmul.mubr.bf16.gmra.mrb[0].mxu0 %v1584
        %v1623 = vpop.f32.mrb[0].mxu0
        %v1624 = vadd.f32 0.0, %v1623
        %v1625 = vpop.f32.mrb[0].mxu0
        %v1626 = vpop.f32.mrb[0].mxu0
        %v1627 = vpop.f32.mrb[0].mxu0
        %1628 = vdwg.mxu0
        %vm1629 = vcmask 64512
        %v1630 = vsel %vm1629, %v1624, -inf
        %1631 = vmax.xlane.f32.xlu0 %v1630
        %v1632 = vpop.xlane.xlu0 %1631
        %v1633 = vsub.f32 %v1624, %v1632
        %v1634 = vmul.f32 %v1633, 1.442695
        %v1635 = vpow.pop %v1634
        %v1636 = vsel %vm1629, %v1635, 0.0
        %1637 = vadd.xlane.f32.xlu0 %v1636
        %v1638 = vpop.xlane.xlu0 %1637
        %v1639 = vrcp.pop %v1638
        %v1640 = vmul.f32 %v1635, %v1639
        %v1641 = vpack.c.bf16 %v1640, %v1640
        %v1643 = vsel %vm1629, %v1641, 0
        %vm1645 = vcmask 1043456
        %v1647 = vsel %vm1645, %v1581, 0
        %1649 = vmatprep.subr.bf16.mxu0 0
        %1650 = vmatpush1.bf16.msra.mxu0 %v1647
        %1651 = vmatprep.subr.bf16.mxu0 0
        %1652 = vmatpush1.bf16.msra.mxu0 0
        %1653 = vmatprep.subr.bf16.mxu0 0
        %1654 = vmatpush1.bf16.msra.mxu0 0
        %1655 = vmatprep.subr.bf16.mxu0 0
        %1656 = vmatpush1.bf16.msra.mxu0 0
        %1657 = vmatprep.subr.bf16.mxu0 0
        %1658 = vmatpush1.bf16.msra.mxu0 0
        %1659 = vmatprep.subr.bf16.mxu0 0
        %1660 = vmatpush1.bf16.msra.mxu0 0
        %1661 = vmatprep.subr.bf16.mxu0 0
        %1662 = vmatpush1.bf16.msra.mxu0 0
        %1663 = vmatprep.subr.bf16.mxu0 0
        %1664 = vmatpush1.bf16.msra.mxu0 0
        %1665 = vmatprep.subr.bf16.mxu0 0
        %1666 = vmatpush1.bf16.msra.mxu0 0
        %1667 = vmatprep.subr.bf16.mxu0 0
        %1668 = vmatpush1.bf16.msra.mxu0 0
        %1669 = vmatprep.subr.bf16.mxu0 0
        %1670 = vmatpush1.bf16.msra.mxu0 0
        %1671 = vmatprep.subr.bf16.mxu0 0
        %1672 = vmatpush1.bf16.msra.mxu0 0
        %1673 = vmatprep.subr.bf16.mxu0 0
        %1674 = vmatpush1.bf16.msra.mxu0 0
        %1675 = vmatprep.subr.bf16.mxu0 0
        %1676 = vmatpush1.bf16.msra.mxu0 0
        %1677 = vmatprep.subr.bf16.mxu0 0
        %1678 = vmatpush1.bf16.msra.mxu0 0
        %1679 = vmatprep.subr.bf16.mxu0 0
        %1680 = vmatpush1.bf16.msra.mxu0 0
        %1681 = vmatprep.mubr.bf16.mxu0 0
        %1682 = vmatmul.mubr.bf16.gmra.mrb[0].mxu0 %v1643
        %v1683 = vpop.f32.mrb[0].mxu0
        %v1684 = vadd.f32 0.0, %v1683
        %v1685 = vpop.f32.mrb[0].mxu0
        %v1686 = vpop.f32.mrb[0].mxu0
        %v1687 = vpop.f32.mrb[0].mxu0
        %1688 = vdwg.mxu0
        %1690 = vrot.lane.b32.xlu0 %v1579, 96
        %v1691 = vpop.permute.xlu0 %1690
        %1693 = vrot.lane.b32.xlu0 %v1580, 96
        %v1694 = vpop.permute.xlu0 %1693
        %v1696 = vsel %vm1582, %v1691, 0
        %v1699 = vsel %vm1582, %v1694, 0
        %1701 = vmatprep.subr.bf16.mxu0 0
        %1702 = vmatpush1.bf16.xpose.msra.mxu0 %v1699
        %1703 = vmatprep.subr.bf16.mxu0 0
        %1704 = vmatpush1.bf16.xpose.msra.mxu0 0
        %1705 = vmatprep.subr.bf16.mxu0 0
        %1706 = vmatpush1.bf16.xpose.msra.mxu0 0
        %1707 = vmatprep.subr.bf16.mxu0 0
        %1708 = vmatpush1.bf16.xpose.msra.mxu0 0
        %1709 = vmatprep.subr.bf16.mxu0 0
        %1710 = vmatpush1.bf16.xpose.msra.mxu0 0
        %1711 = vmatprep.subr.bf16.mxu0 0
        %1712 = vmatpush1.bf16.xpose.msra.mxu0 0
        %1713 = vmatprep.subr.bf16.mxu0 0
        %1714 = vmatpush1.bf16.xpose.msra.mxu0 0
        %1715 = vmatprep.subr.bf16.mxu0 0
        %1716 = vmatpush1.bf16.xpose.msra.mxu0 0
        %1717 = vmatprep.subr.bf16.mxu0 0
        %1718 = vmatpush1.bf16.xpose.msra.mxu0 0
        %1719 = vmatprep.subr.bf16.mxu0 0
        %1720 = vmatpush1.bf16.xpose.msra.mxu0 0
        %1721 = vmatprep.subr.bf16.mxu0 0
        %1722 = vmatpush1.bf16.xpose.msra.mxu0 0
        %1723 = vmatprep.subr.bf16.mxu0 0
        %1724 = vmatpush1.bf16.xpose.msra.mxu0 0
        %1725 = vmatprep.subr.bf16.mxu0 0
        %1726 = vmatpush1.bf16.xpose.msra.mxu0 0
        %1727 = vmatprep.subr.bf16.mxu0 0
        %1728 = vmatpush1.bf16.xpose.msra.mxu0 0
        %1729 = vmatprep.subr.bf16.mxu0 0
        %1730 = vmatpush1.bf16.xpose.msra.mxu0 0
        %1731 = vmatprep.subr.bf16.mxu0 0
        %1732 = vmatpush1.bf16.xpose.msra.mxu0 0
        %1733 = vmatprep.mubr.bf16.mxu0 0
        %1734 = vmatmul.mubr.bf16.gmra.mrb[0].mxu0 %v1696
        %v1735 = vpop.f32.mrb[0].mxu0
        %v1736 = vadd.f32 0.0, %v1735
        %v1737 = vpop.f32.mrb[0].mxu0
        %v1738 = vpop.f32.mrb[0].mxu0
        %v1739 = vpop.f32.mrb[0].mxu0
        %1740 = vdwg.mxu0
        %v1741 = vsel %vm1629, %v1736, -inf
        %1742 = vmax.xlane.f32.xlu0 %v1741
        %v1743 = vpop.xlane.xlu0 %1742
        %v1744 = vsub.f32 %v1736, %v1743
        %v1745 = vmul.f32 %v1744, 1.442695
        %v1746 = vpow.pop %v1745
        %v1747 = vsel %vm1629, %v1746, 0.0
        %1748 = vadd.xlane.f32.xlu0 %v1747
        %v1749 = vpop.xlane.xlu0 %1748
        %v1750 = vrcp.pop %v1749
        %v1751 = vmul.f32 %v1746, %v1750
        %v1752 = vpack.c.bf16 %v1751, %v1751
        %1754 = vrot.lane.b32.xlu0 %v1581, 96
        %v1755 = vpop.permute.xlu0 %1754
        %v1757 = vsel %vm1629, %v1752, 0
        %v1760 = vsel %vm1645, %v1755, 0
        %1762 = vmatprep.subr.bf16.mxu0 0
        %1763 = vmatpush1.bf16.msra.mxu0 %v1760
        %1764 = vmatprep.subr.bf16.mxu0 0
        %1765 = vmatpush1.bf16.msra.mxu0 0
        %1766 = vmatprep.subr.bf16.mxu0 0
        %1767 = vmatpush1.bf16.msra.mxu0 0
        %1768 = vmatprep.subr.bf16.mxu0 0
        %1769 = vmatpush1.bf16.msra.mxu0 0
        %1770 = vmatprep.subr.bf16.mxu0 0
        %1771 = vmatpush1.bf16.msra.mxu0 0
        %1772 = vmatprep.subr.bf16.mxu0 0
        %1773 = vmatpush1.bf16.msra.mxu0 0
        %1774 = vmatprep.subr.bf16.mxu0 0
        %1775 = vmatpush1.bf16.msra.mxu0 0
        %1776 = vmatprep.subr.bf16.mxu0 0
        %1777 = vmatpush1.bf16.msra.mxu0 0
        %1778 = vmatprep.subr.bf16.mxu0 0
        %1779 = vmatpush1.bf16.msra.mxu0 0
        %1780 = vmatprep.subr.bf16.mxu0 0
        %1781 = vmatpush1.bf16.msra.mxu0 0
        %1782 = vmatprep.subr.bf16.mxu0 0
        %1783 = vmatpush1.bf16.msra.mxu0 0
        %1784 = vmatprep.subr.bf16.mxu0 0
        %1785 = vmatpush1.bf16.msra.mxu0 0
        %1786 = vmatprep.subr.bf16.mxu0 0
        %1787 = vmatpush1.bf16.msra.mxu0 0
        %1788 = vmatprep.subr.bf16.mxu0 0
        %1789 = vmatpush1.bf16.msra.mxu0 0
        %1790 = vmatprep.subr.bf16.mxu0 0
        %1791 = vmatpush1.bf16.msra.mxu0 0
        %1792 = vmatprep.subr.bf16.mxu0 0
        %1793 = vmatpush1.bf16.msra.mxu0 0
        %1794 = vmatprep.mubr.bf16.mxu0 0
        %1795 = vmatmul.mubr.bf16.gmra.mrb[0].mxu0 %v1757
        %v1796 = vpop.f32.mrb[0].mxu0
        %v1797 = vadd.f32 0.0, %v1796
        %v1798 = vpop.f32.mrb[0].mxu0
        %v1799 = vpop.f32.mrb[0].mxu0
        %v1800 = vpop.f32.mrb[0].mxu0
        %1801 = vdwg.mxu0
        %1802 = vrot.lane.b32.xlu0 %v1579, 64
        %v1803 = vpop.permute.xlu0 %1802
        %1804 = vrot.lane.b32.xlu0 %v1580, 64
        %v1805 = vpop.permute.xlu0 %1804
        %v1807 = vsel %vm1582, %v1803, 0
        %v1810 = vsel %vm1582, %v1805, 0
        %1812 = vmatprep.subr.bf16.mxu0 0
        %1813 = vmatpush1.bf16.xpose.msra.mxu0 %v1810
        %1814 = vmatprep.subr.bf16.mxu0 0
        %1815 = vmatpush1.bf16.xpose.msra.mxu0 0
        %1816 = vmatprep.subr.bf16.mxu0 0
        %1817 = vmatpush1.bf16.xpose.msra.mxu0 0
        %1818 = vmatprep.subr.bf16.mxu0 0
        %1819 = vmatpush1.bf16.xpose.msra.mxu0 0
        %1820 = vmatprep.subr.bf16.mxu0 0
        %1821 = vmatpush1.bf16.xpose.msra.mxu0 0
        %1822 = vmatprep.subr.bf16.mxu0 0
        %1823 = vmatpush1.bf16.xpose.msra.mxu0 0
        %1824 = vmatprep.subr.bf16.mxu0 0
        %1825 = vmatpush1.bf16.xpose.msra.mxu0 0
        %1826 = vmatprep.subr.bf16.mxu0 0
        %1827 = vmatpush1.bf16.xpose.msra.mxu0 0
        %1828 = vmatprep.subr.bf16.mxu0 0
        %1829 = vmatpush1.bf16.xpose.msra.mxu0 0
        %1830 = vmatprep.subr.bf16.mxu0 0
        %1831 = vmatpush1.bf16.xpose.msra.mxu0 0
        %1832 = vmatprep.subr.bf16.mxu0 0
        %1833 = vmatpush1.bf16.xpose.msra.mxu0 0
        %1834 = vmatprep.subr.bf16.mxu0 0
        %1835 = vmatpush1.bf16.xpose.msra.mxu0 0
        %1836 = vmatprep.subr.bf16.mxu0 0
        %1837 = vmatpush1.bf16.xpose.msra.mxu0 0
        %1838 = vmatprep.subr.bf16.mxu0 0
        %1839 = vmatpush1.bf16.xpose.msra.mxu0 0
        %1840 = vmatprep.subr.bf16.mxu0 0
        %1841 = vmatpush1.bf16.xpose.msra.mxu0 0
        %1842 = vmatprep.subr.bf16.mxu0 0
        %1843 = vmatpush1.bf16.xpose.msra.mxu0 0
        %1844 = vmatprep.mubr.bf16.mxu0 0
        %1845 = vmatmul.mubr.bf16.gmra.mrb[0].mxu0 %v1807
        %v1846 = vpop.f32.mrb[0].mxu0
        %v1847 = vadd.f32 0.0, %v1846
        %v1848 = vpop.f32.mrb[0].mxu0
        %v1849 = vpop.f32.mrb[0].mxu0
        %v1850 = vpop.f32.mrb[0].mxu0
        %1851 = vdwg.mxu0
        %v1852 = vsel %vm1629, %v1847, -inf
        %1853 = vmax.xlane.f32.xlu0 %v1852
        %v1854 = vpop.xlane.xlu0 %1853
        %v1855 = vsub.f32 %v1847, %v1854
        %v1856 = vmul.f32 %v1855, 1.442695
        %v1857 = vpow.pop %v1856
        %v1858 = vsel %vm1629, %v1857, 0.0
        %1859 = vadd.xlane.f32.xlu0 %v1858
        %v1860 = vpop.xlane.xlu0 %1859
        %v1861 = vrcp.pop %v1860
        %v1862 = vmul.f32 %v1857, %v1861
        %v1863 = vpack.c.bf16 %v1862, %v1862
        %1864 = vrot.lane.b32.xlu0 %v1581, 64
        %v1865 = vpop.permute.xlu0 %1864
        %v1867 = vsel %vm1629, %v1863, 0
        %v1870 = vsel %vm1645, %v1865, 0
        %1872 = vmatprep.subr.bf16.mxu0 0
        %1873 = vmatpush1.bf16.msra.mxu0 %v1870
        %1874 = vmatprep.subr.bf16.mxu0 0
        %1875 = vmatpush1.bf16.msra.mxu0 0
        %1876 = vmatprep.subr.bf16.mxu0 0
        %1877 = vmatpush1.bf16.msra.mxu0 0
        %1878 = vmatprep.subr.bf16.mxu0 0
        %1879 = vmatpush1.bf16.msra.mxu0 0
        %1880 = vmatprep.subr.bf16.mxu0 0
        %1881 = vmatpush1.bf16.msra.mxu0 0
        %1882 = vmatprep.subr.bf16.mxu0 0
        %1883 = vmatpush1.bf16.msra.mxu0 0
        %1884 = vmatprep.subr.bf16.mxu0 0
        %1885 = vmatpush1.bf16.msra.mxu0 0
        %1886 = vmatprep.subr.bf16.mxu0 0
        %1887 = vmatpush1.bf16.msra.mxu0 0
        %1888 = vmatprep.subr.bf16.mxu0 0
        %1889 = vmatpush1.bf16.msra.mxu0 0
        %1890 = vmatprep.subr.bf16.mxu0 0
        %1891 = vmatpush1.bf16.msra.mxu0 0
        %1892 = vmatprep.subr.bf16.mxu0 0
        %1893 = vmatpush1.bf16.msra.mxu0 0
        %1894 = vmatprep.subr.bf16.mxu0 0
        %1895 = vmatpush1.bf16.msra.mxu0 0
        %1896 = vmatprep.subr.bf16.mxu0 0
        %1897 = vmatpush1.bf16.msra.mxu0 0
        %1898 = vmatprep.subr.bf16.mxu0 0
        %1899 = vmatpush1.bf16.msra.mxu0 0
        %1900 = vmatprep.subr.bf16.mxu0 0
        %1901 = vmatpush1.bf16.msra.mxu0 0
        %1902 = vmatprep.subr.bf16.mxu0 0
        %1903 = vmatpush1.bf16.msra.mxu0 0
        %1904 = vmatprep.mubr.bf16.mxu0 0
        %1905 = vmatmul.mubr.bf16.gmra.mrb[0].mxu0 %v1867
        %v1906 = vpop.f32.mrb[0].mxu0
        %v1907 = vadd.f32 0.0, %v1906
        %v1908 = vpop.f32.mrb[0].mxu0
        %v1909 = vpop.f32.mrb[0].mxu0
        %v1910 = vpop.f32.mrb[0].mxu0
        %1911 = vdwg.mxu0
        %1912 = vrot.lane.b32.xlu0 %v1579, 32
        %v1913 = vpop.permute.xlu0 %1912
        %1914 = vrot.lane.b32.xlu0 %v1580, 32
        %v1915 = vpop.permute.xlu0 %1914
        %v1917 = vsel %vm1582, %v1913, 0
        %v1920 = vsel %vm1582, %v1915, 0
        %1922 = vmatprep.subr.bf16.mxu0 0
        %1923 = vmatpush1.bf16.xpose.msra.mxu0 %v1920
        %1924 = vmatprep.subr.bf16.mxu0 0
        %1925 = vmatpush1.bf16.xpose.msra.mxu0 0
        %1926 = vmatprep.subr.bf16.mxu0 0
        %1927 = vmatpush1.bf16.xpose.msra.mxu0 0
        %1928 = vmatprep.subr.bf16.mxu0 0
        %1929 = vmatpush1.bf16.xpose.msra.mxu0 0
        %1930 = vmatprep.subr.bf16.mxu0 0
        %1931 = vmatpush1.bf16.xpose.msra.mxu0 0
        %1932 = vmatprep.subr.bf16.mxu0 0
        %1933 = vmatpush1.bf16.xpose.msra.mxu0 0
        %1934 = vmatprep.subr.bf16.mxu0 0
        %1935 = vmatpush1.bf16.xpose.msra.mxu0 0
        %1936 = vmatprep.subr.bf16.mxu0 0
        %1937 = vmatpush1.bf16.xpose.msra.mxu0 0
        %1938 = vmatprep.subr.bf16.mxu0 0
        %1939 = vmatpush1.bf16.xpose.msra.mxu0 0
        %1940 = vmatprep.subr.bf16.mxu0 0
        %1941 = vmatpush1.bf16.xpose.msra.mxu0 0
        %1942 = vmatprep.subr.bf16.mxu0 0
        %1943 = vmatpush1.bf16.xpose.msra.mxu0 0
        %1944 = vmatprep.subr.bf16.mxu0 0
        %1945 = vmatpush1.bf16.xpose.msra.mxu0 0
        %1946 = vmatprep.subr.bf16.mxu0 0
        %1947 = vmatpush1.bf16.xpose.msra.mxu0 0
        %1948 = vmatprep.subr.bf16.mxu0 0
        %1949 = vmatpush1.bf16.xpose.msra.mxu0 0
        %1950 = vmatprep.subr.bf16.mxu0 0
        %1951 = vmatpush1.bf16.xpose.msra.mxu0 0
        %1952 = vmatprep.subr.bf16.mxu0 0
        %1953 = vmatpush1.bf16.xpose.msra.mxu0 0
        %1954 = vmatprep.mubr.bf16.mxu0 0
        %1955 = vmatmul.mubr.bf16.gmra.mrb[0].mxu0 %v1917
        %v1956 = vpop.f32.mrb[0].mxu0
        %v1957 = vadd.f32 0.0, %v1956
        %v1958 = vpop.f32.mrb[0].mxu0
        %v1959 = vpop.f32.mrb[0].mxu0
        %v1960 = vpop.f32.mrb[0].mxu0
        %1961 = vdwg.mxu0
        %v1962 = vsel %vm1629, %v1957, -inf
        %1963 = vmax.xlane.f32.xlu0 %v1962
        %v1964 = vpop.xlane.xlu0 %1963
        %v1965 = vsub.f32 %v1957, %v1964
        %v1966 = vmul.f32 %v1965, 1.442695
        %v1967 = vpow.pop %v1966
        %v1968 = vsel %vm1629, %v1967, 0.0
        %1969 = vadd.xlane.f32.xlu0 %v1968
        %v1970 = vpop.xlane.xlu0 %1969
        %v1971 = vrcp.pop %v1970
        %v1972 = vmul.f32 %v1967, %v1971
        %v1973 = vpack.c.bf16 %v1972, %v1972
        %1974 = vrot.lane.b32.xlu0 %v1581, 32
        %v1975 = vpop.permute.xlu0 %1974
        %v1977 = vsel %vm1629, %v1973, 0
        %v1980 = vsel %vm1645, %v1975, 0
        %1982 = vmatprep.subr.bf16.mxu0 0
        %1983 = vmatpush1.bf16.msra.mxu0 %v1980
        %1984 = vmatprep.subr.bf16.mxu0 0
        %1985 = vmatpush1.bf16.msra.mxu0 0
        %1986 = vmatprep.subr.bf16.mxu0 0
        %1987 = vmatpush1.bf16.msra.mxu0 0
        %1988 = vmatprep.subr.bf16.mxu0 0
        %1989 = vmatpush1.bf16.msra.mxu0 0
        %1990 = vmatprep.subr.bf16.mxu0 0
        %1991 = vmatpush1.bf16.msra.mxu0 0
        %1992 = vmatprep.subr.bf16.mxu0 0
        %1993 = vmatpush1.bf16.msra.mxu0 0
        %1994 = vmatprep.subr.bf16.mxu0 0
        %1995 = vmatpush1.bf16.msra.mxu0 0
        %1996 = vmatprep.subr.bf16.mxu0 0
        %1997 = vmatpush1.bf16.msra.mxu0 0
        %1998 = vmatprep.subr.bf16.mxu0 0
        %1999 = vmatpush1.bf16.msra.mxu0 0
        %2000 = vmatprep.subr.bf16.mxu0 0
        %2001 = vmatpush1.bf16.msra.mxu0 0
        %2002 = vmatprep.subr.bf16.mxu0 0
        %2003 = vmatpush1.bf16.msra.mxu0 0
        %2004 = vmatprep.subr.bf16.mxu0 0
        %2005 = vmatpush1.bf16.msra.mxu0 0
        %2006 = vmatprep.subr.bf16.mxu0 0
        %2007 = vmatpush1.bf16.msra.mxu0 0
        %2008 = vmatprep.subr.bf16.mxu0 0
        %2009 = vmatpush1.bf16.msra.mxu0 0
        %2010 = vmatprep.subr.bf16.mxu0 0
        %2011 = vmatpush1.bf16.msra.mxu0 0
        %2012 = vmatprep.subr.bf16.mxu0 0
        %2013 = vmatpush1.bf16.msra.mxu0 0
        %2014 = vmatprep.mubr.bf16.mxu0 0
        %2015 = vmatmul.mubr.bf16.gmra.mrb[0].mxu0 %v1977
        %v2016 = vpop.f32.mrb[0].mxu0
        %v2017 = vadd.f32 0.0, %v2016
        %v2018 = vpop.f32.mrb[0].mxu0
        %v2019 = vpop.f32.mrb[0].mxu0
        %v2020 = vpop.f32.mrb[0].mxu0
        %2021 = vdwg.mxu0
        %2023 = vrot.lane.b32.xlu0 %v1797, 32
        %v2024 = vpop.permute.xlu0 %2023
        %2027 = vrot.lane.b32.xlu0 %v1907, 64
        %v2028 = vpop.permute.xlu0 %2027
        %2031 = vrot.lane.b32.xlu0 %v2017, 96
        %v2032 = vpop.permute.xlu0 %2031
        %v2034 = vsel %vm1582, %v1684, %v2024
        %vm2035 = vcmask 523264
        %v2036 = vsel %vm2035, %v2034, %v2028
        %vm2037 = vcmask 785408
        %v2038 = vsel %vm2037, %v2036, %v2032
        %v2039 = vadd.f32 %v1189, %v2038
        %v2040 = vld [vmem:[%s11] sm:$0x1]
        %v2041 = vld [vmem:[%s13] sm:$0x1]
        %2042 = vadd.xlane.f32.xlu0 %v2039
        %v2043 = vpop.xlane.xlu0 %2042
        %v2044 = vmul.f32 %v2043, %v1194
        %v2045 = vsub.f32 %v2039, %v2044
        %v2046 = vmul.f32 %v2045, %v2045
        %2047 = vadd.xlane.f32.xlu0 %v2046
        %v2048 = vpop.xlane.xlu0 %2047
        %v2049 = vmul.f32 %v2048, %v1194
        %v2050 = vadd.f32 %v2049, 1e-05
        %v2051 = vrsqrt.pop %v2050
        %v2052 = vmul.f32 %v2045, %v2051
        %v2054 = vlaneseq
        %v2055 = vshrl.u32 %v2054, 7
        %v2056 = vsub.s32 0, %v2055
        %v2057 = vrot.slane %v2040, %v2056
        %v2059 = vmul.f32 %v2052, %v2057
        %v2061 = vlaneseq
        %v2062 = vshrl.u32 %v2061, 7
        %v2063 = vsub.s32 0, %v2062
        %v2064 = vrot.slane %v2041, %v2063
        %v2066 = vadd.f32 %v2059, %v2064
        %v2067 = vpack.c.bf16 %v2066, %v2066
        %v2068 = vld [vmem:[#allocation13] sm:$0xff]
        %v2069 = vld [vmem:[#allocation13 + $0x8] sm:$0xff]
        %v2070 = vld [vmem:[#allocation13 + $0x10] sm:$0xff]
        %v2071 = vld [vmem:[#allocation13 + $0x18] sm:$0xff]
        %v2072 = vld [vmem:[#allocation13 + $0x20] sm:$0xff]
        %v2073 = vld [vmem:[#allocation13 + $0x28] sm:$0xff]
        %v2074 = vld [vmem:[#allocation13 + $0x30] sm:$0xff]
        %v2075 = vld [vmem:[#allocation13 + $0x38] sm:$0xff]
        %v2076 = vld [vmem:[#allocation13 + $0x40] sm:$0xff]
        %v2077 = vld [vmem:[#allocation13 + $0x48] sm:$0xff]
        %v2078 = vld [vmem:[#allocation13 + $0x50] sm:$0xff]
        %v2079 = vld [vmem:[#allocation13 + $0x58] sm:$0xff]
        %v2080 = vld [vmem:[#allocation13 + $0x60] sm:$0xff]
        %v2081 = vld [vmem:[#allocation13 + $0x68] sm:$0xff]
        %v2082 = vld [vmem:[#allocation13 + $0x70] sm:$0xff]
        %v2083 = vld [vmem:[#allocation13 + $0x78] sm:$0xff]
        %v2084 = vld [vmem:[%s29] sm:$0x3]
        %v2086 = vlaneseq
        %v2087 = vshrl.u32 %v2086, 7
        %v2088 = vsub.s32 0, %v2087
        %v2089 = vrot.slane %v2084, %v2088
        %v2090 = vlaneseq
        %v2091 = vshrl.u32 %v2090, 7
        %v2092 = vsub.s32 1, %v2091
        %v2093 = vrot.slane %v2084, %v2092
        %v2112 = vunpack.c.l.b16 %v2068
        %v2113 = vunpack.c.h.b16 %v2068
        %v2114 = vunpack.c.l.b16 %v2069
        %v2115 = vunpack.c.h.b16 %v2069
        %v2116 = vunpack.c.l.b16 %v2070
        %v2117 = vunpack.c.h.b16 %v2070
        %v2118 = vunpack.c.l.b16 %v2071
        %v2119 = vunpack.c.h.b16 %v2071
        %v2120 = vunpack.c.l.b16 %v2072
        %v2121 = vunpack.c.h.b16 %v2072
        %v2122 = vunpack.c.l.b16 %v2073
        %v2123 = vunpack.c.h.b16 %v2073
        %v2124 = vunpack.c.l.b16 %v2074
        %v2125 = vunpack.c.h.b16 %v2074
        %v2126 = vunpack.c.l.b16 %v2075
        %v2127 = vunpack.c.h.b16 %v2075
        %v2128 = vunpack.c.l.b16 %v2076
        %v2129 = vunpack.c.h.b16 %v2076
        %v2130 = vunpack.c.l.b16 %v2077
        %v2131 = vunpack.c.h.b16 %v2077
        %v2132 = vunpack.c.l.b16 %v2078
        %v2133 = vunpack.c.h.b16 %v2078
        %v2134 = vunpack.c.l.b16 %v2079
        %v2135 = vunpack.c.h.b16 %v2079
        %v2136 = vunpack.c.l.b16 %v2080
        %v2137 = vunpack.c.h.b16 %v2080
        %v2138 = vunpack.c.l.b16 %v2081
        %v2139 = vunpack.c.h.b16 %v2081
        %v2140 = vunpack.c.l.b16 %v2082
        %v2141 = vunpack.c.h.b16 %v2082
        %v2142 = vunpack.c.l.b16 %v2083
        %v2143 = vunpack.c.h.b16 %v2083
        %v2144 = vpack.c.b16 %v2114, %v2112
        %v2145 = vpack.c.b16 %v2115, %v2113
        %v2146 = vpack.c.b16 %v2118, %v2116
        %v2147 = vpack.c.b16 %v2119, %v2117
        %v2148 = vpack.c.b16 %v2122, %v2120
        %v2149 = vpack.c.b16 %v2123, %v2121
        %v2150 = vpack.c.b16 %v2126, %v2124
        %v2151 = vpack.c.b16 %v2127, %v2125
        %v2152 = vpack.c.b16 %v2130, %v2128
        %v2153 = vpack.c.b16 %v2131, %v2129
        %v2154 = vpack.c.b16 %v2134, %v2132
        %v2155 = vpack.c.b16 %v2135, %v2133
        %v2156 = vpack.c.b16 %v2138, %v2136
        %v2157 = vpack.c.b16 %v2139, %v2137
        %v2158 = vpack.c.b16 %v2142, %v2140
        %v2159 = vpack.c.b16 %v2143, %v2141
        %2176 = vmatprep.subr.bf16.mxu0 %v2145
        %2177 = vmatpush1.bf16.msra.mxu0 %v2144
        %2178 = vmatprep.subr.bf16.mxu0 %v2147
        %2179 = vmatpush1.bf16.msra.mxu0 %v2146
        %2180 = vmatprep.subr.bf16.mxu0 %v2149
        %2181 = vmatpush1.bf16.msra.mxu0 %v2148
        %2182 = vmatprep.subr.bf16.mxu0 %v2151
        %2183 = vmatpush1.bf16.msra.mxu0 %v2150
        %2184 = vmatprep.subr.bf16.mxu0 %v2153
        %2185 = vmatpush1.bf16.msra.mxu0 %v2152
        %2186 = vmatprep.subr.bf16.mxu0 %v2155
        %2187 = vmatpush1.bf16.msra.mxu0 %v2154
        %2188 = vmatprep.subr.bf16.mxu0 %v2157
        %2189 = vmatpush1.bf16.msra.mxu0 %v2156
        %2190 = vmatprep.subr.bf16.mxu0 %v2159
        %2191 = vmatpush1.bf16.msra.mxu0 %v2158
        %2192 = vmatprep.subr.bf16.mxu0 0
        %2193 = vmatpush1.bf16.msra.mxu0 0
        %2194 = vmatprep.subr.bf16.mxu0 0
        %2195 = vmatpush1.bf16.msra.mxu0 0
        %2196 = vmatprep.subr.bf16.mxu0 0
        %2197 = vmatpush1.bf16.msra.mxu0 0
        %2198 = vmatprep.subr.bf16.mxu0 0
        %2199 = vmatpush1.bf16.msra.mxu0 0
        %2200 = vmatprep.subr.bf16.mxu0 0
        %2201 = vmatpush1.bf16.msra.mxu0 0
        %2202 = vmatprep.subr.bf16.mxu0 0
        %2203 = vmatpush1.bf16.msra.mxu0 0
        %2204 = vmatprep.subr.bf16.mxu0 0
        %2205 = vmatpush1.bf16.msra.mxu0 0
        %2206 = vmatprep.subr.bf16.mxu0 0
        %2207 = vmatpush1.bf16.msra.mxu0 0
        %2208 = vmatprep.mubr.bf16.mxu0 0
        %2209 = vmatmul.mubr.bf16.gmra.mrb[0].mxu0 %v2067
        %v2210 = vpop.f32.mrb[0].mxu0
        %v2211 = vadd.f32 %v2089, %v2210
        %v2212 = vpop.f32.mrb[0].mxu0
        %v2213 = vadd.f32 %v2093, %v2212
        %v2214 = vpop.f32.mrb[0].mxu0
        %v2215 = vpop.f32.mrb[0].mxu0
        %2216 = vdwg.mxu0
        %v2217 = vmax.f32 %v2211, 0.0
        %v2218 = vmax.f32 %v2213, 0.0
        %v2219 = vpack.c.bf16 %v2217, %v2217
        %v2220 = vpack.c.bf16 %v2218, %v2218
        %v2221 = vld [vmem:[#allocation14] sm:$0xf]
        %v2222 = vld [vmem:[#allocation14 + $0x4] sm:$0xf]
        %v2223 = vld [vmem:[#allocation14 + $0x8] sm:$0xf]
        %v2224 = vld [vmem:[#allocation14 + $0xc] sm:$0xf]
        %v2225 = vld [vmem:[#allocation14 + $0x10] sm:$0xf]
        %v2226 = vld [vmem:[#allocation14 + $0x14] sm:$0xf]
        %v2227 = vld [vmem:[#allocation14 + $0x18] sm:$0xf]
        %v2228 = vld [vmem:[#allocation14 + $0x1c] sm:$0xf]
        %v2229 = vld [vmem:[#allocation14 + $0x20] sm:$0xf]
        %v2230 = vld [vmem:[#allocation14 + $0x24] sm:$0xf]
        %v2231 = vld [vmem:[#allocation14 + $0x28] sm:$0xf]
        %v2232 = vld [vmem:[#allocation14 + $0x2c] sm:$0xf]
        %v2233 = vld [vmem:[#allocation14 + $0x30] sm:$0xf]
        %v2234 = vld [vmem:[#allocation14 + $0x34] sm:$0xf]
        %v2235 = vld [vmem:[#allocation14 + $0x38] sm:$0xf]
        %v2236 = vld [vmem:[#allocation14 + $0x3c] sm:$0xf]
        %v2237 = vld [vmem:[#allocation14 + $0x40] sm:$0xf]
        %v2238 = vld [vmem:[#allocation14 + $0x44] sm:$0xf]
        %v2239 = vld [vmem:[#allocation14 + $0x48] sm:$0xf]
        %v2240 = vld [vmem:[#allocation14 + $0x4c] sm:$0xf]
        %v2241 = vld [vmem:[#allocation14 + $0x50] sm:$0xf]
        %v2242 = vld [vmem:[#allocation14 + $0x54] sm:$0xf]
        %v2243 = vld [vmem:[#allocation14 + $0x58] sm:$0xf]
        %v2244 = vld [vmem:[#allocation14 + $0x5c] sm:$0xf]
        %v2245 = vld [vmem:[#allocation14 + $0x60] sm:$0xf]
        %v2246 = vld [vmem:[#allocation14 + $0x64] sm:$0xf]
        %v2247 = vld [vmem:[#allocation14 + $0x68] sm:$0xf]
        %v2248 = vld [vmem:[#allocation14 + $0x6c] sm:$0xf]
        %v2249 = vld [vmem:[#allocation14 + $0x70] sm:$0xf]
        %v2250 = vld [vmem:[#allocation14 + $0x74] sm:$0xf]
        %v2251 = vld [vmem:[#allocation14 + $0x78] sm:$0xf]
        %v2252 = vld [vmem:[#allocation14 + $0x7c] sm:$0xf]
        %v2253 = vld [vmem:[%s33] sm:$0x1]
        %v2255 = vlaneseq
        %v2256 = vshrl.u32 %v2255, 7
        %v2257 = vsub.s32 0, %v2256
        %v2258 = vrot.slane %v2253, %v2257
        %v2292 = vunpack.c.l.b16 %v2221
        %v2293 = vunpack.c.l.b16 %v2222
        %v2294 = vunpack.c.l.b16 %v2223
        %v2295 = vunpack.c.l.b16 %v2224
        %v2296 = vunpack.c.l.b16 %v2225
        %v2297 = vunpack.c.l.b16 %v2226
        %v2298 = vunpack.c.l.b16 %v2227
        %v2299 = vunpack.c.l.b16 %v2228
        %v2300 = vunpack.c.l.b16 %v2229
        %v2301 = vunpack.c.l.b16 %v2230
        %v2302 = vunpack.c.l.b16 %v2231
        %v2303 = vunpack.c.l.b16 %v2232
        %v2304 = vunpack.c.l.b16 %v2233
        %v2305 = vunpack.c.l.b16 %v2234
        %v2306 = vunpack.c.l.b16 %v2235
        %v2307 = vunpack.c.l.b16 %v2236
        %v2308 = vunpack.c.l.b16 %v2237
        %v2309 = vunpack.c.l.b16 %v2238
        %v2310 = vunpack.c.l.b16 %v2239
        %v2311 = vunpack.c.l.b16 %v2240
        %v2312 = vunpack.c.l.b16 %v2241
        %v2313 = vunpack.c.l.b16 %v2242
        %v2314 = vunpack.c.l.b16 %v2243
        %v2315 = vunpack.c.l.b16 %v2244
        %v2316 = vunpack.c.l.b16 %v2245
        %v2317 = vunpack.c.l.b16 %v2246
        %v2318 = vunpack.c.l.b16 %v2247
        %v2319 = vunpack.c.l.b16 %v2248
        %v2320 = vunpack.c.l.b16 %v2249
        %v2321 = vunpack.c.l.b16 %v2250
        %v2322 = vunpack.c.l.b16 %v2251
        %v2323 = vunpack.c.l.b16 %v2252
        %v2324 = vpack.c.b16 %v2293, %v2292
        %v2325 = vpack.c.b16 %v2295, %v2294
        %v2326 = vpack.c.b16 %v2297, %v2296
        %v2327 = vpack.c.b16 %v2299, %v2298
        %v2328 = vpack.c.b16 %v2301, %v2300
        %v2329 = vpack.c.b16 %v2303, %v2302
        %v2330 = vpack.c.b16 %v2305, %v2304
        %v2331 = vpack.c.b16 %v2307, %v2306
        %v2332 = vpack.c.b16 %v2309, %v2308
        %v2333 = vpack.c.b16 %v2311, %v2310
        %v2334 = vpack.c.b16 %v2313, %v2312
        %v2335 = vpack.c.b16 %v2315, %v2314
        %v2336 = vpack.c.b16 %v2317, %v2316
        %v2337 = vpack.c.b16 %v2319, %v2318
        %v2338 = vpack.c.b16 %v2321, %v2320
        %v2339 = vpack.c.b16 %v2323, %v2322
        %2356 = vmatprep.subr.bf16.mxu0 0
        %2357 = vmatpush1.bf16.msra.mxu0 %v2324
        %2358 = vmatprep.subr.bf16.mxu0 0
        %2359 = vmatpush1.bf16.msra.mxu0 %v2325
        %2360 = vmatprep.subr.bf16.mxu0 0
        %2361 = vmatpush1.bf16.msra.mxu0 %v2326
        %2362 = vmatprep.subr.bf16.mxu0 0
        %2363 = vmatpush1.bf16.msra.mxu0 %v2327
        %2364 = vmatprep.subr.bf16.mxu0 0
        %2365 = vmatpush1.bf16.msra.mxu0 %v2328
        %2366 = vmatprep.subr.bf16.mxu0 0
        %2367 = vmatpush1.bf16.msra.mxu0 %v2329
        %2368 = vmatprep.subr.bf16.mxu0 0
        %2369 = vmatpush1.bf16.msra.mxu0 %v2330
        %2370 = vmatprep.subr.bf16.mxu0 0
        %2371 = vmatpush1.bf16.msra.mxu0 %v2331
        %2372 = vmatprep.subr.bf16.mxu0 0
        %2373 = vmatpush1.bf16.msra.mxu0 %v2332
        %2374 = vmatprep.subr.bf16.mxu0 0
        %2375 = vmatpush1.bf16.msra.mxu0 %v2333
        %2376 = vmatprep.subr.bf16.mxu0 0
        %2377 = vmatpush1.bf16.msra.mxu0 %v2334
        %2378 = vmatprep.subr.bf16.mxu0 0
        %2379 = vmatpush1.bf16.msra.mxu0 %v2335
        %2380 = vmatprep.subr.bf16.mxu0 0
        %2381 = vmatpush1.bf16.msra.mxu0 %v2336
        %2382 = vmatprep.subr.bf16.mxu0 0
        %2383 = vmatpush1.bf16.msra.mxu0 %v2337
        %2384 = vmatprep.subr.bf16.mxu0 0
        %2385 = vmatpush1.bf16.msra.mxu0 %v2338
        %2386 = vmatprep.subr.bf16.mxu0 0
        %2387 = vmatpush1.bf16.msra.mxu0 %v2339
        %2388 = vmatprep.mubr.bf16.mxu0 %v2220
        %2389 = vmatmul.mubr.bf16.gmra.mrb[0].mxu0 %v2219
        %v2390 = vpop.f32.mrb[0].mxu0
        %v2391 = vadd.f32 %v2258, %v2390
        %v2392 = vpop.f32.mrb[0].mxu0
        %v2393 = vpop.f32.mrb[0].mxu0
        %v2394 = vpop.f32.mrb[0].mxu0
        %2395 = vdwg.mxu0
        %v2396 = vadd.f32 %v2039, %v2391
        %2397 = vadd.xlane.f32.xlu0 %v2396
        %v2398 = vpop.xlane.xlu0 %2397
        %v2399 = vmul.f32 %v2398, %v1194
        %v2400 = vsub.f32 %v2396, %v2399
        %v2401 = vmul.f32 %v2400, %v2400
        %2402 = vadd.xlane.f32.xlu0 %v2401
        %v2403 = vpop.xlane.xlu0 %2402
        %v2404 = vmul.f32 %v2403, %v1194
        %v2405 = vadd.f32 %v2404, 1e-05
        %v2406 = vrsqrt.pop %v2405
        %v2407 = vmul.f32 %v2400, %v2406
        %v2408 = vld [vmem:[%s35] sm:$0x1]
        %v2409 = vld [vmem:[%s37] sm:$0x1]
        %v2411 = vlaneseq
        %v2412 = vshrl.u32 %v2411, 7
        %v2413 = vsub.s32 0, %v2412
        %v2414 = vrot.slane %v2408, %v2413
        %v2416 = vmul.f32 %v2407, %v2414
        %v2418 = vlaneseq
        %v2419 = vshrl.u32 %v2418, 7
        %v2420 = vsub.s32 0, %v2419
        %v2421 = vrot.slane %v2409, %v2420
        %v2423 = vadd.f32 %v2416, %v2421
        %v2424 = vpack.c.bf16 %v2423, %v2423
        %v2425 = vmul.f32 %v1225, %v2414
        %v2426 = vadd.f32 %v2425, %v2421
        %v2427 = vpack.c.bf16 %v2426, %v2426
        %v2428 = vld [vmem:[%s43] sm:$0xf]
        %v2429 = vld [vmem:[%s43 + $0x4] sm:$0xf]
        %v2430 = vld [vmem:[%s43 + $0x8] sm:$0xf]
        %v2431 = vld [vmem:[%s43 + $0xc] sm:$0xf]
        %v2432 = vld [vmem:[%s43 + $0x10] sm:$0xf]
        %v2433 = vld [vmem:[%s43 + $0x14] sm:$0xf]
        %v2434 = vld [vmem:[%s43 + $0x18] sm:$0xf]
        %v2435 = vld [vmem:[%s43 + $0x1c] sm:$0xf]
        %v2436 = vld [vmem:[%s43 + $0x20] sm:$0xf]
        %v2437 = vld [vmem:[%s43 + $0x24] sm:$0xf]
        %v2438 = vld [vmem:[%s43 + $0x28] sm:$0xf]
        %v2439 = vld [vmem:[%s43 + $0x2c] sm:$0xf]
        %v2440 = vld [vmem:[%s43 + $0x30] sm:$0xf]
        %v2441 = vld [vmem:[%s43 + $0x34] sm:$0xf]
        %v2442 = vld [vmem:[%s43 + $0x38] sm:$0xf]
        %v2443 = vld [vmem:[%s43 + $0x3c] sm:$0xf]
        %v2444 = vld [vmem:[%s45] sm:$0x1]
        %v2446 = vlaneseq
        %v2447 = vshrl.u32 %v2446, 7
        %v2448 = vsub.s32 0, %v2447
        %v2449 = vrot.slane %v2444, %v2448
        %v2467 = vunpack.c.l.b16 %v2428
        %v2468 = vunpack.c.l.b16 %v2429
        %v2469 = vunpack.c.l.b16 %v2430
        %v2470 = vunpack.c.l.b16 %v2431
        %v2471 = vunpack.c.l.b16 %v2432
        %v2472 = vunpack.c.l.b16 %v2433
        %v2473 = vunpack.c.l.b16 %v2434
        %v2474 = vunpack.c.l.b16 %v2435
        %v2475 = vunpack.c.l.b16 %v2436
        %v2476 = vunpack.c.l.b16 %v2437
        %v2477 = vunpack.c.l.b16 %v2438
        %v2478 = vunpack.c.l.b16 %v2439
        %v2479 = vunpack.c.l.b16 %v2440
        %v2480 = vunpack.c.l.b16 %v2441
        %v2481 = vunpack.c.l.b16 %v2442
        %v2482 = vunpack.c.l.b16 %v2443
        %v2483 = vpack.c.b16 %v2468, %v2467
        %v2484 = vpack.c.b16 %v2470, %v2469
        %v2485 = vpack.c.b16 %v2472, %v2471
        %v2486 = vpack.c.b16 %v2474, %v2473
        %v2487 = vpack.c.b16 %v2476, %v2475
        %v2488 = vpack.c.b16 %v2478, %v2477
        %v2489 = vpack.c.b16 %v2480, %v2479
        %v2490 = vpack.c.b16 %v2482, %v2481
        %2499 = vmatprep.subr.bf16.mxu0 0
        %2500 = vmatpush1.bf16.msra.mxu0 %v2483
        %2501 = vmatprep.subr.bf16.mxu0 0
        %2502 = vmatpush1.bf16.msra.mxu0 %v2484
        %2503 = vmatprep.subr.bf16.mxu0 0
        %2504 = vmatpush1.bf16.msra.mxu0 %v2485
        %2505 = vmatprep.subr.bf16.mxu0 0
        %2506 = vmatpush1.bf16.msra.mxu0 %v2486
        %2507 = vmatprep.subr.bf16.mxu0 0
        %2508 = vmatpush1.bf16.msra.mxu0 %v2487
        %2509 = vmatprep.subr.bf16.mxu0 0
        %2510 = vmatpush1.bf16.msra.mxu0 %v2488
        %2511 = vmatprep.subr.bf16.mxu0 0
        %2512 = vmatpush1.bf16.msra.mxu0 %v2489
        %2513 = vmatprep.subr.bf16.mxu0 0
        %2514 = vmatpush1.bf16.msra.mxu0 %v2490
        %2515 = vmatprep.subr.bf16.mxu0 0
        %2516 = vmatpush1.bf16.msra.mxu0 0
        %2517 = vmatprep.subr.bf16.mxu0 0
        %2518 = vmatpush1.bf16.msra.mxu0 0
        %2519 = vmatprep.subr.bf16.mxu0 0
        %2520 = vmatpush1.bf16.msra.mxu0 0
        %2521 = vmatprep.subr.bf16.mxu0 0
        %2522 = vmatpush1.bf16.msra.mxu0 0
        %2523 = vmatprep.subr.bf16.mxu0 0
        %2524 = vmatpush1.bf16.msra.mxu0 0
        %2525 = vmatprep.subr.bf16.mxu0 0
        %2526 = vmatpush1.bf16.msra.mxu0 0
        %2527 = vmatprep.subr.bf16.mxu0 0
        %2528 = vmatpush1.bf16.msra.mxu0 0
        %2529 = vmatprep.subr.bf16.mxu0 0
        %2530 = vmatpush1.bf16.msra.mxu0 0
        %2531 = vmatprep.mubr.bf16.mxu0 0
        %2532 = vmatmul.mubr.bf16.gmra.mrb[0].mxu0 %v2424
        %v2533 = vpop.f32.mrb[0].mxu0
        %v2534 = vadd.f32 %v2449, %v2533
        %v2535 = vpop.f32.mrb[0].mxu0
        %v2536 = vpop.f32.mrb[0].mxu0
        %v2537 = vpop.f32.mrb[0].mxu0
        %2538 = vdwg.mxu0
        %v2539 = vld [vmem:[#allocation17] sm:$0xf]
        %v2540 = vld [vmem:[#allocation17 + $0x4] sm:$0xf]
        %v2541 = vld [vmem:[#allocation17 + $0x8] sm:$0xf]
        %v2542 = vld [vmem:[#allocation17 + $0xc] sm:$0xf]
        %v2543 = vld [vmem:[#allocation17 + $0x10] sm:$0xf]
        %v2544 = vld [vmem:[#allocation17 + $0x14] sm:$0xf]
        %v2545 = vld [vmem:[#allocation17 + $0x18] sm:$0xf]
        %v2546 = vld [vmem:[#allocation17 + $0x1c] sm:$0xf]
        %v2547 = vld [vmem:[#allocation17 + $0x20] sm:$0xf]
        %v2548 = vld [vmem:[#allocation17 + $0x24] sm:$0xf]
        %v2549 = vld [vmem:[#allocation17 + $0x28] sm:$0xf]
        %v2550 = vld [vmem:[#allocation17 + $0x2c] sm:$0xf]
        %v2551 = vld [vmem:[#allocation17 + $0x30] sm:$0xf]
        %v2552 = vld [vmem:[#allocation17 + $0x34] sm:$0xf]
        %v2553 = vld [vmem:[#allocation17 + $0x38] sm:$0xf]
        %v2554 = vld [vmem:[#allocation17 + $0x3c] sm:$0xf]
        %v2555 = vld [vmem:[%s49] sm:$0x1]
        %v2557 = vlaneseq
        %v2558 = vshrl.u32 %v2557, 7
        %v2559 = vsub.s32 0, %v2558
        %v2560 = vrot.slane %v2555, %v2559
        %v2578 = vunpack.c.l.b16 %v2539
        %v2579 = vunpack.c.l.b16 %v2540
        %v2580 = vunpack.c.l.b16 %v2541
        %v2581 = vunpack.c.l.b16 %v2542
        %v2582 = vunpack.c.l.b16 %v2543
        %v2583 = vunpack.c.l.b16 %v2544
        %v2584 = vunpack.c.l.b16 %v2545
        %v2585 = vunpack.c.l.b16 %v2546
        %v2586 = vunpack.c.l.b16 %v2547
        %v2587 = vunpack.c.l.b16 %v2548
        %v2588 = vunpack.c.l.b16 %v2549
        %v2589 = vunpack.c.l.b16 %v2550
        %v2590 = vunpack.c.l.b16 %v2551
        %v2591 = vunpack.c.l.b16 %v2552
        %v2592 = vunpack.c.l.b16 %v2553
        %v2593 = vunpack.c.l.b16 %v2554
        %v2594 = vpack.c.b16 %v2579, %v2578
        %v2595 = vpack.c.b16 %v2581, %v2580
        %v2596 = vpack.c.b16 %v2583, %v2582
        %v2597 = vpack.c.b16 %v2585, %v2584
        %v2598 = vpack.c.b16 %v2587, %v2586
        %v2599 = vpack.c.b16 %v2589, %v2588
        %v2600 = vpack.c.b16 %v2591, %v2590
        %v2601 = vpack.c.b16 %v2593, %v2592
        %2610 = vmatprep.subr.bf16.mxu0 0
        %2611 = vmatpush1.bf16.msra.mxu0 %v2594
        %2612 = vmatprep.subr.bf16.mxu0 0
        %2613 = vmatpush1.bf16.msra.mxu0 %v2595
        %2614 = vmatprep.subr.bf16.mxu0 0
        %2615 = vmatpush1.bf16.msra.mxu0 %v2596
        %2616 = vmatprep.subr.bf16.mxu0 0
        %2617 = vmatpush1.bf16.msra.mxu0 %v2597
        %2618 = vmatprep.subr.bf16.mxu0 0
        %2619 = vmatpush1.bf16.msra.mxu0 %v2598
        %2620 = vmatprep.subr.bf16.mxu0 0
        %2621 = vmatpush1.bf16.msra.mxu0 %v2599
        %2622 = vmatprep.subr.bf16.mxu0 0
        %2623 = vmatpush1.bf16.msra.mxu0 %v2600
        %2624 = vmatprep.subr.bf16.mxu0 0
        %2625 = vmatpush1.bf16.msra.mxu0 %v2601
        %2626 = vmatprep.subr.bf16.mxu0 0
        %2627 = vmatpush1.bf16.msra.mxu0 0
        %2628 = vmatprep.subr.bf16.mxu0 0
        %2629 = vmatpush1.bf16.msra.mxu0 0
        %2630 = vmatprep.subr.bf16.mxu0 0
        %2631 = vmatpush1.bf16.msra.mxu0 0
        %2632 = vmatprep.subr.bf16.mxu0 0
        %2633 = vmatpush1.bf16.msra.mxu0 0
        %2634 = vmatprep.subr.bf16.mxu0 0
        %2635 = vmatpush1.bf16.msra.mxu0 0
        %2636 = vmatprep.subr.bf16.mxu0 0
        %2637 = vmatpush1.bf16.msra.mxu0 0
        %2638 = vmatprep.subr.bf16.mxu0 0
        %2639 = vmatpush1.bf16.msra.mxu0 0
        %2640 = vmatprep.subr.bf16.mxu0 0
        %2641 = vmatpush1.bf16.msra.mxu0 0
        %2642 = vmatprep.mubr.bf16.mxu0 0
        %2643 = vmatmul.mubr.bf16.gmra.mrb[0].mxu0 %v2427
        %v2644 = vpop.f32.mrb[0].mxu0
        %v2645 = vadd.f32 %v2560, %v2644
        %v2646 = vpop.f32.mrb[0].mxu0
        %v2647 = vpop.f32.mrb[0].mxu0
        %v2648 = vpop.f32.mrb[0].mxu0
        %2649 = vdwg.mxu0
        %v2650 = vld [vmem:[#allocation19] sm:$0xf]
        %v2651 = vld [vmem:[#allocation19 + $0x4] sm:$0xf]
        %v2652 = vld [vmem:[#allocation19 + $0x8] sm:$0xf]
        %v2653 = vld [vmem:[#allocation19 + $0xc] sm:$0xf]
        %v2654 = vld [vmem:[#allocation19 + $0x10] sm:$0xf]
        %v2655 = vld [vmem:[#allocation19 + $0x14] sm:$0xf]
        %v2656 = vld [vmem:[#allocation19 + $0x18] sm:$0xf]
        %v2657 = vld [vmem:[#allocation19 + $0x1c] sm:$0xf]
        %v2658 = vld [vmem:[#allocation19 + $0x20] sm:$0xf]
        %v2659 = vld [vmem:[#allocation19 + $0x24] sm:$0xf]
        %v2660 = vld [vmem:[#allocation19 + $0x28] sm:$0xf]
        %v2661 = vld [vmem:[#allocation19 + $0x2c] sm:$0xf]
        %v2662 = vld [vmem:[#allocation19 + $0x30] sm:$0xf]
        %v2663 = vld [vmem:[#allocation19 + $0x34] sm:$0xf]
        %v2664 = vld [vmem:[#allocation19 + $0x38] sm:$0xf]
        %v2665 = vld [vmem:[#allocation19 + $0x3c] sm:$0xf]
        %v2666 = vld [vmem:[%s53] sm:$0x1]
        %v2668 = vlaneseq
        %v2669 = vshrl.u32 %v2668, 7
        %v2670 = vsub.s32 0, %v2669
        %v2671 = vrot.slane %v2666, %v2670
        %v2689 = vunpack.c.l.b16 %v2650
        %v2690 = vunpack.c.l.b16 %v2651
        %v2691 = vunpack.c.l.b16 %v2652
        %v2692 = vunpack.c.l.b16 %v2653
        %v2693 = vunpack.c.l.b16 %v2654
        %v2694 = vunpack.c.l.b16 %v2655
        %v2695 = vunpack.c.l.b16 %v2656
        %v2696 = vunpack.c.l.b16 %v2657
        %v2697 = vunpack.c.l.b16 %v2658
        %v2698 = vunpack.c.l.b16 %v2659
        %v2699 = vunpack.c.l.b16 %v2660
        %v2700 = vunpack.c.l.b16 %v2661
        %v2701 = vunpack.c.l.b16 %v2662
        %v2702 = vunpack.c.l.b16 %v2663
        %v2703 = vunpack.c.l.b16 %v2664
        %v2704 = vunpack.c.l.b16 %v2665
        %v2705 = vpack.c.b16 %v2690, %v2689
        %v2706 = vpack.c.b16 %v2692, %v2691
        %v2707 = vpack.c.b16 %v2694, %v2693
        %v2708 = vpack.c.b16 %v2696, %v2695
        %v2709 = vpack.c.b16 %v2698, %v2697
        %v2710 = vpack.c.b16 %v2700, %v2699
        %v2711 = vpack.c.b16 %v2702, %v2701
        %v2712 = vpack.c.b16 %v2704, %v2703
        %2721 = vmatprep.subr.bf16.mxu0 0
        %2722 = vmatpush1.bf16.msra.mxu0 %v2705
        %2723 = vmatprep.subr.bf16.mxu0 0
        %2724 = vmatpush1.bf16.msra.mxu0 %v2706
        %2725 = vmatprep.subr.bf16.mxu0 0
        %2726 = vmatpush1.bf16.msra.mxu0 %v2707
        %2727 = vmatprep.subr.bf16.mxu0 0
        %2728 = vmatpush1.bf16.msra.mxu0 %v2708
        %2729 = vmatprep.subr.bf16.mxu0 0
        %2730 = vmatpush1.bf16.msra.mxu0 %v2709
        %2731 = vmatprep.subr.bf16.mxu0 0
        %2732 = vmatpush1.bf16.msra.mxu0 %v2710
        %2733 = vmatprep.subr.bf16.mxu0 0
        %2734 = vmatpush1.bf16.msra.mxu0 %v2711
        %2735 = vmatprep.subr.bf16.mxu0 0
        %2736 = vmatpush1.bf16.msra.mxu0 %v2712
        %2737 = vmatprep.subr.bf16.mxu0 0
        %2738 = vmatpush1.bf16.msra.mxu0 0
        %2739 = vmatprep.subr.bf16.mxu0 0
        %2740 = vmatpush1.bf16.msra.mxu0 0
        %2741 = vmatprep.subr.bf16.mxu0 0
        %2742 = vmatpush1.bf16.msra.mxu0 0
        %2743 = vmatprep.subr.bf16.mxu0 0
        %2744 = vmatpush1.bf16.msra.mxu0 0
        %2745 = vmatprep.subr.bf16.mxu0 0
        %2746 = vmatpush1.bf16.msra.mxu0 0
        %2747 = vmatprep.subr.bf16.mxu0 0
        %2748 = vmatpush1.bf16.msra.mxu0 0
        %2749 = vmatprep.subr.bf16.mxu0 0
        %2750 = vmatpush1.bf16.msra.mxu0 0
        %2751 = vmatprep.subr.bf16.mxu0 0
        %2752 = vmatpush1.bf16.msra.mxu0 0
        %2753 = vmatprep.mubr.bf16.mxu0 0
        %2754 = vmatmul.mubr.bf16.gmra.mrb[0].mxu0 %v2427
        %v2755 = vpop.f32.mrb[0].mxu0
        %v2756 = vadd.f32 %v2671, %v2755
        %v2757 = vpop.f32.mrb[0].mxu0
        %v2758 = vpop.f32.mrb[0].mxu0
        %v2759 = vpop.f32.mrb[0].mxu0
        %2760 = vdwg.mxu0
        %v2761 = vpack.c.bf16 %v2534, %v2534
        %v2762 = vpack.c.bf16 %v2645, %v2645
        %v2763 = vpack.c.bf16 %v2756, %v2756
        %v2765 = vsel %vm1582, %v2761, 0
        %v2768 = vsel %vm1582, %v2762, 0
        %2770 = vmatprep.subr.bf16.mxu0 0
        %2771 = vmatpush1.bf16.xpose.msra.mxu0 %v2768
        %2772 = vmatprep.subr.bf16.mxu0 0
        %2773 = vmatpush1.bf16.xpose.msra.mxu0 0
        %2774 = vmatprep.subr.bf16.mxu0 0
        %2775 = vmatpush1.bf16.xpose.msra.mxu0 0
        %2776 = vmatprep.subr.bf16.mxu0 0
        %2777 = vmatpush1.bf16.xpose.msra.mxu0 0
        %2778 = vmatprep.subr.bf16.mxu0 0
        %2779 = vmatpush1.bf16.xpose.msra.mxu0 0
        %2780 = vmatprep.subr.bf16.mxu0 0
        %2781 = vmatpush1.bf16.xpose.msra.mxu0 0
        %2782 = vmatprep.subr.bf16.mxu0 0
        %2783 = vmatpush1.bf16.xpose.msra.mxu0 0
        %2784 = vmatprep.subr.bf16.mxu0 0
        %2785 = vmatpush1.bf16.xpose.msra.mxu0 0
        %2786 = vmatprep.subr.bf16.mxu0 0
        %2787 = vmatpush1.bf16.xpose.msra.mxu0 0
        %2788 = vmatprep.subr.bf16.mxu0 0
        %2789 = vmatpush1.bf16.xpose.msra.mxu0 0
        %2790 = vmatprep.subr.bf16.mxu0 0
        %2791 = vmatpush1.bf16.xpose.msra.mxu0 0
        %2792 = vmatprep.subr.bf16.mxu0 0
        %2793 = vmatpush1.bf16.xpose.msra.mxu0 0
        %2794 = vmatprep.subr.bf16.mxu0 0
        %2795 = vmatpush1.bf16.xpose.msra.mxu0 0
        %2796 = vmatprep.subr.bf16.mxu0 0
        %2797 = vmatpush1.bf16.xpose.msra.mxu0 0
        %2798 = vmatprep.subr.bf16.mxu0 0
        %2799 = vmatpush1.bf16.xpose.msra.mxu0 0
        %2800 = vmatprep.subr.bf16.mxu0 0
        %2801 = vmatpush1.bf16.xpose.msra.mxu0 0
        %2802 = vmatprep.mubr.bf16.mxu0 0
        %2803 = vmatmul.mubr.bf16.gmra.mrb[0].mxu0 %v2765
        %v2804 = vpop.f32.mrb[0].mxu0
        %v2805 = vadd.f32 0.0, %v2804
        %v2806 = vpop.f32.mrb[0].mxu0
        %v2807 = vpop.f32.mrb[0].mxu0
        %v2808 = vpop.f32.mrb[0].mxu0
        %2809 = vdwg.mxu0
        %v2810 = vsel %vm1629, %v2805, -inf
        %2811 = vmax.xlane.f32.xlu0 %v2810
        %v2812 = vpop.xlane.xlu0 %2811
        %v2813 = vsub.f32 %v2805, %v2812
        %v2814 = vmul.f32 %v2813, 1.442695
        %v2815 = vpow.pop %v2814
        %v2816 = vsel %vm1629, %v2815, 0.0
        %2817 = vadd.xlane.f32.xlu0 %v2816
        %v2818 = vpop.xlane.xlu0 %2817
        %v2819 = vrcp.pop %v2818
        %v2820 = vmul.f32 %v2815, %v2819
        %v2821 = vpack.c.bf16 %v2820, %v2820
        %v2823 = vsel %vm1629, %v2821, 0
        %v2826 = vsel %vm1645, %v2763, 0
        %2828 = vmatprep.subr.bf16.mxu0 0
        %2829 = vmatpush1.bf16.msra.mxu0 %v2826
        %2830 = vmatprep.subr.bf16.mxu0 0
        %2831 = vmatpush1.bf16.msra.mxu0 0
        %2832 = vmatprep.subr.bf16.mxu0 0
        %2833 = vmatpush1.bf16.msra.mxu0 0
        %2834 = vmatprep.subr.bf16.mxu0 0
        %2835 = vmatpush1.bf16.msra.mxu0 0
        %2836 = vmatprep.subr.bf16.mxu0 0
        %2837 = vmatpush1.bf16.msra.mxu0 0
        %2838 = vmatprep.subr.bf16.mxu0 0
        %2839 = vmatpush1.bf16.msra.mxu0 0
        %2840 = vmatprep.subr.bf16.mxu0 0
        %2841 = vmatpush1.bf16.msra.mxu0 0
        %2842 = vmatprep.subr.bf16.mxu0 0
        %2843 = vmatpush1.bf16.msra.mxu0 0
        %2844 = vmatprep.subr.bf16.mxu0 0
        %2845 = vmatpush1.bf16.msra.mxu0 0
        %2846 = vmatprep.subr.bf16.mxu0 0
        %2847 = vmatpush1.bf16.msra.mxu0 0
        %2848 = vmatprep.subr.bf16.mxu0 0
        %2849 = vmatpush1.bf16.msra.mxu0 0
        %2850 = vmatprep.subr.bf16.mxu0 0
        %2851 = vmatpush1.bf16.msra.mxu0 0
        %2852 = vmatprep.subr.bf16.mxu0 0
        %2853 = vmatpush1.bf16.msra.mxu0 0
        %2854 = vmatprep.subr.bf16.mxu0 0
        %2855 = vmatpush1.bf16.msra.mxu0 0
        %2856 = vmatprep.subr.bf16.mxu0 0
        %2857 = vmatpush1.bf16.msra.mxu0 0
        %2858 = vmatprep.subr.bf16.mxu0 0
        %2859 = vmatpush1.bf16.msra.mxu0 0
        %2860 = vmatprep.mubr.bf16.mxu0 0
        %2861 = vmatmul.mubr.bf16.gmra.mrb[0].mxu0 %v2823
        %v2862 = vpop.f32.mrb[0].mxu0
        %v2863 = vadd.f32 0.0, %v2862
        %v2864 = vpop.f32.mrb[0].mxu0
        %v2865 = vpop.f32.mrb[0].mxu0
        %v2866 = vpop.f32.mrb[0].mxu0
        %2867 = vdwg.mxu0
        %2869 = vrot.lane.b32.xlu0 %v2761, 96
        %v2870 = vpop.permute.xlu0 %2869
        %2872 = vrot.lane.b32.xlu0 %v2762, 96
        %v2873 = vpop.permute.xlu0 %2872
        %v2875 = vsel %vm1582, %v2870, 0
        %v2878 = vsel %vm1582, %v2873, 0
        %2880 = vmatprep.subr.bf16.mxu0 0
        %2881 = vmatpush1.bf16.xpose.msra.mxu0 %v2878
        %2882 = vmatprep.subr.bf16.mxu0 0
        %2883 = vmatpush1.bf16.xpose.msra.mxu0 0
        %2884 = vmatprep.subr.bf16.mxu0 0
        %2885 = vmatpush1.bf16.xpose.msra.mxu0 0
        %2886 = vmatprep.subr.bf16.mxu0 0
        %2887 = vmatpush1.bf16.xpose.msra.mxu0 0
        %2888 = vmatprep.subr.bf16.mxu0 0
        %2889 = vmatpush1.bf16.xpose.msra.mxu0 0
        %2890 = vmatprep.subr.bf16.mxu0 0
        %2891 = vmatpush1.bf16.xpose.msra.mxu0 0
        %2892 = vmatprep.subr.bf16.mxu0 0
        %2893 = vmatpush1.bf16.xpose.msra.mxu0 0
        %2894 = vmatprep.subr.bf16.mxu0 0
        %2895 = vmatpush1.bf16.xpose.msra.mxu0 0
        %2896 = vmatprep.subr.bf16.mxu0 0
        %2897 = vmatpush1.bf16.xpose.msra.mxu0 0
        %2898 = vmatprep.subr.bf16.mxu0 0
        %2899 = vmatpush1.bf16.xpose.msra.mxu0 0
        %2900 = vmatprep.subr.bf16.mxu0 0
        %2901 = vmatpush1.bf16.xpose.msra.mxu0 0
        %2902 = vmatprep.subr.bf16.mxu0 0
        %2903 = vmatpush1.bf16.xpose.msra.mxu0 0
        %2904 = vmatprep.subr.bf16.mxu0 0
        %2905 = vmatpush1.bf16.xpose.msra.mxu0 0
        %2906 = vmatprep.subr.bf16.mxu0 0
        %2907 = vmatpush1.bf16.xpose.msra.mxu0 0
        %2908 = vmatprep.subr.bf16.mxu0 0
        %2909 = vmatpush1.bf16.xpose.msra.mxu0 0
        %2910 = vmatprep.subr.bf16.mxu0 0
        %2911 = vmatpush1.bf16.xpose.msra.mxu0 0
        %2912 = vmatprep.mubr.bf16.mxu0 0
        %2913 = vmatmul.mubr.bf16.gmra.mrb[0].mxu0 %v2875
        %v2914 = vpop.f32.mrb[0].mxu0
        %v2915 = vadd.f32 0.0, %v2914
        %v2916 = vpop.f32.mrb[0].mxu0
        %v2917 = vpop.f32.mrb[0].mxu0
        %v2918 = vpop.f32.mrb[0].mxu0
        %2919 = vdwg.mxu0
        %v2920 = vsel %vm1629, %v2915, -inf
        %2921 = vmax.xlane.f32.xlu0 %v2920
        %v2922 = vpop.xlane.xlu0 %2921
        %v2923 = vsub.f32 %v2915, %v2922
        %v2924 = vmul.f32 %v2923, 1.442695
        %v2925 = vpow.pop %v2924
        %v2926 = vsel %vm1629, %v2925, 0.0
        %2927 = vadd.xlane.f32.xlu0 %v2926
        %v2928 = vpop.xlane.xlu0 %2927
        %v2929 = vrcp.pop %v2928
        %v2930 = vmul.f32 %v2925, %v2929
        %v2931 = vpack.c.bf16 %v2930, %v2930
        %2933 = vrot.lane.b32.xlu0 %v2763, 96
        %v2934 = vpop.permute.xlu0 %2933
        %v2936 = vsel %vm1629, %v2931, 0
        %v2939 = vsel %vm1645, %v2934, 0
        %2941 = vmatprep.subr.bf16.mxu0 0
        %2942 = vmatpush1.bf16.msra.mxu0 %v2939
        %2943 = vmatprep.subr.bf16.mxu0 0
        %2944 = vmatpush1.bf16.msra.mxu0 0
        %2945 = vmatprep.subr.bf16.mxu0 0
        %2946 = vmatpush1.bf16.msra.mxu0 0
        %2947 = vmatprep.subr.bf16.mxu0 0
        %2948 = vmatpush1.bf16.msra.mxu0 0
        %2949 = vmatprep.subr.bf16.mxu0 0
        %2950 = vmatpush1.bf16.msra.mxu0 0
        %2951 = vmatprep.subr.bf16.mxu0 0
        %2952 = vmatpush1.bf16.msra.mxu0 0
        %2953 = vmatprep.subr.bf16.mxu0 0
        %2954 = vmatpush1.bf16.msra.mxu0 0
        %2955 = vmatprep.subr.bf16.mxu0 0
        %2956 = vmatpush1.bf16.msra.mxu0 0
        %2957 = vmatprep.subr.bf16.mxu0 0
        %2958 = vmatpush1.bf16.msra.mxu0 0
        %2959 = vmatprep.subr.bf16.mxu0 0
        %2960 = vmatpush1.bf16.msra.mxu0 0
        %2961 = vmatprep.subr.bf16.mxu0 0
        %2962 = vmatpush1.bf16.msra.mxu0 0
        %2963 = vmatprep.subr.bf16.mxu0 0
        %2964 = vmatpush1.bf16.msra.mxu0 0
        %2965 = vmatprep.subr.bf16.mxu0 0
        %2966 = vmatpush1.bf16.msra.mxu0 0
        %2967 = vmatprep.subr.bf16.mxu0 0
        %2968 = vmatpush1.bf16.msra.mxu0 0
        %2969 = vmatprep.subr.bf16.mxu0 0
        %2970 = vmatpush1.bf16.msra.mxu0 0
        %2971 = vmatprep.subr.bf16.mxu0 0
        %2972 = vmatpush1.bf16.msra.mxu0 0
        %2973 = vmatprep.mubr.bf16.mxu0 0
        %2974 = vmatmul.mubr.bf16.gmra.mrb[0].mxu0 %v2936
        %v2975 = vpop.f32.mrb[0].mxu0
        %v2976 = vadd.f32 0.0, %v2975
        %v2977 = vpop.f32.mrb[0].mxu0
        %v2978 = vpop.f32.mrb[0].mxu0
        %v2979 = vpop.f32.mrb[0].mxu0
        %2980 = vdwg.mxu0
        %2981 = vrot.lane.b32.xlu0 %v2761, 64
        %v2982 = vpop.permute.xlu0 %2981
        %2983 = vrot.lane.b32.xlu0 %v2762, 64
        %v2984 = vpop.permute.xlu0 %2983
        %v2986 = vsel %vm1582, %v2982, 0
        %v2989 = vsel %vm1582, %v2984, 0
        %2991 = vmatprep.subr.bf16.mxu0 0
        %2992 = vmatpush1.bf16.xpose.msra.mxu0 %v2989
        %2993 = vmatprep.subr.bf16.mxu0 0
        %2994 = vmatpush1.bf16.xpose.msra.mxu0 0
        %2995 = vmatprep.subr.bf16.mxu0 0
        %2996 = vmatpush1.bf16.xpose.msra.mxu0 0
        %2997 = vmatprep.subr.bf16.mxu0 0
        %2998 = vmatpush1.bf16.xpose.msra.mxu0 0
        %2999 = vmatprep.subr.bf16.mxu0 0
        %3000 = vmatpush1.bf16.xpose.msra.mxu0 0
        %3001 = vmatprep.subr.bf16.mxu0 0
        %3002 = vmatpush1.bf16.xpose.msra.mxu0 0
        %3003 = vmatprep.subr.bf16.mxu0 0
        %3004 = vmatpush1.bf16.xpose.msra.mxu0 0
        %3005 = vmatprep.subr.bf16.mxu0 0
        %3006 = vmatpush1.bf16.xpose.msra.mxu0 0
        %3007 = vmatprep.subr.bf16.mxu0 0
        %3008 = vmatpush1.bf16.xpose.msra.mxu0 0
        %3009 = vmatprep.subr.bf16.mxu0 0
        %3010 = vmatpush1.bf16.xpose.msra.mxu0 0
        %3011 = vmatprep.subr.bf16.mxu0 0
        %3012 = vmatpush1.bf16.xpose.msra.mxu0 0
        %3013 = vmatprep.subr.bf16.mxu0 0
        %3014 = vmatpush1.bf16.xpose.msra.mxu0 0
        %3015 = vmatprep.subr.bf16.mxu0 0
        %3016 = vmatpush1.bf16.xpose.msra.mxu0 0
        %3017 = vmatprep.subr.bf16.mxu0 0
        %3018 = vmatpush1.bf16.xpose.msra.mxu0 0
        %3019 = vmatprep.subr.bf16.mxu0 0
        %3020 = vmatpush1.bf16.xpose.msra.mxu0 0
        %3021 = vmatprep.subr.bf16.mxu0 0
        %3022 = vmatpush1.bf16.xpose.msra.mxu0 0
        %3023 = vmatprep.mubr.bf16.mxu0 0
        %3024 = vmatmul.mubr.bf16.gmra.mrb[0].mxu0 %v2986
        %v3025 = vpop.f32.mrb[0].mxu0
        %v3026 = vadd.f32 0.0, %v3025
        %v3027 = vpop.f32.mrb[0].mxu0
        %v3028 = vpop.f32.mrb[0].mxu0
        %v3029 = vpop.f32.mrb[0].mxu0
        %3030 = vdwg.mxu0
        %v3031 = vsel %vm1629, %v3026, -inf
        %3032 = vmax.xlane.f32.xlu0 %v3031
        %v3033 = vpop.xlane.xlu0 %3032
        %v3034 = vsub.f32 %v3026, %v3033
        %v3035 = vmul.f32 %v3034, 1.442695
        %v3036 = vpow.pop %v3035
        %v3037 = vsel %vm1629, %v3036, 0.0
        %3038 = vadd.xlane.f32.xlu0 %v3037
        %v3039 = vpop.xlane.xlu0 %3038
        %v3040 = vrcp.pop %v3039
        %v3041 = vmul.f32 %v3036, %v3040
        %v3042 = vpack.c.bf16 %v3041, %v3041
        %3043 = vrot.lane.b32.xlu0 %v2763, 64
        %v3044 = vpop.permute.xlu0 %3043
        %v3046 = vsel %vm1629, %v3042, 0
        %v3049 = vsel %vm1645, %v3044, 0
        %3051 = vmatprep.subr.bf16.mxu0 0
        %3052 = vmatpush1.bf16.msra.mxu0 %v3049
        %3053 = vmatprep.subr.bf16.mxu0 0
        %3054 = vmatpush1.bf16.msra.mxu0 0
        %3055 = vmatprep.subr.bf16.mxu0 0
        %3056 = vmatpush1.bf16.msra.mxu0 0
        %3057 = vmatprep.subr.bf16.mxu0 0
        %3058 = vmatpush1.bf16.msra.mxu0 0
        %3059 = vmatprep.subr.bf16.mxu0 0
        %3060 = vmatpush1.bf16.msra.mxu0 0
        %3061 = vmatprep.subr.bf16.mxu0 0
        %3062 = vmatpush1.bf16.msra.mxu0 0
        %3063 = vmatprep.subr.bf16.mxu0 0
        %3064 = vmatpush1.bf16.msra.mxu0 0
        %3065 = vmatprep.subr.bf16.mxu0 0
        %3066 = vmatpush1.bf16.msra.mxu0 0
        %3067 = vmatprep.subr.bf16.mxu0 0
        %3068 = vmatpush1.bf16.msra.mxu0 0
        %3069 = vmatprep.subr.bf16.mxu0 0
        %3070 = vmatpush1.bf16.msra.mxu0 0
        %3071 = vmatprep.subr.bf16.mxu0 0
        %3072 = vmatpush1.bf16.msra.mxu0 0
        %3073 = vmatprep.subr.bf16.mxu0 0
        %3074 = vmatpush1.bf16.msra.mxu0 0
        %3075 = vmatprep.subr.bf16.mxu0 0
        %3076 = vmatpush1.bf16.msra.mxu0 0
        %3077 = vmatprep.subr.bf16.mxu0 0
        %3078 = vmatpush1.bf16.msra.mxu0 0
        %3079 = vmatprep.subr.bf16.mxu0 0
        %3080 = vmatpush1.bf16.msra.mxu0 0
        %3081 = vmatprep.subr.bf16.mxu0 0
        %3082 = vmatpush1.bf16.msra.mxu0 0
        %3083 = vmatprep.mubr.bf16.mxu0 0
        %3084 = vmatmul.mubr.bf16.gmra.mrb[0].mxu0 %v3046
        %v3085 = vpop.f32.mrb[0].mxu0
        %v3086 = vadd.f32 0.0, %v3085
        %v3087 = vpop.f32.mrb[0].mxu0
        %v3088 = vpop.f32.mrb[0].mxu0
        %v3089 = vpop.f32.mrb[0].mxu0
        %3090 = vdwg.mxu0
        %3091 = vrot.lane.b32.xlu0 %v2761, 32
        %v3092 = vpop.permute.xlu0 %3091
        %3093 = vrot.lane.b32.xlu0 %v2762, 32
        %v3094 = vpop.permute.xlu0 %3093
        %v3096 = vsel %vm1582, %v3092, 0
        %v3099 = vsel %vm1582, %v3094, 0
        %3101 = vmatprep.subr.bf16.mxu0 0
        %3102 = vmatpush1.bf16.xpose.msra.mxu0 %v3099
        %3103 = vmatprep.subr.bf16.mxu0 0
        %3104 = vmatpush1.bf16.xpose.msra.mxu0 0
        %3105 = vmatprep.subr.bf16.mxu0 0
        %3106 = vmatpush1.bf16.xpose.msra.mxu0 0
        %3107 = vmatprep.subr.bf16.mxu0 0
        %3108 = vmatpush1.bf16.xpose.msra.mxu0 0
        %3109 = vmatprep.subr.bf16.mxu0 0
        %3110 = vmatpush1.bf16.xpose.msra.mxu0 0
        %3111 = vmatprep.subr.bf16.mxu0 0
        %3112 = vmatpush1.bf16.xpose.msra.mxu0 0
        %3113 = vmatprep.subr.bf16.mxu0 0
        %3114 = vmatpush1.bf16.xpose.msra.mxu0 0
        %3115 = vmatprep.subr.bf16.mxu0 0
        %3116 = vmatpush1.bf16.xpose.msra.mxu0 0
        %3117 = vmatprep.subr.bf16.mxu0 0
        %3118 = vmatpush1.bf16.xpose.msra.mxu0 0
        %3119 = vmatprep.subr.bf16.mxu0 0
        %3120 = vmatpush1.bf16.xpose.msra.mxu0 0
        %3121 = vmatprep.subr.bf16.mxu0 0
        %3122 = vmatpush1.bf16.xpose.msra.mxu0 0
        %3123 = vmatprep.subr.bf16.mxu0 0
        %3124 = vmatpush1.bf16.xpose.msra.mxu0 0
        %3125 = vmatprep.subr.bf16.mxu0 0
        %3126 = vmatpush1.bf16.xpose.msra.mxu0 0
        %3127 = vmatprep.subr.bf16.mxu0 0
        %3128 = vmatpush1.bf16.xpose.msra.mxu0 0
        %3129 = vmatprep.subr.bf16.mxu0 0
        %3130 = vmatpush1.bf16.xpose.msra.mxu0 0
        %3131 = vmatprep.subr.bf16.mxu0 0
        %3132 = vmatpush1.bf16.xpose.msra.mxu0 0
        %3133 = vmatprep.mubr.bf16.mxu0 0
        %3134 = vmatmul.mubr.bf16.gmra.mrb[0].mxu0 %v3096
        %v3135 = vpop.f32.mrb[0].mxu0
        %v3136 = vadd.f32 0.0, %v3135
        %v3137 = vpop.f32.mrb[0].mxu0
        %v3138 = vpop.f32.mrb[0].mxu0
        %v3139 = vpop.f32.mrb[0].mxu0
        %3140 = vdwg.mxu0
        %v3141 = vsel %vm1629, %v3136, -inf
        %3142 = vmax.xlane.f32.xlu0 %v3141
        %v3143 = vpop.xlane.xlu0 %3142
        %v3144 = vsub.f32 %v3136, %v3143
        %v3145 = vmul.f32 %v3144, 1.442695
        %v3146 = vpow.pop %v3145
        %v3147 = vsel %vm1629, %v3146, 0.0
        %3148 = vadd.xlane.f32.xlu0 %v3147
        %v3149 = vpop.xlane.xlu0 %3148
        %v3150 = vrcp.pop %v3149
        %v3151 = vmul.f32 %v3146, %v3150
        %v3152 = vpack.c.bf16 %v3151, %v3151
        %3153 = vrot.lane.b32.xlu0 %v2763, 32
        %v3154 = vpop.permute.xlu0 %3153
        %v3156 = vsel %vm1629, %v3152, 0
        %v3159 = vsel %vm1645, %v3154, 0
        %3161 = vmatprep.subr.bf16.mxu0 0
        %3162 = vmatpush1.bf16.msra.mxu0 %v3159
        %3163 = vmatprep.subr.bf16.mxu0 0
        %3164 = vmatpush1.bf16.msra.mxu0 0
        %3165 = vmatprep.subr.bf16.mxu0 0
        %3166 = vmatpush1.bf16.msra.mxu0 0
        %3167 = vmatprep.subr.bf16.mxu0 0
        %3168 = vmatpush1.bf16.msra.mxu0 0
        %3169 = vmatprep.subr.bf16.mxu0 0
        %3170 = vmatpush1.bf16.msra.mxu0 0
        %3171 = vmatprep.subr.bf16.mxu0 0
        %3172 = vmatpush1.bf16.msra.mxu0 0
        %3173 = vmatprep.subr.bf16.mxu0 0
        %3174 = vmatpush1.bf16.msra.mxu0 0
        %3175 = vmatprep.subr.bf16.mxu0 0
        %3176 = vmatpush1.bf16.msra.mxu0 0
        %3177 = vmatprep.subr.bf16.mxu0 0
        %3178 = vmatpush1.bf16.msra.mxu0 0
        %3179 = vmatprep.subr.bf16.mxu0 0
        %3180 = vmatpush1.bf16.msra.mxu0 0
        %3181 = vmatprep.subr.bf16.mxu0 0
        %3182 = vmatpush1.bf16.msra.mxu0 0
        %3183 = vmatprep.subr.bf16.mxu0 0
        %3184 = vmatpush1.bf16.msra.mxu0 0
        %3185 = vmatprep.subr.bf16.mxu0 0
        %3186 = vmatpush1.bf16.msra.mxu0 0
        %3187 = vmatprep.subr.bf16.mxu0 0
        %3188 = vmatpush1.bf16.msra.mxu0 0
        %3189 = vmatprep.subr.bf16.mxu0 0
        %3190 = vmatpush1.bf16.msra.mxu0 0
        %3191 = vmatprep.subr.bf16.mxu0 0
        %3192 = vmatpush1.bf16.msra.mxu0 0
        %3193 = vmatprep.mubr.bf16.mxu0 0
        %3194 = vmatmul.mubr.bf16.gmra.mrb[0].mxu0 %v3156
        %v3195 = vpop.f32.mrb[0].mxu0
        %v3196 = vadd.f32 0.0, %v3195
        %v3197 = vpop.f32.mrb[0].mxu0
        %v3198 = vpop.f32.mrb[0].mxu0
        %v3199 = vpop.f32.mrb[0].mxu0
        %3200 = vdwg.mxu0
        %3202 = vrot.lane.b32.xlu0 %v2976, 32
        %v3203 = vpop.permute.xlu0 %3202
        %3206 = vrot.lane.b32.xlu0 %v3086, 64
        %v3207 = vpop.permute.xlu0 %3206
        %3210 = vrot.lane.b32.xlu0 %v3196, 96
        %v3211 = vpop.permute.xlu0 %3210
        %v3213 = vsel %vm1582, %v2863, %v3203
        %v3214 = vsel %vm2035, %v3213, %v3207
        %v3215 = vsel %vm2037, %v3214, %v3211
        %v3216 = vadd.f32 %v2396, %v3215
        %v3217 = vld [vmem:[%s39] sm:$0x1]
        %v3218 = vld [vmem:[#allocation16] sm:$0x1]
        %3219 = vadd.xlane.f32.xlu0 %v3216
        %v3220 = vpop.xlane.xlu0 %3219
        %v3221 = vmul.f32 %v3220, %v1194
        %v3222 = vsub.f32 %v3216, %v3221
        %v3223 = vmul.f32 %v3222, %v3222
        %3224 = vadd.xlane.f32.xlu0 %v3223
        %v3225 = vpop.xlane.xlu0 %3224
        %v3226 = vmul.f32 %v3225, %v1194
        %v3227 = vadd.f32 %v3226, 1e-05
        %v3228 = vrsqrt.pop %v3227
        %v3229 = vmul.f32 %v3222, %v3228
        %v3231 = vlaneseq
        %v3232 = vshrl.u32 %v3231, 7
        %v3233 = vsub.s32 0, %v3232
        %v3234 = vrot.slane %v3217, %v3233
        %v3236 = vmul.f32 %v3229, %v3234
        %v3238 = vlaneseq
        %v3239 = vshrl.u32 %v3238, 7
        %v3240 = vsub.s32 0, %v3239
        %v3241 = vrot.slane %v3218, %v3240
        %v3243 = vadd.f32 %v3236, %v3241
        %v3244 = vpack.c.bf16 %v3243, %v3243
        %v3245 = vld [vmem:[#allocation20] sm:$0xff]
        %v3246 = vld [vmem:[#allocation20 + $0x8] sm:$0xff]
        %v3247 = vld [vmem:[#allocation20 + $0x10] sm:$0xff]
        %v3248 = vld [vmem:[#allocation20 + $0x18] sm:$0xff]
        %v3249 = vld [vmem:[#allocation20 + $0x20] sm:$0xff]
        %v3250 = vld [vmem:[#allocation20 + $0x28] sm:$0xff]
        %v3251 = vld [vmem:[#allocation20 + $0x30] sm:$0xff]
        %v3252 = vld [vmem:[#allocation20 + $0x38] sm:$0xff]
        %v3253 = vld [vmem:[#allocation20 + $0x40] sm:$0xff]
        %v3254 = vld [vmem:[#allocation20 + $0x48] sm:$0xff]
        %v3255 = vld [vmem:[#allocation20 + $0x50] sm:$0xff]
        %v3256 = vld [vmem:[#allocation20 + $0x58] sm:$0xff]
        %v3257 = vld [vmem:[#allocation20 + $0x60] sm:$0xff]
        %v3258 = vld [vmem:[#allocation20 + $0x68] sm:$0xff]
        %v3259 = vld [vmem:[#allocation20 + $0x70] sm:$0xff]
        %v3260 = vld [vmem:[#allocation20 + $0x78] sm:$0xff]
        %v3261 = vld [vmem:[%s57] sm:$0x3]
        %v3263 = vlaneseq
        %v3264 = vshrl.u32 %v3263, 7
        %v3265 = vsub.s32 0, %v3264
        %v3266 = vrot.slane %v3261, %v3265
        %v3267 = vlaneseq
        %v3268 = vshrl.u32 %v3267, 7
        %v3269 = vsub.s32 1, %v3268
        %v3270 = vrot.slane %v3261, %v3269
        %v3289 = vunpack.c.l.b16 %v3245
        %v3290 = vunpack.c.h.b16 %v3245
        %v3291 = vunpack.c.l.b16 %v3246
        %v3292 = vunpack.c.h.b16 %v3246
        %v3293 = vunpack.c.l.b16 %v3247
        %v3294 = vunpack.c.h.b16 %v3247
        %v3295 = vunpack.c.l.b16 %v3248
        %v3296 = vunpack.c.h.b16 %v3248
        %v3297 = vunpack.c.l.b16 %v3249
        %v3298 = vunpack.c.h.b16 %v3249
        %v3299 = vunpack.c.l.b16 %v3250
        %v3300 = vunpack.c.h.b16 %v3250
        %v3301 = vunpack.c.l.b16 %v3251
        %v3302 = vunpack.c.h.b16 %v3251
        %v3303 = vunpack.c.l.b16 %v3252
        %v3304 = vunpack.c.h.b16 %v3252
        %v3305 = vunpack.c.l.b16 %v3253
        %v3306 = vunpack.c.h.b16 %v3253
        %v3307 = vunpack.c.l.b16 %v3254
        %v3308 = vunpack.c.h.b16 %v3254
        %v3309 = vunpack.c.l.b16 %v3255
        %v3310 = vunpack.c.h.b16 %v3255
        %v3311 = vunpack.c.l.b16 %v3256
        %v3312 = vunpack.c.h.b16 %v3256
        %v3313 = vunpack.c.l.b16 %v3257
        %v3314 = vunpack.c.h.b16 %v3257
        %v3315 = vunpack.c.l.b16 %v3258
        %v3316 = vunpack.c.h.b16 %v3258
        %v3317 = vunpack.c.l.b16 %v3259
        %v3318 = vunpack.c.h.b16 %v3259
        %v3319 = vunpack.c.l.b16 %v3260
        %v3320 = vunpack.c.h.b16 %v3260
        %v3321 = vpack.c.b16 %v3291, %v3289
        %v3322 = vpack.c.b16 %v3292, %v3290
        %v3323 = vpack.c.b16 %v3295, %v3293
        %v3324 = vpack.c.b16 %v3296, %v3294
        %v3325 = vpack.c.b16 %v3299, %v3297
        %v3326 = vpack.c.b16 %v3300, %v3298
        %v3327 = vpack.c.b16 %v3303, %v3301
        %v3328 = vpack.c.b16 %v3304, %v3302
        %v3329 = vpack.c.b16 %v3307, %v3305
        %v3330 = vpack.c.b16 %v3308, %v3306
        %v3331 = vpack.c.b16 %v3311, %v3309
        %v3332 = vpack.c.b16 %v3312, %v3310
        %v3333 = vpack.c.b16 %v3315, %v3313
        %v3334 = vpack.c.b16 %v3316, %v3314
        %v3335 = vpack.c.b16 %v3319, %v3317
        %v3336 = vpack.c.b16 %v3320, %v3318
        %3353 = vmatprep.subr.bf16.mxu0 %v3322
        %3354 = vmatpush1.bf16.msra.mxu0 %v3321
        %3355 = vmatprep.subr.bf16.mxu0 %v3324
        %3356 = vmatpush1.bf16.msra.mxu0 %v3323
        %3357 = vmatprep.subr.bf16.mxu0 %v3326
        %3358 = vmatpush1.bf16.msra.mxu0 %v3325
        %3359 = vmatprep.subr.bf16.mxu0 %v3328
        %3360 = vmatpush1.bf16.msra.mxu0 %v3327
        %3361 = vmatprep.subr.bf16.mxu0 %v3330
        %3362 = vmatpush1.bf16.msra.mxu0 %v3329
        %3363 = vmatprep.subr.bf16.mxu0 %v3332
        %3364 = vmatpush1.bf16.msra.mxu0 %v3331
        %3365 = vmatprep.subr.bf16.mxu0 %v3334
        %3366 = vmatpush1.bf16.msra.mxu0 %v3333
        %3367 = vmatprep.subr.bf16.mxu0 %v3336
        %3368 = vmatpush1.bf16.msra.mxu0 %v3335
        %3369 = vmatprep.subr.bf16.mxu0 0
        %3370 = vmatpush1.bf16.msra.mxu0 0
        %3371 = vmatprep.subr.bf16.mxu0 0
        %3372 = vmatpush1.bf16.msra.mxu0 0
        %3373 = vmatprep.subr.bf16.mxu0 0
        %3374 = vmatpush1.bf16.msra.mxu0 0
        %3375 = vmatprep.subr.bf16.mxu0 0
        %3376 = vmatpush1.bf16.msra.mxu0 0
        %3377 = vmatprep.subr.bf16.mxu0 0
        %3378 = vmatpush1.bf16.msra.mxu0 0
        %3379 = vmatprep.subr.bf16.mxu0 0
        %3380 = vmatpush1.bf16.msra.mxu0 0
        %3381 = vmatprep.subr.bf16.mxu0 0
        %3382 = vmatpush1.bf16.msra.mxu0 0
        %3383 = vmatprep.subr.bf16.mxu0 0
        %3384 = vmatpush1.bf16.msra.mxu0 0
        %3385 = vmatprep.mubr.bf16.mxu0 0
        %3386 = vmatmul.mubr.bf16.gmra.mrb[0].mxu0 %v3244
        %v3387 = vpop.f32.mrb[0].mxu0
        %v3388 = vadd.f32 %v3266, %v3387
        %v3389 = vpop.f32.mrb[0].mxu0
        %v3390 = vadd.f32 %v3270, %v3389
        %v3391 = vpop.f32.mrb[0].mxu0
        %v3392 = vpop.f32.mrb[0].mxu0
        %3393 = vdwg.mxu0
        %v3394 = vmax.f32 %v3388, 0.0
        %v3395 = vmax.f32 %v3390, 0.0
        %v3396 = vpack.c.bf16 %v3394, %v3394
        %v3397 = vpack.c.bf16 %v3395, %v3395
        %v3398 = vld [vmem:[#allocation22] sm:$0xf]
        %v3399 = vld [vmem:[#allocation22 + $0x4] sm:$0xf]
        %v3400 = vld [vmem:[#allocation22 + $0x8] sm:$0xf]
        %v3401 = vld [vmem:[#allocation22 + $0xc] sm:$0xf]
        %v3402 = vld [vmem:[#allocation22 + $0x10] sm:$0xf]
        %v3403 = vld [vmem:[#allocation22 + $0x14] sm:$0xf]
        %v3404 = vld [vmem:[#allocation22 + $0x18] sm:$0xf]
        %v3405 = vld [vmem:[#allocation22 + $0x1c] sm:$0xf]
        %v3406 = vld [vmem:[#allocation22 + $0x20] sm:$0xf]
        %v3407 = vld [vmem:[#allocation22 + $0x24] sm:$0xf]
        %v3408 = vld [vmem:[#allocation22 + $0x28] sm:$0xf]
        %v3409 = vld [vmem:[#allocation22 + $0x2c] sm:$0xf]
        %v3410 = vld [vmem:[#allocation22 + $0x30] sm:$0xf]
        %v3411 = vld [vmem:[#allocation22 + $0x34] sm:$0xf]
        %v3412 = vld [vmem:[#allocation22 + $0x38] sm:$0xf]
        %v3413 = vld [vmem:[#allocation22 + $0x3c] sm:$0xf]
        %v3414 = vld [vmem:[#allocation22 + $0x40] sm:$0xf]
        %v3415 = vld [vmem:[#allocation22 + $0x44] sm:$0xf]
        %v3416 = vld [vmem:[#allocation22 + $0x48] sm:$0xf]
        %v3417 = vld [vmem:[#allocation22 + $0x4c] sm:$0xf]
        %v3418 = vld [vmem:[#allocation22 + $0x50] sm:$0xf]
        %v3419 = vld [vmem:[#allocation22 + $0x54] sm:$0xf]
        %v3420 = vld [vmem:[#allocation22 + $0x58] sm:$0xf]
        %v3421 = vld [vmem:[#allocation22 + $0x5c] sm:$0xf]
        %v3422 = vld [vmem:[#allocation22 + $0x60] sm:$0xf]
        %v3423 = vld [vmem:[#allocation22 + $0x64] sm:$0xf]
        %v3424 = vld [vmem:[#allocation22 + $0x68] sm:$0xf]
        %v3425 = vld [vmem:[#allocation22 + $0x6c] sm:$0xf]
        %v3426 = vld [vmem:[#allocation22 + $0x70] sm:$0xf]
        %v3427 = vld [vmem:[#allocation22 + $0x74] sm:$0xf]
        %v3428 = vld [vmem:[#allocation22 + $0x78] sm:$0xf]
        %v3429 = vld [vmem:[#allocation22 + $0x7c] sm:$0xf]
        %v3430 = vld [vmem:[%s61] sm:$0x1]
        %v3432 = vlaneseq
        %v3433 = vshrl.u32 %v3432, 7
        %v3434 = vsub.s32 0, %v3433
        %v3435 = vrot.slane %v3430, %v3434
        %v3469 = vunpack.c.l.b16 %v3398
        %v3470 = vunpack.c.l.b16 %v3399
        %v3471 = vunpack.c.l.b16 %v3400
        %v3472 = vunpack.c.l.b16 %v3401
        %v3473 = vunpack.c.l.b16 %v3402
        %v3474 = vunpack.c.l.b16 %v3403
        %v3475 = vunpack.c.l.b16 %v3404
        %v3476 = vunpack.c.l.b16 %v3405
        %v3477 = vunpack.c.l.b16 %v3406
        %v3478 = vunpack.c.l.b16 %v3407
        %v3479 = vunpack.c.l.b16 %v3408
        %v3480 = vunpack.c.l.b16 %v3409
        %v3481 = vunpack.c.l.b16 %v3410
        %v3482 = vunpack.c.l.b16 %v3411
        %v3483 = vunpack.c.l.b16 %v3412
        %v3484 = vunpack.c.l.b16 %v3413
        %v3485 = vunpack.c.l.b16 %v3414
        %v3486 = vunpack.c.l.b16 %v3415
        %v3487 = vunpack.c.l.b16 %v3416
        %v3488 = vunpack.c.l.b16 %v3417
        %v3489 = vunpack.c.l.b16 %v3418
        %v3490 = vunpack.c.l.b16 %v3419
        %v3491 = vunpack.c.l.b16 %v3420
        %v3492 = vunpack.c.l.b16 %v3421
        %v3493 = vunpack.c.l.b16 %v3422
        %v3494 = vunpack.c.l.b16 %v3423
        %v3495 = vunpack.c.l.b16 %v3424
        %v3496 = vunpack.c.l.b16 %v3425
        %v3497 = vunpack.c.l.b16 %v3426
        %v3498 = vunpack.c.l.b16 %v3427
        %v3499 = vunpack.c.l.b16 %v3428
        %v3500 = vunpack.c.l.b16 %v3429
        %v3501 = vpack.c.b16 %v3470, %v3469
        %v3502 = vpack.c.b16 %v3472, %v3471
        %v3503 = vpack.c.b16 %v3474, %v3473
        %v3504 = vpack.c.b16 %v3476, %v3475
        %v3505 = vpack.c.b16 %v3478, %v3477
        %v3506 = vpack.c.b16 %v3480, %v3479
        %v3507 = vpack.c.b16 %v3482, %v3481
        %v3508 = vpack.c.b16 %v3484, %v3483
        %v3509 = vpack.c.b16 %v3486, %v3485
        %v3510 = vpack.c.b16 %v3488, %v3487
        %v3511 = vpack.c.b16 %v3490, %v3489
        %v3512 = vpack.c.b16 %v3492, %v3491
        %v3513 = vpack.c.b16 %v3494, %v3493
        %v3514 = vpack.c.b16 %v3496, %v3495
        %v3515 = vpack.c.b16 %v3498, %v3497
        %v3516 = vpack.c.b16 %v3500, %v3499
        %3533 = vmatprep.subr.bf16.mxu0 0
        %3534 = vmatpush1.bf16.msra.mxu0 %v3501
        %3535 = vmatprep.subr.bf16.mxu0 0
        %3536 = vmatpush1.bf16.msra.mxu0 %v3502
        %3537 = vmatprep.subr.bf16.mxu0 0
        %3538 = vmatpush1.bf16.msra.mxu0 %v3503
        %3539 = vmatprep.subr.bf16.mxu0 0
        %3540 = vmatpush1.bf16.msra.mxu0 %v3504
        %3541 = vmatprep.subr.bf16.mxu0 0
        %3542 = vmatpush1.bf16.msra.mxu0 %v3505
        %3543 = vmatprep.subr.bf16.mxu0 0
        %3544 = vmatpush1.bf16.msra.mxu0 %v3506
        %3545 = vmatprep.subr.bf16.mxu0 0
        %3546 = vmatpush1.bf16.msra.mxu0 %v3507
        %3547 = vmatprep.subr.bf16.mxu0 0
        %3548 = vmatpush1.bf16.msra.mxu0 %v3508
        %3549 = vmatprep.subr.bf16.mxu0 0
        %3550 = vmatpush1.bf16.msra.mxu0 %v3509
        %3551 = vmatprep.subr.bf16.mxu0 0
        %3552 = vmatpush1.bf16.msra.mxu0 %v3510
        %3553 = vmatprep.subr.bf16.mxu0 0
        %3554 = vmatpush1.bf16.msra.mxu0 %v3511
        %3555 = vmatprep.subr.bf16.mxu0 0
        %3556 = vmatpush1.bf16.msra.mxu0 %v3512
        %3557 = vmatprep.subr.bf16.mxu0 0
        %3558 = vmatpush1.bf16.msra.mxu0 %v3513
        %3559 = vmatprep.subr.bf16.mxu0 0
        %3560 = vmatpush1.bf16.msra.mxu0 %v3514
        %3561 = vmatprep.subr.bf16.mxu0 0
        %3562 = vmatpush1.bf16.msra.mxu0 %v3515
        %3563 = vmatprep.subr.bf16.mxu0 0
        %3564 = vmatpush1.bf16.msra.mxu0 %v3516
        %3565 = vmatprep.mubr.bf16.mxu0 %v3397
        %3566 = vmatmul.mubr.bf16.gmra.mrb[0].mxu0 %v3396
        %v3567 = vpop.f32.mrb[0].mxu0
        %v3568 = vadd.f32 %v3435, %v3567
        %v3569 = vpop.f32.mrb[0].mxu0
        %v3570 = vpop.f32.mrb[0].mxu0
        %v3571 = vpop.f32.mrb[0].mxu0
        %3572 = vdwg.mxu0
        %v3573 = vadd.f32 %v3216, %v3568
        %3574 = vst [vmem:[%s1187] sm:$0xff] %v3573
        %s3575 = sand.u32 %s762, 1
        %s3576 = scalar_lea.sflag [#allocation4], %s3575
        %s3577 = sand.u32 %s762, 1
        %s3578 = smul.addr %s3577, 8
        %s3579 = scalar_lea.vmem [#allocation23], %s3578
        // Predicated region
        $region197: #{tpu_custom_call.1} parent=143 // pred_check
          %p3580 = pneg %p772
        $region198: #{tpu_custom_call.1} parent=143 // pred_check_branch
          %3582 = sbr.rel (%p3580) target = $region200
        $region199: #{tpu_custom_call.1} parent=143 // pred_region
          %s3584 = ssub.s32 128, 128
          %3585 = vsyncadd %s3576, %s3584
          %s3586 = smul.addr %s88, 128
          %s3587 = scalar_lea.hbm %s63, %s3586
          %s3589 = sshll.u32 %s3579, 4
          %s3590 = int_to_ptr.vmem [resolvable:$true] %s3589
          %3592 = dma.vmem_to_hbm [thread:$0]  %s3590, 128, %s3587, %s3576
        $region200: #{tpu_custom_call.1} parent=143 // pred_fallthru
          _
      $region144: #{tpu_custom_call.1} parent=5 // pred_fallthru
        _
      %p3593 = scmp.le.s32.totalorder 2, %s83
      // Predicated region
      $region201: #{tpu_custom_call.1} parent=5 // pred_check
        %p3594 = pneg %p3593
      $region202: #{tpu_custom_call.1} parent=5 // pred_check_branch
        %3596 = sbr.rel (%p3594) target = $region204
      $region203: #{tpu_custom_call.1} parent=5 // pred_region
        %s3597 = ssub.s32 %s83, 2
        // Predicated region
        $region205: #{tpu_custom_call.1} parent=203 // pred_check
          %p3598 = pneg %p778
        $region206: #{tpu_custom_call.1} parent=203 // pred_check_branch
          %3600 = sbr.rel (%p3598) target = $region208
        $region207: #{tpu_custom_call.1} parent=203 // pred_region
          %s3601 = sand.u32 %s763, 1
          %s3602 = scalar_lea.sflag [#allocation4], %s3601
          %s3603 = sand.u32 %s763, 1
          %s3604 = smul.addr %s3603, 8
          %s3605 = scalar_lea.vmem [#allocation23], %s3604
          %3606 = dma.done %s3602, 128
        $region208: #{tpu_custom_call.1} parent=203 // pred_fallthru
          _
      $region204: #{tpu_custom_call.1} parent=5 // pred_fallthru
        _
    $region6: #{tpu_custom_call.1} parent=1 // loop_footer
      %s87 = sadd.s32 1, %s83
    $region7: #{tpu_custom_call.1} parent=1 // loop_footer_branch
      %82 = sbr.rel target = $region3
    $region8: #{tpu_custom_call.1} parent=1 // loop_exit
      _
    %3607 = vsyncpa [#allocation3], 1
    %s3608 = scalar_lea.sflag [#allocation3], 1
    %3609 = vsyncpa %s3608, 1
    %3610 = vsyncpa [#allocation6], 1
    %s3611 = scalar_lea.sflag [#allocation6], 1
    %3612 = vsyncpa %s3611, 1
    %3613 = vsyncpa [#allocation9], 1
    %3614 = vsyncpa [#allocation12], 1
    %3615 = vsyncpa [#allocation15], 1
    %3616 = vsyncpa [#allocation18], 1
    %3617 = vsyncpa [#allocation21], 1
    %3618 = vsyncpa [#allocation4], 1
    %s3619 = scalar_lea.sflag [#allocation4], 1
    %3620 = vsyncpa %s3619, 1

// kernel: tpu_custom_call.1
$region0: #{tpu_custom_call.1}
  #allocation0 [shape = 'u32[]', space=smem, size = 0x4, offset = 0x4, fixed_abs, tag = 'smem constant byte address 0x4 - core index']
  #allocation1 [shape = 'u32[144,128]{1,0:T(1,128)}', space=vmem, size = 0x12000, scoped, tag = 'internal scratch']
  %s0 = inlined_call_operand.smem [shape: u32[32], index: -1, kind: input, shape index: {}]
  %s1 = sld [smem:[%s0]]
  %s2 = scalar_lea.smem %s0, 1
  %s3 = sld [smem:[%s2]]
  %s4 = scalar_lea.smem %s0, 2
  %s5 = sld [smem:[%s4]]
  %s6 = scalar_lea.smem %s0, 3
  %s7 = sld [smem:[%s6]]
  %s8 = scalar_lea.smem %s0, 4
  %s9 = sld [smem:[%s8]]
  %s10 = scalar_lea.smem %s0, 5
  %s11 = sld [smem:[%s10]]
  %s12 = scalar_lea.smem %s0, 6
  %s13 = sld [smem:[%s12]]
  %s14 = scalar_lea.smem %s0, 7
  %s15 = sld [smem:[%s14]]
  %s16 = scalar_lea.smem %s0, 8
  %s17 = sld [smem:[%s16]]
  %s18 = scalar_lea.smem %s0, 9
  %s19 = sld [smem:[%s18]]
  %s20 = scalar_lea.smem %s0, 10
  %s21 = sld [smem:[%s20]]
  %s22 = scalar_lea.smem %s0, 11
  %s23 = sld [smem:[%s22]]
  %s24 = scalar_lea.smem %s0, 12
  %s25 = sld [smem:[%s24]]
  %s26 = scalar_lea.smem %s0, 13
  %s27 = sld [smem:[%s26]]
  %s28 = scalar_lea.smem %s0, 14
  %s29 = sld [smem:[%s28]]
  %s30 = scalar_lea.smem %s0, 15
  %s31 = sld [smem:[%s30]]
  %s32 = scalar_lea.smem %s0, 16
  %s33 = sld [smem:[%s32]]
  %s34 = scalar_lea.smem %s0, 17
  %s35 = sld [smem:[%s34]]
  %s36 = scalar_lea.smem %s0, 18
  %s37 = sld [smem:[%s36]]
  %s38 = scalar_lea.smem %s0, 19
  %s39 = sld [smem:[%s38]]
  %s40 = scalar_lea.smem %s0, 20
  %s41 = sld [smem:[%s40]]
  %s42 = scalar_lea.smem %s0, 21
  %s43 = sld [smem:[%s42]]
  %s44 = scalar_lea.smem %s0, 22
  %s45 = sld [smem:[%s44]]
  %s46 = scalar_lea.smem %s0, 23
  %s47 = sld [smem:[%s46]]
  %s48 = scalar_lea.smem %s0, 24
  %s49 = sld [smem:[%s48]]
  %s50 = scalar_lea.smem %s0, 25
  %s51 = sld [smem:[%s50]]
  %s52 = scalar_lea.smem %s0, 26
  %s53 = sld [smem:[%s52]]
  %s54 = scalar_lea.smem %s0, 27
  %s55 = sld [smem:[%s54]]
  %s56 = scalar_lea.smem %s0, 28
  %s57 = sld [smem:[%s56]]
  %s58 = scalar_lea.smem %s0, 29
  %s59 = sld [smem:[%s58]]
  %s60 = scalar_lea.smem %s0, 30
  %s61 = sld [smem:[%s60]]
  %s62 = scalar_lea.smem %s0, 31
  %s63 = sld [smem:[%s62]]
  %s64 = sld [smem:[#allocation0]]
  $region209: #{tpu_custom_call.1} parent=0
    _
  %s66 = ssub.s32 1, %s64
  %s67 = scalar_select 0, %s66, %s64
  $region1: #{tpu_custom_call.1} parent=0
    #allocation2 [shape = 'u8[8192]{0}', space=vmem, size = 0x2000, scoped, tag = 'input window, operand 0']
    #allocation3 [shape = 's32[2]{0}', space=sflag, size = 0x8, scoped, tag = 'scoped memory for tpu_custom_call.1']
    #allocation4 [shape = 's32[2]{0}', space=sflag, size = 0x8, scoped, tag = 'scoped memory for tpu_custom_call.1']
    #allocation5 [shape = 'u8[8192]{0}', space=vmem, size = 0x2000, scoped, tag = 'input window, operand 1']
    #allocation6 [shape = 's32[2]{0}', space=sflag, size = 0x8, scoped, tag = 'scoped memory for tpu_custom_call.1']
    #allocation7 [shape = 'u8[8192]{0}', space=vmem, size = 0x2000, scoped, tag = 'input window, operand 2']
    #allocation8 [shape = 'u8[32768]{0}', space=vmem, size = 0x8000, scoped, tag = 'input window, operand 7, single buffered']
    #allocation9 [shape = 's32[1]{0}', space=sflag, size = 0x4, scoped, tag = 'scoped memory for tpu_custom_call.1']
    #allocation10 [shape = 'u8[32768]{0}', space=vmem, size = 0x8000, scoped, tag = 'input window, operand 9, single buffered']
    #allocation11 [shape = 'u8[32768]{0}', space=vmem, size = 0x8000, scoped, tag = 'input window, operand 11, single buffered']
    #allocation12 [shape = 's32[1]{0}', space=sflag, size = 0x4, scoped, tag = 'scoped memory for tpu_custom_call.1']
    #allocation13 [shape = 'u8[65536]{0}', space=vmem, size = 0x10000, scoped, tag = 'input window, operand 13, single buffered']
    #allocation14 [shape = 'u8[65536]{0}', space=vmem, size = 0x10000, scoped, tag = 'input window, operand 15, single buffered']
    #allocation15 [shape = 's32[1]{0}', space=sflag, size = 0x4, scoped, tag = 'scoped memory for tpu_custom_call.1']
    #allocation16 [shape = 'u8[512]{0}', space=vmem, size = 0x400, scoped, tag = 'input window, operand 20, single buffered']
    #allocation17 [shape = 'u8[32768]{0}', space=vmem, size = 0x8000, scoped, tag = 'input window, operand 23, single buffered']
    #allocation18 [shape = 's32[1]{0}', space=sflag, size = 0x4, scoped, tag = 'scoped memory for tpu_custom_call.1']
    #allocation19 [shape = 'u8[32768]{0}', space=vmem, size = 0x8000, scoped, tag = 'input window, operand 25, single buffered']
    #allocation20 [shape = 'u8[65536]{0}', space=vmem, size = 0x10000, scoped, tag = 'input window, operand 27, single buffered']
    #allocation21 [shape = 's32[1]{0}', space=sflag, size = 0x4, scoped, tag = 'scoped memory for tpu_custom_call.1']
    #allocation22 [shape = 'u8[65536]{0}', space=vmem, size = 0x10000, scoped, tag = 'input window, operand 29, single buffered']
    #allocation23 [shape = 'u8[8192]{0}', space=vmem, size = 0x2000, scoped, tag = 'output window, operand 0']
    %68 = vsyncpa [#allocation3], 0
    %s69 = scalar_lea.sflag [#allocation3], 1
    %70 = vsyncpa %s69, 0
    %71 = vsyncpa [#allocation6], 0
    %s72 = scalar_lea.sflag [#allocation6], 1
    %73 = vsyncpa %s72, 0
    %74 = vsyncpa [#allocation9], 0
    %75 = vsyncpa [#allocation12], 0
    %76 = vsyncpa [#allocation15], 0
    %77 = vsyncpa [#allocation18], 0
    %78 = vsyncpa [#allocation21], 0
    %79 = vsyncpa [#allocation4], 0
    %s80 = scalar_lea.sflag [#allocation4], 1
    %81 = vsyncpa %s80, 0
    loop: start=0, step=1, limit=4
    $region2: #{tpu_custom_call.1} parent=1 // loop_pre_header
      _
    $region3: #{tpu_custom_call.1} parent=1 // loop_header
      %s83 = sphi 0, %s87
      %p84 = scmp.ge.s32.totalorder %s83, 4
      %s93 = sphi 0, %s95
      %s96 = sphi 0, %s93
      %s97 = sphi 0, %s96
      %s113 = sphi 0, %s97
      %s119 = sphi 0, %s121
      %s122 = sphi 0, %s119
      %s123 = sphi 0, %s122
      %s139 = sphi 0, %s123
      %s145 = sphi 0, %s147
      %s148 = sphi 0, %s145
      %s149 = sphi 0, %s148
      %s165 = sphi 0, %s149
      %s169 = sphi 0, %s169
      %s171 = sphi 0, %s169
      %s172 = sphi 0, %s171
      %s186 = sphi 0, %s172
      %s190 = sphi 0, %s190
      %s192 = sphi 0, %s190
      %s193 = sphi 0, %s192
      %s207 = sphi 0, %s193
      %s211 = sphi 0, %s211
      %s213 = sphi 0, %s211
      %s214 = sphi 0, %s213
      %s228 = sphi 0, %s214
      %s232 = sphi 0, %s232
      %s234 = sphi 0, %s232
      %s235 = sphi 0, %s234
      %s249 = sphi 0, %s235
      %s253 = sphi 0, %s253
      %s255 = sphi 0, %s253
      %s256 = sphi 0, %s255
      %s270 = sphi 0, %s256
      %s274 = sphi 0, %s274
      %s276 = sphi 0, %s274
      %s277 = sphi 0, %s276
      %s291 = sphi 0, %s277
      %s295 = sphi 0, %s295
      %s297 = sphi 0, %s295
      %s298 = sphi 0, %s297
      %s312 = sphi 0, %s298
      %s316 = sphi 0, %s316
      %s318 = sphi 0, %s316
      %s319 = sphi 0, %s318
      %s333 = sphi 0, %s319
      %s337 = sphi 0, %s337
      %s339 = sphi 0, %s337
      %s340 = sphi 0, %s339
      %s354 = sphi 0, %s340
      %s358 = sphi 0, %s358
      %s360 = sphi 0, %s358
      %s361 = sphi 0, %s360
      %s375 = sphi 0, %s361
      %s379 = sphi 0, %s379
      %s381 = sphi 0, %s379
      %s382 = sphi 0, %s381
      %s396 = sphi 0, %s382
      %s400 = sphi 0, %s400
      %s402 = sphi 0, %s400
      %s403 = sphi 0, %s402
      %s417 = sphi 0, %s403
      %s421 = sphi 0, %s421
      %s423 = sphi 0, %s421
      %s424 = sphi 0, %s423
      %s438 = sphi 0, %s424
      %s442 = sphi 0, %s442
      %s444 = sphi 0, %s442
      %s445 = sphi 0, %s444
      %s459 = sphi 0, %s445
      %s463 = sphi 0, %s463
      %s465 = sphi 0, %s463
      %s466 = sphi 0, %s465
      %s480 = sphi 0, %s466
      %s484 = sphi 0, %s484
      %s486 = sphi 0, %s484
      %s487 = sphi 0, %s486
      %s501 = sphi 0, %s487
      %s505 = sphi 0, %s505
      %s507 = sphi 0, %s505
      %s508 = sphi 0, %s507
      %s522 = sphi 0, %s508
      %s526 = sphi 0, %s526
      %s528 = sphi 0, %s526
      %s529 = sphi 0, %s528
      %s543 = sphi 0, %s529
      %s547 = sphi 0, %s547
      %s549 = sphi 0, %s547
      %s550 = sphi 0, %s549
      %s564 = sphi 0, %s550
      %s568 = sphi 0, %s568
      %s570 = sphi 0, %s568
      %s571 = sphi 0, %s570
      %s585 = sphi 0, %s571
      %s589 = sphi 0, %s589
      %s591 = sphi 0, %s589
      %s592 = sphi 0, %s591
      %s606 = sphi 0, %s592
      %s610 = sphi 0, %s610
      %s612 = sphi 0, %s610
      %s613 = sphi 0, %s612
      %s627 = sphi 0, %s613
      %s631 = sphi 0, %s631
      %s633 = sphi 0, %s631
      %s634 = sphi 0, %s633
      %s648 = sphi 0, %s634
      %s652 = sphi 0, %s652
      %s654 = sphi 0, %s652
      %s655 = sphi 0, %s654
      %s669 = sphi 0, %s655
      %s673 = sphi 0, %s673
      %s675 = sphi 0, %s673
      %s676 = sphi 0, %s675
      %s690 = sphi 0, %s676
      %s694 = sphi 0, %s694
      %s696 = sphi 0, %s694
      %s697 = sphi 0, %s696
      %s711 = sphi 0, %s697
      %s715 = sphi 0, %s715
      %s717 = sphi 0, %s715
      %s718 = sphi 0, %s717
      %s732 = sphi 0, %s718
      %s736 = sphi 0, %s736
      %s738 = sphi 0, %s736
      %s739 = sphi 0, %s738
      %s753 = sphi 0, %s739
      %s759 = sphi 0, %s761
      %s762 = sphi 0, %s759
      %s763 = sphi 0, %s762
      %s779 = sphi 0, %s763
    $region4: #{tpu_custom_call.1} parent=1 // loop_header_branch
      %86 = sbr.rel (%p84) target = $region8
    $region5: #{tpu_custom_call.1} parent=1 // loop_body
      %s88 = ssub.s32 %s83, 1
      %s89 = ssub.s32 %s83, 2
      %s90 = sadd.s32 %s83, 1
      %s91 = ssub.s32 %s83, %s90
      %p92 = scmp.eq.s32.totalorder %s91, 0
      %s94 = sadd.s32 %s93, 1
      %s95 = scalar_select %p92, %s93, %s94
      %p98 = pneg %p92
      %p99 = scmp.eq.s32.totalorder %s83, 1
      %p100 = por %p98, %p99
      %p101 = scmp.ne.s32.totalorder %s93, %s96
      %p102 = scmp.eq.s32.totalorder %s83, 0
      %p103 = por %p101, %p102
      %p104 = scmp.ne.s32.totalorder %s93, %s96
      %p105 = scmp.eq.s32.totalorder %s88, 1
      %p106 = por %p104, %p105
      %p107 = scmp.ne.s32.totalorder %s96, %s97
      %p108 = scmp.eq.s32.totalorder %s88, 0
      %p109 = por %p107, %p108
      %p110 = scmp.ne.s32.totalorder %s96, %s97
      %p111 = scmp.eq.s32.totalorder %s89, 1
      %p112 = por %p110, %p111
      %p114 = scmp.ne.s32.totalorder %s97, %s113
      %p115 = scmp.eq.s32.totalorder %s89, 0
      %p116 = por %p114, %p115
      %s117 = ssub.s32 %s83, %s90
      %p118 = scmp.eq.s32.totalorder %s117, 0
      %s120 = sadd.s32 %s119, 1
      %s121 = scalar_select %p118, %s119, %s120
      %p124 = pneg %p118
      %p125 = scmp.eq.s32.totalorder %s83, 1
      %p126 = por %p124, %p125
      %p127 = scmp.ne.s32.totalorder %s119, %s122
      %p128 = scmp.eq.s32.totalorder %s83, 0
      %p129 = por %p127, %p128
      %p130 = scmp.ne.s32.totalorder %s119, %s122
      %p131 = scmp.eq.s32.totalorder %s88, 1
      %p132 = por %p130, %p131
      %p133 = scmp.ne.s32.totalorder %s122, %s123
      %p134 = scmp.eq.s32.totalorder %s88, 0
      %p135 = por %p133, %p134
      %p136 = scmp.ne.s32.totalorder %s122, %s123
      %p137 = scmp.eq.s32.totalorder %s89, 1
      %p138 = por %p136, %p137
      %p140 = scmp.ne.s32.totalorder %s123, %s139
      %p141 = scmp.eq.s32.totalorder %s89, 0
      %p142 = por %p140, %p141
      %s143 = ssub.s32 %s83, %s90
      %p144 = scmp.eq.s32.totalorder %s143, 0
      %s146 = sadd.s32 %s145, 1
      %s147 = scalar_select %p144, %s145, %s146
      %p150 = pneg %p144
      %p151 = scmp.eq.s32.totalorder %s83, 1
      %p152 = por %p150, %p151
      %p153 = scmp.ne.s32.totalorder %s145, %s148
      %p154 = scmp.eq.s32.totalorder %s83, 0
      %p155 = por %p153, %p154
      %p156 = scmp.ne.s32.totalorder %s145, %s148
      %p157 = scmp.eq.s32.totalorder %s88, 1
      %p158 = por %p156, %p157
      %p159 = scmp.ne.s32.totalorder %s148, %s149
      %p160 = scmp.eq.s32.totalorder %s88, 0
      %p161 = por %p159, %p160
      %p162 = scmp.ne.s32.totalorder %s148, %s149
      %p163 = scmp.eq.s32.totalorder %s89, 1
      %p164 = por %p162, %p163
      %p166 = scmp.ne.s32.totalorder %s149, %s165
      %p167 = scmp.eq.s32.totalorder %s89, 0
      %p168 = por %p166, %p167
      %s170 = sadd.s32 %s169, 1
      %p173 = scmp.eq.s32.totalorder %s83, 1
      %p174 = scmp.ne.s32.totalorder %s169, %s171
      %p175 = scmp.eq.s32.totalorder %s83, 0
      %p176 = por %p174, %p175
      %p177 = scmp.ne.s32.totalorder %s169, %s171
      %p178 = scmp.eq.s32.totalorder %s88, 1
      %p179 = por %p177, %p178
      %p180 = scmp.ne.s32.totalorder %s171, %s172
      %p181 = scmp.eq.s32.totalorder %s88, 0
      %p182 = por %p180, %p181
      %p183 = scmp.ne.s32.totalorder %s171, %s172
      %p184 = scmp.eq.s32.totalorder %s89, 1
      %p185 = por %p183, %p184
      %p187 = scmp.ne.s32.totalorder %s172, %s186
      %p188 = scmp.eq.s32.totalorder %s89, 0
      %p189 = por %p187, %p188
      %s191 = sadd.s32 %s190, 1
      %p194 = scmp.eq.s32.totalorder %s83, 1
      %p195 = scmp.ne.s32.totalorder %s190, %s192
      %p196 = scmp.eq.s32.totalorder %s83, 0
      %p197 = por %p195, %p196
      %p198 = scmp.ne.s32.totalorder %s190, %s192
      %p199 = scmp.eq.s32.totalorder %s88, 1
      %p200 = por %p198, %p199
      %p201 = scmp.ne.s32.totalorder %s192, %s193
      %p202 = scmp.eq.s32.totalorder %s88, 0
      %p203 = por %p201, %p202
      %p204 = scmp.ne.s32.totalorder %s192, %s193
      %p205 = scmp.eq.s32.totalorder %s89, 1
      %p206 = por %p204, %p205
      %p208 = scmp.ne.s32.totalorder %s193, %s207
      %p209 = scmp.eq.s32.totalorder %s89, 0
      %p210 = por %p208, %p209
      %s212 = sadd.s32 %s211, 1
      %p215 = scmp.eq.s32.totalorder %s83, 1
      %p216 = scmp.ne.s32.totalorder %s211, %s213
      %p217 = scmp.eq.s32.totalorder %s83, 0
      %p218 = por %p216, %p217
      %p219 = scmp.ne.s32.totalorder %s211, %s213
      %p220 = scmp.eq.s32.totalorder %s88, 1
      %p221 = por %p219, %p220
      %p222 = scmp.ne.s32.totalorder %s213, %s214
      %p223 = scmp.eq.s32.totalorder %s88, 0
      %p224 = por %p222, %p223
      %p225 = scmp.ne.s32.totalorder %s213, %s214
      %p226 = scmp.eq.s32.totalorder %s89, 1
      %p227 = por %p225, %p226
      %p229 = scmp.ne.s32.totalorder %s214, %s228
      %p230 = scmp.eq.s32.totalorder %s89, 0
      %p231 = por %p229, %p230
      %s233 = sadd.s32 %s232, 1
      %p236 = scmp.eq.s32.totalorder %s83, 1
      %p237 = scmp.ne.s32.totalorder %s232, %s234
      %p238 = scmp.eq.s32.totalorder %s83, 0
      %p239 = por %p237, %p238
      %p240 = scmp.ne.s32.totalorder %s232, %s234
      %p241 = scmp.eq.s32.totalorder %s88, 1
      %p242 = por %p240, %p241
      %p243 = scmp.ne.s32.totalorder %s234, %s235
      %p244 = scmp.eq.s32.totalorder %s88, 0
      %p245 = por %p243, %p244
      %p246 = scmp.ne.s32.totalorder %s234, %s235
      %p247 = scmp.eq.s32.totalorder %s89, 1
      %p248 = por %p246, %p247
      %p250 = scmp.ne.s32.totalorder %s235, %s249
      %p251 = scmp.eq.s32.totalorder %s89, 0
      %p252 = por %p250, %p251
      %s254 = sadd.s32 %s253, 1
      %p257 = scmp.eq.s32.totalorder %s83, 1
      %p258 = scmp.ne.s32.totalorder %s253, %s255
      %p259 = scmp.eq.s32.totalorder %s83, 0
      %p260 = por %p258, %p259
      %p261 = scmp.ne.s32.totalorder %s253, %s255
      %p262 = scmp.eq.s32.totalorder %s88, 1
      %p263 = por %p261, %p262
      %p264 = scmp.ne.s32.totalorder %s255, %s256
      %p265 = scmp.eq.s32.totalorder %s88, 0
      %p266 = por %p264, %p265
      %p267 = scmp.ne.s32.totalorder %s255, %s256
      %p268 = scmp.eq.s32.totalorder %s89, 1
      %p269 = por %p267, %p268
      %p271 = scmp.ne.s32.totalorder %s256, %s270
      %p272 = scmp.eq.s32.totalorder %s89, 0
      %p273 = por %p271, %p272
      %s275 = sadd.s32 %s274, 1
      %p278 = scmp.eq.s32.totalorder %s83, 1
      %p279 = scmp.ne.s32.totalorder %s274, %s276
      %p280 = scmp.eq.s32.totalorder %s83, 0
      %p281 = por %p279, %p280
      %p282 = scmp.ne.s32.totalorder %s274, %s276
      %p283 = scmp.eq.s32.totalorder %s88, 1
      %p284 = por %p282, %p283
      %p285 = scmp.ne.s32.totalorder %s276, %s277
      %p286 = scmp.eq.s32.totalorder %s88, 0
      %p287 = por %p285, %p286
      %p288 = scmp.ne.s32.totalorder %s276, %s277
      %p289 = scmp.eq.s32.totalorder %s89, 1
      %p290 = por %p288, %p289
      %p292 = scmp.ne.s32.totalorder %s277, %s291
      %p293 = scmp.eq.s32.totalorder %s89, 0
      %p294 = por %p292, %p293
      %s296 = sadd.s32 %s295, 1
      %p299 = scmp.eq.s32.totalorder %s83, 1
      %p300 = scmp.ne.s32.totalorder %s295, %s297
      %p301 = scmp.eq.s32.totalorder %s83, 0
      %p302 = por %p300, %p301
      %p303 = scmp.ne.s32.totalorder %s295, %s297
      %p304 = scmp.eq.s32.totalorder %s88, 1
      %p305 = por %p303, %p304
      %p306 = scmp.ne.s32.totalorder %s297, %s298
      %p307 = scmp.eq.s32.totalorder %s88, 0
      %p308 = por %p306, %p307
      %p309 = scmp.ne.s32.totalorder %s297, %s298
      %p310 = scmp.eq.s32.totalorder %s89, 1
      %p311 = por %p309, %p310
      %p313 = scmp.ne.s32.totalorder %s298, %s312
      %p314 = scmp.eq.s32.totalorder %s89, 0
      %p315 = por %p313, %p314
      %s317 = sadd.s32 %s316, 1
      %p320 = scmp.eq.s32.totalorder %s83, 1
      %p321 = scmp.ne.s32.totalorder %s316, %s318
      %p322 = scmp.eq.s32.totalorder %s83, 0
      %p323 = por %p321, %p322
      %p324 = scmp.ne.s32.totalorder %s316, %s318
      %p325 = scmp.eq.s32.totalorder %s88, 1
      %p326 = por %p324, %p325
      %p327 = scmp.ne.s32.totalorder %s318, %s319
      %p328 = scmp.eq.s32.totalorder %s88, 0
      %p329 = por %p327, %p328
      %p330 = scmp.ne.s32.totalorder %s318, %s319
      %p331 = scmp.eq.s32.totalorder %s89, 1
      %p332 = por %p330, %p331
      %p334 = scmp.ne.s32.totalorder %s319, %s333
      %p335 = scmp.eq.s32.totalorder %s89, 0
      %p336 = por %p334, %p335
      %s338 = sadd.s32 %s337, 1
      %p341 = scmp.eq.s32.totalorder %s83, 1
      %p342 = scmp.ne.s32.totalorder %s337, %s339
      %p343 = scmp.eq.s32.totalorder %s83, 0
      %p344 = por %p342, %p343
      %p345 = scmp.ne.s32.totalorder %s337, %s339
      %p346 = scmp.eq.s32.totalorder %s88, 1
      %p347 = por %p345, %p346
      %p348 = scmp.ne.s32.totalorder %s339, %s340
      %p349 = scmp.eq.s32.totalorder %s88, 0
      %p350 = por %p348, %p349
      %p351 = scmp.ne.s32.totalorder %s339, %s340
      %p352 = scmp.eq.s32.totalorder %s89, 1
      %p353 = por %p351, %p352
      %p355 = scmp.ne.s32.totalorder %s340, %s354
      %p356 = scmp.eq.s32.totalorder %s89, 0
      %p357 = por %p355, %p356
      %s359 = sadd.s32 %s358, 1
      %p362 = scmp.eq.s32.totalorder %s83, 1
      %p363 = scmp.ne.s32.totalorder %s358, %s360
      %p364 = scmp.eq.s32.totalorder %s83, 0
      %p365 = por %p363, %p364
      %p366 = scmp.ne.s32.totalorder %s358, %s360
      %p367 = scmp.eq.s32.totalorder %s88, 1
      %p368 = por %p366, %p367
      %p369 = scmp.ne.s32.totalorder %s360, %s361
      %p370 = scmp.eq.s32.totalorder %s88, 0
      %p371 = por %p369, %p370
      %p372 = scmp.ne.s32.totalorder %s360, %s361
      %p373 = scmp.eq.s32.totalorder %s89, 1
      %p374 = por %p372, %p373
      %p376 = scmp.ne.s32.totalorder %s361, %s375
      %p377 = scmp.eq.s32.totalorder %s89, 0
      %p378 = por %p376, %p377
      %s380 = sadd.s32 %s379, 1
      %p383 = scmp.eq.s32.totalorder %s83, 1
      %p384 = scmp.ne.s32.totalorder %s379, %s381
      %p385 = scmp.eq.s32.totalorder %s83, 0
      %p386 = por %p384, %p385
      %p387 = scmp.ne.s32.totalorder %s379, %s381
      %p388 = scmp.eq.s32.totalorder %s88, 1
      %p389 = por %p387, %p388
      %p390 = scmp.ne.s32.totalorder %s381, %s382
      %p391 = scmp.eq.s32.totalorder %s88, 0
      %p392 = por %p390, %p391
      %p393 = scmp.ne.s32.totalorder %s381, %s382
      %p394 = scmp.eq.s32.totalorder %s89, 1
      %p395 = por %p393, %p394
      %p397 = scmp.ne.s32.totalorder %s382, %s396
      %p398 = scmp.eq.s32.totalorder %s89, 0
      %p399 = por %p397, %p398
      %s401 = sadd.s32 %s400, 1
      %p404 = scmp.eq.s32.totalorder %s83, 1
      %p405 = scmp.ne.s32.totalorder %s400, %s402
      %p406 = scmp.eq.s32.totalorder %s83, 0
      %p407 = por %p405, %p406
      %p408 = scmp.ne.s32.totalorder %s400, %s402
      %p409 = scmp.eq.s32.totalorder %s88, 1
      %p410 = por %p408, %p409
      %p411 = scmp.ne.s32.totalorder %s402, %s403
      %p412 = scmp.eq.s32.totalorder %s88, 0
      %p413 = por %p411, %p412
      %p414 = scmp.ne.s32.totalorder %s402, %s403
      %p415 = scmp.eq.s32.totalorder %s89, 1
      %p416 = por %p414, %p415
      %p418 = scmp.ne.s32.totalorder %s403, %s417
      %p419 = scmp.eq.s32.totalorder %s89, 0
      %p420 = por %p418, %p419
      %s422 = sadd.s32 %s421, 1
      %p425 = scmp.eq.s32.totalorder %s83, 1
      %p426 = scmp.ne.s32.totalorder %s421, %s423
      %p427 = scmp.eq.s32.totalorder %s83, 0
      %p428 = por %p426, %p427
      %p429 = scmp.ne.s32.totalorder %s421, %s423
      %p430 = scmp.eq.s32.totalorder %s88, 1
      %p431 = por %p429, %p430
      %p432 = scmp.ne.s32.totalorder %s423, %s424
      %p433 = scmp.eq.s32.totalorder %s88, 0
      %p434 = por %p432, %p433
      %p435 = scmp.ne.s32.totalorder %s423, %s424
      %p436 = scmp.eq.s32.totalorder %s89, 1
      %p437 = por %p435, %p436
      %p439 = scmp.ne.s32.totalorder %s424, %s438
      %p440 = scmp.eq.s32.totalorder %s89, 0
      %p441 = por %p439, %p440
      %s443 = sadd.s32 %s442, 1
      %p446 = scmp.eq.s32.totalorder %s83, 1
      %p447 = scmp.ne.s32.totalorder %s442, %s444
      %p448 = scmp.eq.s32.totalorder %s83, 0
      %p449 = por %p447, %p448
      %p450 = scmp.ne.s32.totalorder %s442, %s444
      %p451 = scmp.eq.s32.totalorder %s88, 1
      %p452 = por %p450, %p451
      %p453 = scmp.ne.s32.totalorder %s444, %s445
      %p454 = scmp.eq.s32.totalorder %s88, 0
      %p455 = por %p453, %p454
      %p456 = scmp.ne.s32.totalorder %s444, %s445
      %p457 = scmp.eq.s32.totalorder %s89, 1
      %p458 = por %p456, %p457
      %p460 = scmp.ne.s32.totalorder %s445, %s459
      %p461 = scmp.eq.s32.totalorder %s89, 0
      %p462 = por %p460, %p461
      %s464 = sadd.s32 %s463, 1
      %p467 = scmp.eq.s32.totalorder %s83, 1
      %p468 = scmp.ne.s32.totalorder %s463, %s465
      %p469 = scmp.eq.s32.totalorder %s83, 0
      %p470 = por %p468, %p469
      %p471 = scmp.ne.s32.totalorder %s463, %s465
      %p472 = scmp.eq.s32.totalorder %s88, 1
      %p473 = por %p471, %p472
      %p474 = scmp.ne.s32.totalorder %s465, %s466
      %p475 = scmp.eq.s32.totalorder %s88, 0
      %p476 = por %p474, %p475
      %p477 = scmp.ne.s32.totalorder %s465, %s466
      %p478 = scmp.eq.s32.totalorder %s89, 1
      %p479 = por %p477, %p478
      %p481 = scmp.ne.s32.totalorder %s466, %s480
      %p482 = scmp.eq.s32.totalorder %s89, 0
      %p483 = por %p481, %p482
      %s485 = sadd.s32 %s484, 1
      %p488 = scmp.eq.s32.totalorder %s83, 1
      %p489 = scmp.ne.s32.totalorder %s484, %s486
      %p490 = scmp.eq.s32.totalorder %s83, 0
      %p491 = por %p489, %p490
      %p492 = scmp.ne.s32.totalorder %s484, %s486
      %p493 = scmp.eq.s32.totalorder %s88, 1
      %p494 = por %p492, %p493
      %p495 = scmp.ne.s32.totalorder %s486, %s487
      %p496 = scmp.eq.s32.totalorder %s88, 0
      %p497 = por %p495, %p496
      %p498 = scmp.ne.s32.totalorder %s486, %s487
      %p499 = scmp.eq.s32.totalorder %s89, 1
      %p500 = por %p498, %p499
      %p502 = scmp.ne.s32.totalorder %s487, %s501
      %p503 = scmp.eq.s32.totalorder %s89, 0
      %p504 = por %p502, %p503
      %s506 = sadd.s32 %s505, 1
      %p509 = scmp.eq.s32.totalorder %s83, 1
      %p510 = scmp.ne.s32.totalorder %s505, %s507
      %p511 = scmp.eq.s32.totalorder %s83, 0
      %p512 = por %p510, %p511
      %p513 = scmp.ne.s32.totalorder %s505, %s507
      %p514 = scmp.eq.s32.totalorder %s88, 1
      %p515 = por %p513, %p514
      %p516 = scmp.ne.s32.totalorder %s507, %s508
      %p517 = scmp.eq.s32.totalorder %s88, 0
      %p518 = por %p516, %p517
      %p519 = scmp.ne.s32.totalorder %s507, %s508
      %p520 = scmp.eq.s32.totalorder %s89, 1
      %p521 = por %p519, %p520
      %p523 = scmp.ne.s32.totalorder %s508, %s522
      %p524 = scmp.eq.s32.totalorder %s89, 0
      %p525 = por %p523, %p524
      %s527 = sadd.s32 %s526, 1
      %p530 = scmp.eq.s32.totalorder %s83, 1
      %p531 = scmp.ne.s32.totalorder %s526, %s528
      %p532 = scmp.eq.s32.totalorder %s83, 0
      %p533 = por %p531, %p532
      %p534 = scmp.ne.s32.totalorder %s526, %s528
      %p535 = scmp.eq.s32.totalorder %s88, 1
      %p536 = por %p534, %p535
      %p537 = scmp.ne.s32.totalorder %s528, %s529
      %p538 = scmp.eq.s32.totalorder %s88, 0
      %p539 = por %p537, %p538
      %p540 = scmp.ne.s32.totalorder %s528, %s529
      %p541 = scmp.eq.s32.totalorder %s89, 1
      %p542 = por %p540, %p541
      %p544 = scmp.ne.s32.totalorder %s529, %s543
      %p545 = scmp.eq.s32.totalorder %s89, 0
      %p546 = por %p544, %p545
      %s548 = sadd.s32 %s547, 1
      %p551 = scmp.eq.s32.totalorder %s83, 1
      %p552 = scmp.ne.s32.totalorder %s547, %s549
      %p553 = scmp.eq.s32.totalorder %s83, 0
      %p554 = por %p552, %p553
      %p555 = scmp.ne.s32.totalorder %s547, %s549
      %p556 = scmp.eq.s32.totalorder %s88, 1
      %p557 = por %p555, %p556
      %p558 = scmp.ne.s32.totalorder %s549, %s550
      %p559 = scmp.eq.s32.totalorder %s88, 0
      %p560 = por %p558, %p559
      %p561 = scmp.ne.s32.totalorder %s549, %s550
      %p562 = scmp.eq.s32.totalorder %s89, 1
      %p563 = por %p561, %p562
      %p565 = scmp.ne.s32.totalorder %s550, %s564
      %p566 = scmp.eq.s32.totalorder %s89, 0
      %p567 = por %p565, %p566
      %s569 = sadd.s32 %s568, 1
      %p572 = scmp.eq.s32.totalorder %s83, 1
      %p573 = scmp.ne.s32.totalorder %s568, %s570
      %p574 = scmp.eq.s32.totalorder %s83, 0
      %p575 = por %p573, %p574
      %p576 = scmp.ne.s32.totalorder %s568, %s570
      %p577 = scmp.eq.s32.totalorder %s88, 1
      %p578 = por %p576, %p577
      %p579 = scmp.ne.s32.totalorder %s570, %s571
      %p580 = scmp.eq.s32.totalorder %s88, 0
      %p581 = por %p579, %p580
      %p582 = scmp.ne.s32.totalorder %s570, %s571
      %p583 = scmp.eq.s32.totalorder %s89, 1
      %p584 = por %p582, %p583
      %p586 = scmp.ne.s32.totalorder %s571, %s585
      %p587 = scmp.eq.s32.totalorder %s89, 0
      %p588 = por %p586, %p587
      %s590 = sadd.s32 %s589, 1
      %p593 = scmp.eq.s32.totalorder %s83, 1
      %p594 = scmp.ne.s32.totalorder %s589, %s591
      %p595 = scmp.eq.s32.totalorder %s83, 0
      %p596 = por %p594, %p595
      %p597 = scmp.ne.s32.totalorder %s589, %s591
      %p598 = scmp.eq.s32.totalorder %s88, 1
      %p599 = por %p597, %p598
      %p600 = scmp.ne.s32.totalorder %s591, %s592
      %p601 = scmp.eq.s32.totalorder %s88, 0
      %p602 = por %p600, %p601
      %p603 = scmp.ne.s32.totalorder %s591, %s592
      %p604 = scmp.eq.s32.totalorder %s89, 1
      %p605 = por %p603, %p604
      %p607 = scmp.ne.s32.totalorder %s592, %s606
      %p608 = scmp.eq.s32.totalorder %s89, 0
      %p609 = por %p607, %p608
      %s611 = sadd.s32 %s610, 1
      %p614 = scmp.eq.s32.totalorder %s83, 1
      %p615 = scmp.ne.s32.totalorder %s610, %s612
      %p616 = scmp.eq.s32.totalorder %s83, 0
      %p617 = por %p615, %p616
      %p618 = scmp.ne.s32.totalorder %s610, %s612
      %p619 = scmp.eq.s32.totalorder %s88, 1
      %p620 = por %p618, %p619
      %p621 = scmp.ne.s32.totalorder %s612, %s613
      %p622 = scmp.eq.s32.totalorder %s88, 0
      %p623 = por %p621, %p622
      %p624 = scmp.ne.s32.totalorder %s612, %s613
      %p625 = scmp.eq.s32.totalorder %s89, 1
      %p626 = por %p624, %p625
      %p628 = scmp.ne.s32.totalorder %s613, %s627
      %p629 = scmp.eq.s32.totalorder %s89, 0
      %p630 = por %p628, %p629
      %s632 = sadd.s32 %s631, 1
      %p635 = scmp.eq.s32.totalorder %s83, 1
      %p636 = scmp.ne.s32.totalorder %s631, %s633
      %p637 = scmp.eq.s32.totalorder %s83, 0
      %p638 = por %p636, %p637
      %p639 = scmp.ne.s32.totalorder %s631, %s633
      %p640 = scmp.eq.s32.totalorder %s88, 1
      %p641 = por %p639, %p640
      %p642 = scmp.ne.s32.totalorder %s633, %s634
      %p643 = scmp.eq.s32.totalorder %s88, 0
      %p644 = por %p642, %p643
      %p645 = scmp.ne.s32.totalorder %s633, %s634
      %p646 = scmp.eq.s32.totalorder %s89, 1
      %p647 = por %p645, %p646
      %p649 = scmp.ne.s32.totalorder %s634, %s648
      %p650 = scmp.eq.s32.totalorder %s89, 0
      %p651 = por %p649, %p650
      %s653 = sadd.s32 %s652, 1
      %p656 = scmp.eq.s32.totalorder %s83, 1
      %p657 = scmp.ne.s32.totalorder %s652, %s654
      %p658 = scmp.eq.s32.totalorder %s83, 0
      %p659 = por %p657, %p658
      %p660 = scmp.ne.s32.totalorder %s652, %s654
      %p661 = scmp.eq.s32.totalorder %s88, 1
      %p662 = por %p660, %p661
      %p663 = scmp.ne.s32.totalorder %s654, %s655
      %p664 = scmp.eq.s32.totalorder %s88, 0
      %p665 = por %p663, %p664
      %p666 = scmp.ne.s32.totalorder %s654, %s655
      %p667 = scmp.eq.s32.totalorder %s89, 1
      %p668 = por %p666, %p667
      %p670 = scmp.ne.s32.totalorder %s655, %s669
      %p671 = scmp.eq.s32.totalorder %s89, 0
      %p672 = por %p670, %p671
      %s674 = sadd.s32 %s673, 1
      %p677 = scmp.eq.s32.totalorder %s83, 1
      %p678 = scmp.ne.s32.totalorder %s673, %s675
      %p679 = scmp.eq.s32.totalorder %s83, 0
      %p680 = por %p678, %p679
      %p681 = scmp.ne.s32.totalorder %s673, %s675
      %p682 = scmp.eq.s32.totalorder %s88, 1
      %p683 = por %p681, %p682
      %p684 = scmp.ne.s32.totalorder %s675, %s676
      %p685 = scmp.eq.s32.totalorder %s88, 0
      %p686 = por %p684, %p685
      %p687 = scmp.ne.s32.totalorder %s675, %s676
      %p688 = scmp.eq.s32.totalorder %s89, 1
      %p689 = por %p687, %p688
      %p691 = scmp.ne.s32.totalorder %s676, %s690
      %p692 = scmp.eq.s32.totalorder %s89, 0
      %p693 = por %p691, %p692
      %s695 = sadd.s32 %s694, 1
      %p698 = scmp.eq.s32.totalorder %s83, 1
      %p699 = scmp.ne.s32.totalorder %s694, %s696
      %p700 = scmp.eq.s32.totalorder %s83, 0
      %p701 = por %p699, %p700
      %p702 = scmp.ne.s32.totalorder %s694, %s696
      %p703 = scmp.eq.s32.totalorder %s88, 1
      %p704 = por %p702, %p703
      %p705 = scmp.ne.s32.totalorder %s696, %s697
      %p706 = scmp.eq.s32.totalorder %s88, 0
      %p707 = por %p705, %p706
      %p708 = scmp.ne.s32.totalorder %s696, %s697
      %p709 = scmp.eq.s32.totalorder %s89, 1
      %p710 = por %p708, %p709
      %p712 = scmp.ne.s32.totalorder %s697, %s711
      %p713 = scmp.eq.s32.totalorder %s89, 0
      %p714 = por %p712, %p713
      %s716 = sadd.s32 %s715, 1
      %p719 = scmp.eq.s32.totalorder %s83, 1
      %p720 = scmp.ne.s32.totalorder %s715, %s717
      %p721 = scmp.eq.s32.totalorder %s83, 0
      %p722 = por %p720, %p721
      %p723 = scmp.ne.s32.totalorder %s715, %s717
      %p724 = scmp.eq.s32.totalorder %s88, 1
      %p725 = por %p723, %p724
      %p726 = scmp.ne.s32.totalorder %s717, %s718
      %p727 = scmp.eq.s32.totalorder %s88, 0
      %p728 = por %p726, %p727
      %p729 = scmp.ne.s32.totalorder %s717, %s718
      %p730 = scmp.eq.s32.totalorder %s89, 1
      %p731 = por %p729, %p730
      %p733 = scmp.ne.s32.totalorder %s718, %s732
      %p734 = scmp.eq.s32.totalorder %s89, 0
      %p735 = por %p733, %p734
      %s737 = sadd.s32 %s736, 1
      %p740 = scmp.eq.s32.totalorder %s83, 1
      %p741 = scmp.ne.s32.totalorder %s736, %s738
      %p742 = scmp.eq.s32.totalorder %s83, 0
      %p743 = por %p741, %p742
      %p744 = scmp.ne.s32.totalorder %s736, %s738
      %p745 = scmp.eq.s32.totalorder %s88, 1
      %p746 = por %p744, %p745
      %p747 = scmp.ne.s32.totalorder %s738, %s739
      %p748 = scmp.eq.s32.totalorder %s88, 0
      %p749 = por %p747, %p748
      %p750 = scmp.ne.s32.totalorder %s738, %s739
      %p751 = scmp.eq.s32.totalorder %s89, 1
      %p752 = por %p750, %p751
      %p754 = scmp.ne.s32.totalorder %s739, %s753
      %p755 = scmp.eq.s32.totalorder %s89, 0
      %p756 = por %p754, %p755
      %s757 = ssub.s32 %s83, %s90
      %p758 = scmp.eq.s32.totalorder %s757, 0
      %s760 = sadd.s32 %s759, 1
      %s761 = scalar_select %p758, %s759, %s760
      %p764 = pneg %p758
      %p765 = scmp.eq.s32.totalorder %s83, 1
      %p766 = por %p764, %p765
      %p767 = scmp.ne.s32.totalorder %s759, %s762
      %p768 = scmp.eq.s32.totalorder %s83, 0
      %p769 = por %p767, %p768
      %p770 = scmp.ne.s32.totalorder %s759, %s762
      %p771 = scmp.eq.s32.totalorder %s88, 1
      %p772 = por %p770, %p771
      %p773 = scmp.ne.s32.totalorder %s762, %s763
      %p774 = scmp.eq.s32.totalorder %s88, 0
      %p775 = por %p773, %p774
      %p776 = scmp.ne.s32.totalorder %s762, %s763
      %p777 = scmp.eq.s32.totalorder %s89, 1
      %p778 = por %p776, %p777
      %p780 = scmp.ne.s32.totalorder %s763, %s779
      %p781 = scmp.eq.s32.totalorder %s89, 0
      %p782 = por %p780, %p781
      %p783 = scmp.le.s32.totalorder 1, %s83
      %p784 = scmp.lt.s32.totalorder %s83, 3
      %p785 = pnand %p783, %p784
      %p786 = pneg %p785
      // Predicated region
      $region9: #{tpu_custom_call.1} parent=5 // pred_check
        _
      $region10: #{tpu_custom_call.1} parent=5 // pred_check_branch
        %788 = sbr.rel (%p785) target = $region12
      $region11: #{tpu_custom_call.1} parent=5 // pred_region
        %s789 = ssub.s32 %s83, 1
        // Predicated region
        $region13: #{tpu_custom_call.1} parent=11 // pred_check
          %p790 = pneg %p182
        $region14: #{tpu_custom_call.1} parent=11 // pred_check_branch
          %792 = sbr.rel (%p790) target = $region16
        $region15: #{tpu_custom_call.1} parent=11 // pred_region
          _
        $region16: #{tpu_custom_call.1} parent=11 // pred_fallthru
          _
        // Predicated region
        $region17: #{tpu_custom_call.1} parent=11 // pred_check
          %p793 = pneg %p203
        $region18: #{tpu_custom_call.1} parent=11 // pred_check_branch
          %795 = sbr.rel (%p793) target = $region20
        $region19: #{tpu_custom_call.1} parent=11 // pred_region
          _
        $region20: #{tpu_custom_call.1} parent=11 // pred_fallthru
          _
        // Predicated region
        $region21: #{tpu_custom_call.1} parent=11 // pred_check
          %p796 = pneg %p224
        $region22: #{tpu_custom_call.1} parent=11 // pred_check_branch
          %798 = sbr.rel (%p796) target = $region24
        $region23: #{tpu_custom_call.1} parent=11 // pred_region
          _
        $region24: #{tpu_custom_call.1} parent=11 // pred_fallthru
          _
        // Predicated region
        $region25: #{tpu_custom_call.1} parent=11 // pred_check
          %p799 = pneg %p245
        $region26: #{tpu_custom_call.1} parent=11 // pred_check_branch
          %801 = sbr.rel (%p799) target = $region28
        $region27: #{tpu_custom_call.1} parent=11 // pred_region
          _
        $region28: #{tpu_custom_call.1} parent=11 // pred_fallthru
          _
        // Predicated region
        $region29: #{tpu_custom_call.1} parent=11 // pred_check
          %p802 = pneg %p266
        $region30: #{tpu_custom_call.1} parent=11 // pred_check_branch
          %804 = sbr.rel (%p802) target = $region32
        $region31: #{tpu_custom_call.1} parent=11 // pred_region
          %s806 = ssub.s32 1024, 1024
          %807 = vsyncadd [#allocation9], %s806
          %s808 = sshll.u32 [#allocation8], 4
          %s809 = int_to_ptr.vmem [resolvable:$true] %s808
          %814 = dma.hbm_to_vmem [thread:$0]  %s15, 1024, %s809, [#allocation9], 64, 64, 4
        $region32: #{tpu_custom_call.1} parent=11 // pred_fallthru
          _
        // Predicated region
        $region33: #{tpu_custom_call.1} parent=11 // pred_check
          %p815 = pneg %p287
        $region34: #{tpu_custom_call.1} parent=11 // pred_check_branch
          %817 = sbr.rel (%p815) target = $region36
        $region35: #{tpu_custom_call.1} parent=11 // pred_region
          _
        $region36: #{tpu_custom_call.1} parent=11 // pred_fallthru
          _
        // Predicated region
        $region37: #{tpu_custom_call.1} parent=11 // pred_check
          %p818 = pneg %p308
        $region38: #{tpu_custom_call.1} parent=11 // pred_check_branch
          %820 = sbr.rel (%p818) target = $region40
        $region39: #{tpu_custom_call.1} parent=11 // pred_region
          %s822 = ssub.s32 1024, 1024
          %823 = vsyncadd [#allocation9], %s822
          %s824 = sshll.u32 [#allocation10], 4
          %s825 = int_to_ptr.vmem [resolvable:$true] %s824
          %830 = dma.hbm_to_vmem [thread:$0]  %s19, 1024, %s825, [#allocation9], 64, 64, 4
        $region40: #{tpu_custom_call.1} parent=11 // pred_fallthru
          _
        // Predicated region
        $region41: #{tpu_custom_call.1} parent=11 // pred_check
          %p831 = pneg %p329
        $region42: #{tpu_custom_call.1} parent=11 // pred_check_branch
          %833 = sbr.rel (%p831) target = $region44
        $region43: #{tpu_custom_call.1} parent=11 // pred_region
          _
        $region44: #{tpu_custom_call.1} parent=11 // pred_fallthru
          _
        // Predicated region
        $region45: #{tpu_custom_call.1} parent=11 // pred_check
          %p834 = pneg %p350
        $region46: #{tpu_custom_call.1} parent=11 // pred_check_branch
          %836 = sbr.rel (%p834) target = $region48
        $region47: #{tpu_custom_call.1} parent=11 // pred_region
          %s838 = ssub.s32 1024, 1024
          %839 = vsyncadd [#allocation12], %s838
          %s840 = sshll.u32 [#allocation11], 4
          %s841 = int_to_ptr.vmem [resolvable:$true] %s840
          %846 = dma.hbm_to_vmem [thread:$0]  %s23, 1024, %s841, [#allocation12], 64, 64, 4
        $region48: #{tpu_custom_call.1} parent=11 // pred_fallthru
          _
        // Predicated region
        $region49: #{tpu_custom_call.1} parent=11 // pred_check
          %p847 = pneg %p371
        $region50: #{tpu_custom_call.1} parent=11 // pred_check_branch
          %849 = sbr.rel (%p847) target = $region52
        $region51: #{tpu_custom_call.1} parent=11 // pred_region
          _
        $region52: #{tpu_custom_call.1} parent=11 // pred_fallthru
          _
        // Predicated region
        $region53: #{tpu_custom_call.1} parent=11 // pred_check
          %p850 = pneg %p392
        $region54: #{tpu_custom_call.1} parent=11 // pred_check_branch
          %852 = sbr.rel (%p850) target = $region56
        $region55: #{tpu_custom_call.1} parent=11 // pred_region
          %s854 = ssub.s32 2048, 2048
          %855 = vsyncadd [#allocation12], %s854
          %s856 = sshll.u32 [#allocation13], 4
          %s857 = int_to_ptr.vmem [resolvable:$true] %s856
          %862 = dma.hbm_to_vmem [thread:$0]  %s27, 2048, %s857, [#allocation12], 128, 128, 8
        $region56: #{tpu_custom_call.1} parent=11 // pred_fallthru
          _
        // Predicated region
        $region57: #{tpu_custom_call.1} parent=11 // pred_check
          %p863 = pneg %p413
        $region58: #{tpu_custom_call.1} parent=11 // pred_check_branch
          %865 = sbr.rel (%p863) target = $region60
        $region59: #{tpu_custom_call.1} parent=11 // pred_region
          _
        $region60: #{tpu_custom_call.1} parent=11 // pred_fallthru
          _
        // Predicated region
        $region61: #{tpu_custom_call.1} parent=11 // pred_check
          %p866 = pneg %p434
        $region62: #{tpu_custom_call.1} parent=11 // pred_check_branch
          %868 = sbr.rel (%p866) target = $region64
        $region63: #{tpu_custom_call.1} parent=11 // pred_region
          %s870 = ssub.s32 2048, 2048
          %871 = vsyncadd [#allocation15], %s870
          %s872 = sshll.u32 [#allocation14], 4
          %s873 = int_to_ptr.vmem [resolvable:$true] %s872
          %878 = dma.hbm_to_vmem [thread:$0]  %s31, 2048, %s873, [#allocation15], 64, 64, 4
        $region64: #{tpu_custom_call.1} parent=11 // pred_fallthru
          _
        // Predicated region
        $region65: #{tpu_custom_call.1} parent=11 // pred_check
          %p879 = pneg %p455
        $region66: #{tpu_custom_call.1} parent=11 // pred_check_branch
          %881 = sbr.rel (%p879) target = $region68
        $region67: #{tpu_custom_call.1} parent=11 // pred_region
          _
        $region68: #{tpu_custom_call.1} parent=11 // pred_fallthru
          _
        // Predicated region
        $region69: #{tpu_custom_call.1} parent=11 // pred_check
          %p882 = pneg %p476
        $region70: #{tpu_custom_call.1} parent=11 // pred_check_branch
          %884 = sbr.rel (%p882) target = $region72
        $region71: #{tpu_custom_call.1} parent=11 // pred_region
          _
        $region72: #{tpu_custom_call.1} parent=11 // pred_fallthru
          _
        // Predicated region
        $region73: #{tpu_custom_call.1} parent=11 // pred_check
          %p885 = pneg %p497
        $region74: #{tpu_custom_call.1} parent=11 // pred_check_branch
          %887 = sbr.rel (%p885) target = $region76
        $region75: #{tpu_custom_call.1} parent=11 // pred_region
          _
        $region76: #{tpu_custom_call.1} parent=11 // pred_fallthru
          _
        // Predicated region
        $region77: #{tpu_custom_call.1} parent=11 // pred_check
          %p888 = pneg %p518
        $region78: #{tpu_custom_call.1} parent=11 // pred_check_branch
          %890 = sbr.rel (%p888) target = $region80
        $region79: #{tpu_custom_call.1} parent=11 // pred_region
          _
        $region80: #{tpu_custom_call.1} parent=11 // pred_fallthru
          _
        // Predicated region
        $region81: #{tpu_custom_call.1} parent=11 // pred_check
          %p891 = pneg %p539
        $region82: #{tpu_custom_call.1} parent=11 // pred_check_branch
          %893 = sbr.rel (%p891) target = $region84
        $region83: #{tpu_custom_call.1} parent=11 // pred_region
          %s895 = ssub.s32 16, 16
          %896 = vsyncadd [#allocation15], %s895
          %s898 = sshll.u32 [#allocation16], 4
          %s899 = int_to_ptr.vmem [resolvable:$true] %s898
          %901 = dma.hbm_to_vmem [thread:$0]  %s41, 16, %s899, [#allocation15]
        $region84: #{tpu_custom_call.1} parent=11 // pred_fallthru
          _
        // Predicated region
        $region85: #{tpu_custom_call.1} parent=11 // pred_check
          %p902 = pneg %p560
        $region86: #{tpu_custom_call.1} parent=11 // pred_check_branch
          %904 = sbr.rel (%p902) target = $region88
        $region87: #{tpu_custom_call.1} parent=11 // pred_region
          _
        $region88: #{tpu_custom_call.1} parent=11 // pred_fallthru
          _
        // Predicated region
        $region89: #{tpu_custom_call.1} parent=11 // pred_check
          %p905 = pneg %p581
        $region90: #{tpu_custom_call.1} parent=11 // pred_check_branch
          %907 = sbr.rel (%p905) target = $region92
        $region91: #{tpu_custom_call.1} parent=11 // pred_region
          _
        $region92: #{tpu_custom_call.1} parent=11 // pred_fallthru
          _
        // Predicated region
        $region93: #{tpu_custom_call.1} parent=11 // pred_check
          %p908 = pneg %p602
        $region94: #{tpu_custom_call.1} parent=11 // pred_check_branch
          %910 = sbr.rel (%p908) target = $region96
        $region95: #{tpu_custom_call.1} parent=11 // pred_region
          %s912 = ssub.s32 1024, 1024
          %913 = vsyncadd [#allocation18], %s912
          %s914 = sshll.u32 [#allocation17], 4
          %s915 = int_to_ptr.vmem [resolvable:$true] %s914
          %920 = dma.hbm_to_vmem [thread:$0]  %s47, 1024, %s915, [#allocation18], 64, 64, 4
        $region96: #{tpu_custom_call.1} parent=11 // pred_fallthru
          _
        // Predicated region
        $region97: #{tpu_custom_call.1} parent=11 // pred_check
          %p921 = pneg %p623
        $region98: #{tpu_custom_call.1} parent=11 // pred_check_branch
          %923 = sbr.rel (%p921) target = $region100
        $region99: #{tpu_custom_call.1} parent=11 // pred_region
          _
        $region100: #{tpu_custom_call.1} parent=11 // pred_fallthru
          _
        // Predicated region
        $region101: #{tpu_custom_call.1} parent=11 // pred_check
          %p924 = pneg %p644
        $region102: #{tpu_custom_call.1} parent=11 // pred_check_branch
          %926 = sbr.rel (%p924) target = $region104
        $region103: #{tpu_custom_call.1} parent=11 // pred_region
          %s928 = ssub.s32 1024, 1024
          %929 = vsyncadd [#allocation18], %s928
          %s930 = sshll.u32 [#allocation19], 4
          %s931 = int_to_ptr.vmem [resolvable:$true] %s930
          %936 = dma.hbm_to_vmem [thread:$0]  %s51, 1024, %s931, [#allocation18], 64, 64, 4
        $region104: #{tpu_custom_call.1} parent=11 // pred_fallthru
          _
        // Predicated region
        $region105: #{tpu_custom_call.1} parent=11 // pred_check
          %p937 = pneg %p665
        $region106: #{tpu_custom_call.1} parent=11 // pred_check_branch
          %939 = sbr.rel (%p937) target = $region108
        $region107: #{tpu_custom_call.1} parent=11 // pred_region
          _
        $region108: #{tpu_custom_call.1} parent=11 // pred_fallthru
          _
        // Predicated region
        $region109: #{tpu_custom_call.1} parent=11 // pred_check
          %p940 = pneg %p686
        $region110: #{tpu_custom_call.1} parent=11 // pred_check_branch
          %942 = sbr.rel (%p940) target = $region112
        $region111: #{tpu_custom_call.1} parent=11 // pred_region
          %s944 = ssub.s32 2048, 2048
          %945 = vsyncadd [#allocation21], %s944
          %s946 = sshll.u32 [#allocation20], 4
          %s947 = int_to_ptr.vmem [resolvable:$true] %s946
          %952 = dma.hbm_to_vmem [thread:$0]  %s55, 2048, %s947, [#allocation21], 128, 128, 8
        $region112: #{tpu_custom_call.1} parent=11 // pred_fallthru
          _
        // Predicated region
        $region113: #{tpu_custom_call.1} parent=11 // pred_check
          %p953 = pneg %p707
        $region114: #{tpu_custom_call.1} parent=11 // pred_check_branch
          %955 = sbr.rel (%p953) target = $region116
        $region115: #{tpu_custom_call.1} parent=11 // pred_region
          _
        $region116: #{tpu_custom_call.1} parent=11 // pred_fallthru
          _
        // Predicated region
        $region117: #{tpu_custom_call.1} parent=11 // pred_check
          %p956 = pneg %p728
        $region118: #{tpu_custom_call.1} parent=11 // pred_check_branch
          %958 = sbr.rel (%p956) target = $region120
        $region119: #{tpu_custom_call.1} parent=11 // pred_region
          %s960 = ssub.s32 2048, 2048
          %961 = vsyncadd [#allocation21], %s960
          %s962 = sshll.u32 [#allocation22], 4
          %s963 = int_to_ptr.vmem [resolvable:$true] %s962
          %968 = dma.hbm_to_vmem [thread:$0]  %s59, 2048, %s963, [#allocation21], 64, 64, 4
        $region120: #{tpu_custom_call.1} parent=11 // pred_fallthru
          _
        // Predicated region
        $region121: #{tpu_custom_call.1} parent=11 // pred_check
          %p969 = pneg %p749
        $region122: #{tpu_custom_call.1} parent=11 // pred_check_branch
          %971 = sbr.rel (%p969) target = $region124
        $region123: #{tpu_custom_call.1} parent=11 // pred_region
          _
        $region124: #{tpu_custom_call.1} parent=11 // pred_fallthru
          _
      $region12: #{tpu_custom_call.1} parent=5 // pred_fallthru
        _
      %p972 = scmp.lt.s32.totalorder %s83, 2
      // Predicated region
      $region125: #{tpu_custom_call.1} parent=5 // pred_check
        %p973 = pneg %p972
      $region126: #{tpu_custom_call.1} parent=5 // pred_check_branch
        %975 = sbr.rel (%p973) target = $region128
      $region127: #{tpu_custom_call.1} parent=5 // pred_region
        // Predicated region
        $region129: #{tpu_custom_call.1} parent=127 // pred_check
          %p976 = pneg %p103
        $region130: #{tpu_custom_call.1} parent=127 // pred_check_branch
          %978 = sbr.rel (%p976) target = $region132
        $region131: #{tpu_custom_call.1} parent=127 // pred_region
          %s979 = sand.u32 %s93, 1
          %s980 = scalar_lea.sflag [#allocation3], %s979
          %s981 = sand.u32 %s93, 1
          %s982 = smul.addr %s981, 8
          %s983 = scalar_lea.vmem [#allocation2], %s982
          %s985 = ssub.s32 128, 128
          %986 = vsyncadd %s980, %s985
          %s987 = smul.addr %s83, 128
          %s988 = scalar_lea.hbm %s1, %s987
          %s990 = sshll.u32 %s983, 4
          %s991 = int_to_ptr.vmem [resolvable:$true] %s990
          %993 = dma.hbm_to_vmem [thread:$0]  %s988, 128, %s991, %s980
        $region132: #{tpu_custom_call.1} parent=127 // pred_fallthru
          _
        // Predicated region
        $region133: #{tpu_custom_call.1} parent=127 // pred_check
          %p994 = pneg %p129
        $region134: #{tpu_custom_call.1} parent=127 // pred_check_branch
          %996 = sbr.rel (%p994) target = $region136
        $region135: #{tpu_custom_call.1} parent=127 // pred_region
          %s997 = sand.u32 %s83, 1
          %s998 = scalar_lea.sflag [#allocation6], %s997
          %s999 = sand.u32 %s119, 1
          %s1000 = smul.addr %s999, 8
          %s1001 = scalar_lea.vmem [#allocation5], %s1000
          %s1003 = ssub.s32 128, 128
          %1004 = vsyncadd %s998, %s1003
          %s1005 = smul.addr %s83, 128
          %s1006 = scalar_lea.hbm %s3, %s1005
          %s1008 = sshll.u32 %s1001, 4
          %s1009 = int_to_ptr.vmem [resolvable:$true] %s1008
          %1011 = dma.hbm_to_vmem [thread:$0]  %s1006, 128, %s1009, %s998
        $region136: #{tpu_custom_call.1} parent=127 // pred_fallthru
          _
        // Predicated region
        $region137: #{tpu_custom_call.1} parent=127 // pred_check
          %p1012 = pneg %p155
        $region138: #{tpu_custom_call.1} parent=127 // pred_check_branch
          %1014 = sbr.rel (%p1012) target = $region140
        $region139: #{tpu_custom_call.1} parent=127 // pred_region
          %s1015 = sand.u32 %s83, 1
          %s1016 = scalar_lea.sflag [#allocation6], %s1015
          %s1017 = sand.u32 %s145, 1
          %s1018 = smul.addr %s1017, 8
          %s1019 = scalar_lea.vmem [#allocation7], %s1018
          %s1021 = ssub.s32 128, 128
          %1022 = vsyncadd %s1016, %s1021
          %s1023 = smul.addr %s83, 128
          %s1024 = scalar_lea.hbm %s5, %s1023
          %s1026 = sshll.u32 %s1019, 4
          %s1027 = int_to_ptr.vmem [resolvable:$true] %s1026
          %1029 = dma.hbm_to_vmem [thread:$0]  %s1024, 128, %s1027, %s1016
        $region140: #{tpu_custom_call.1} parent=127 // pred_fallthru
          _
      $region128: #{tpu_custom_call.1} parent=5 // pred_fallthru
        _
      %p1030 = scmp.le.s32.totalorder 1, %s83
      %p1031 = scmp.lt.s32.totalorder %s83, 3
      %p1032 = pnand %p1030, %p1031
      %p1033 = pneg %p1032
      // Predicated region
      $region141: #{tpu_custom_call.1} parent=5 // pred_check
        _
      $region142: #{tpu_custom_call.1} parent=5 // pred_check_branch
        %1035 = sbr.rel (%p1032) target = $region144
      $region143: #{tpu_custom_call.1} parent=5 // pred_region
        %s1036 = ssub.s32 %s83, 1
        %s1037 = sand.u32 %s96, 1
        %s1038 = scalar_lea.sflag [#allocation3], %s1037
        %s1039 = sand.u32 %s96, 1
        %s1040 = smul.addr %s1039, 8
        %s1041 = scalar_lea.vmem [#allocation2], %s1040
        // Predicated region
        $region145: #{tpu_custom_call.1} parent=143 // pred_check
          %p1042 = pneg %p109
        $region146: #{tpu_custom_call.1} parent=143 // pred_check_branch
          %1044 = sbr.rel (%p1042) target = $region148
        $region147: #{tpu_custom_call.1} parent=143 // pred_region
          %1045 = dma.done %s1038, 128
        $region148: #{tpu_custom_call.1} parent=143 // pred_fallthru
          _
        %s1046 = sand.u32 %s88, 1
        %s1047 = scalar_lea.sflag [#allocation6], %s1046
        %s1048 = sand.u32 %s122, 1
        %s1049 = smul.addr %s1048, 8
        %s1050 = scalar_lea.vmem [#allocation5], %s1049
        // Predicated region
        $region149: #{tpu_custom_call.1} parent=143 // pred_check
          %p1051 = pneg %p135
        $region150: #{tpu_custom_call.1} parent=143 // pred_check_branch
          %1053 = sbr.rel (%p1051) target = $region152
        $region151: #{tpu_custom_call.1} parent=143 // pred_region
          %1054 = dma.done %s1047, 128
        $region152: #{tpu_custom_call.1} parent=143 // pred_fallthru
          _
        %s1055 = sand.u32 %s88, 1
        %s1056 = scalar_lea.sflag [#allocation6], %s1055
        %s1057 = sand.u32 %s148, 1
        %s1058 = smul.addr %s1057, 8
        %s1059 = scalar_lea.vmem [#allocation7], %s1058
        // Predicated region
        $region153: #{tpu_custom_call.1} parent=143 // pred_check
          %p1060 = pneg %p161
        $region154: #{tpu_custom_call.1} parent=143 // pred_check_branch
          %1062 = sbr.rel (%p1060) target = $region156
        $region155: #{tpu_custom_call.1} parent=143 // pred_region
          %1063 = dma.done %s1056, 128
        $region156: #{tpu_custom_call.1} parent=143 // pred_fallthru
          _
        // Predicated region
        $region157: #{tpu_custom_call.1} parent=143 // pred_check
          %p1064 = pneg %p266
        $region158: #{tpu_custom_call.1} parent=143 // pred_check_branch
          %1066 = sbr.rel (%p1064) target = $region160
        $region159: #{tpu_custom_call.1} parent=143 // pred_region
          %1067 = dma.done [#allocation9], 1024
        $region160: #{tpu_custom_call.1} parent=143 // pred_fallthru
          _
        // Predicated region
        $region161: #{tpu_custom_call.1} parent=143 // pred_check
          %p1068 = pneg %p308
        $region162: #{tpu_custom_call.1} parent=143 // pred_check_branch
          %1070 = sbr.rel (%p1068) target = $region164
        $region163: #{tpu_custom_call.1} parent=143 // pred_region
          %1071 = dma.done [#allocation9], 1024
        $region164: #{tpu_custom_call.1} parent=143 // pred_fallthru
          _
        // Predicated region
        $region165: #{tpu_custom_call.1} parent=143 // pred_check
          %p1072 = pneg %p350
        $region166: #{tpu_custom_call.1} parent=143 // pred_check_branch
          %1074 = sbr.rel (%p1072) target = $region168
        $region167: #{tpu_custom_call.1} parent=143 // pred_region
          %1075 = dma.done [#allocation12], 1024
        $region168: #{tpu_custom_call.1} parent=143 // pred_fallthru
          _
        // Predicated region
        $region169: #{tpu_custom_call.1} parent=143 // pred_check
          %p1076 = pneg %p392
        $region170: #{tpu_custom_call.1} parent=143 // pred_check_branch
          %1078 = sbr.rel (%p1076) target = $region172
        $region171: #{tpu_custom_call.1} parent=143 // pred_region
          %1079 = dma.done [#allocation12], 2048
        $region172: #{tpu_custom_call.1} parent=143 // pred_fallthru
          _
        // Predicated region
        $region173: #{tpu_custom_call.1} parent=143 // pred_check
          %p1080 = pneg %p434
        $region174: #{tpu_custom_call.1} parent=143 // pred_check_branch
          %1082 = sbr.rel (%p1080) target = $region176
        $region175: #{tpu_custom_call.1} parent=143 // pred_region
          %1083 = dma.done [#allocation15], 2048
        $region176: #{tpu_custom_call.1} parent=143 // pred_fallthru
          _
        // Predicated region
        $region177: #{tpu_custom_call.1} parent=143 // pred_check
          %p1084 = pneg %p539
        $region178: #{tpu_custom_call.1} parent=143 // pred_check_branch
          %1086 = sbr.rel (%p1084) target = $region180
        $region179: #{tpu_custom_call.1} parent=143 // pred_region
          %1087 = dma.done [#allocation15], 16
        $region180: #{tpu_custom_call.1} parent=143 // pred_fallthru
          _
        // Predicated region
        $region181: #{tpu_custom_call.1} parent=143 // pred_check
          %p1088 = pneg %p602
        $region182: #{tpu_custom_call.1} parent=143 // pred_check_branch
          %1090 = sbr.rel (%p1088) target = $region184
        $region183: #{tpu_custom_call.1} parent=143 // pred_region
          %1091 = dma.done [#allocation18], 1024
        $region184: #{tpu_custom_call.1} parent=143 // pred_fallthru
          _
        // Predicated region
        $region185: #{tpu_custom_call.1} parent=143 // pred_check
          %p1092 = pneg %p644
        $region186: #{tpu_custom_call.1} parent=143 // pred_check_branch
          %1094 = sbr.rel (%p1092) target = $region188
        $region187: #{tpu_custom_call.1} parent=143 // pred_region
          %1095 = dma.done [#allocation18], 1024
        $region188: #{tpu_custom_call.1} parent=143 // pred_fallthru
          _
        // Predicated region
        $region189: #{tpu_custom_call.1} parent=143 // pred_check
          %p1096 = pneg %p686
        $region190: #{tpu_custom_call.1} parent=143 // pred_check_branch
          %1098 = sbr.rel (%p1096) target = $region192
        $region191: #{tpu_custom_call.1} parent=143 // pred_region
          %1099 = dma.done [#allocation21], 2048
        $region192: #{tpu_custom_call.1} parent=143 // pred_fallthru
          _
        // Predicated region
        $region193: #{tpu_custom_call.1} parent=143 // pred_check
          %p1100 = pneg %p728
        $region194: #{tpu_custom_call.1} parent=143 // pred_check_branch
          %1102 = sbr.rel (%p1100) target = $region196
        $region195: #{tpu_custom_call.1} parent=143 // pred_region
          %1103 = dma.done [#allocation21], 2048
        $region196: #{tpu_custom_call.1} parent=143 // pred_fallthru
          _
        %s1104 = sand.u32 %s96, 1
        %s1105 = scalar_lea.sflag [#allocation3], %s1104
        %s1106 = sand.u32 %s96, 1
        %s1107 = smul.addr %s1106, 8
        %s1108 = scalar_lea.vmem [#allocation2], %s1107
        %p1109 = pneg %p109
        %p1110 = pneg %p106
        %s1111 = sand.u32 %s88, 1
        %s1112 = scalar_lea.sflag [#allocation6], %s1111
        %s1113 = sand.u32 %s122, 1
        %s1114 = smul.addr %s1113, 8
        %s1115 = scalar_lea.vmem [#allocation5], %s1114
        %p1116 = pneg %p135
        %p1117 = pneg %p132
        %s1118 = sand.u32 %s88, 1
        %s1119 = scalar_lea.sflag [#allocation6], %s1118
        %s1120 = sand.u32 %s148, 1
        %s1121 = smul.addr %s1120, 8
        %s1122 = scalar_lea.vmem [#allocation7], %s1121
        %p1123 = pneg %p161
        %p1124 = pneg %p158
        %p1125 = pneg %p182
        %p1126 = pneg %p179
        %p1127 = pneg %p203
        %p1128 = pneg %p200
        %p1129 = pneg %p224
        %p1130 = pneg %p221
        %p1131 = pneg %p245
        %p1132 = pneg %p242
        %p1133 = pneg %p266
        %p1134 = pneg %p263
        %p1135 = pneg %p287
        %p1136 = pneg %p284
        %p1137 = pneg %p308
        %p1138 = pneg %p305
        %p1139 = pneg %p329
        %p1140 = pneg %p326
        %p1141 = pneg %p350
        %p1142 = pneg %p347
        %p1143 = pneg %p371
        %p1144 = pneg %p368
        %p1145 = pneg %p392
        %p1146 = pneg %p389
        %p1147 = pneg %p413
        %p1148 = pneg %p410
        %p1149 = pneg %p434
        %p1150 = pneg %p431
        %p1151 = pneg %p455
        %p1152 = pneg %p452
        %p1153 = pneg %p476
        %p1154 = pneg %p473
        %p1155 = pneg %p497
        %p1156 = pneg %p494
        %p1157 = pneg %p518
        %p1158 = pneg %p515
        %p1159 = pneg %p539
        %p1160 = pneg %p536
        %p1161 = pneg %p560
        %p1162 = pneg %p557
        %p1163 = pneg %p581
        %p1164 = pneg %p578
        %p1165 = pneg %p602
        %p1166 = pneg %p599
        %p1167 = pneg %p623
        %p1168 = pneg %p620
        %p1169 = pneg %p644
        %p1170 = pneg %p641
        %p1171 = pneg %p665
        %p1172 = pneg %p662
        %p1173 = pneg %p686
        %p1174 = pneg %p683
        %p1175 = pneg %p707
        %p1176 = pneg %p704
        %p1177 = pneg %p728
        %p1178 = pneg %p725
        %p1179 = pneg %p749
        %p1180 = pneg %p746
        %p1181 = pneg %p775
        %p1182 = pneg %p772
        %s1183 = sand.u32 %s762, 1
        %s1184 = scalar_lea.sflag [#allocation4], %s1183
        %s1185 = sand.u32 %s762, 1
        %s1186 = smul.addr %s1185, 8
        %s1187 = scalar_lea.vmem [#allocation23], %s1186
        %v1189 = vld [vmem:[%s1041] sm:$0xff]
        %v1190 = vld [vmem:[%s1050] sm:$0xff]
        %v1191 = vld [vmem:[%s1059] sm:$0xff]
        %1192 = vadd.xlane.f32.xlu0 %v1189
        %v1193 = vpop.xlane.xlu0 %1192
        %v1194 = vrcp.pop 128.0
        %v1195 = vmul.f32 %v1193, %v1194
        %v1196 = vsub.f32 %v1189, %v1195
        %v1197 = vmul.f32 %v1196, %v1196
        %1198 = vadd.xlane.f32.xlu0 %v1197
        %v1199 = vpop.xlane.xlu0 %1198
        %v1200 = vmul.f32 %v1199, %v1194
        %v1201 = vadd.f32 %v1200, 1e-05
        %v1202 = vrsqrt.pop %v1201
        %v1203 = vmul.f32 %v1196, %v1202
        %1204 = vadd.xlane.f32.xlu0 %v1190
        %v1205 = vpop.xlane.xlu0 %1204
        %v1206 = vmul.f32 %v1205, %v1194
        %v1207 = vsub.f32 %v1190, %v1206
        %v1208 = vmul.f32 %v1207, %v1207
        %1209 = vadd.xlane.f32.xlu0 %v1208
        %v1210 = vpop.xlane.xlu0 %1209
        %v1211 = vmul.f32 %v1210, %v1194
        %v1212 = vadd.f32 %v1211, 1e-05
        %v1213 = vrsqrt.pop %v1212
        %v1214 = vmul.f32 %v1207, %v1213
        %1215 = vadd.xlane.f32.xlu0 %v1191
        %v1216 = vpop.xlane.xlu0 %1215
        %v1217 = vmul.f32 %v1216, %v1194
        %v1218 = vsub.f32 %v1191, %v1217
        %v1219 = vmul.f32 %v1218, %v1218
        %1220 = vadd.xlane.f32.xlu0 %v1219
        %v1221 = vpop.xlane.xlu0 %1220
        %v1222 = vmul.f32 %v1221, %v1194
        %v1223 = vadd.f32 %v1222, 1e-05
        %v1224 = vrsqrt.pop %v1223
        %v1225 = vmul.f32 %v1218, %v1224
        %v1226 = vld [vmem:[%s7] sm:$0x1]
        %v1227 = vld [vmem:[%s9] sm:$0x1]
        %v1229 = vlaneseq
        %v1230 = vshrl.u32 %v1229, 7
        %v1231 = vsub.s32 0, %v1230
        %v1232 = vrot.slane %v1226, %v1231
        %v1234 = vmul.f32 %v1203, %v1232
        %v1236 = vlaneseq
        %v1237 = vshrl.u32 %v1236, 7
        %v1238 = vsub.s32 0, %v1237
        %v1239 = vrot.slane %v1227, %v1238
        %v1241 = vadd.f32 %v1234, %v1239
        %v1242 = vpack.c.bf16 %v1241, %v1241
        %v1243 = vmul.f32 %v1214, %v1232
        %v1244 = vadd.f32 %v1243, %v1239
        %v1245 = vpack.c.bf16 %v1244, %v1244
        %v1246 = vld [vmem:[#allocation8] sm:$0xf]
        %v1247 = vld [vmem:[#allocation8 + $0x4] sm:$0xf]
        %v1248 = vld [vmem:[#allocation8 + $0x8] sm:$0xf]
        %v1249 = vld [vmem:[#allocation8 + $0xc] sm:$0xf]
        %v1250 = vld [vmem:[#allocation8 + $0x10] sm:$0xf]
        %v1251 = vld [vmem:[#allocation8 + $0x14] sm:$0xf]
        %v1252 = vld [vmem:[#allocation8 + $0x18] sm:$0xf]
        %v1253 = vld [vmem:[#allocation8 + $0x1c] sm:$0xf]
        %v1254 = vld [vmem:[#allocation8 + $0x20] sm:$0xf]
        %v1255 = vld [vmem:[#allocation8 + $0x24] sm:$0xf]
        %v1256 = vld [vmem:[#allocation8 + $0x28] sm:$0xf]
        %v1257 = vld [vmem:[#allocation8 + $0x2c] sm:$0xf]
        %v1258 = vld [vmem:[#allocation8 + $0x30] sm:$0xf]
        %v1259 = vld [vmem:[#allocation8 + $0x34] sm:$0xf]
        %v1260 = vld [vmem:[#allocation8 + $0x38] sm:$0xf]
        %v1261 = vld [vmem:[#allocation8 + $0x3c] sm:$0xf]
        %v1262 = vld [vmem:[%s17] sm:$0x1]
        %v1264 = vlaneseq
        %v1265 = vshrl.u32 %v1264, 7
        %v1266 = vsub.s32 0, %v1265
        %v1267 = vrot.slane %v1262, %v1266
        %v1285 = vunpack.c.l.b16 %v1246
        %v1286 = vunpack.c.l.b16 %v1247
        %v1287 = vunpack.c.l.b16 %v1248
        %v1288 = vunpack.c.l.b16 %v1249
        %v1289 = vunpack.c.l.b16 %v1250
        %v1290 = vunpack.c.l.b16 %v1251
        %v1291 = vunpack.c.l.b16 %v1252
        %v1292 = vunpack.c.l.b16 %v1253
        %v1293 = vunpack.c.l.b16 %v1254
        %v1294 = vunpack.c.l.b16 %v1255
        %v1295 = vunpack.c.l.b16 %v1256
        %v1296 = vunpack.c.l.b16 %v1257
        %v1297 = vunpack.c.l.b16 %v1258
        %v1298 = vunpack.c.l.b16 %v1259
        %v1299 = vunpack.c.l.b16 %v1260
        %v1300 = vunpack.c.l.b16 %v1261
        %v1301 = vpack.c.b16 %v1286, %v1285
        %v1302 = vpack.c.b16 %v1288, %v1287
        %v1303 = vpack.c.b16 %v1290, %v1289
        %v1304 = vpack.c.b16 %v1292, %v1291
        %v1305 = vpack.c.b16 %v1294, %v1293
        %v1306 = vpack.c.b16 %v1296, %v1295
        %v1307 = vpack.c.b16 %v1298, %v1297
        %v1308 = vpack.c.b16 %v1300, %v1299
        %1317 = vmatprep.subr.bf16.mxu0 0
        %1318 = vmatpush1.bf16.msra.mxu0 %v1301
        %1319 = vmatprep.subr.bf16.mxu0 0
        %1320 = vmatpush1.bf16.msra.mxu0 %v1302
        %1321 = vmatprep.subr.bf16.mxu0 0
        %1322 = vmatpush1.bf16.msra.mxu0 %v1303
        %1323 = vmatprep.subr.bf16.mxu0 0
        %1324 = vmatpush1.bf16.msra.mxu0 %v1304
        %1325 = vmatprep.subr.bf16.mxu0 0
        %1326 = vmatpush1.bf16.msra.mxu0 %v1305
        %1327 = vmatprep.subr.bf16.mxu0 0
        %1328 = vmatpush1.bf16.msra.mxu0 %v1306
        %1329 = vmatprep.subr.bf16.mxu0 0
        %1330 = vmatpush1.bf16.msra.mxu0 %v1307
        %1331 = vmatprep.subr.bf16.mxu0 0
        %1332 = vmatpush1.bf16.msra.mxu0 %v1308
        %1333 = vmatprep.subr.bf16.mxu0 0
        %1334 = vmatpush1.bf16.msra.mxu0 0
        %1335 = vmatprep.subr.bf16.mxu0 0
        %1336 = vmatpush1.bf16.msra.mxu0 0
        %1337 = vmatprep.subr.bf16.mxu0 0
        %1338 = vmatpush1.bf16.msra.mxu0 0
        %1339 = vmatprep.subr.bf16.mxu0 0
        %1340 = vmatpush1.bf16.msra.mxu0 0
        %1341 = vmatprep.subr.bf16.mxu0 0
        %1342 = vmatpush1.bf16.msra.mxu0 0
        %1343 = vmatprep.subr.bf16.mxu0 0
        %1344 = vmatpush1.bf16.msra.mxu0 0
        %1345 = vmatprep.subr.bf16.mxu0 0
        %1346 = vmatpush1.bf16.msra.mxu0 0
        %1347 = vmatprep.subr.bf16.mxu0 0
        %1348 = vmatpush1.bf16.msra.mxu0 0
        %1349 = vmatprep.mubr.bf16.mxu0 0
        %1350 = vmatmul.mubr.bf16.gmra.mrb[0].mxu0 %v1242
        %v1351 = vpop.f32.mrb[0].mxu0
        %v1352 = vadd.f32 %v1267, %v1351
        %v1353 = vpop.f32.mrb[0].mxu0
        %v1354 = vpop.f32.mrb[0].mxu0
        %v1355 = vpop.f32.mrb[0].mxu0
        %1356 = vdwg.mxu0
        %v1357 = vld [vmem:[#allocation10] sm:$0xf]
        %v1358 = vld [vmem:[#allocation10 + $0x4] sm:$0xf]
        %v1359 = vld [vmem:[#allocation10 + $0x8] sm:$0xf]
        %v1360 = vld [vmem:[#allocation10 + $0xc] sm:$0xf]
        %v1361 = vld [vmem:[#allocation10 + $0x10] sm:$0xf]
        %v1362 = vld [vmem:[#allocation10 + $0x14] sm:$0xf]
        %v1363 = vld [vmem:[#allocation10 + $0x18] sm:$0xf]
        %v1364 = vld [vmem:[#allocation10 + $0x1c] sm:$0xf]
        %v1365 = vld [vmem:[#allocation10 + $0x20] sm:$0xf]
        %v1366 = vld [vmem:[#allocation10 + $0x24] sm:$0xf]
        %v1367 = vld [vmem:[#allocation10 + $0x28] sm:$0xf]
        %v1368 = vld [vmem:[#allocation10 + $0x2c] sm:$0xf]
        %v1369 = vld [vmem:[#allocation10 + $0x30] sm:$0xf]
        %v1370 = vld [vmem:[#allocation10 + $0x34] sm:$0xf]
        %v1371 = vld [vmem:[#allocation10 + $0x38] sm:$0xf]
        %v1372 = vld [vmem:[#allocation10 + $0x3c] sm:$0xf]
        %v1373 = vld [vmem:[%s21] sm:$0x1]
        %v1375 = vlaneseq
        %v1376 = vshrl.u32 %v1375, 7
        %v1377 = vsub.s32 0, %v1376
        %v1378 = vrot.slane %v1373, %v1377
        %v1396 = vunpack.c.l.b16 %v1357
        %v1397 = vunpack.c.l.b16 %v1358
        %v1398 = vunpack.c.l.b16 %v1359
        %v1399 = vunpack.c.l.b16 %v1360
        %v1400 = vunpack.c.l.b16 %v1361
        %v1401 = vunpack.c.l.b16 %v1362
        %v1402 = vunpack.c.l.b16 %v1363
        %v1403 = vunpack.c.l.b16 %v1364
        %v1404 = vunpack.c.l.b16 %v1365
        %v1405 = vunpack.c.l.b16 %v1366
        %v1406 = vunpack.c.l.b16 %v1367
        %v1407 = vunpack.c.l.b16 %v1368
        %v1408 = vunpack.c.l.b16 %v1369
        %v1409 = vunpack.c.l.b16 %v1370
        %v1410 = vunpack.c.l.b16 %v1371
        %v1411 = vunpack.c.l.b16 %v1372
        %v1412 = vpack.c.b16 %v1397, %v1396
        %v1413 = vpack.c.b16 %v1399, %v1398
        %v1414 = vpack.c.b16 %v1401, %v1400
        %v1415 = vpack.c.b16 %v1403, %v1402
        %v1416 = vpack.c.b16 %v1405, %v1404
        %v1417 = vpack.c.b16 %v1407, %v1406
        %v1418 = vpack.c.b16 %v1409, %v1408
        %v1419 = vpack.c.b16 %v1411, %v1410
        %1428 = vmatprep.subr.bf16.mxu0 0
        %1429 = vmatpush1.bf16.msra.mxu0 %v1412
        %1430 = vmatprep.subr.bf16.mxu0 0
        %1431 = vmatpush1.bf16.msra.mxu0 %v1413
        %1432 = vmatprep.subr.bf16.mxu0 0
        %1433 = vmatpush1.bf16.msra.mxu0 %v1414
        %1434 = vmatprep.subr.bf16.mxu0 0
        %1435 = vmatpush1.bf16.msra.mxu0 %v1415
        %1436 = vmatprep.subr.bf16.mxu0 0
        %1437 = vmatpush1.bf16.msra.mxu0 %v1416
        %1438 = vmatprep.subr.bf16.mxu0 0
        %1439 = vmatpush1.bf16.msra.mxu0 %v1417
        %1440 = vmatprep.subr.bf16.mxu0 0
        %1441 = vmatpush1.bf16.msra.mxu0 %v1418
        %1442 = vmatprep.subr.bf16.mxu0 0
        %1443 = vmatpush1.bf16.msra.mxu0 %v1419
        %1444 = vmatprep.subr.bf16.mxu0 0
        %1445 = vmatpush1.bf16.msra.mxu0 0
        %1446 = vmatprep.subr.bf16.mxu0 0
        %1447 = vmatpush1.bf16.msra.mxu0 0
        %1448 = vmatprep.subr.bf16.mxu0 0
        %1449 = vmatpush1.bf16.msra.mxu0 0
        %1450 = vmatprep.subr.bf16.mxu0 0
        %1451 = vmatpush1.bf16.msra.mxu0 0
        %1452 = vmatprep.subr.bf16.mxu0 0
        %1453 = vmatpush1.bf16.msra.mxu0 0
        %1454 = vmatprep.subr.bf16.mxu0 0
        %1455 = vmatpush1.bf16.msra.mxu0 0
        %1456 = vmatprep.subr.bf16.mxu0 0
        %1457 = vmatpush1.bf16.msra.mxu0 0
        %1458 = vmatprep.subr.bf16.mxu0 0
        %1459 = vmatpush1.bf16.msra.mxu0 0
        %1460 = vmatprep.mubr.bf16.mxu0 0
        %1461 = vmatmul.mubr.bf16.gmra.mrb[0].mxu0 %v1245
        %v1462 = vpop.f32.mrb[0].mxu0
        %v1463 = vadd.f32 %v1378, %v1462
        %v1464 = vpop.f32.mrb[0].mxu0
        %v1465 = vpop.f32.mrb[0].mxu0
        %v1466 = vpop.f32.mrb[0].mxu0
        %1467 = vdwg.mxu0
        %v1468 = vld [vmem:[#allocation11] sm:$0xf]
        %v1469 = vld [vmem:[#allocation11 + $0x4] sm:$0xf]
        %v1470 = vld [vmem:[#allocation11 + $0x8] sm:$0xf]
        %v1471 = vld [vmem:[#allocation11 + $0xc] sm:$0xf]
        %v1472 = vld [vmem:[#allocation11 + $0x10] sm:$0xf]
        %v1473 = vld [vmem:[#allocation11 + $0x14] sm:$0xf]
        %v1474 = vld [vmem:[#allocation11 + $0x18] sm:$0xf]
        %v1475 = vld [vmem:[#allocation11 + $0x1c] sm:$0xf]
        %v1476 = vld [vmem:[#allocation11 + $0x20] sm:$0xf]
        %v1477 = vld [vmem:[#allocation11 + $0x24] sm:$0xf]
        %v1478 = vld [vmem:[#allocation11 + $0x28] sm:$0xf]
        %v1479 = vld [vmem:[#allocation11 + $0x2c] sm:$0xf]
        %v1480 = vld [vmem:[#allocation11 + $0x30] sm:$0xf]
        %v1481 = vld [vmem:[#allocation11 + $0x34] sm:$0xf]
        %v1482 = vld [vmem:[#allocation11 + $0x38] sm:$0xf]
        %v1483 = vld [vmem:[#allocation11 + $0x3c] sm:$0xf]
        %v1484 = vld [vmem:[%s25] sm:$0x1]
        %v1486 = vlaneseq
        %v1487 = vshrl.u32 %v1486, 7
        %v1488 = vsub.s32 0, %v1487
        %v1489 = vrot.slane %v1484, %v1488
        %v1507 = vunpack.c.l.b16 %v1468
        %v1508 = vunpack.c.l.b16 %v1469
        %v1509 = vunpack.c.l.b16 %v1470
        %v1510 = vunpack.c.l.b16 %v1471
        %v1511 = vunpack.c.l.b16 %v1472
        %v1512 = vunpack.c.l.b16 %v1473
        %v1513 = vunpack.c.l.b16 %v1474
        %v1514 = vunpack.c.l.b16 %v1475
        %v1515 = vunpack.c.l.b16 %v1476
        %v1516 = vunpack.c.l.b16 %v1477
        %v1517 = vunpack.c.l.b16 %v1478
        %v1518 = vunpack.c.l.b16 %v1479
        %v1519 = vunpack.c.l.b16 %v1480
        %v1520 = vunpack.c.l.b16 %v1481
        %v1521 = vunpack.c.l.b16 %v1482
        %v1522 = vunpack.c.l.b16 %v1483
        %v1523 = vpack.c.b16 %v1508, %v1507
        %v1524 = vpack.c.b16 %v1510, %v1509
        %v1525 = vpack.c.b16 %v1512, %v1511
        %v1526 = vpack.c.b16 %v1514, %v1513
        %v1527 = vpack.c.b16 %v1516, %v1515
        %v1528 = vpack.c.b16 %v1518, %v1517
        %v1529 = vpack.c.b16 %v1520, %v1519
        %v1530 = vpack.c.b16 %v1522, %v1521
        %1539 = vmatprep.subr.bf16.mxu0 0
        %1540 = vmatpush1.bf16.msra.mxu0 %v1523
        %1541 = vmatprep.subr.bf16.mxu0 0
        %1542 = vmatpush1.bf16.msra.mxu0 %v1524
        %1543 = vmatprep.subr.bf16.mxu0 0
        %1544 = vmatpush1.bf16.msra.mxu0 %v1525
        %1545 = vmatprep.subr.bf16.mxu0 0
        %1546 = vmatpush1.bf16.msra.mxu0 %v1526
        %1547 = vmatprep.subr.bf16.mxu0 0
        %1548 = vmatpush1.bf16.msra.mxu0 %v1527
        %1549 = vmatprep.subr.bf16.mxu0 0
        %1550 = vmatpush1.bf16.msra.mxu0 %v1528
        %1551 = vmatprep.subr.bf16.mxu0 0
        %1552 = vmatpush1.bf16.msra.mxu0 %v1529
        %1553 = vmatprep.subr.bf16.mxu0 0
        %1554 = vmatpush1.bf16.msra.mxu0 %v1530
        %1555 = vmatprep.subr.bf16.mxu0 0
        %1556 = vmatpush1.bf16.msra.mxu0 0
        %1557 = vmatprep.subr.bf16.mxu0 0
        %1558 = vmatpush1.bf16.msra.mxu0 0
        %1559 = vmatprep.subr.bf16.mxu0 0
        %1560 = vmatpush1.bf16.msra.mxu0 0
        %1561 = vmatprep.subr.bf16.mxu0 0
        %1562 = vmatpush1.bf16.msra.mxu0 0
        %1563 = vmatprep.subr.bf16.mxu0 0
        %1564 = vmatpush1.bf16.msra.mxu0 0
        %1565 = vmatprep.subr.bf16.mxu0 0
        %1566 = vmatpush1.bf16.msra.mxu0 0
        %1567 = vmatprep.subr.bf16.mxu0 0
        %1568 = vmatpush1.bf16.msra.mxu0 0
        %1569 = vmatprep.subr.bf16.mxu0 0
        %1570 = vmatpush1.bf16.msra.mxu0 0
        %1571 = vmatprep.mubr.bf16.mxu0 0
        %1572 = vmatmul.mubr.bf16.gmra.mrb[0].mxu0 %v1245
        %v1573 = vpop.f32.mrb[0].mxu0
        %v1574 = vadd.f32 %v1489, %v1573
        %v1575 = vpop.f32.mrb[0].mxu0
        %v1576 = vpop.f32.mrb[0].mxu0
        %v1577 = vpop.f32.mrb[0].mxu0
        %1578 = vdwg.mxu0
        %v1579 = vpack.c.bf16 %v1352, %v1352
        %v1580 = vpack.c.bf16 %v1463, %v1463
        %v1581 = vpack.c.bf16 %v1574, %v1574
        %vm1582 = vcmask 261120
        %v1584 = vsel %vm1582, %v1579, 0
        %v1587 = vsel %vm1582, %v1580, 0
        %1589 = vmatprep.subr.bf16.mxu0 0
        %1590 = vmatpush1.bf16.xpose.msra.mxu0 %v1587
        %1591 = vmatprep.subr.bf16.mxu0 0
        %1592 = vmatpush1.bf16.xpose.msra.mxu0 0
        %1593 = vmatprep.subr.bf16.mxu0 0
        %1594 = vmatpush1.bf16.xpose.msra.mxu0 0
        %1595 = vmatprep.subr.bf16.mxu0 0
        %1596 = vmatpush1.bf16.xpose.msra.mxu0 0
        %1597 = vmatprep.subr.bf16.mxu0 0
        %1598 = vmatpush1.bf16.xpose.msra.mxu0 0
        %1599 = vmatprep.subr.bf16.mxu0 0
        %1600 = vmatpush1.bf16.xpose.msra.mxu0 0
        %1601 = vmatprep.subr.bf16.mxu0 0
        %1602 = vmatpush1.bf16.xpose.msra.mxu0 0
        %1603 = vmatprep.subr.bf16.mxu0 0
        %1604 = vmatpush1.bf16.xpose.msra.mxu0 0
        %1605 = vmatprep.subr.bf16.mxu0 0
        %1606 = vmatpush1.bf16.xpose.msra.mxu0 0
        %1607 = vmatprep.subr.bf16.mxu0 0
        %1608 = vmatpush1.bf16.xpose.msra.mxu0 0
        %1609 = vmatprep.subr.bf16.mxu0 0
        %1610 = vmatpush1.bf16.xpose.msra.mxu0 0
        %1611 = vmatprep.subr.bf16.mxu0 0
        %1612 = vmatpush1.bf16.xpose.msra.mxu0 0
        %1613 = vmatprep.subr.bf16.mxu0 0
        %1614 = vmatpush1.bf16.xpose.msra.mxu0 0
        %1615 = vmatprep.subr.bf16.mxu0 0
        %1616 = vmatpush1.bf16.xpose.msra.mxu0 0
        %1617 = vmatprep.subr.bf16.mxu0 0
        %1618 = vmatpush1.bf16.xpose.msra.mxu0 0
        %1619 = vmatprep.subr.bf16.mxu0 0
        %1620 = vmatpush1.bf16.xpose.msra.mxu0 0
        %1621 = vmatprep.mubr.bf16.mxu0 0
        %1622 = vmatmul.mubr.bf16.gmra.mrb[0].mxu0 %v1584
        %v1623 = vpop.f32.mrb[0].mxu0
        %v1624 = vadd.f32 0.0, %v1623
        %v1625 = vpop.f32.mrb[0].mxu0
        %v1626 = vpop.f32.mrb[0].mxu0
        %v1627 = vpop.f32.mrb[0].mxu0
        %1628 = vdwg.mxu0
        %vm1629 = vcmask 64512
        %v1630 = vsel %vm1629, %v1624, -inf
        %1631 = vmax.xlane.f32.xlu0 %v1630
        %v1632 = vpop.xlane.xlu0 %1631
        %v1633 = vsub.f32 %v1624, %v1632
        %v1634 = vmul.f32 %v1633, 1.442695
        %v1635 = vpow.pop %v1634
        %v1636 = vsel %vm1629, %v1635, 0.0
        %1637 = vadd.xlane.f32.xlu0 %v1636
        %v1638 = vpop.xlane.xlu0 %1637
        %v1639 = vrcp.pop %v1638
        %v1640 = vmul.f32 %v1635, %v1639
        %v1641 = vpack.c.bf16 %v1640, %v1640
        %v1643 = vsel %vm1629, %v1641, 0
        %vm1645 = vcmask 1043456
        %v1647 = vsel %vm1645, %v1581, 0
        %1649 = vmatprep.subr.bf16.mxu0 0
        %1650 = vmatpush1.bf16.msra.mxu0 %v1647
        %1651 = vmatprep.subr.bf16.mxu0 0
        %1652 = vmatpush1.bf16.msra.mxu0 0
        %1653 = vmatprep.subr.bf16.mxu0 0
        %1654 = vmatpush1.bf16.msra.mxu0 0
        %1655 = vmatprep.subr.bf16.mxu0 0
        %1656 = vmatpush1.bf16.msra.mxu0 0
        %1657 = vmatprep.subr.bf16.mxu0 0
        %1658 = vmatpush1.bf16.msra.mxu0 0
        %1659 = vmatprep.subr.bf16.mxu0 0
        %1660 = vmatpush1.bf16.msra.mxu0 0
        %1661 = vmatprep.subr.bf16.mxu0 0
        %1662 = vmatpush1.bf16.msra.mxu0 0
        %1663 = vmatprep.subr.bf16.mxu0 0
        %1664 = vmatpush1.bf16.msra.mxu0 0
        %1665 = vmatprep.subr.bf16.mxu0 0
        %1666 = vmatpush1.bf16.msra.mxu0 0
        %1667 = vmatprep.subr.bf16.mxu0 0
        %1668 = vmatpush1.bf16.msra.mxu0 0
        %1669 = vmatprep.subr.bf16.mxu0 0
        %1670 = vmatpush1.bf16.msra.mxu0 0
        %1671 = vmatprep.subr.bf16.mxu0 0
        %1672 = vmatpush1.bf16.msra.mxu0 0
        %1673 = vmatprep.subr.bf16.mxu0 0
        %1674 = vmatpush1.bf16.msra.mxu0 0
        %1675 = vmatprep.subr.bf16.mxu0 0
        %1676 = vmatpush1.bf16.msra.mxu0 0
        %1677 = vmatprep.subr.bf16.mxu0 0
        %1678 = vmatpush1.bf16.msra.mxu0 0
        %1679 = vmatprep.subr.bf16.mxu0 0
        %1680 = vmatpush1.bf16.msra.mxu0 0
        %1681 = vmatprep.mubr.bf16.mxu0 0
        %1682 = vmatmul.mubr.bf16.gmra.mrb[0].mxu0 %v1643
        %v1683 = vpop.f32.mrb[0].mxu0
        %v1684 = vadd.f32 0.0, %v1683
        %v1685 = vpop.f32.mrb[0].mxu0
        %v1686 = vpop.f32.mrb[0].mxu0
        %v1687 = vpop.f32.mrb[0].mxu0
        %1688 = vdwg.mxu0
        %1690 = vrot.lane.b32.xlu0 %v1579, 96
        %v1691 = vpop.permute.xlu0 %1690
        %1693 = vrot.lane.b32.xlu0 %v1580, 96
        %v1694 = vpop.permute.xlu0 %1693
        %v1696 = vsel %vm1582, %v1691, 0
        %v1699 = vsel %vm1582, %v1694, 0
        %1701 = vmatprep.subr.bf16.mxu0 0
        %1702 = vmatpush1.bf16.xpose.msra.mxu0 %v1699
        %1703 = vmatprep.subr.bf16.mxu0 0
        %1704 = vmatpush1.bf16.xpose.msra.mxu0 0
        %1705 = vmatprep.subr.bf16.mxu0 0
        %1706 = vmatpush1.bf16.xpose.msra.mxu0 0
        %1707 = vmatprep.subr.bf16.mxu0 0
        %1708 = vmatpush1.bf16.xpose.msra.mxu0 0
        %1709 = vmatprep.subr.bf16.mxu0 0
        %1710 = vmatpush1.bf16.xpose.msra.mxu0 0
        %1711 = vmatprep.subr.bf16.mxu0 0
        %1712 = vmatpush1.bf16.xpose.msra.mxu0 0
        %1713 = vmatprep.subr.bf16.mxu0 0
        %1714 = vmatpush1.bf16.xpose.msra.mxu0 0
        %1715 = vmatprep.subr.bf16.mxu0 0
        %1716 = vmatpush1.bf16.xpose.msra.mxu0 0
        %1717 = vmatprep.subr.bf16.mxu0 0
        %1718 = vmatpush1.bf16.xpose.msra.mxu0 0
        %1719 = vmatprep.subr.bf16.mxu0 0
        %1720 = vmatpush1.bf16.xpose.msra.mxu0 0
        %1721 = vmatprep.subr.bf16.mxu0 0
        %1722 = vmatpush1.bf16.xpose.msra.mxu0 0
        %1723 = vmatprep.subr.bf16.mxu0 0
        %1724 = vmatpush1.bf16.xpose.msra.mxu0 0
        %1725 = vmatprep.subr.bf16.mxu0 0
        %1726 = vmatpush1.bf16.xpose.msra.mxu0 0
        %1727 = vmatprep.subr.bf16.mxu0 0
        %1728 = vmatpush1.bf16.xpose.msra.mxu0 0
        %1729 = vmatprep.subr.bf16.mxu0 0
        %1730 = vmatpush1.bf16.xpose.msra.mxu0 0
        %1731 = vmatprep.subr.bf16.mxu0 0
        %1732 = vmatpush1.bf16.xpose.msra.mxu0 0
        %1733 = vmatprep.mubr.bf16.mxu0 0
        %1734 = vmatmul.mubr.bf16.gmra.mrb[0].mxu0 %v1696
        %v1735 = vpop.f32.mrb[0].mxu0
        %v1736 = vadd.f32 0.0, %v1735
        %v1737 = vpop.f32.mrb[0].mxu0
        %v1738 = vpop.f32.mrb[0].mxu0
        %v1739 = vpop.f32.mrb[0].mxu0
        %1740 = vdwg.mxu0
        %v1741 = vsel %vm1629, %v1736, -inf
        %1742 = vmax.xlane.f32.xlu0 %v1741
        %v1743 = vpop.xlane.xlu0 %1742
        %v1744 = vsub.f32 %v1736, %v1743
        %v1745 = vmul.f32 %v1744, 1.442695
        %v1746 = vpow.pop %v1745
        %v1747 = vsel %vm1629, %v1746, 0.0
        %1748 = vadd.xlane.f32.xlu0 %v1747
        %v1749 = vpop.xlane.xlu0 %1748
        %v1750 = vrcp.pop %v1749
        %v1751 = vmul.f32 %v1746, %v1750
        %v1752 = vpack.c.bf16 %v1751, %v1751
        %1754 = vrot.lane.b32.xlu0 %v1581, 96
        %v1755 = vpop.permute.xlu0 %1754
        %v1757 = vsel %vm1629, %v1752, 0
        %v1760 = vsel %vm1645, %v1755, 0
        %1762 = vmatprep.subr.bf16.mxu0 0
        %1763 = vmatpush1.bf16.msra.mxu0 %v1760
        %1764 = vmatprep.subr.bf16.mxu0 0
        %1765 = vmatpush1.bf16.msra.mxu0 0
        %1766 = vmatprep.subr.bf16.mxu0 0
        %1767 = vmatpush1.bf16.msra.mxu0 0
        %1768 = vmatprep.subr.bf16.mxu0 0
        %1769 = vmatpush1.bf16.msra.mxu0 0
        %1770 = vmatprep.subr.bf16.mxu0 0
        %1771 = vmatpush1.bf16.msra.mxu0 0
        %1772 = vmatprep.subr.bf16.mxu0 0
        %1773 = vmatpush1.bf16.msra.mxu0 0
        %1774 = vmatprep.subr.bf16.mxu0 0
        %1775 = vmatpush1.bf16.msra.mxu0 0
        %1776 = vmatprep.subr.bf16.mxu0 0
        %1777 = vmatpush1.bf16.msra.mxu0 0
        %1778 = vmatprep.subr.bf16.mxu0 0
        %1779 = vmatpush1.bf16.msra.mxu0 0
        %1780 = vmatprep.subr.bf16.mxu0 0
        %1781 = vmatpush1.bf16.msra.mxu0 0
        %1782 = vmatprep.subr.bf16.mxu0 0
        %1783 = vmatpush1.bf16.msra.mxu0 0
        %1784 = vmatprep.subr.bf16.mxu0 0
        %1785 = vmatpush1.bf16.msra.mxu0 0
        %1786 = vmatprep.subr.bf16.mxu0 0
        %1787 = vmatpush1.bf16.msra.mxu0 0
        %1788 = vmatprep.subr.bf16.mxu0 0
        %1789 = vmatpush1.bf16.msra.mxu0 0
        %1790 = vmatprep.subr.bf16.mxu0 0
        %1791 = vmatpush1.bf16.msra.mxu0 0
        %1792 = vmatprep.subr.bf16.mxu0 0
        %1793 = vmatpush1.bf16.msra.mxu0 0
        %1794 = vmatprep.mubr.bf16.mxu0 0
        %1795 = vmatmul.mubr.bf16.gmra.mrb[0].mxu0 %v1757
        %v1796 = vpop.f32.mrb[0].mxu0
        %v1797 = vadd.f32 0.0, %v1796
        %v1798 = vpop.f32.mrb[0].mxu0
        %v1799 = vpop.f32.mrb[0].mxu0
        %v1800 = vpop.f32.mrb[0].mxu0
        %1801 = vdwg.mxu0
        %1802 = vrot.lane.b32.xlu0 %v1579, 64
        %v1803 = vpop.permute.xlu0 %1802
        %1804 = vrot.lane.b32.xlu0 %v1580, 64
        %v1805 = vpop.permute.xlu0 %1804
        %v1807 = vsel %vm1582, %v1803, 0
        %v1810 = vsel %vm1582, %v1805, 0
        %1812 = vmatprep.subr.bf16.mxu0 0
        %1813 = vmatpush1.bf16.xpose.msra.mxu0 %v1810
        %1814 = vmatprep.subr.bf16.mxu0 0
        %1815 = vmatpush1.bf16.xpose.msra.mxu0 0
        %1816 = vmatprep.subr.bf16.mxu0 0
        %1817 = vmatpush1.bf16.xpose.msra.mxu0 0
        %1818 = vmatprep.subr.bf16.mxu0 0
        %1819 = vmatpush1.bf16.xpose.msra.mxu0 0
        %1820 = vmatprep.subr.bf16.mxu0 0
        %1821 = vmatpush1.bf16.xpose.msra.mxu0 0
        %1822 = vmatprep.subr.bf16.mxu0 0
        %1823 = vmatpush1.bf16.xpose.msra.mxu0 0
        %1824 = vmatprep.subr.bf16.mxu0 0
        %1825 = vmatpush1.bf16.xpose.msra.mxu0 0
        %1826 = vmatprep.subr.bf16.mxu0 0
        %1827 = vmatpush1.bf16.xpose.msra.mxu0 0
        %1828 = vmatprep.subr.bf16.mxu0 0
        %1829 = vmatpush1.bf16.xpose.msra.mxu0 0
        %1830 = vmatprep.subr.bf16.mxu0 0
        %1831 = vmatpush1.bf16.xpose.msra.mxu0 0
        %1832 = vmatprep.subr.bf16.mxu0 0
        %1833 = vmatpush1.bf16.xpose.msra.mxu0 0
        %1834 = vmatprep.subr.bf16.mxu0 0
        %1835 = vmatpush1.bf16.xpose.msra.mxu0 0
        %1836 = vmatprep.subr.bf16.mxu0 0
        %1837 = vmatpush1.bf16.xpose.msra.mxu0 0
        %1838 = vmatprep.subr.bf16.mxu0 0
        %1839 = vmatpush1.bf16.xpose.msra.mxu0 0
        %1840 = vmatprep.subr.bf16.mxu0 0
        %1841 = vmatpush1.bf16.xpose.msra.mxu0 0
        %1842 = vmatprep.subr.bf16.mxu0 0
        %1843 = vmatpush1.bf16.xpose.msra.mxu0 0
        %1844 = vmatprep.mubr.bf16.mxu0 0
        %1845 = vmatmul.mubr.bf16.gmra.mrb[0].mxu0 %v1807
        %v1846 = vpop.f32.mrb[0].mxu0
        %v1847 = vadd.f32 0.0, %v1846
        %v1848 = vpop.f32.mrb[0].mxu0
        %v1849 = vpop.f32.mrb[0].mxu0
        %v1850 = vpop.f32.mrb[0].mxu0
        %1851 = vdwg.mxu0
        %v1852 = vsel %vm1629, %v1847, -inf
        %1853 = vmax.xlane.f32.xlu0 %v1852
        %v1854 = vpop.xlane.xlu0 %1853
        %v1855 = vsub.f32 %v1847, %v1854
        %v1856 = vmul.f32 %v1855, 1.442695
        %v1857 = vpow.pop %v1856
        %v1858 = vsel %vm1629, %v1857, 0.0
        %1859 = vadd.xlane.f32.xlu0 %v1858
        %v1860 = vpop.xlane.xlu0 %1859
        %v1861 = vrcp.pop %v1860
        %v1862 = vmul.f32 %v1857, %v1861
        %v1863 = vpack.c.bf16 %v1862, %v1862
        %1864 = vrot.lane.b32.xlu0 %v1581, 64
        %v1865 = vpop.permute.xlu0 %1864
        %v1867 = vsel %vm1629, %v1863, 0
        %v1870 = vsel %vm1645, %v1865, 0
        %1872 = vmatprep.subr.bf16.mxu0 0
        %1873 = vmatpush1.bf16.msra.mxu0 %v1870
        %1874 = vmatprep.subr.bf16.mxu0 0
        %1875 = vmatpush1.bf16.msra.mxu0 0
        %1876 = vmatprep.subr.bf16.mxu0 0
        %1877 = vmatpush1.bf16.msra.mxu0 0
        %1878 = vmatprep.subr.bf16.mxu0 0
        %1879 = vmatpush1.bf16.msra.mxu0 0
        %1880 = vmatprep.subr.bf16.mxu0 0
        %1881 = vmatpush1.bf16.msra.mxu0 0
        %1882 = vmatprep.subr.bf16.mxu0 0
        %1883 = vmatpush1.bf16.msra.mxu0 0
        %1884 = vmatprep.subr.bf16.mxu0 0
        %1885 = vmatpush1.bf16.msra.mxu0 0
        %1886 = vmatprep.subr.bf16.mxu0 0
        %1887 = vmatpush1.bf16.msra.mxu0 0
        %1888 = vmatprep.subr.bf16.mxu0 0
        %1889 = vmatpush1.bf16.msra.mxu0 0
        %1890 = vmatprep.subr.bf16.mxu0 0
        %1891 = vmatpush1.bf16.msra.mxu0 0
        %1892 = vmatprep.subr.bf16.mxu0 0
        %1893 = vmatpush1.bf16.msra.mxu0 0
        %1894 = vmatprep.subr.bf16.mxu0 0
        %1895 = vmatpush1.bf16.msra.mxu0 0
        %1896 = vmatprep.subr.bf16.mxu0 0
        %1897 = vmatpush1.bf16.msra.mxu0 0
        %1898 = vmatprep.subr.bf16.mxu0 0
        %1899 = vmatpush1.bf16.msra.mxu0 0
        %1900 = vmatprep.subr.bf16.mxu0 0
        %1901 = vmatpush1.bf16.msra.mxu0 0
        %1902 = vmatprep.subr.bf16.mxu0 0
        %1903 = vmatpush1.bf16.msra.mxu0 0
        %1904 = vmatprep.mubr.bf16.mxu0 0
        %1905 = vmatmul.mubr.bf16.gmra.mrb[0].mxu0 %v1867
        %v1906 = vpop.f32.mrb[0].mxu0
        %v1907 = vadd.f32 0.0, %v1906
        %v1908 = vpop.f32.mrb[0].mxu0
        %v1909 = vpop.f32.mrb[0].mxu0
        %v1910 = vpop.f32.mrb[0].mxu0
        %1911 = vdwg.mxu0
        %1912 = vrot.lane.b32.xlu0 %v1579, 32
        %v1913 = vpop.permute.xlu0 %1912
        %1914 = vrot.lane.b32.xlu0 %v1580, 32
        %v1915 = vpop.permute.xlu0 %1914
        %v1917 = vsel %vm1582, %v1913, 0
        %v1920 = vsel %vm1582, %v1915, 0
        %1922 = vmatprep.subr.bf16.mxu0 0
        %1923 = vmatpush1.bf16.xpose.msra.mxu0 %v1920
        %1924 = vmatprep.subr.bf16.mxu0 0
        %1925 = vmatpush1.bf16.xpose.msra.mxu0 0
        %1926 = vmatprep.subr.bf16.mxu0 0
        %1927 = vmatpush1.bf16.xpose.msra.mxu0 0
        %1928 = vmatprep.subr.bf16.mxu0 0
        %1929 = vmatpush1.bf16.xpose.msra.mxu0 0
        %1930 = vmatprep.subr.bf16.mxu0 0
        %1931 = vmatpush1.bf16.xpose.msra.mxu0 0
        %1932 = vmatprep.subr.bf16.mxu0 0
        %1933 = vmatpush1.bf16.xpose.msra.mxu0 0
        %1934 = vmatprep.subr.bf16.mxu0 0
        %1935 = vmatpush1.bf16.xpose.msra.mxu0 0
        %1936 = vmatprep.subr.bf16.mxu0 0
        %1937 = vmatpush1.bf16.xpose.msra.mxu0 0
        %1938 = vmatprep.subr.bf16.mxu0 0
        %1939 = vmatpush1.bf16.xpose.msra.mxu0 0
        %1940 = vmatprep.subr.bf16.mxu0 0
        %1941 = vmatpush1.bf16.xpose.msra.mxu0 0
        %1942 = vmatprep.subr.bf16.mxu0 0
        %1943 = vmatpush1.bf16.xpose.msra.mxu0 0
        %1944 = vmatprep.subr.bf16.mxu0 0
        %1945 = vmatpush1.bf16.xpose.msra.mxu0 0
        %1946 = vmatprep.subr.bf16.mxu0 0
        %1947 = vmatpush1.bf16.xpose.msra.mxu0 0
        %1948 = vmatprep.subr.bf16.mxu0 0
        %1949 = vmatpush1.bf16.xpose.msra.mxu0 0
        %1950 = vmatprep.subr.bf16.mxu0 0
        %1951 = vmatpush1.bf16.xpose.msra.mxu0 0
        %1952 = vmatprep.subr.bf16.mxu0 0
        %1953 = vmatpush1.bf16.xpose.msra.mxu0 0
        %1954 = vmatprep.mubr.bf16.mxu0 0
        %1955 = vmatmul.mubr.bf16.gmra.mrb[0].mxu0 %v1917
        %v1956 = vpop.f32.mrb[0].mxu0
        %v1957 = vadd.f32 0.0, %v1956
        %v1958 = vpop.f32.mrb[0].mxu0
        %v1959 = vpop.f32.mrb[0].mxu0
        %v1960 = vpop.f32.mrb[0].mxu0
        %1961 = vdwg.mxu0
        %v1962 = vsel %vm1629, %v1957, -inf
        %1963 = vmax.xlane.f32.xlu0 %v1962
        %v1964 = vpop.xlane.xlu0 %1963
        %v1965 = vsub.f32 %v1957, %v1964
        %v1966 = vmul.f32 %v1965, 1.442695
        %v1967 = vpow.pop %v1966
        %v1968 = vsel %vm1629, %v1967, 0.0
        %1969 = vadd.xlane.f32.xlu0 %v1968
        %v1970 = vpop.xlane.xlu0 %1969
        %v1971 = vrcp.pop %v1970
        %v1972 = vmul.f32 %v1967, %v1971
        %v1973 = vpack.c.bf16 %v1972, %v1972
        %1974 = vrot.lane.b32.xlu0 %v1581, 32
        %v1975 = vpop.permute.xlu0 %1974
        %v1977 = vsel %vm1629, %v1973, 0
        %v1980 = vsel %vm1645, %v1975, 0
        %1982 = vmatprep.subr.bf16.mxu0 0
        %1983 = vmatpush1.bf16.msra.mxu0 %v1980
        %1984 = vmatprep.subr.bf16.mxu0 0
        %1985 = vmatpush1.bf16.msra.mxu0 0
        %1986 = vmatprep.subr.bf16.mxu0 0
        %1987 = vmatpush1.bf16.msra.mxu0 0
        %1988 = vmatprep.subr.bf16.mxu0 0
        %1989 = vmatpush1.bf16.msra.mxu0 0
        %1990 = vmatprep.subr.bf16.mxu0 0
        %1991 = vmatpush1.bf16.msra.mxu0 0
        %1992 = vmatprep.subr.bf16.mxu0 0
        %1993 = vmatpush1.bf16.msra.mxu0 0
        %1994 = vmatprep.subr.bf16.mxu0 0
        %1995 = vmatpush1.bf16.msra.mxu0 0
        %1996 = vmatprep.subr.bf16.mxu0 0
        %1997 = vmatpush1.bf16.msra.mxu0 0
        %1998 = vmatprep.subr.bf16.mxu0 0
        %1999 = vmatpush1.bf16.msra.mxu0 0
        %2000 = vmatprep.subr.bf16.mxu0 0
        %2001 = vmatpush1.bf16.msra.mxu0 0
        %2002 = vmatprep.subr.bf16.mxu0 0
        %2003 = vmatpush1.bf16.msra.mxu0 0
        %2004 = vmatprep.subr.bf16.mxu0 0
        %2005 = vmatpush1.bf16.msra.mxu0 0
        %2006 = vmatprep.subr.bf16.mxu0 0
        %2007 = vmatpush1.bf16.msra.mxu0 0
        %2008 = vmatprep.subr.bf16.mxu0 0
        %2009 = vmatpush1.bf16.msra.mxu0 0
        %2010 = vmatprep.subr.bf16.mxu0 0
        %2011 = vmatpush1.bf16.msra.mxu0 0
        %2012 = vmatprep.subr.bf16.mxu0 0
        %2013 = vmatpush1.bf16.msra.mxu0 0
        %2014 = vmatprep.mubr.bf16.mxu0 0
        %2015 = vmatmul.mubr.bf16.gmra.mrb[0].mxu0 %v1977
        %v2016 = vpop.f32.mrb[0].mxu0
        %v2017 = vadd.f32 0.0, %v2016
        %v2018 = vpop.f32.mrb[0].mxu0
        %v2019 = vpop.f32.mrb[0].mxu0
        %v2020 = vpop.f32.mrb[0].mxu0
        %2021 = vdwg.mxu0
        %2023 = vrot.lane.b32.xlu0 %v1797, 32
        %v2024 = vpop.permute.xlu0 %2023
        %2027 = vrot.lane.b32.xlu0 %v1907, 64
        %v2028 = vpop.permute.xlu0 %2027
        %2031 = vrot.lane.b32.xlu0 %v2017, 96
        %v2032 = vpop.permute.xlu0 %2031
        %v2034 = vsel %vm1582, %v1684, %v2024
        %vm2035 = vcmask 523264
        %v2036 = vsel %vm2035, %v2034, %v2028
        %vm2037 = vcmask 785408
        %v2038 = vsel %vm2037, %v2036, %v2032
        %v2039 = vadd.f32 %v1189, %v2038
        %v2040 = vld [vmem:[%s11] sm:$0x1]
        %v2041 = vld [vmem:[%s13] sm:$0x1]
        %2042 = vadd.xlane.f32.xlu0 %v2039
        %v2043 = vpop.xlane.xlu0 %2042
        %v2044 = vmul.f32 %v2043, %v1194
        %v2045 = vsub.f32 %v2039, %v2044
        %v2046 = vmul.f32 %v2045, %v2045
        %2047 = vadd.xlane.f32.xlu0 %v2046
        %v2048 = vpop.xlane.xlu0 %2047
        %v2049 = vmul.f32 %v2048, %v1194
        %v2050 = vadd.f32 %v2049, 1e-05
        %v2051 = vrsqrt.pop %v2050
        %v2052 = vmul.f32 %v2045, %v2051
        %v2054 = vlaneseq
        %v2055 = vshrl.u32 %v2054, 7
        %v2056 = vsub.s32 0, %v2055
        %v2057 = vrot.slane %v2040, %v2056
        %v2059 = vmul.f32 %v2052, %v2057
        %v2061 = vlaneseq
        %v2062 = vshrl.u32 %v2061, 7
        %v2063 = vsub.s32 0, %v2062
        %v2064 = vrot.slane %v2041, %v2063
        %v2066 = vadd.f32 %v2059, %v2064
        %v2067 = vpack.c.bf16 %v2066, %v2066
        %v2068 = vld [vmem:[#allocation13] sm:$0xff]
        %v2069 = vld [vmem:[#allocation13 + $0x8] sm:$0xff]
        %v2070 = vld [vmem:[#allocation13 + $0x10] sm:$0xff]
        %v2071 = vld [vmem:[#allocation13 + $0x18] sm:$0xff]
        %v2072 = vld [vmem:[#allocation13 + $0x20] sm:$0xff]
        %v2073 = vld [vmem:[#allocation13 + $0x28] sm:$0xff]
        %v2074 = vld [vmem:[#allocation13 + $0x30] sm:$0xff]
        %v2075 = vld [vmem:[#allocation13 + $0x38] sm:$0xff]
        %v2076 = vld [vmem:[#allocation13 + $0x40] sm:$0xff]
        %v2077 = vld [vmem:[#allocation13 + $0x48] sm:$0xff]
        %v2078 = vld [vmem:[#allocation13 + $0x50] sm:$0xff]
        %v2079 = vld [vmem:[#allocation13 + $0x58] sm:$0xff]
        %v2080 = vld [vmem:[#allocation13 + $0x60] sm:$0xff]
        %v2081 = vld [vmem:[#allocation13 + $0x68] sm:$0xff]
        %v2082 = vld [vmem:[#allocation13 + $0x70] sm:$0xff]
        %v2083 = vld [vmem:[#allocation13 + $0x78] sm:$0xff]
        %v2084 = vld [vmem:[%s29] sm:$0x3]
        %v2086 = vlaneseq
        %v2087 = vshrl.u32 %v2086, 7
        %v2088 = vsub.s32 0, %v2087
        %v2089 = vrot.slane %v2084, %v2088
        %v2090 = vlaneseq
        %v2091 = vshrl.u32 %v2090, 7
        %v2092 = vsub.s32 1, %v2091
        %v2093 = vrot.slane %v2084, %v2092
        %v2112 = vunpack.c.l.b16 %v2068
        %v2113 = vunpack.c.h.b16 %v2068
        %v2114 = vunpack.c.l.b16 %v2069
        %v2115 = vunpack.c.h.b16 %v2069
        %v2116 = vunpack.c.l.b16 %v2070
        %v2117 = vunpack.c.h.b16 %v2070
        %v2118 = vunpack.c.l.b16 %v2071
        %v2119 = vunpack.c.h.b16 %v2071
        %v2120 = vunpack.c.l.b16 %v2072
        %v2121 = vunpack.c.h.b16 %v2072
        %v2122 = vunpack.c.l.b16 %v2073
        %v2123 = vunpack.c.h.b16 %v2073
        %v2124 = vunpack.c.l.b16 %v2074
        %v2125 = vunpack.c.h.b16 %v2074
        %v2126 = vunpack.c.l.b16 %v2075
        %v2127 = vunpack.c.h.b16 %v2075
        %v2128 = vunpack.c.l.b16 %v2076
        %v2129 = vunpack.c.h.b16 %v2076
        %v2130 = vunpack.c.l.b16 %v2077
        %v2131 = vunpack.c.h.b16 %v2077
        %v2132 = vunpack.c.l.b16 %v2078
        %v2133 = vunpack.c.h.b16 %v2078
        %v2134 = vunpack.c.l.b16 %v2079
        %v2135 = vunpack.c.h.b16 %v2079
        %v2136 = vunpack.c.l.b16 %v2080
        %v2137 = vunpack.c.h.b16 %v2080
        %v2138 = vunpack.c.l.b16 %v2081
        %v2139 = vunpack.c.h.b16 %v2081
        %v2140 = vunpack.c.l.b16 %v2082
        %v2141 = vunpack.c.h.b16 %v2082
        %v2142 = vunpack.c.l.b16 %v2083
        %v2143 = vunpack.c.h.b16 %v2083
        %v2144 = vpack.c.b16 %v2114, %v2112
        %v2145 = vpack.c.b16 %v2115, %v2113
        %v2146 = vpack.c.b16 %v2118, %v2116
        %v2147 = vpack.c.b16 %v2119, %v2117
        %v2148 = vpack.c.b16 %v2122, %v2120
        %v2149 = vpack.c.b16 %v2123, %v2121
        %v2150 = vpack.c.b16 %v2126, %v2124
        %v2151 = vpack.c.b16 %v2127, %v2125
        %v2152 = vpack.c.b16 %v2130, %v2128
        %v2153 = vpack.c.b16 %v2131, %v2129
        %v2154 = vpack.c.b16 %v2134, %v2132
        %v2155 = vpack.c.b16 %v2135, %v2133
        %v2156 = vpack.c.b16 %v2138, %v2136
        %v2157 = vpack.c.b16 %v2139, %v2137
        %v2158 = vpack.c.b16 %v2142, %v2140
        %v2159 = vpack.c.b16 %v2143, %v2141
        %2176 = vmatprep.subr.bf16.mxu0 %v2145
        %2177 = vmatpush1.bf16.msra.mxu0 %v2144
        %2178 = vmatprep.subr.bf16.mxu0 %v2147
        %2179 = vmatpush1.bf16.msra.mxu0 %v2146
        %2180 = vmatprep.subr.bf16.mxu0 %v2149
        %2181 = vmatpush1.bf16.msra.mxu0 %v2148
        %2182 = vmatprep.subr.bf16.mxu0 %v2151
        %2183 = vmatpush1.bf16.msra.mxu0 %v2150
        %2184 = vmatprep.subr.bf16.mxu0 %v2153
        %2185 = vmatpush1.bf16.msra.mxu0 %v2152
        %2186 = vmatprep.subr.bf16.mxu0 %v2155
        %2187 = vmatpush1.bf16.msra.mxu0 %v2154
        %2188 = vmatprep.subr.bf16.mxu0 %v2157
        %2189 = vmatpush1.bf16.msra.mxu0 %v2156
        %2190 = vmatprep.subr.bf16.mxu0 %v2159
        %2191 = vmatpush1.bf16.msra.mxu0 %v2158
        %2192 = vmatprep.subr.bf16.mxu0 0
        %2193 = vmatpush1.bf16.msra.mxu0 0
        %2194 = vmatprep.subr.bf16.mxu0 0
        %2195 = vmatpush1.bf16.msra.mxu0 0
        %2196 = vmatprep.subr.bf16.mxu0 0
        %2197 = vmatpush1.bf16.msra.mxu0 0
        %2198 = vmatprep.subr.bf16.mxu0 0
        %2199 = vmatpush1.bf16.msra.mxu0 0
        %2200 = vmatprep.subr.bf16.mxu0 0
        %2201 = vmatpush1.bf16.msra.mxu0 0
        %2202 = vmatprep.subr.bf16.mxu0 0
        %2203 = vmatpush1.bf16.msra.mxu0 0
        %2204 = vmatprep.subr.bf16.mxu0 0
        %2205 = vmatpush1.bf16.msra.mxu0 0
        %2206 = vmatprep.subr.bf16.mxu0 0
        %2207 = vmatpush1.bf16.msra.mxu0 0
        %2208 = vmatprep.mubr.bf16.mxu0 0
        %2209 = vmatmul.mubr.bf16.gmra.mrb[0].mxu0 %v2067
        %v2210 = vpop.f32.mrb[0].mxu0
        %v2211 = vadd.f32 %v2089, %v2210
        %v2212 = vpop.f32.mrb[0].mxu0
        %v2213 = vadd.f32 %v2093, %v2212
        %v2214 = vpop.f32.mrb[0].mxu0
        %v2215 = vpop.f32.mrb[0].mxu0
        %2216 = vdwg.mxu0
        %v2217 = vmax.f32 %v2211, 0.0
        %v2218 = vmax.f32 %v2213, 0.0
        %v2219 = vpack.c.bf16 %v2217, %v2217
        %v2220 = vpack.c.bf16 %v2218, %v2218
        %v2221 = vld [vmem:[#allocation14] sm:$0xf]
        %v2222 = vld [vmem:[#allocation14 + $0x4] sm:$0xf]
        %v2223 = vld [vmem:[#allocation14 + $0x8] sm:$0xf]
        %v2224 = vld [vmem:[#allocation14 + $0xc] sm:$0xf]
        %v2225 = vld [vmem:[#allocation14 + $0x10] sm:$0xf]
        %v2226 = vld [vmem:[#allocation14 + $0x14] sm:$0xf]
        %v2227 = vld [vmem:[#allocation14 + $0x18] sm:$0xf]
        %v2228 = vld [vmem:[#allocation14 + $0x1c] sm:$0xf]
        %v2229 = vld [vmem:[#allocation14 + $0x20] sm:$0xf]
        %v2230 = vld [vmem:[#allocation14 + $0x24] sm:$0xf]
        %v2231 = vld [vmem:[#allocation14 + $0x28] sm:$0xf]
        %v2232 = vld [vmem:[#allocation14 + $0x2c] sm:$0xf]
        %v2233 = vld [vmem:[#allocation14 + $0x30] sm:$0xf]
        %v2234 = vld [vmem:[#allocation14 + $0x34] sm:$0xf]
        %v2235 = vld [vmem:[#allocation14 + $0x38] sm:$0xf]
        %v2236 = vld [vmem:[#allocation14 + $0x3c] sm:$0xf]
        %v2237 = vld [vmem:[#allocation14 + $0x40] sm:$0xf]
        %v2238 = vld [vmem:[#allocation14 + $0x44] sm:$0xf]
        %v2239 = vld [vmem:[#allocation14 + $0x48] sm:$0xf]
        %v2240 = vld [vmem:[#allocation14 + $0x4c] sm:$0xf]
        %v2241 = vld [vmem:[#allocation14 + $0x50] sm:$0xf]
        %v2242 = vld [vmem:[#allocation14 + $0x54] sm:$0xf]
        %v2243 = vld [vmem:[#allocation14 + $0x58] sm:$0xf]
        %v2244 = vld [vmem:[#allocation14 + $0x5c] sm:$0xf]
        %v2245 = vld [vmem:[#allocation14 + $0x60] sm:$0xf]
        %v2246 = vld [vmem:[#allocation14 + $0x64] sm:$0xf]
        %v2247 = vld [vmem:[#allocation14 + $0x68] sm:$0xf]
        %v2248 = vld [vmem:[#allocation14 + $0x6c] sm:$0xf]
        %v2249 = vld [vmem:[#allocation14 + $0x70] sm:$0xf]
        %v2250 = vld [vmem:[#allocation14 + $0x74] sm:$0xf]
        %v2251 = vld [vmem:[#allocation14 + $0x78] sm:$0xf]
        %v2252 = vld [vmem:[#allocation14 + $0x7c] sm:$0xf]
        %v2253 = vld [vmem:[%s33] sm:$0x1]
        %v2255 = vlaneseq
        %v2256 = vshrl.u32 %v2255, 7
        %v2257 = vsub.s32 0, %v2256
        %v2258 = vrot.slane %v2253, %v2257
        %v2292 = vunpack.c.l.b16 %v2221
        %v2293 = vunpack.c.l.b16 %v2222
        %v2294 = vunpack.c.l.b16 %v2223
        %v2295 = vunpack.c.l.b16 %v2224
        %v2296 = vunpack.c.l.b16 %v2225
        %v2297 = vunpack.c.l.b16 %v2226
        %v2298 = vunpack.c.l.b16 %v2227
        %v2299 = vunpack.c.l.b16 %v2228
        %v2300 = vunpack.c.l.b16 %v2229
        %v2301 = vunpack.c.l.b16 %v2230
        %v2302 = vunpack.c.l.b16 %v2231
        %v2303 = vunpack.c.l.b16 %v2232
        %v2304 = vunpack.c.l.b16 %v2233
        %v2305 = vunpack.c.l.b16 %v2234
        %v2306 = vunpack.c.l.b16 %v2235
        %v2307 = vunpack.c.l.b16 %v2236
        %v2308 = vunpack.c.l.b16 %v2237
        %v2309 = vunpack.c.l.b16 %v2238
        %v2310 = vunpack.c.l.b16 %v2239
        %v2311 = vunpack.c.l.b16 %v2240
        %v2312 = vunpack.c.l.b16 %v2241
        %v2313 = vunpack.c.l.b16 %v2242
        %v2314 = vunpack.c.l.b16 %v2243
        %v2315 = vunpack.c.l.b16 %v2244
        %v2316 = vunpack.c.l.b16 %v2245
        %v2317 = vunpack.c.l.b16 %v2246
        %v2318 = vunpack.c.l.b16 %v2247
        %v2319 = vunpack.c.l.b16 %v2248
        %v2320 = vunpack.c.l.b16 %v2249
        %v2321 = vunpack.c.l.b16 %v2250
        %v2322 = vunpack.c.l.b16 %v2251
        %v2323 = vunpack.c.l.b16 %v2252
        %v2324 = vpack.c.b16 %v2293, %v2292
        %v2325 = vpack.c.b16 %v2295, %v2294
        %v2326 = vpack.c.b16 %v2297, %v2296
        %v2327 = vpack.c.b16 %v2299, %v2298
        %v2328 = vpack.c.b16 %v2301, %v2300
        %v2329 = vpack.c.b16 %v2303, %v2302
        %v2330 = vpack.c.b16 %v2305, %v2304
        %v2331 = vpack.c.b16 %v2307, %v2306
        %v2332 = vpack.c.b16 %v2309, %v2308
        %v2333 = vpack.c.b16 %v2311, %v2310
        %v2334 = vpack.c.b16 %v2313, %v2312
        %v2335 = vpack.c.b16 %v2315, %v2314
        %v2336 = vpack.c.b16 %v2317, %v2316
        %v2337 = vpack.c.b16 %v2319, %v2318
        %v2338 = vpack.c.b16 %v2321, %v2320
        %v2339 = vpack.c.b16 %v2323, %v2322
        %2356 = vmatprep.subr.bf16.mxu0 0
        %2357 = vmatpush1.bf16.msra.mxu0 %v2324
        %2358 = vmatprep.subr.bf16.mxu0 0
        %2359 = vmatpush1.bf16.msra.mxu0 %v2325
        %2360 = vmatprep.subr.bf16.mxu0 0
        %2361 = vmatpush1.bf16.msra.mxu0 %v2326
        %2362 = vmatprep.subr.bf16.mxu0 0
        %2363 = vmatpush1.bf16.msra.mxu0 %v2327
        %2364 = vmatprep.subr.bf16.mxu0 0
        %2365 = vmatpush1.bf16.msra.mxu0 %v2328
        %2366 = vmatprep.subr.bf16.mxu0 0
        %2367 = vmatpush1.bf16.msra.mxu0 %v2329
        %2368 = vmatprep.subr.bf16.mxu0 0
        %2369 = vmatpush1.bf16.msra.mxu0 %v2330
        %2370 = vmatprep.subr.bf16.mxu0 0
        %2371 = vmatpush1.bf16.msra.mxu0 %v2331
        %2372 = vmatprep.subr.bf16.mxu0 0
        %2373 = vmatpush1.bf16.msra.mxu0 %v2332
        %2374 = vmatprep.subr.bf16.mxu0 0
        %2375 = vmatpush1.bf16.msra.mxu0 %v2333
        %2376 = vmatprep.subr.bf16.mxu0 0
        %2377 = vmatpush1.bf16.msra.mxu0 %v2334
        %2378 = vmatprep.subr.bf16.mxu0 0
        %2379 = vmatpush1.bf16.msra.mxu0 %v2335
        %2380 = vmatprep.subr.bf16.mxu0 0
        %2381 = vmatpush1.bf16.msra.mxu0 %v2336
        %2382 = vmatprep.subr.bf16.mxu0 0
        %2383 = vmatpush1.bf16.msra.mxu0 %v2337
        %2384 = vmatprep.subr.bf16.mxu0 0
        %2385 = vmatpush1.bf16.msra.mxu0 %v2338
        %2386 = vmatprep.subr.bf16.mxu0 0
        %2387 = vmatpush1.bf16.msra.mxu0 %v2339
        %2388 = vmatprep.mubr.bf16.mxu0 %v2220
        %2389 = vmatmul.mubr.bf16.gmra.mrb[0].mxu0 %v2219
        %v2390 = vpop.f32.mrb[0].mxu0
        %v2391 = vadd.f32 %v2258, %v2390
        %v2392 = vpop.f32.mrb[0].mxu0
        %v2393 = vpop.f32.mrb[0].mxu0
        %v2394 = vpop.f32.mrb[0].mxu0
        %2395 = vdwg.mxu0
        %v2396 = vadd.f32 %v2039, %v2391
        %2397 = vadd.xlane.f32.xlu0 %v2396
        %v2398 = vpop.xlane.xlu0 %2397
        %v2399 = vmul.f32 %v2398, %v1194
        %v2400 = vsub.f32 %v2396, %v2399
        %v2401 = vmul.f32 %v2400, %v2400
        %2402 = vadd.xlane.f32.xlu0 %v2401
        %v2403 = vpop.xlane.xlu0 %2402
        %v2404 = vmul.f32 %v2403, %v1194
        %v2405 = vadd.f32 %v2404, 1e-05
        %v2406 = vrsqrt.pop %v2405
        %v2407 = vmul.f32 %v2400, %v2406
        %v2408 = vld [vmem:[%s35] sm:$0x1]
        %v2409 = vld [vmem:[%s37] sm:$0x1]
        %v2411 = vlaneseq
        %v2412 = vshrl.u32 %v2411, 7
        %v2413 = vsub.s32 0, %v2412
        %v2414 = vrot.slane %v2408, %v2413
        %v2416 = vmul.f32 %v2407, %v2414
        %v2418 = vlaneseq
        %v2419 = vshrl.u32 %v2418, 7
        %v2420 = vsub.s32 0, %v2419
        %v2421 = vrot.slane %v2409, %v2420
        %v2423 = vadd.f32 %v2416, %v2421
        %v2424 = vpack.c.bf16 %v2423, %v2423
        %v2425 = vmul.f32 %v1225, %v2414
        %v2426 = vadd.f32 %v2425, %v2421
        %v2427 = vpack.c.bf16 %v2426, %v2426
        %v2428 = vld [vmem:[%s43] sm:$0xf]
        %v2429 = vld [vmem:[%s43 + $0x4] sm:$0xf]
        %v2430 = vld [vmem:[%s43 + $0x8] sm:$0xf]
        %v2431 = vld [vmem:[%s43 + $0xc] sm:$0xf]
        %v2432 = vld [vmem:[%s43 + $0x10] sm:$0xf]
        %v2433 = vld [vmem:[%s43 + $0x14] sm:$0xf]
        %v2434 = vld [vmem:[%s43 + $0x18] sm:$0xf]
        %v2435 = vld [vmem:[%s43 + $0x1c] sm:$0xf]
        %v2436 = vld [vmem:[%s43 + $0x20] sm:$0xf]
        %v2437 = vld [vmem:[%s43 + $0x24] sm:$0xf]
        %v2438 = vld [vmem:[%s43 + $0x28] sm:$0xf]
        %v2439 = vld [vmem:[%s43 + $0x2c] sm:$0xf]
        %v2440 = vld [vmem:[%s43 + $0x30] sm:$0xf]
        %v2441 = vld [vmem:[%s43 + $0x34] sm:$0xf]
        %v2442 = vld [vmem:[%s43 + $0x38] sm:$0xf]
        %v2443 = vld [vmem:[%s43 + $0x3c] sm:$0xf]
        %v2444 = vld [vmem:[%s45] sm:$0x1]
        %v2446 = vlaneseq
        %v2447 = vshrl.u32 %v2446, 7
        %v2448 = vsub.s32 0, %v2447
        %v2449 = vrot.slane %v2444, %v2448
        %v2467 = vunpack.c.l.b16 %v2428
        %v2468 = vunpack.c.l.b16 %v2429
        %v2469 = vunpack.c.l.b16 %v2430
        %v2470 = vunpack.c.l.b16 %v2431
        %v2471 = vunpack.c.l.b16 %v2432
        %v2472 = vunpack.c.l.b16 %v2433
        %v2473 = vunpack.c.l.b16 %v2434
        %v2474 = vunpack.c.l.b16 %v2435
        %v2475 = vunpack.c.l.b16 %v2436
        %v2476 = vunpack.c.l.b16 %v2437
        %v2477 = vunpack.c.l.b16 %v2438
        %v2478 = vunpack.c.l.b16 %v2439
        %v2479 = vunpack.c.l.b16 %v2440
        %v2480 = vunpack.c.l.b16 %v2441
        %v2481 = vunpack.c.l.b16 %v2442
        %v2482 = vunpack.c.l.b16 %v2443
        %v2483 = vpack.c.b16 %v2468, %v2467
        %v2484 = vpack.c.b16 %v2470, %v2469
        %v2485 = vpack.c.b16 %v2472, %v2471
        %v2486 = vpack.c.b16 %v2474, %v2473
        %v2487 = vpack.c.b16 %v2476, %v2475
        %v2488 = vpack.c.b16 %v2478, %v2477
        %v2489 = vpack.c.b16 %v2480, %v2479
        %v2490 = vpack.c.b16 %v2482, %v2481
        %2499 = vmatprep.subr.bf16.mxu0 0
        %2500 = vmatpush1.bf16.msra.mxu0 %v2483
        %2501 = vmatprep.subr.bf16.mxu0 0
        %2502 = vmatpush1.bf16.msra.mxu0 %v2484
        %2503 = vmatprep.subr.bf16.mxu0 0
        %2504 = vmatpush1.bf16.msra.mxu0 %v2485
        %2505 = vmatprep.subr.bf16.mxu0 0
        %2506 = vmatpush1.bf16.msra.mxu0 %v2486
        %2507 = vmatprep.subr.bf16.mxu0 0
        %2508 = vmatpush1.bf16.msra.mxu0 %v2487
        %2509 = vmatprep.subr.bf16.mxu0 0
        %2510 = vmatpush1.bf16.msra.mxu0 %v2488
        %2511 = vmatprep.subr.bf16.mxu0 0
        %2512 = vmatpush1.bf16.msra.mxu0 %v2489
        %2513 = vmatprep.subr.bf16.mxu0 0
        %2514 = vmatpush1.bf16.msra.mxu0 %v2490
        %2515 = vmatprep.subr.bf16.mxu0 0
        %2516 = vmatpush1.bf16.msra.mxu0 0
        %2517 = vmatprep.subr.bf16.mxu0 0
        %2518 = vmatpush1.bf16.msra.mxu0 0
        %2519 = vmatprep.subr.bf16.mxu0 0
        %2520 = vmatpush1.bf16.msra.mxu0 0
        %2521 = vmatprep.subr.bf16.mxu0 0
        %2522 = vmatpush1.bf16.msra.mxu0 0
        %2523 = vmatprep.subr.bf16.mxu0 0
        %2524 = vmatpush1.bf16.msra.mxu0 0
        %2525 = vmatprep.subr.bf16.mxu0 0
        %2526 = vmatpush1.bf16.msra.mxu0 0
        %2527 = vmatprep.subr.bf16.mxu0 0
        %2528 = vmatpush1.bf16.msra.mxu0 0
        %2529 = vmatprep.subr.bf16.mxu0 0
        %2530 = vmatpush1.bf16.msra.mxu0 0
        %2531 = vmatprep.mubr.bf16.mxu0 0
        %2532 = vmatmul.mubr.bf16.gmra.mrb[0].mxu0 %v2424
        %v2533 = vpop.f32.mrb[0].mxu0
        %v2534 = vadd.f32 %v2449, %v2533
        %v2535 = vpop.f32.mrb[0].mxu0
        %v2536 = vpop.f32.mrb[0].mxu0
        %v2537 = vpop.f32.mrb[0].mxu0
        %2538 = vdwg.mxu0
        %v2539 = vld [vmem:[#allocation17] sm:$0xf]
        %v2540 = vld [vmem:[#allocation17 + $0x4] sm:$0xf]
        %v2541 = vld [vmem:[#allocation17 + $0x8] sm:$0xf]
        %v2542 = vld [vmem:[#allocation17 + $0xc] sm:$0xf]
        %v2543 = vld [vmem:[#allocation17 + $0x10] sm:$0xf]
        %v2544 = vld [vmem:[#allocation17 + $0x14] sm:$0xf]
        %v2545 = vld [vmem:[#allocation17 + $0x18] sm:$0xf]
        %v2546 = vld [vmem:[#allocation17 + $0x1c] sm:$0xf]
        %v2547 = vld [vmem:[#allocation17 + $0x20] sm:$0xf]
        %v2548 = vld [vmem:[#allocation17 + $0x24] sm:$0xf]
        %v2549 = vld [vmem:[#allocation17 + $0x28] sm:$0xf]
        %v2550 = vld [vmem:[#allocation17 + $0x2c] sm:$0xf]
        %v2551 = vld [vmem:[#allocation17 + $0x30] sm:$0xf]
        %v2552 = vld [vmem:[#allocation17 + $0x34] sm:$0xf]
        %v2553 = vld [vmem:[#allocation17 + $0x38] sm:$0xf]
        %v2554 = vld [vmem:[#allocation17 + $0x3c] sm:$0xf]
        %v2555 = vld [vmem:[%s49] sm:$0x1]
        %v2557 = vlaneseq
        %v2558 = vshrl.u32 %v2557, 7
        %v2559 = vsub.s32 0, %v2558
        %v2560 = vrot.slane %v2555, %v2559
        %v2578 = vunpack.c.l.b16 %v2539
        %v2579 = vunpack.c.l.b16 %v2540
        %v2580 = vunpack.c.l.b16 %v2541
        %v2581 = vunpack.c.l.b16 %v2542
        %v2582 = vunpack.c.l.b16 %v2543
        %v2583 = vunpack.c.l.b16 %v2544
        %v2584 = vunpack.c.l.b16 %v2545
        %v2585 = vunpack.c.l.b16 %v2546
        %v2586 = vunpack.c.l.b16 %v2547
        %v2587 = vunpack.c.l.b16 %v2548
        %v2588 = vunpack.c.l.b16 %v2549
        %v2589 = vunpack.c.l.b16 %v2550
        %v2590 = vunpack.c.l.b16 %v2551
        %v2591 = vunpack.c.l.b16 %v2552
        %v2592 = vunpack.c.l.b16 %v2553
        %v2593 = vunpack.c.l.b16 %v2554
        %v2594 = vpack.c.b16 %v2579, %v2578
        %v2595 = vpack.c.b16 %v2581, %v2580
        %v2596 = vpack.c.b16 %v2583, %v2582
        %v2597 = vpack.c.b16 %v2585, %v2584
        %v2598 = vpack.c.b16 %v2587, %v2586
        %v2599 = vpack.c.b16 %v2589, %v2588
        %v2600 = vpack.c.b16 %v2591, %v2590
        %v2601 = vpack.c.b16 %v2593, %v2592
        %2610 = vmatprep.subr.bf16.mxu0 0
        %2611 = vmatpush1.bf16.msra.mxu0 %v2594
        %2612 = vmatprep.subr.bf16.mxu0 0
        %2613 = vmatpush1.bf16.msra.mxu0 %v2595
        %2614 = vmatprep.subr.bf16.mxu0 0
        %2615 = vmatpush1.bf16.msra.mxu0 %v2596
        %2616 = vmatprep.subr.bf16.mxu0 0
        %2617 = vmatpush1.bf16.msra.mxu0 %v2597
        %2618 = vmatprep.subr.bf16.mxu0 0
        %2619 = vmatpush1.bf16.msra.mxu0 %v2598
        %2620 = vmatprep.subr.bf16.mxu0 0
        %2621 = vmatpush1.bf16.msra.mxu0 %v2599
        %2622 = vmatprep.subr.bf16.mxu0 0
        %2623 = vmatpush1.bf16.msra.mxu0 %v2600
        %2624 = vmatprep.subr.bf16.mxu0 0
        %2625 = vmatpush1.bf16.msra.mxu0 %v2601
        %2626 = vmatprep.subr.bf16.mxu0 0
        %2627 = vmatpush1.bf16.msra.mxu0 0
        %2628 = vmatprep.subr.bf16.mxu0 0
        %2629 = vmatpush1.bf16.msra.mxu0 0
        %2630 = vmatprep.subr.bf16.mxu0 0
        %2631 = vmatpush1.bf16.msra.mxu0 0
        %2632 = vmatprep.subr.bf16.mxu0 0
        %2633 = vmatpush1.bf16.msra.mxu0 0
        %2634 = vmatprep.subr.bf16.mxu0 0
        %2635 = vmatpush1.bf16.msra.mxu0 0
        %2636 = vmatprep.subr.bf16.mxu0 0
        %2637 = vmatpush1.bf16.msra.mxu0 0
        %2638 = vmatprep.subr.bf16.mxu0 0
        %2639 = vmatpush1.bf16.msra.mxu0 0
        %2640 = vmatprep.subr.bf16.mxu0 0
        %2641 = vmatpush1.bf16.msra.mxu0 0
        %2642 = vmatprep.mubr.bf16.mxu0 0
        %2643 = vmatmul.mubr.bf16.gmra.mrb[0].mxu0 %v2427
        %v2644 = vpop.f32.mrb[0].mxu0
        %v2645 = vadd.f32 %v2560, %v2644
        %v2646 = vpop.f32.mrb[0].mxu0
        %v2647 = vpop.f32.mrb[0].mxu0
        %v2648 = vpop.f32.mrb[0].mxu0
        %2649 = vdwg.mxu0
        %v2650 = vld [vmem:[#allocation19] sm:$0xf]
        %v2651 = vld [vmem:[#allocation19 + $0x4] sm:$0xf]
        %v2652 = vld [vmem:[#allocation19 + $0x8] sm:$0xf]
        %v2653 = vld [vmem:[#allocation19 + $0xc] sm:$0xf]
        %v2654 = vld [vmem:[#allocation19 + $0x10] sm:$0xf]
        %v2655 = vld [vmem:[#allocation19 + $0x14] sm:$0xf]
        %v2656 = vld [vmem:[#allocation19 + $0x18] sm:$0xf]
        %v2657 = vld [vmem:[#allocation19 + $0x1c] sm:$0xf]
        %v2658 = vld [vmem:[#allocation19 + $0x20] sm:$0xf]
        %v2659 = vld [vmem:[#allocation19 + $0x24] sm:$0xf]
        %v2660 = vld [vmem:[#allocation19 + $0x28] sm:$0xf]
        %v2661 = vld [vmem:[#allocation19 + $0x2c] sm:$0xf]
        %v2662 = vld [vmem:[#allocation19 + $0x30] sm:$0xf]
        %v2663 = vld [vmem:[#allocation19 + $0x34] sm:$0xf]
        %v2664 = vld [vmem:[#allocation19 + $0x38] sm:$0xf]
        %v2665 = vld [vmem:[#allocation19 + $0x3c] sm:$0xf]
        %v2666 = vld [vmem:[%s53] sm:$0x1]
        %v2668 = vlaneseq
        %v2669 = vshrl.u32 %v2668, 7
        %v2670 = vsub.s32 0, %v2669
        %v2671 = vrot.slane %v2666, %v2670
        %v2689 = vunpack.c.l.b16 %v2650
        %v2690 = vunpack.c.l.b16 %v2651
        %v2691 = vunpack.c.l.b16 %v2652
        %v2692 = vunpack.c.l.b16 %v2653
        %v2693 = vunpack.c.l.b16 %v2654
        %v2694 = vunpack.c.l.b16 %v2655
        %v2695 = vunpack.c.l.b16 %v2656
        %v2696 = vunpack.c.l.b16 %v2657
        %v2697 = vunpack.c.l.b16 %v2658
        %v2698 = vunpack.c.l.b16 %v2659
        %v2699 = vunpack.c.l.b16 %v2660
        %v2700 = vunpack.c.l.b16 %v2661
        %v2701 = vunpack.c.l.b16 %v2662
        %v2702 = vunpack.c.l.b16 %v2663
        %v2703 = vunpack.c.l.b16 %v2664
        %v2704 = vunpack.c.l.b16 %v2665
        %v2705 = vpack.c.b16 %v2690, %v2689
        %v2706 = vpack.c.b16 %v2692, %v2691
        %v2707 = vpack.c.b16 %v2694, %v2693
        %v2708 = vpack.c.b16 %v2696, %v2695
        %v2709 = vpack.c.b16 %v2698, %v2697
        %v2710 = vpack.c.b16 %v2700, %v2699
        %v2711 = vpack.c.b16 %v2702, %v2701
        %v2712 = vpack.c.b16 %v2704, %v2703
        %2721 = vmatprep.subr.bf16.mxu0 0
        %2722 = vmatpush1.bf16.msra.mxu0 %v2705
        %2723 = vmatprep.subr.bf16.mxu0 0
        %2724 = vmatpush1.bf16.msra.mxu0 %v2706
        %2725 = vmatprep.subr.bf16.mxu0 0
        %2726 = vmatpush1.bf16.msra.mxu0 %v2707
        %2727 = vmatprep.subr.bf16.mxu0 0
        %2728 = vmatpush1.bf16.msra.mxu0 %v2708
        %2729 = vmatprep.subr.bf16.mxu0 0
        %2730 = vmatpush1.bf16.msra.mxu0 %v2709
        %2731 = vmatprep.subr.bf16.mxu0 0
        %2732 = vmatpush1.bf16.msra.mxu0 %v2710
        %2733 = vmatprep.subr.bf16.mxu0 0
        %2734 = vmatpush1.bf16.msra.mxu0 %v2711
        %2735 = vmatprep.subr.bf16.mxu0 0
        %2736 = vmatpush1.bf16.msra.mxu0 %v2712
        %2737 = vmatprep.subr.bf16.mxu0 0
        %2738 = vmatpush1.bf16.msra.mxu0 0
        %2739 = vmatprep.subr.bf16.mxu0 0
        %2740 = vmatpush1.bf16.msra.mxu0 0
        %2741 = vmatprep.subr.bf16.mxu0 0
        %2742 = vmatpush1.bf16.msra.mxu0 0
        %2743 = vmatprep.subr.bf16.mxu0 0
        %2744 = vmatpush1.bf16.msra.mxu0 0
        %2745 = vmatprep.subr.bf16.mxu0 0
        %2746 = vmatpush1.bf16.msra.mxu0 0
        %2747 = vmatprep.subr.bf16.mxu0 0
        %2748 = vmatpush1.bf16.msra.mxu0 0
        %2749 = vmatprep.subr.bf16.mxu0 0
        %2750 = vmatpush1.bf16.msra.mxu0 0
        %2751 = vmatprep.subr.bf16.mxu0 0
        %2752 = vmatpush1.bf16.msra.mxu0 0
        %2753 = vmatprep.mubr.bf16.mxu0 0
        %2754 = vmatmul.mubr.bf16.gmra.mrb[0].mxu0 %v2427
        %v2755 = vpop.f32.mrb[0].mxu0
        %v2756 = vadd.f32 %v2671, %v2755
        %v2757 = vpop.f32.mrb[0].mxu0
        %v2758 = vpop.f32.mrb[0].mxu0
        %v2759 = vpop.f32.mrb[0].mxu0
        %2760 = vdwg.mxu0
        %v2761 = vpack.c.bf16 %v2534, %v2534
        %v2762 = vpack.c.bf16 %v2645, %v2645
        %v2763 = vpack.c.bf16 %v2756, %v2756
        %v2765 = vsel %vm1582, %v2761, 0
        %v2768 = vsel %vm1582, %v2762, 0
        %2770 = vmatprep.subr.bf16.mxu0 0
        %2771 = vmatpush1.bf16.xpose.msra.mxu0 %v2768
        %2772 = vmatprep.subr.bf16.mxu0 0
        %2773 = vmatpush1.bf16.xpose.msra.mxu0 0
        %2774 = vmatprep.subr.bf16.mxu0 0
        %2775 = vmatpush1.bf16.xpose.msra.mxu0 0
        %2776 = vmatprep.subr.bf16.mxu0 0
        %2777 = vmatpush1.bf16.xpose.msra.mxu0 0
        %2778 = vmatprep.subr.bf16.mxu0 0
        %2779 = vmatpush1.bf16.xpose.msra.mxu0 0
        %2780 = vmatprep.subr.bf16.mxu0 0
        %2781 = vmatpush1.bf16.xpose.msra.mxu0 0
        %2782 = vmatprep.subr.bf16.mxu0 0
        %2783 = vmatpush1.bf16.xpose.msra.mxu0 0
        %2784 = vmatprep.subr.bf16.mxu0 0
        %2785 = vmatpush1.bf16.xpose.msra.mxu0 0
        %2786 = vmatprep.subr.bf16.mxu0 0
        %2787 = vmatpush1.bf16.xpose.msra.mxu0 0
        %2788 = vmatprep.subr.bf16.mxu0 0
        %2789 = vmatpush1.bf16.xpose.msra.mxu0 0
        %2790 = vmatprep.subr.bf16.mxu0 0
        %2791 = vmatpush1.bf16.xpose.msra.mxu0 0
        %2792 = vmatprep.subr.bf16.mxu0 0
        %2793 = vmatpush1.bf16.xpose.msra.mxu0 0
        %2794 = vmatprep.subr.bf16.mxu0 0
        %2795 = vmatpush1.bf16.xpose.msra.mxu0 0
        %2796 = vmatprep.subr.bf16.mxu0 0
        %2797 = vmatpush1.bf16.xpose.msra.mxu0 0
        %2798 = vmatprep.subr.bf16.mxu0 0
        %2799 = vmatpush1.bf16.xpose.msra.mxu0 0
        %2800 = vmatprep.subr.bf16.mxu0 0
        %2801 = vmatpush1.bf16.xpose.msra.mxu0 0
        %2802 = vmatprep.mubr.bf16.mxu0 0
        %2803 = vmatmul.mubr.bf16.gmra.mrb[0].mxu0 %v2765
        %v2804 = vpop.f32.mrb[0].mxu0
        %v2805 = vadd.f32 0.0, %v2804
        %v2806 = vpop.f32.mrb[0].mxu0
        %v2807 = vpop.f32.mrb[0].mxu0
        %v2808 = vpop.f32.mrb[0].mxu0
        %2809 = vdwg.mxu0
        %v2810 = vsel %vm1629, %v2805, -inf
        %2811 = vmax.xlane.f32.xlu0 %v2810
        %v2812 = vpop.xlane.xlu0 %2811
        %v2813 = vsub.f32 %v2805, %v2812
        %v2814 = vmul.f32 %v2813, 1.442695
        %v2815 = vpow.pop %v2814
        %v2816 = vsel %vm1629, %v2815, 0.0
        %2817 = vadd.xlane.f32.xlu0 %v2816
        %v2818 = vpop.xlane.xlu0 %2817
        %v2819 = vrcp.pop %v2818
        %v2820 = vmul.f32 %v2815, %v2819
        %v2821 = vpack.c.bf16 %v2820, %v2820
        %v2823 = vsel %vm1629, %v2821, 0
        %v2826 = vsel %vm1645, %v2763, 0
        %2828 = vmatprep.subr.bf16.mxu0 0
        %2829 = vmatpush1.bf16.msra.mxu0 %v2826
        %2830 = vmatprep.subr.bf16.mxu0 0
        %2831 = vmatpush1.bf16.msra.mxu0 0
        %2832 = vmatprep.subr.bf16.mxu0 0
        %2833 = vmatpush1.bf16.msra.mxu0 0
        %2834 = vmatprep.subr.bf16.mxu0 0
        %2835 = vmatpush1.bf16.msra.mxu0 0
        %2836 = vmatprep.subr.bf16.mxu0 0
        %2837 = vmatpush1.bf16.msra.mxu0 0
        %2838 = vmatprep.subr.bf16.mxu0 0
        %2839 = vmatpush1.bf16.msra.mxu0 0
        %2840 = vmatprep.subr.bf16.mxu0 0
        %2841 = vmatpush1.bf16.msra.mxu0 0
        %2842 = vmatprep.subr.bf16.mxu0 0
        %2843 = vmatpush1.bf16.msra.mxu0 0
        %2844 = vmatprep.subr.bf16.mxu0 0
        %2845 = vmatpush1.bf16.msra.mxu0 0
        %2846 = vmatprep.subr.bf16.mxu0 0
        %2847 = vmatpush1.bf16.msra.mxu0 0
        %2848 = vmatprep.subr.bf16.mxu0 0
        %2849 = vmatpush1.bf16.msra.mxu0 0
        %2850 = vmatprep.subr.bf16.mxu0 0
        %2851 = vmatpush1.bf16.msra.mxu0 0
        %2852 = vmatprep.subr.bf16.mxu0 0
        %2853 = vmatpush1.bf16.msra.mxu0 0
        %2854 = vmatprep.subr.bf16.mxu0 0
        %2855 = vmatpush1.bf16.msra.mxu0 0
        %2856 = vmatprep.subr.bf16.mxu0 0
        %2857 = vmatpush1.bf16.msra.mxu0 0
        %2858 = vmatprep.subr.bf16.mxu0 0
        %2859 = vmatpush1.bf16.msra.mxu0 0
        %2860 = vmatprep.mubr.bf16.mxu0 0
        %2861 = vmatmul.mubr.bf16.gmra.mrb[0].mxu0 %v2823
        %v2862 = vpop.f32.mrb[0].mxu0
        %v2863 = vadd.f32 0.0, %v2862
        %v2864 = vpop.f32.mrb[0].mxu0
        %v2865 = vpop.f32.mrb[0].mxu0
        %v2866 = vpop.f32.mrb[0].mxu0
        %2867 = vdwg.mxu0
        %2869 = vrot.lane.b32.xlu0 %v2761, 96
        %v2870 = vpop.permute.xlu0 %2869
        %2872 = vrot.lane.b32.xlu0 %v2762, 96
        %v2873 = vpop.permute.xlu0 %2872
        %v2875 = vsel %vm1582, %v2870, 0
        %v2878 = vsel %vm1582, %v2873, 0
        %2880 = vmatprep.subr.bf16.mxu0 0
        %2881 = vmatpush1.bf16.xpose.msra.mxu0 %v2878
        %2882 = vmatprep.subr.bf16.mxu0 0
        %2883 = vmatpush1.bf16.xpose.msra.mxu0 0
        %2884 = vmatprep.subr.bf16.mxu0 0
        %2885 = vmatpush1.bf16.xpose.msra.mxu0 0
        %2886 = vmatprep.subr.bf16.mxu0 0
        %2887 = vmatpush1.bf16.xpose.msra.mxu0 0
        %2888 = vmatprep.subr.bf16.mxu0 0
        %2889 = vmatpush1.bf16.xpose.msra.mxu0 0
        %2890 = vmatprep.subr.bf16.mxu0 0
        %2891 = vmatpush1.bf16.xpose.msra.mxu0 0
        %2892 = vmatprep.subr.bf16.mxu0 0
        %2893 = vmatpush1.bf16.xpose.msra.mxu0 0
        %2894 = vmatprep.subr.bf16.mxu0 0
        %2895 = vmatpush1.bf16.xpose.msra.mxu0 0
        %2896 = vmatprep.subr.bf16.mxu0 0
        %2897 = vmatpush1.bf16.xpose.msra.mxu0 0
        %2898 = vmatprep.subr.bf16.mxu0 0
        %2899 = vmatpush1.bf16.xpose.msra.mxu0 0
        %2900 = vmatprep.subr.bf16.mxu0 0
        %2901 = vmatpush1.bf16.xpose.msra.mxu0 0
        %2902 = vmatprep.subr.bf16.mxu0 0
        %2903 = vmatpush1.bf16.xpose.msra.mxu0 0
        %2904 = vmatprep.subr.bf16.mxu0 0
        %2905 = vmatpush1.bf16.xpose.msra.mxu0 0
        %2906 = vmatprep.subr.bf16.mxu0 0
        %2907 = vmatpush1.bf16.xpose.msra.mxu0 0
        %2908 = vmatprep.subr.bf16.mxu0 0
        %2909 = vmatpush1.bf16.xpose.msra.mxu0 0
        %2910 = vmatprep.subr.bf16.mxu0 0
        %2911 = vmatpush1.bf16.xpose.msra.mxu0 0
        %2912 = vmatprep.mubr.bf16.mxu0 0
        %2913 = vmatmul.mubr.bf16.gmra.mrb[0].mxu0 %v2875
        %v2914 = vpop.f32.mrb[0].mxu0
        %v2915 = vadd.f32 0.0, %v2914
        %v2916 = vpop.f32.mrb[0].mxu0
        %v2917 = vpop.f32.mrb[0].mxu0
        %v2918 = vpop.f32.mrb[0].mxu0
        %2919 = vdwg.mxu0
        %v2920 = vsel %vm1629, %v2915, -inf
        %2921 = vmax.xlane.f32.xlu0 %v2920
        %v2922 = vpop.xlane.xlu0 %2921
        %v2923 = vsub.f32 %v2915, %v2922
        %v2924 = vmul.f32 %v2923, 1.442695
        %v2925 = vpow.pop %v2924
        %v2926 = vsel %vm1629, %v2925, 0.0
        %2927 = vadd.xlane.f32.xlu0 %v2926
        %v2928 = vpop.xlane.xlu0 %2927
        %v2929 = vrcp.pop %v2928
        %v2930 = vmul.f32 %v2925, %v2929
        %v2931 = vpack.c.bf16 %v2930, %v2930
        %2933 = vrot.lane.b32.xlu0 %v2763, 96
        %v2934 = vpop.permute.xlu0 %2933
        %v2936 = vsel %vm1629, %v2931, 0
        %v2939 = vsel %vm1645, %v2934, 0
        %2941 = vmatprep.subr.bf16.mxu0 0
        %2942 = vmatpush1.bf16.msra.mxu0 %v2939
        %2943 = vmatprep.subr.bf16.mxu0 0
        %2944 = vmatpush1.bf16.msra.mxu0 0
        %2945 = vmatprep.subr.bf16.mxu0 0
        %2946 = vmatpush1.bf16.msra.mxu0 0
        %2947 = vmatprep.subr.bf16.mxu0 0
        %2948 = vmatpush1.bf16.msra.mxu0 0
        %2949 = vmatprep.subr.bf16.mxu0 0
        %2950 = vmatpush1.bf16.msra.mxu0 0
        %2951 = vmatprep.subr.bf16.mxu0 0
        %2952 = vmatpush1.bf16.msra.mxu0 0
        %2953 = vmatprep.subr.bf16.mxu0 0
        %2954 = vmatpush1.bf16.msra.mxu0 0
        %2955 = vmatprep.subr.bf16.mxu0 0
        %2956 = vmatpush1.bf16.msra.mxu0 0
        %2957 = vmatprep.subr.bf16.mxu0 0
        %2958 = vmatpush1.bf16.msra.mxu0 0
        %2959 = vmatprep.subr.bf16.mxu0 0
        %2960 = vmatpush1.bf16.msra.mxu0 0
        %2961 = vmatprep.subr.bf16.mxu0 0
        %2962 = vmatpush1.bf16.msra.mxu0 0
        %2963 = vmatprep.subr.bf16.mxu0 0
        %2964 = vmatpush1.bf16.msra.mxu0 0
        %2965 = vmatprep.subr.bf16.mxu0 0
        %2966 = vmatpush1.bf16.msra.mxu0 0
        %2967 = vmatprep.subr.bf16.mxu0 0
        %2968 = vmatpush1.bf16.msra.mxu0 0
        %2969 = vmatprep.subr.bf16.mxu0 0
        %2970 = vmatpush1.bf16.msra.mxu0 0
        %2971 = vmatprep.subr.bf16.mxu0 0
        %2972 = vmatpush1.bf16.msra.mxu0 0
        %2973 = vmatprep.mubr.bf16.mxu0 0
        %2974 = vmatmul.mubr.bf16.gmra.mrb[0].mxu0 %v2936
        %v2975 = vpop.f32.mrb[0].mxu0
        %v2976 = vadd.f32 0.0, %v2975
        %v2977 = vpop.f32.mrb[0].mxu0
        %v2978 = vpop.f32.mrb[0].mxu0
        %v2979 = vpop.f32.mrb[0].mxu0
        %2980 = vdwg.mxu0
        %2981 = vrot.lane.b32.xlu0 %v2761, 64
        %v2982 = vpop.permute.xlu0 %2981
        %2983 = vrot.lane.b32.xlu0 %v2762, 64
        %v2984 = vpop.permute.xlu0 %2983
        %v2986 = vsel %vm1582, %v2982, 0
        %v2989 = vsel %vm1582, %v2984, 0
        %2991 = vmatprep.subr.bf16.mxu0 0
        %2992 = vmatpush1.bf16.xpose.msra.mxu0 %v2989
        %2993 = vmatprep.subr.bf16.mxu0 0
        %2994 = vmatpush1.bf16.xpose.msra.mxu0 0
        %2995 = vmatprep.subr.bf16.mxu0 0
        %2996 = vmatpush1.bf16.xpose.msra.mxu0 0
        %2997 = vmatprep.subr.bf16.mxu0 0
        %2998 = vmatpush1.bf16.xpose.msra.mxu0 0
        %2999 = vmatprep.subr.bf16.mxu0 0
        %3000 = vmatpush1.bf16.xpose.msra.mxu0 0
        %3001 = vmatprep.subr.bf16.mxu0 0
        %3002 = vmatpush1.bf16.xpose.msra.mxu0 0
        %3003 = vmatprep.subr.bf16.mxu0 0
        %3004 = vmatpush1.bf16.xpose.msra.mxu0 0
        %3005 = vmatprep.subr.bf16.mxu0 0
        %3006 = vmatpush1.bf16.xpose.msra.mxu0 0
        %3007 = vmatprep.subr.bf16.mxu0 0
        %3008 = vmatpush1.bf16.xpose.msra.mxu0 0
        %3009 = vmatprep.subr.bf16.mxu0 0
        %3010 = vmatpush1.bf16.xpose.msra.mxu0 0
        %3011 = vmatprep.subr.bf16.mxu0 0
        %3012 = vmatpush1.bf16.xpose.msra.mxu0 0
        %3013 = vmatprep.subr.bf16.mxu0 0
        %3014 = vmatpush1.bf16.xpose.msra.mxu0 0
        %3015 = vmatprep.subr.bf16.mxu0 0
        %3016 = vmatpush1.bf16.xpose.msra.mxu0 0
        %3017 = vmatprep.subr.bf16.mxu0 0
        %3018 = vmatpush1.bf16.xpose.msra.mxu0 0
        %3019 = vmatprep.subr.bf16.mxu0 0
        %3020 = vmatpush1.bf16.xpose.msra.mxu0 0
        %3021 = vmatprep.subr.bf16.mxu0 0
        %3022 = vmatpush1.bf16.xpose.msra.mxu0 0
        %3023 = vmatprep.mubr.bf16.mxu0 0
        %3024 = vmatmul.mubr.bf16.gmra.mrb[0].mxu0 %v2986
        %v3025 = vpop.f32.mrb[0].mxu0
        %v3026 = vadd.f32 0.0, %v3025
        %v3027 = vpop.f32.mrb[0].mxu0
        %v3028 = vpop.f32.mrb[0].mxu0
        %v3029 = vpop.f32.mrb[0].mxu0
        %3030 = vdwg.mxu0
        %v3031 = vsel %vm1629, %v3026, -inf
        %3032 = vmax.xlane.f32.xlu0 %v3031
        %v3033 = vpop.xlane.xlu0 %3032
        %v3034 = vsub.f32 %v3026, %v3033
        %v3035 = vmul.f32 %v3034, 1.442695
        %v3036 = vpow.pop %v3035
        %v3037 = vsel %vm1629, %v3036, 0.0
        %3038 = vadd.xlane.f32.xlu0 %v3037
        %v3039 = vpop.xlane.xlu0 %3038
        %v3040 = vrcp.pop %v3039
        %v3041 = vmul.f32 %v3036, %v3040
        %v3042 = vpack.c.bf16 %v3041, %v3041
        %3043 = vrot.lane.b32.xlu0 %v2763, 64
        %v3044 = vpop.permute.xlu0 %3043
        %v3046 = vsel %vm1629, %v3042, 0
        %v3049 = vsel %vm1645, %v3044, 0
        %3051 = vmatprep.subr.bf16.mxu0 0
        %3052 = vmatpush1.bf16.msra.mxu0 %v3049
        %3053 = vmatprep.subr.bf16.mxu0 0
        %3054 = vmatpush1.bf16.msra.mxu0 0
        %3055 = vmatprep.subr.bf16.mxu0 0
        %3056 = vmatpush1.bf16.msra.mxu0 0
        %3057 = vmatprep.subr.bf16.mxu0 0
        %3058 = vmatpush1.bf16.msra.mxu0 0
        %3059 = vmatprep.subr.bf16.mxu0 0
        %3060 = vmatpush1.bf16.msra.mxu0 0
        %3061 = vmatprep.subr.bf16.mxu0 0
        %3062 = vmatpush1.bf16.msra.mxu0 0
        %3063 = vmatprep.subr.bf16.mxu0 0
        %3064 = vmatpush1.bf16.msra.mxu0 0
        %3065 = vmatprep.subr.bf16.mxu0 0
        %3066 = vmatpush1.bf16.msra.mxu0 0
        %3067 = vmatprep.subr.bf16.mxu0 0
        %3068 = vmatpush1.bf16.msra.mxu0 0
        %3069 = vmatprep.subr.bf16.mxu0 0
        %3070 = vmatpush1.bf16.msra.mxu0 0
        %3071 = vmatprep.subr.bf16.mxu0 0
        %3072 = vmatpush1.bf16.msra.mxu0 0
        %3073 = vmatprep.subr.bf16.mxu0 0
        %3074 = vmatpush1.bf16.msra.mxu0 0
        %3075 = vmatprep.subr.bf16.mxu0 0
        %3076 = vmatpush1.bf16.msra.mxu0 0
        %3077 = vmatprep.subr.bf16.mxu0 0
        %3078 = vmatpush1.bf16.msra.mxu0 0
        %3079 = vmatprep.subr.bf16.mxu0 0
        %3080 = vmatpush1.bf16.msra.mxu0 0
        %3081 = vmatprep.subr.bf16.mxu0 0
        %3082 = vmatpush1.bf16.msra.mxu0 0
        %3083 = vmatprep.mubr.bf16.mxu0 0
        %3084 = vmatmul.mubr.bf16.gmra.mrb[0].mxu0 %v3046
        %v3085 = vpop.f32.mrb[0].mxu0
        %v3086 = vadd.f32 0.0, %v3085
        %v3087 = vpop.f32.mrb[0].mxu0
        %v3088 = vpop.f32.mrb[0].mxu0
        %v3089 = vpop.f32.mrb[0].mxu0
        %3090 = vdwg.mxu0
        %3091 = vrot.lane.b32.xlu0 %v2761, 32
        %v3092 = vpop.permute.xlu0 %3091
        %3093 = vrot.lane.b32.xlu0 %v2762, 32
        %v3094 = vpop.permute.xlu0 %3093
        %v3096 = vsel %vm1582, %v3092, 0
        %v3099 = vsel %vm1582, %v3094, 0
        %3101 = vmatprep.subr.bf16.mxu0 0
        %3102 = vmatpush1.bf16.xpose.msra.mxu0 %v3099
        %3103 = vmatprep.subr.bf16.mxu0 0
        %3104 = vmatpush1.bf16.xpose.msra.mxu0 0
        %3105 = vmatprep.subr.bf16.mxu0 0
        %3106 = vmatpush1.bf16.xpose.msra.mxu0 0
        %3107 = vmatprep.subr.bf16.mxu0 0
        %3108 = vmatpush1.bf16.xpose.msra.mxu0 0
        %3109 = vmatprep.subr.bf16.mxu0 0
        %3110 = vmatpush1.bf16.xpose.msra.mxu0 0
        %3111 = vmatprep.subr.bf16.mxu0 0
        %3112 = vmatpush1.bf16.xpose.msra.mxu0 0
        %3113 = vmatprep.subr.bf16.mxu0 0
        %3114 = vmatpush1.bf16.xpose.msra.mxu0 0
        %3115 = vmatprep.subr.bf16.mxu0 0
        %3116 = vmatpush1.bf16.xpose.msra.mxu0 0
        %3117 = vmatprep.subr.bf16.mxu0 0
        %3118 = vmatpush1.bf16.xpose.msra.mxu0 0
        %3119 = vmatprep.subr.bf16.mxu0 0
        %3120 = vmatpush1.bf16.xpose.msra.mxu0 0
        %3121 = vmatprep.subr.bf16.mxu0 0
        %3122 = vmatpush1.bf16.xpose.msra.mxu0 0
        %3123 = vmatprep.subr.bf16.mxu0 0
        %3124 = vmatpush1.bf16.xpose.msra.mxu0 0
        %3125 = vmatprep.subr.bf16.mxu0 0
        %3126 = vmatpush1.bf16.xpose.msra.mxu0 0
        %3127 = vmatprep.subr.bf16.mxu0 0
        %3128 = vmatpush1.bf16.xpose.msra.mxu0 0
        %3129 = vmatprep.subr.bf16.mxu0 0
        %3130 = vmatpush1.bf16.xpose.msra.mxu0 0
        %3131 = vmatprep.subr.bf16.mxu0 0
        %3132 = vmatpush1.bf16.xpose.msra.mxu0 0
        %3133 = vmatprep.mubr.bf16.mxu0 0
        %3134 = vmatmul.mubr.bf16.gmra.mrb[0].mxu0 %v3096
        %v3135 = vpop.f32.mrb[0].mxu0
        %v3136 = vadd.f32 0.0, %v3135
        %v3137 = vpop.f32.mrb[0].mxu0
        %v3138 = vpop.f32.mrb[0].mxu0
        %v3139 = vpop.f32.mrb[0].mxu0
        %3140 = vdwg.mxu0
        %v3141 = vsel %vm1629, %v3136, -inf
        %3142 = vmax.xlane.f32.xlu0 %v3141
        %v3143 = vpop.xlane.xlu0 %3142
        %v3144 = vsub.f32 %v3136, %v3143
        %v3145 = vmul.f32 %v3144, 1.442695
        %v3146 = vpow.pop %v3145
        %v3147 = vsel %vm1629, %v3146, 0.0
        %3148 = vadd.xlane.f32.xlu0 %v3147
        %v3149 = vpop.xlane.xlu0 %3148
        %v3150 = vrcp.pop %v3149
        %v3151 = vmul.f32 %v3146, %v3150
        %v3152 = vpack.c.bf16 %v3151, %v3151
        %3153 = vrot.lane.b32.xlu0 %v2763, 32
        %v3154 = vpop.permute.xlu0 %3153
        %v3156 = vsel %vm1629, %v3152, 0
        %v3159 = vsel %vm1645, %v3154, 0
        %3161 = vmatprep.subr.bf16.mxu0 0
        %3162 = vmatpush1.bf16.msra.mxu0 %v3159
        %3163 = vmatprep.subr.bf16.mxu0 0
        %3164 = vmatpush1.bf16.msra.mxu0 0
        %3165 = vmatprep.subr.bf16.mxu0 0
        %3166 = vmatpush1.bf16.msra.mxu0 0
        %3167 = vmatprep.subr.bf16.mxu0 0
        %3168 = vmatpush1.bf16.msra.mxu0 0
        %3169 = vmatprep.subr.bf16.mxu0 0
        %3170 = vmatpush1.bf16.msra.mxu0 0
        %3171 = vmatprep.subr.bf16.mxu0 0
        %3172 = vmatpush1.bf16.msra.mxu0 0
        %3173 = vmatprep.subr.bf16.mxu0 0
        %3174 = vmatpush1.bf16.msra.mxu0 0
        %3175 = vmatprep.subr.bf16.mxu0 0
        %3176 = vmatpush1.bf16.msra.mxu0 0
        %3177 = vmatprep.subr.bf16.mxu0 0
        %3178 = vmatpush1.bf16.msra.mxu0 0
        %3179 = vmatprep.subr.bf16.mxu0 0
        %3180 = vmatpush1.bf16.msra.mxu0 0
        %3181 = vmatprep.subr.bf16.mxu0 0
        %3182 = vmatpush1.bf16.msra.mxu0 0
        %3183 = vmatprep.subr.bf16.mxu0 0
        %3184 = vmatpush1.bf16.msra.mxu0 0
        %3185 = vmatprep.subr.bf16.mxu0 0
        %3186 = vmatpush1.bf16.msra.mxu0 0
        %3187 = vmatprep.subr.bf16.mxu0 0
        %3188 = vmatpush1.bf16.msra.mxu0 0
        %3189 = vmatprep.subr.bf16.mxu0 0
        %3190 = vmatpush1.bf16.msra.mxu0 0
        %3191 = vmatprep.subr.bf16.mxu0 0
        %3192 = vmatpush1.bf16.msra.mxu0 0
        %3193 = vmatprep.mubr.bf16.mxu0 0
        %3194 = vmatmul.mubr.bf16.gmra.mrb[0].mxu0 %v3156
        %v3195 = vpop.f32.mrb[0].mxu0
        %v3196 = vadd.f32 0.0, %v3195
        %v3197 = vpop.f32.mrb[0].mxu0
        %v3198 = vpop.f32.mrb[0].mxu0
        %v3199 = vpop.f32.mrb[0].mxu0
        %3200 = vdwg.mxu0
        %3202 = vrot.lane.b32.xlu0 %v2976, 32
        %v3203 = vpop.permute.xlu0 %3202
        %3206 = vrot.lane.b32.xlu0 %v3086, 64
        %v3207 = vpop.permute.xlu0 %3206
        %3210 = vrot.lane.b32.xlu0 %v3196, 96
        %v3211 = vpop.permute.xlu0 %3210
        %v3213 = vsel %vm1582, %v2863, %v3203
        %v3214 = vsel %vm2035, %v3213, %v3207
        %v3215 = vsel %vm2037, %v3214, %v3211
        %v3216 = vadd.f32 %v2396, %v3215
        %v3217 = vld [vmem:[%s39] sm:$0x1]
        %v3218 = vld [vmem:[#allocation16] sm:$0x1]
        %3219 = vadd.xlane.f32.xlu0 %v3216
        %v3220 = vpop.xlane.xlu0 %3219
        %v3221 = vmul.f32 %v3220, %v1194
        %v3222 = vsub.f32 %v3216, %v3221
        %v3223 = vmul.f32 %v3222, %v3222
        %3224 = vadd.xlane.f32.xlu0 %v3223
        %v3225 = vpop.xlane.xlu0 %3224
        %v3226 = vmul.f32 %v3225, %v1194
        %v3227 = vadd.f32 %v3226, 1e-05
        %v3228 = vrsqrt.pop %v3227
        %v3229 = vmul.f32 %v3222, %v3228
        %v3231 = vlaneseq
        %v3232 = vshrl.u32 %v3231, 7
        %v3233 = vsub.s32 0, %v3232
        %v3234 = vrot.slane %v3217, %v3233
        %v3236 = vmul.f32 %v3229, %v3234
        %v3238 = vlaneseq
        %v3239 = vshrl.u32 %v3238, 7
        %v3240 = vsub.s32 0, %v3239
        %v3241 = vrot.slane %v3218, %v3240
        %v3243 = vadd.f32 %v3236, %v3241
        %v3244 = vpack.c.bf16 %v3243, %v3243
        %v3245 = vld [vmem:[#allocation20] sm:$0xff]
        %v3246 = vld [vmem:[#allocation20 + $0x8] sm:$0xff]
        %v3247 = vld [vmem:[#allocation20 + $0x10] sm:$0xff]
        %v3248 = vld [vmem:[#allocation20 + $0x18] sm:$0xff]
        %v3249 = vld [vmem:[#allocation20 + $0x20] sm:$0xff]
        %v3250 = vld [vmem:[#allocation20 + $0x28] sm:$0xff]
        %v3251 = vld [vmem:[#allocation20 + $0x30] sm:$0xff]
        %v3252 = vld [vmem:[#allocation20 + $0x38] sm:$0xff]
        %v3253 = vld [vmem:[#allocation20 + $0x40] sm:$0xff]
        %v3254 = vld [vmem:[#allocation20 + $0x48] sm:$0xff]
        %v3255 = vld [vmem:[#allocation20 + $0x50] sm:$0xff]
        %v3256 = vld [vmem:[#allocation20 + $0x58] sm:$0xff]
        %v3257 = vld [vmem:[#allocation20 + $0x60] sm:$0xff]
        %v3258 = vld [vmem:[#allocation20 + $0x68] sm:$0xff]
        %v3259 = vld [vmem:[#allocation20 + $0x70] sm:$0xff]
        %v3260 = vld [vmem:[#allocation20 + $0x78] sm:$0xff]
        %v3261 = vld [vmem:[%s57] sm:$0x3]
        %v3263 = vlaneseq
        %v3264 = vshrl.u32 %v3263, 7
        %v3265 = vsub.s32 0, %v3264
        %v3266 = vrot.slane %v3261, %v3265
        %v3267 = vlaneseq
        %v3268 = vshrl.u32 %v3267, 7
        %v3269 = vsub.s32 1, %v3268
        %v3270 = vrot.slane %v3261, %v3269
        %v3289 = vunpack.c.l.b16 %v3245
        %v3290 = vunpack.c.h.b16 %v3245
        %v3291 = vunpack.c.l.b16 %v3246
        %v3292 = vunpack.c.h.b16 %v3246
        %v3293 = vunpack.c.l.b16 %v3247
        %v3294 = vunpack.c.h.b16 %v3247
        %v3295 = vunpack.c.l.b16 %v3248
        %v3296 = vunpack.c.h.b16 %v3248
        %v3297 = vunpack.c.l.b16 %v3249
        %v3298 = vunpack.c.h.b16 %v3249
        %v3299 = vunpack.c.l.b16 %v3250
        %v3300 = vunpack.c.h.b16 %v3250
        %v3301 = vunpack.c.l.b16 %v3251
        %v3302 = vunpack.c.h.b16 %v3251
        %v3303 = vunpack.c.l.b16 %v3252
        %v3304 = vunpack.c.h.b16 %v3252
        %v3305 = vunpack.c.l.b16 %v3253
        %v3306 = vunpack.c.h.b16 %v3253
        %v3307 = vunpack.c.l.b16 %v3254
        %v3308 = vunpack.c.h.b16 %v3254
        %v3309 = vunpack.c.l.b16 %v3255
        %v3310 = vunpack.c.h.b16 %v3255
        %v3311 = vunpack.c.l.b16 %v3256
        %v3312 = vunpack.c.h.b16 %v3256
        %v3313 = vunpack.c.l.b16 %v3257
        %v3314 = vunpack.c.h.b16 %v3257
        %v3315 = vunpack.c.l.b16 %v3258
        %v3316 = vunpack.c.h.b16 %v3258
        %v3317 = vunpack.c.l.b16 %v3259
        %v3318 = vunpack.c.h.b16 %v3259
        %v3319 = vunpack.c.l.b16 %v3260
        %v3320 = vunpack.c.h.b16 %v3260
        %v3321 = vpack.c.b16 %v3291, %v3289
        %v3322 = vpack.c.b16 %v3292, %v3290
        %v3323 = vpack.c.b16 %v3295, %v3293
        %v3324 = vpack.c.b16 %v3296, %v3294
        %v3325 = vpack.c.b16 %v3299, %v3297
        %v3326 = vpack.c.b16 %v3300, %v3298
        %v3327 = vpack.c.b16 %v3303, %v3301
        %v3328 = vpack.c.b16 %v3304, %v3302
        %v3329 = vpack.c.b16 %v3307, %v3305
        %v3330 = vpack.c.b16 %v3308, %v3306
        %v3331 = vpack.c.b16 %v3311, %v3309
        %v3332 = vpack.c.b16 %v3312, %v3310
        %v3333 = vpack.c.b16 %v3315, %v3313
        %v3334 = vpack.c.b16 %v3316, %v3314
        %v3335 = vpack.c.b16 %v3319, %v3317
        %v3336 = vpack.c.b16 %v3320, %v3318
        %3353 = vmatprep.subr.bf16.mxu0 %v3322
        %3354 = vmatpush1.bf16.msra.mxu0 %v3321
        %3355 = vmatprep.subr.bf16.mxu0 %v3324
        %3356 = vmatpush1.bf16.msra.mxu0 %v3323
        %3357 = vmatprep.subr.bf16.mxu0 %v3326
        %3358 = vmatpush1.bf16.msra.mxu0 %v3325
        %3359 = vmatprep.subr.bf16.mxu0 %v3328
        %3360 = vmatpush1.bf16.msra.mxu0 %v3327
        %3361 = vmatprep.subr.bf16.mxu0 %v3330
        %3362 = vmatpush1.bf16.msra.mxu0 %v3329
        %3363 = vmatprep.subr.bf16.mxu0 %v3332
        %3364 = vmatpush1.bf16.msra.mxu0 %v3331
        %3365 = vmatprep.subr.bf16.mxu0 %v3334
        %3366 = vmatpush1.bf16.msra.mxu0 %v3333
        %3367 = vmatprep.subr.bf16.mxu0 %v3336
        %3368 = vmatpush1.bf16.msra.mxu0 %v3335
        %3369 = vmatprep.subr.bf16.mxu0 0
        %3370 = vmatpush1.bf16.msra.mxu0 0
        %3371 = vmatprep.subr.bf16.mxu0 0
        %3372 = vmatpush1.bf16.msra.mxu0 0
        %3373 = vmatprep.subr.bf16.mxu0 0
        %3374 = vmatpush1.bf16.msra.mxu0 0
        %3375 = vmatprep.subr.bf16.mxu0 0
        %3376 = vmatpush1.bf16.msra.mxu0 0
        %3377 = vmatprep.subr.bf16.mxu0 0
        %3378 = vmatpush1.bf16.msra.mxu0 0
        %3379 = vmatprep.subr.bf16.mxu0 0
        %3380 = vmatpush1.bf16.msra.mxu0 0
        %3381 = vmatprep.subr.bf16.mxu0 0
        %3382 = vmatpush1.bf16.msra.mxu0 0
        %3383 = vmatprep.subr.bf16.mxu0 0
        %3384 = vmatpush1.bf16.msra.mxu0 0
        %3385 = vmatprep.mubr.bf16.mxu0 0
        %3386 = vmatmul.mubr.bf16.gmra.mrb[0].mxu0 %v3244
        %v3387 = vpop.f32.mrb[0].mxu0
        %v3388 = vadd.f32 %v3266, %v3387
        %v3389 = vpop.f32.mrb[0].mxu0
        %v3390 = vadd.f32 %v3270, %v3389
        %v3391 = vpop.f32.mrb[0].mxu0
        %v3392 = vpop.f32.mrb[0].mxu0
        %3393 = vdwg.mxu0
        %v3394 = vmax.f32 %v3388, 0.0
        %v3395 = vmax.f32 %v3390, 0.0
        %v3396 = vpack.c.bf16 %v3394, %v3394
        %v3397 = vpack.c.bf16 %v3395, %v3395
        %v3398 = vld [vmem:[#allocation22] sm:$0xf]
        %v3399 = vld [vmem:[#allocation22 + $0x4] sm:$0xf]
        %v3400 = vld [vmem:[#allocation22 + $0x8] sm:$0xf]
        %v3401 = vld [vmem:[#allocation22 + $0xc] sm:$0xf]
        %v3402 = vld [vmem:[#allocation22 + $0x10] sm:$0xf]
        %v3403 = vld [vmem:[#allocation22 + $0x14] sm:$0xf]
        %v3404 = vld [vmem:[#allocation22 + $0x18] sm:$0xf]
        %v3405 = vld [vmem:[#allocation22 + $0x1c] sm:$0xf]
        %v3406 = vld [vmem:[#allocation22 + $0x20] sm:$0xf]
        %v3407 = vld [vmem:[#allocation22 + $0x24] sm:$0xf]
        %v3408 = vld [vmem:[#allocation22 + $0x28] sm:$0xf]
        %v3409 = vld [vmem:[#allocation22 + $0x2c] sm:$0xf]
        %v3410 = vld [vmem:[#allocation22 + $0x30] sm:$0xf]
        %v3411 = vld [vmem:[#allocation22 + $0x34] sm:$0xf]
        %v3412 = vld [vmem:[#allocation22 + $0x38] sm:$0xf]
        %v3413 = vld [vmem:[#allocation22 + $0x3c] sm:$0xf]
        %v3414 = vld [vmem:[#allocation22 + $0x40] sm:$0xf]
        %v3415 = vld [vmem:[#allocation22 + $0x44] sm:$0xf]
        %v3416 = vld [vmem:[#allocation22 + $0x48] sm:$0xf]
        %v3417 = vld [vmem:[#allocation22 + $0x4c] sm:$0xf]
        %v3418 = vld [vmem:[#allocation22 + $0x50] sm:$0xf]
        %v3419 = vld [vmem:[#allocation22 + $0x54] sm:$0xf]
        %v3420 = vld [vmem:[#allocation22 + $0x58] sm:$0xf]
        %v3421 = vld [vmem:[#allocation22 + $0x5c] sm:$0xf]
        %v3422 = vld [vmem:[#allocation22 + $0x60] sm:$0xf]
        %v3423 = vld [vmem:[#allocation22 + $0x64] sm:$0xf]
        %v3424 = vld [vmem:[#allocation22 + $0x68] sm:$0xf]
        %v3425 = vld [vmem:[#allocation22 + $0x6c] sm:$0xf]
        %v3426 = vld [vmem:[#allocation22 + $0x70] sm:$0xf]
        %v3427 = vld [vmem:[#allocation22 + $0x74] sm:$0xf]
        %v3428 = vld [vmem:[#allocation22 + $0x78] sm:$0xf]
        %v3429 = vld [vmem:[#allocation22 + $0x7c] sm:$0xf]
        %v3430 = vld [vmem:[%s61] sm:$0x1]
        %v3432 = vlaneseq
        %v3433 = vshrl.u32 %v3432, 7
        %v3434 = vsub.s32 0, %v3433
        %v3435 = vrot.slane %v3430, %v3434
        %v3469 = vunpack.c.l.b16 %v3398
        %v3470 = vunpack.c.l.b16 %v3399
        %v3471 = vunpack.c.l.b16 %v3400
        %v3472 = vunpack.c.l.b16 %v3401
        %v3473 = vunpack.c.l.b16 %v3402
        %v3474 = vunpack.c.l.b16 %v3403
        %v3475 = vunpack.c.l.b16 %v3404
        %v3476 = vunpack.c.l.b16 %v3405
        %v3477 = vunpack.c.l.b16 %v3406
        %v3478 = vunpack.c.l.b16 %v3407
        %v3479 = vunpack.c.l.b16 %v3408
        %v3480 = vunpack.c.l.b16 %v3409
        %v3481 = vunpack.c.l.b16 %v3410
        %v3482 = vunpack.c.l.b16 %v3411
        %v3483 = vunpack.c.l.b16 %v3412
        %v3484 = vunpack.c.l.b16 %v3413
        %v3485 = vunpack.c.l.b16 %v3414
        %v3486 = vunpack.c.l.b16 %v3415
        %v3487 = vunpack.c.l.b16 %v3416
        %v3488 = vunpack.c.l.b16 %v3417
        %v3489 = vunpack.c.l.b16 %v3418
        %v3490 = vunpack.c.l.b16 %v3419
        %v3491 = vunpack.c.l.b16 %v3420
        %v3492 = vunpack.c.l.b16 %v3421
        %v3493 = vunpack.c.l.b16 %v3422
        %v3494 = vunpack.c.l.b16 %v3423
        %v3495 = vunpack.c.l.b16 %v3424
        %v3496 = vunpack.c.l.b16 %v3425
        %v3497 = vunpack.c.l.b16 %v3426
        %v3498 = vunpack.c.l.b16 %v3427
        %v3499 = vunpack.c.l.b16 %v3428
        %v3500 = vunpack.c.l.b16 %v3429
        %v3501 = vpack.c.b16 %v3470, %v3469
        %v3502 = vpack.c.b16 %v3472, %v3471
        %v3503 = vpack.c.b16 %v3474, %v3473
        %v3504 = vpack.c.b16 %v3476, %v3475
        %v3505 = vpack.c.b16 %v3478, %v3477
        %v3506 = vpack.c.b16 %v3480, %v3479
        %v3507 = vpack.c.b16 %v3482, %v3481
        %v3508 = vpack.c.b16 %v3484, %v3483
        %v3509 = vpack.c.b16 %v3486, %v3485
        %v3510 = vpack.c.b16 %v3488, %v3487
        %v3511 = vpack.c.b16 %v3490, %v3489
        %v3512 = vpack.c.b16 %v3492, %v3491
        %v3513 = vpack.c.b16 %v3494, %v3493
        %v3514 = vpack.c.b16 %v3496, %v3495
        %v3515 = vpack.c.b16 %v3498, %v3497
        %v3516 = vpack.c.b16 %v3500, %v3499
        %3533 = vmatprep.subr.bf16.mxu0 0
        %3534 = vmatpush1.bf16.msra.mxu0 %v3501
        %3535 = vmatprep.subr.bf16.mxu0 0
        %3536 = vmatpush1.bf16.msra.mxu0 %v3502
        %3537 = vmatprep.subr.bf16.mxu0 0
        %3538 = vmatpush1.bf16.msra.mxu0 %v3503
        %3539 = vmatprep.subr.bf16.mxu0 0
        %3540 = vmatpush1.bf16.msra.mxu0 %v3504
        %3541 = vmatprep.subr.bf16.mxu0 0
        %3542 = vmatpush1.bf16.msra.mxu0 %v3505
        %3543 = vmatprep.subr.bf16.mxu0 0
        %3544 = vmatpush1.bf16.msra.mxu0 %v3506
        %3545 = vmatprep.subr.bf16.mxu0 0
        %3546 = vmatpush1.bf16.msra.mxu0 %v3507
        %3547 = vmatprep.subr.bf16.mxu0 0
        %3548 = vmatpush1.bf16.msra.mxu0 %v3508
        %3549 = vmatprep.subr.bf16.mxu0 0
        %3550 = vmatpush1.bf16.msra.mxu0 %v3509
        %3551 = vmatprep.subr.bf16.mxu0 0
        %3552 = vmatpush1.bf16.msra.mxu0 %v3510
        %3553 = vmatprep.subr.bf16.mxu0 0
        %3554 = vmatpush1.bf16.msra.mxu0 %v3511
        %3555 = vmatprep.subr.bf16.mxu0 0
        %3556 = vmatpush1.bf16.msra.mxu0 %v3512
        %3557 = vmatprep.subr.bf16.mxu0 0
        %3558 = vmatpush1.bf16.msra.mxu0 %v3513
        %3559 = vmatprep.subr.bf16.mxu0 0
        %3560 = vmatpush1.bf16.msra.mxu0 %v3514
        %3561 = vmatprep.subr.bf16.mxu0 0
        %3562 = vmatpush1.bf16.msra.mxu0 %v3515
        %3563 = vmatprep.subr.bf16.mxu0 0
        %3564 = vmatpush1.bf16.msra.mxu0 %v3516
        %3565 = vmatprep.mubr.bf16.mxu0 %v3397
        %3566 = vmatmul.mubr.bf16.gmra.mrb[0].mxu0 %v3396
        %v3567 = vpop.f32.mrb[0].mxu0
        %v3568 = vadd.f32 %v3435, %v3567
        %v3569 = vpop.f32.mrb[0].mxu0
        %v3570 = vpop.f32.mrb[0].mxu0
        %v3571 = vpop.f32.mrb[0].mxu0
        %3572 = vdwg.mxu0
        %v3573 = vadd.f32 %v3216, %v3568
        %3574 = vst [vmem:[%s1187] sm:$0xff] %v3573
        %s3575 = sand.u32 %s762, 1
        %s3576 = scalar_lea.sflag [#allocation4], %s3575
        %s3577 = sand.u32 %s762, 1
        %s3578 = smul.addr %s3577, 8
        %s3579 = scalar_lea.vmem [#allocation23], %s3578
        // Predicated region
        $region197: #{tpu_custom_call.1} parent=143 // pred_check
          %p3580 = pneg %p772
        $region198: #{tpu_custom_call.1} parent=143 // pred_check_branch
          %3582 = sbr.rel (%p3580) target = $region200
        $region199: #{tpu_custom_call.1} parent=143 // pred_region
          %s3584 = ssub.s32 128, 128
          %3585 = vsyncadd %s3576, %s3584
          %s3586 = smul.addr %s88, 128
          %s3587 = scalar_lea.hbm %s63, %s3586
          %s3589 = sshll.u32 %s3579, 4
          %s3590 = int_to_ptr.vmem [resolvable:$true] %s3589
          %3592 = dma.vmem_to_hbm [thread:$0]  %s3590, 128, %s3587, %s3576
        $region200: #{tpu_custom_call.1} parent=143 // pred_fallthru
          _
      $region144: #{tpu_custom_call.1} parent=5 // pred_fallthru
        _
      %p3593 = scmp.le.s32.totalorder 2, %s83
      // Predicated region
      $region201: #{tpu_custom_call.1} parent=5 // pred_check
        %p3594 = pneg %p3593
      $region202: #{tpu_custom_call.1} parent=5 // pred_check_branch
        %3596 = sbr.rel (%p3594) target = $region204
      $region203: #{tpu_custom_call.1} parent=5 // pred_region
        %s3597 = ssub.s32 %s83, 2
        // Predicated region
        $region205: #{tpu_custom_call.1} parent=203 // pred_check
          %p3598 = pneg %p778
        $region206: #{tpu_custom_call.1} parent=203 // pred_check_branch
          %3600 = sbr.rel (%p3598) target = $region208
        $region207: #{tpu_custom_call.1} parent=203 // pred_region
          %s3601 = sand.u32 %s763, 1
          %s3602 = scalar_lea.sflag [#allocation4], %s3601
          %s3603 = sand.u32 %s763, 1
          %s3604 = smul.addr %s3603, 8
          %s3605 = scalar_lea.vmem [#allocation23], %s3604
          %3606 = dma.done %s3602, 128
        $region208: #{tpu_custom_call.1} parent=203 // pred_fallthru
          _
      $region204: #{tpu_custom_call.1} parent=5 // pred_fallthru
        _
    $region6: #{tpu_custom_call.1} parent=1 // loop_footer
      %s87 = sadd.s32 1, %s83
    $region7: #{tpu_custom_call.1} parent=1 // loop_footer_branch
      %82 = sbr.rel target = $region3
    $region8: #{tpu_custom_call.1} parent=1 // loop_exit
      _
    %3607 = vsyncpa [#allocation3], 1
    %s3608 = scalar_lea.sflag [#allocation3], 1
    %3609 = vsyncpa %s3608, 1
    %3610 = vsyncpa [#allocation6], 1
    %s3611 = scalar_lea.sflag [#allocation6], 1
    %3612 = vsyncpa %s3611, 1
    %3613 = vsyncpa [#allocation9], 1
    %3614 = vsyncpa [#allocation12], 1
    %3615 = vsyncpa [#allocation15], 1
    %3616 = vsyncpa [#allocation18], 1
    %3617 = vsyncpa [#allocation21], 1
    %3618 = vsyncpa [#allocation4], 1
    %s3619 = scalar_lea.sflag [#allocation4], 1
    %3620 = vsyncpa %s3619, 1

</llo_original>
